<compile_context>
chip_gen: v5e
topology: v5e:2x2
jax: 0.10.0
libtpu: 0.0.40
codegen_flags: <defaults>
</compile_context>

<pallas_src>
import math
import functools

import jax
import jax.numpy as jnp
from jax import lax
from jax.experimental import pallas as pl
from jax.experimental.pallas import tpu as pltpu


# Interior of the padded scratch starts at this column offset (multiple of 16
# so the bf16 interior store is sublane-tile aligned). Left halo column is at
# _PAD - 1, right halo column at _PAD + W.
_PAD = 16
_INV_SQRT2 = 1.0 / math.sqrt(2.0)


def _round_up(x, m):
    return ((x + m - 1) // m) * m


def _zero_halo(xp_ref, H, W):
    """Zero only the 1-pixel halo (2 rows + 2 columns) of the padded scratch."""
    Wp, C = xp_ref.shape[1], xp_ref.shape[2]
    zrow = jnp.zeros((1, Wp, C), xp_ref.dtype)
    xp_ref[0:1, :, :] = zrow
    xp_ref[H + 1:H + 2, :, :] = zrow
    zcol = jnp.zeros((H + 2, 1, C), xp_ref.dtype)
    xp_ref[:, _PAD - 1:_PAD, :] = zcol
    xp_ref[:, _PAD + W:_PAD + W + 1, :] = zcol


def _conv3x3(xp_ref, w_ref, H, W):
    """3x3 same-conv as 9 shifted (H*W, C) x (C, Cw) MXU matmuls, f32 accum.

    xp_ref: (H+2, W+_PAD+1, C) bf16 scratch ref; valid data at rows [1, H+1),
            columns [_PAD, _PAD+W); zero halo around it.
    w_ref : (3, 3, C, Cw) bf16 ref (BN scale already folded in host-side).
    Taps are sliced directly from the ref (no full-value materialization) so
    each load sits next to its matmul and vreg pressure stays low.
    """
    acc = None
    # TODO(synk): on v7x, accumulate inside the MXU result buffer (MRB)
    # instead of this f32 VALU add chain.
    for kh in range(3):
        for kw in range(3):
            col0 = _PAD - 1 + kw
            tap = xp_ref[kh:kh + H, col0:col0 + W, :]        # (H, W, C) bf16
            tap = tap.reshape(H * W, tap.shape[-1])
            part = jnp.dot(tap, w_ref[kh, kw],
                           preferred_element_type=jnp.float32)
            acc = part if acc is None else acc + part
    return acc                                               # (H*W, Cw) f32


def _resblock_kernel(x_ref, wcat_ref, bcat_ref, w2_ref, b2_ref, out_ref,
                     xp1_ref, xp2_ref, *, H, W, Cout, Cseg, identity):
    # ---- stage 0: input tile -> padded bf16 VMEM scratch (halo built
    # in-kernel; only the halo strips are zeroed).
    _zero_halo(xp1_ref, H, W)
    xp1_ref[1:H + 1, _PAD:_PAD + W, :] = x_ref[0]            # already bf16

    # ---- conv1 (+ fused skip conv when Cin != Cout) + bias.
    # wcat output lanes: [0, Cseg) = conv1 (BN folded), [Cseg, 2*Cseg) = skip.
    cat = _conv3x3(xp1_ref, wcat_ref, H, W) + bcat_ref[...]  # (H*W, Ccat) f32
    y1 = jnp.maximum(cat[:, :Cseg], 0.0)                     # ReLU

    # ---- stage 1: conv1 output stays in VMEM (never round-trips to HBM).
    _zero_halo(xp2_ref, H, W)
    xp2_ref[1:H + 1, _PAD:_PAD + W, :] = (
        y1.astype(jnp.bfloat16).reshape(H, W, Cseg))

    # ---- conv2 + bias.
    y2 = _conv3x3(xp2_ref, w2_ref, H, W) + b2_ref[...]       # (H*W, Cseg) f32

    # ---- residual add + 1/sqrt(2); `identity` is a trace-time constant.
    if identity:
        res = xp1_ref[1:H + 1, _PAD:_PAD + W, :].astype(jnp.float32)
        res = res.reshape(H * W, Cout)                       # Cin == Cout
        out = (y2[:, :Cout] + res) * _INV_SQRT2
    else:
        res = cat[:, Cseg:2 * Cseg]                          # skip-conv lanes
        out = ((y2 + res) * _INV_SQRT2)[:, :Cout]

    # Unpadded f32 store (last dim = Cout): no 128-lane write amplification.
    # TODO(synk): for small Cout with (W*Cout) % 128 == 0, a packed
    # (1, H, W*Cout) store would additionally make the vst lane-dense.
    out_ref[...] = out.reshape(1, H * W, Cout)


def _vmem_limit_bytes(H, W, Cin, Cseg, Ccat, Cout):
    """Scoped-VMEM request: scratches + double-buffered blocks + headroom."""
    bf16, f32 = 2, 4
    wp16 = _round_up(W + _PAD + 1, 16)
    scratch = (H + 2) * wp16 * (_round_up(Cin, 128) + Cseg) * bf16
    blocks = 2 * (                                   # double-buffered blocks
        H * _round_up(W, 16) * _round_up(Cin, 128) * bf16       # x
        + 9 * _round_up(Cin, 16) * Ccat * bf16                   # wcat
        + 9 * Cseg * Cseg * bf16                                  # w2
        + 8 * (Ccat + Cseg) * f32                                 # biases
        + _round_up(H * W, 8) * _round_up(Cout, 128) * f32)       # out
    est = scratch + blocks + (4 << 20)
    return min(64 << 20, max(32 << 20, int(1.5 * est)))


def resblock_forward(x_nchw, params, in_channels, out_channels):
    """ResBlock forward. Input/output NCHW f32 (PyTorch convention)."""
    N, _, H, W = x_nchw.shape
    Cin, Cout = in_channels, out_channels
    Cseg = _round_up(Cout, 128)          # lane-aligned width of an MXU segment
    identity = (Cin == Cout)             # TODO(synk): stride != 1 unsupported

    x = jnp.transpose(x_nchw.astype(jnp.bfloat16), (0, 2, 3, 1))   # NHWC bf16

    def pad_last(a, to):
        p = to - a.shape[-1]
        return a if p == 0 else jnp.pad(a, [(0, 0)] * (a.ndim - 1) + [(0, p)])

    w1 = pad_last(params["w1"], Cseg)                        # (3,3,Cin,Cseg)
    b1 = pad_last(params["b1"].reshape(1, Cout), Cseg)       # (1,Cseg) f32
    # conv2: pad input channels to Cseg too (padded y1 lanes are exact zeros).
    w2 = jnp.pad(params["w2"],
                 [(0, 0), (0, 0), (0, Cseg - Cout), (0, Cseg - Cout)])
    b2 = pad_last(params["b2"].reshape(1, Cout), Cseg)

    if identity:
        wcat, bcat = w1, b1                                  # Ccat = Cseg
    else:
        ws = pad_last(params["w_skip"], Cseg)
        bs = pad_last(params["b_skip"].reshape(1, Cout), Cseg)
        wcat = jnp.concatenate([w1, ws], axis=-1)            # (3,3,Cin,2Cseg)
        bcat = jnp.concatenate([b1, bs], axis=-1)            # (1,2Cseg)
    Ccat = wcat.shape[-1]

    kernel = functools.partial(_resblock_kernel, H=H, W=W, Cout=Cout,
                               Cseg=Cseg, identity=identity)

    out = pl.pallas_call(
        kernel,
        out_shape=jax.ShapeDtypeStruct((N, H * W, Cout), jnp.float32),
        grid_spec=pltpu.PrefetchScalarGridSpec(
            num_scalar_prefetch=0,
            grid=(N,),
            in_specs=[
                pl.BlockSpec((1, H, W, Cin), lambda n: (n, 0, 0, 0)),
                pl.BlockSpec((3, 3, Cin, Ccat), lambda n: (0, 0, 0, 0)),
                pl.BlockSpec((1, Ccat), lambda n: (0, 0)),
                pl.BlockSpec((3, 3, Cseg, Cseg), lambda n: (0, 0, 0, 0)),
                pl.BlockSpec((1, Cseg), lambda n: (0, 0)),
            ],
            out_specs=pl.BlockSpec((1, H * W, Cout), lambda n: (n, 0, 0)),
            scratch_shapes=[
                pltpu.VMEM((H + 2, W + _PAD + 1, Cin), jnp.bfloat16),
                pltpu.VMEM((H + 2, W + _PAD + 1, Cseg), jnp.bfloat16),
            ],
        ),
        compiler_params=pltpu.CompilerParams(
            dimension_semantics=("parallel",),
            vmem_limit_bytes=_vmem_limit_bytes(H, W, Cin, Cseg, Ccat, Cout)),
    )(x, wcat, bcat, w2, b2)

    out = out.reshape(N, H, W, Cout)
    return jnp.transpose(out, (0, 3, 1, 2))


# ---------------------------------------------------------------------------
# Deterministic parameter construction (BN folded, inference mode)
# ---------------------------------------------------------------------------
def make_resblock_params(key, in_channels, out_channels):
    ks = jax.random.split(key, 14)
    eps = 1e-5

    def conv_w(k, cin, cout):
        w = jax.random.normal(k, (cout, cin, 3, 3), jnp.float32) * 0.1  # OIHW
        return jnp.transpose(w, (2, 3, 1, 0))                           # HWIO

    def bn_fold(keys, cout):
        kb, kg, kbe, km, kv = keys
        conv_b = jax.random.normal(kb, (cout,), jnp.float32) * 0.05
        gamma = 1.0 + 0.1 * jax.random.normal(kg, (cout,), jnp.float32)
        beta = 0.1 * jax.random.normal(kbe, (cout,), jnp.float32)
        mean = 0.1 * jax.random.normal(km, (cout,), jnp.float32)
        var = jnp.abs(jax.random.normal(kv, (cout,), jnp.float32)) + 0.5
        scale = gamma / jnp.sqrt(var + eps)
        return scale, conv_b * scale + beta - mean * scale

    p = {}
    s1, b1 = bn_fold(ks[1:6], out_channels)
    p["w1"] = (conv_w(ks[0], in_channels, out_channels) * s1).astype(jnp.bfloat16)
    p["b1"] = b1
    s2, b2 = bn_fold(ks[7:12], out_channels)
    p["w2"] = (conv_w(ks[6], out_channels, out_channels) * s2).astype(jnp.bfloat16)
    p["b2"] = b2
    if in_channels != out_channels:
        p["w_skip"] = conv_w(ks[12], in_channels, out_channels).astype(jnp.bfloat16)
        p["b_skip"] = jax.random.normal(ks[13], (out_channels,),
                                        jnp.float32) * 0.05
    return p


# ---------------------------------------------------------------------------
# Pure-JAX reference (same bf16-input / f32-accumulation numerics)
# ---------------------------------------------------------------------------
def _conv_ref(x_bf16, w_hwio_bf16, bias_f32):
    y = lax.conv_general_dilated(
        x_bf16, w_hwio_bf16, window_strides=(1, 1), padding=((1, 1), (1, 1)),
        dimension_numbers=("NHWC", "HWIO", "NHWC"),
        preferred_element_type=jnp.float32)
    return y + bias_f32.reshape(1, 1, 1, -1)


def resblock_reference(x_nchw, params, in_channels, out_channels):
    x = jnp.transpose(x_nchw.astype(jnp.bfloat16), (0, 2, 3, 1))
    if in_channels != out_channels:
        res = _conv_ref(x, params["w_skip"], params["b_skip"])
    else:
        res = x.astype(jnp.float32)
    h = jnp.maximum(_conv_ref(x, params["w1"], params["b1"]), 0.0)
    out = _conv_ref(h.astype(jnp.bfloat16), params["w2"], params["b2"])
    out = (out + res) * (1.0 / math.sqrt(2.0))
    return jnp.transpose(out, (0, 3, 1, 2))


# ---------------------------------------------------------------------------
if __name__ == "__main__":
    key = jax.random.PRNGKey(0)
    k_x, k_p, k_p2 = jax.random.split(key, 3)

    N, Cin, Cout, H, W = 2, 4, 8, 16, 16   # Cin != Cout -> fused skip-conv path
    x = jax.random.normal(k_x, (N, Cin, H, W), jnp.float32)
    params = make_resblock_params(k_p, Cin, Cout)

    out = jax.block_until_ready(resblock_forward(x, params, Cin, Cout))
    ref = jax.block_until_ready(resblock_reference(x, params, Cin, Cout))
    assert out.shape == (N, Cout, H, W), out.shape
    err = float(jnp.max(jnp.abs(out - ref)))
    assert err < 1e-3, f"max abs err {err}"

    # identity-skip variant (in_channels == out_channels)
    params_id = make_resblock_params(k_p2, Cout, Cout)
    x_id = jax.random.normal(k_x, (N, Cout, H, W), jnp.float32)
    out_id = jax.block_until_ready(resblock_forward(x_id, params_id, Cout, Cout))
    ref_id = jax.block_until_ready(resblock_reference(x_id, params_id, Cout, Cout))
    err_id = float(jnp.max(jnp.abs(out_id - ref_id)))
    assert err_id < 1e-3, f"identity-skip max abs err {err_id}"

    print("KERNEL_OK")
</pallas_src>

<mosaic_0001>
module attributes {stable_mosaic.version = 11 : i64} {
  func.func @_resblock_kernel(%arg0: i32, %arg1: memref<1x16x16x4xbf16, #tpu.memory_space<vmem>>, %arg2: memref<3x3x4x256xbf16, #tpu.memory_space<vmem>>, %arg3: memref<1x256xf32, #tpu.memory_space<vmem>>, %arg4: memref<3x3x128x128xbf16, #tpu.memory_space<vmem>>, %arg5: memref<1x128xf32, #tpu.memory_space<vmem>>, %arg6: memref<1x256x8xf32, #tpu.memory_space<vmem>>, %arg7: memref<18x33x4xbf16, #tpu.memory_space<vmem>>, %arg8: memref<18x33x128xbf16, #tpu.memory_space<vmem>>) attributes {dimension_semantics = [#tpu.dimension_semantics<parallel>], iteration_bounds = array<i64: 2>, scalar_prefetch = 0 : i64, scratch_operands = 2 : i64, tpu.core_type = #tpu.core_type<tc>, window_params = [{transform_indices = @transform_0, window_bounds = array<i64: 1, 16, 16, 4>}, {pipeline_mode = #tpu.pipeline_mode<synchronous>, transform_indices = @transform_1, window_bounds = array<i64: 3, 3, 4, 256>}, {pipeline_mode = #tpu.pipeline_mode<synchronous>, transform_indices = @transform_2, window_bounds = array<i64: 1, 256>}, {pipeline_mode = #tpu.pipeline_mode<synchronous>, transform_indices = @transform_3, window_bounds = array<i64: 3, 3, 128, 128>}, {pipeline_mode = #tpu.pipeline_mode<synchronous>, transform_indices = @transform_4, window_bounds = array<i64: 1, 128>}, {transform_indices = @transform_5, window_bounds = array<i64: 1, 256, 8>}]} {
    %cst = arith.constant 0.000000e+00 : bf16
    %0 = vector.broadcast %cst : bf16 to vector<1x33x4xbf16>
    %c0 = arith.constant 0 : index
    %c0_0 = arith.constant 0 : index
    %c0_1 = arith.constant 0 : index
    %1 = vector.load %arg7[%c0, %c0_0, %c0_1] : memref<18x33x4xbf16, #tpu.memory_space<vmem>>, vector<1x33x4xbf16>
    tpu.vector_store %arg7[%c0, %c0_0, %c0_1], %0 {strides = array<i32>} : memref<18x33x4xbf16, #tpu.memory_space<vmem>>, vector<1x33x4xbf16>,
    %c17 = arith.constant 17 : index
    %c0_2 = arith.constant 0 : index
    %c0_3 = arith.constant 0 : index
    %2 = vector.load %arg7[%c17, %c0_2, %c0_3] : memref<18x33x4xbf16, #tpu.memory_space<vmem>>, vector<1x33x4xbf16>
    tpu.vector_store %arg7[%c17, %c0_2, %c0_3], %0 {strides = array<i32>} : memref<18x33x4xbf16, #tpu.memory_space<vmem>>, vector<1x33x4xbf16>,
    %cst_4 = arith.constant 0.000000e+00 : bf16
    %3 = vector.broadcast %cst_4 : bf16 to vector<18x1x4xbf16>
    %c0_5 = arith.constant 0 : index
    %c15 = arith.constant 15 : index
    %c0_6 = arith.constant 0 : index
    %4 = vector.load %arg7[%c0_5, %c15, %c0_6] : memref<18x33x4xbf16, #tpu.memory_space<vmem>>, vector<18x1x4xbf16>
    tpu.vector_store %arg7[%c0_5, %c15, %c0_6], %3 {strides = array<i32>} : memref<18x33x4xbf16, #tpu.memory_space<vmem>>, vector<18x1x4xbf16>,
    %c0_7 = arith.constant 0 : index
    %c32 = arith.constant 32 : index
    %c0_8 = arith.constant 0 : index
    %5 = vector.load %arg7[%c0_7, %c32, %c0_8] : memref<18x33x4xbf16, #tpu.memory_space<vmem>>, vector<18x1x4xbf16>
    tpu.vector_store %arg7[%c0_7, %c32, %c0_8], %3 {strides = array<i32>} : memref<18x33x4xbf16, #tpu.memory_space<vmem>>, vector<18x1x4xbf16>,
    %c0_9 = arith.constant 0 : index
    %c0_10 = arith.constant 0 : index
    %c0_11 = arith.constant 0 : index
    %c0_12 = arith.constant 0 : index
    %6 = vector.load %arg1[%c0_9, %c0_10, %c0_11, %c0_12] : memref<1x16x16x4xbf16, #tpu.memory_space<vmem>>, vector<1x16x16x4xbf16>
    %7 = vector.shape_cast %6 : vector<1x16x16x4xbf16> to vector<16x16x4xbf16>
    %c1 = arith.constant 1 : index
    %c16 = arith.constant 16 : index
    %c0_13 = arith.constant 0 : index
    %8 = vector.load %arg7[%c1, %c16, %c0_13] : memref<18x33x4xbf16, #tpu.memory_space<vmem>>, vector<16x16x4xbf16>
    tpu.vector_store %arg7[%c1, %c16, %c0_13], %7 {strides = array<i32>} : memref<18x33x4xbf16, #tpu.memory_space<vmem>>, vector<16x16x4xbf16>,
    %c0_14 = arith.constant 0 : index
    %c15_15 = arith.constant 15 : index
    %c0_16 = arith.constant 0 : index
    %9 = vector.load %arg7[%c0_14, %c15_15, %c0_16] : memref<18x33x4xbf16, #tpu.memory_space<vmem>>, vector<16x16x4xbf16>
    %10 = vector.shape_cast %9 : vector<16x16x4xbf16> to vector<256x4xbf16>
    %c0_17 = arith.constant 0 : index
    %c0_18 = arith.constant 0 : index
    %c0_19 = arith.constant 0 : index
    %c0_20 = arith.constant 0 : index
    %11 = vector.load %arg2[%c0_17, %c0_18, %c0_19, %c0_20] : memref<3x3x4x256xbf16, #tpu.memory_space<vmem>>, vector<1x1x4x256xbf16>
    %12 = vector.shape_cast %11 : vector<1x1x4x256xbf16> to vector<4x256xbf16>
    %cst_21 = arith.constant dense<0.000000e+00> : vector<256x256xf32>
    %13 = tpu.matmul %10, %12, %cst_21 {dimension_numbers = #tpu.dot_dimension_numbers<[1], [0], [0], [1], [0, 0, 1, 1], [], []>} : vector<256x4xbf16>, vector<4x256xbf16>, vector<256x256xf32> -> vector<256x256xf32>
    %c0_22 = arith.constant 0 : index
    %c16_23 = arith.constant 16 : index
    %c0_24 = arith.constant 0 : index
    %14 = vector.load %arg7[%c0_22, %c16_23, %c0_24] : memref<18x33x4xbf16, #tpu.memory_space<vmem>>, vector<16x16x4xbf16>
    %15 = vector.shape_cast %14 : vector<16x16x4xbf16> to vector<256x4xbf16>
    %c0_25 = arith.constant 0 : index
    %c1_26 = arith.constant 1 : index
    %c0_27 = arith.constant 0 : index
    %c0_28 = arith.constant 0 : index
    %16 = vector.load %arg2[%c0_25, %c1_26, %c0_27, %c0_28] : memref<3x3x4x256xbf16, #tpu.memory_space<vmem>>, vector<1x1x4x256xbf16>
    %17 = vector.shape_cast %16 : vector<1x1x4x256xbf16> to vector<4x256xbf16>
    %cst_29 = arith.constant dense<0.000000e+00> : vector<256x256xf32>
    %18 = tpu.matmul %15, %17, %cst_29 {dimension_numbers = #tpu.dot_dimension_numbers<[1], [0], [0], [1], [0, 0, 1, 1], [], []>} : vector<256x4xbf16>, vector<4x256xbf16>, vector<256x256xf32> -> vector<256x256xf32>
    %19 = arith.addf %13, %18 : vector<256x256xf32>
    %c0_30 = arith.constant 0 : index
    %c17_31 = arith.constant 17 : index
    %c0_32 = arith.constant 0 : index
    %20 = vector.load %arg7[%c0_30, %c17_31, %c0_32] : memref<18x33x4xbf16, #tpu.memory_space<vmem>>, vector<16x16x4xbf16>
    %21 = vector.shape_cast %20 : vector<16x16x4xbf16> to vector<256x4xbf16>
    %c0_33 = arith.constant 0 : index
    %c2 = arith.constant 2 : index
    %c0_34 = arith.constant 0 : index
    %c0_35 = arith.constant 0 : index
    %22 = vector.load %arg2[%c0_33, %c2, %c0_34, %c0_35] : memref<3x3x4x256xbf16, #tpu.memory_space<vmem>>, vector<1x1x4x256xbf16>
    %23 = vector.shape_cast %22 : vector<1x1x4x256xbf16> to vector<4x256xbf16>
    %cst_36 = arith.constant dense<0.000000e+00> : vector<256x256xf32>
    %24 = tpu.matmul %21, %23, %cst_36 {dimension_numbers = #tpu.dot_dimension_numbers<[1], [0], [0], [1], [0, 0, 1, 1], [], []>} : vector<256x4xbf16>, vector<4x256xbf16>, vector<256x256xf32> -> vector<256x256xf32>
    %25 = arith.addf %19, %24 : vector<256x256xf32>
    %c1_37 = arith.constant 1 : index
    %c15_38 = arith.constant 15 : index
    %c0_39 = arith.constant 0 : index
    %26 = vector.load %arg7[%c1_37, %c15_38, %c0_39] : memref<18x33x4xbf16, #tpu.memory_space<vmem>>, vector<16x16x4xbf16>
    %27 = vector.shape_cast %26 : vector<16x16x4xbf16> to vector<256x4xbf16>
    %c1_40 = arith.constant 1 : index
    %c0_41 = arith.constant 0 : index
    %c0_42 = arith.constant 0 : index
    %c0_43 = arith.constant 0 : index
    %28 = vector.load %arg2[%c1_40, %c0_41, %c0_42, %c0_43] : memref<3x3x4x256xbf16, #tpu.memory_space<vmem>>, vector<1x1x4x256xbf16>
    %29 = vector.shape_cast %28 : vector<1x1x4x256xbf16> to vector<4x256xbf16>
    %cst_44 = arith.constant dense<0.000000e+00> : vector<256x256xf32>
    %30 = tpu.matmul %27, %29, %cst_44 {dimension_numbers = #tpu.dot_dimension_numbers<[1], [0], [0], [1], [0, 0, 1, 1], [], []>} : vector<256x4xbf16>, vector<4x256xbf16>, vector<256x256xf32> -> vector<256x256xf32>
    %31 = arith.addf %25, %30 : vector<256x256xf32>
    %c1_45 = arith.constant 1 : index
    %c16_46 = arith.constant 16 : index
    %c0_47 = arith.constant 0 : index
    %32 = vector.load %arg7[%c1_45, %c16_46, %c0_47] : memref<18x33x4xbf16, #tpu.memory_space<vmem>>, vector<16x16x4xbf16>
    %33 = vector.shape_cast %32 : vector<16x16x4xbf16> to vector<256x4xbf16>
    %c1_48 = arith.constant 1 : index
    %c1_49 = arith.constant 1 : index
    %c0_50 = arith.constant 0 : index
    %c0_51 = arith.constant 0 : index
    %34 = vector.load %arg2[%c1_48, %c1_49, %c0_50, %c0_51] : memref<3x3x4x256xbf16, #tpu.memory_space<vmem>>, vector<1x1x4x256xbf16>
    %35 = vector.shape_cast %34 : vector<1x1x4x256xbf16> to vector<4x256xbf16>
    %cst_52 = arith.constant dense<0.000000e+00> : vector<256x256xf32>
    %36 = tpu.matmul %33, %35, %cst_52 {dimension_numbers = #tpu.dot_dimension_numbers<[1], [0], [0], [1], [0, 0, 1, 1], [], []>} : vector<256x4xbf16>, vector<4x256xbf16>, vector<256x256xf32> -> vector<256x256xf32>
    %37 = arith.addf %31, %36 : vector<256x256xf32>
    %c1_53 = arith.constant 1 : index
    %c17_54 = arith.constant 17 : index
    %c0_55 = arith.constant 0 : index
    %38 = vector.load %arg7[%c1_53, %c17_54, %c0_55] : memref<18x33x4xbf16, #tpu.memory_space<vmem>>, vector<16x16x4xbf16>
    %39 = vector.shape_cast %38 : vector<16x16x4xbf16> to vector<256x4xbf16>
    %c1_56 = arith.constant 1 : index
    %c2_57 = arith.constant 2 : index
    %c0_58 = arith.constant 0 : index
    %c0_59 = arith.constant 0 : index
    %40 = vector.load %arg2[%c1_56, %c2_57, %c0_58, %c0_59] : memref<3x3x4x256xbf16, #tpu.memory_space<vmem>>, vector<1x1x4x256xbf16>
    %41 = vector.shape_cast %40 : vector<1x1x4x256xbf16> to vector<4x256xbf16>
    %cst_60 = arith.constant dense<0.000000e+00> : vector<256x256xf32>
    %42 = tpu.matmul %39, %41, %cst_60 {dimension_numbers = #tpu.dot_dimension_numbers<[1], [0], [0], [1], [0, 0, 1, 1], [], []>} : vector<256x4xbf16>, vector<4x256xbf16>, vector<256x256xf32> -> vector<256x256xf32>
    %43 = arith.addf %37, %42 : vector<256x256xf32>
    %c2_61 = arith.constant 2 : index
    %c15_62 = arith.constant 15 : index
    %c0_63 = arith.constant 0 : index
    %44 = vector.load %arg7[%c2_61, %c15_62, %c0_63] : memref<18x33x4xbf16, #tpu.memory_space<vmem>>, vector<16x16x4xbf16>
    %45 = vector.shape_cast %44 : vector<16x16x4xbf16> to vector<256x4xbf16>
    %c2_64 = arith.constant 2 : index
    %c0_65 = arith.constant 0 : index
    %c0_66 = arith.constant 0 : index
    %c0_67 = arith.constant 0 : index
    %46 = vector.load %arg2[%c2_64, %c0_65, %c0_66, %c0_67] : memref<3x3x4x256xbf16, #tpu.memory_space<vmem>>, vector<1x1x4x256xbf16>
    %47 = vector.shape_cast %46 : vector<1x1x4x256xbf16> to vector<4x256xbf16>
    %cst_68 = arith.constant dense<0.000000e+00> : vector<256x256xf32>
    %48 = tpu.matmul %45, %47, %cst_68 {dimension_numbers = #tpu.dot_dimension_numbers<[1], [0], [0], [1], [0, 0, 1, 1], [], []>} : vector<256x4xbf16>, vector<4x256xbf16>, vector<256x256xf32> -> vector<256x256xf32>
    %49 = arith.addf %43, %48 : vector<256x256xf32>
    %c2_69 = arith.constant 2 : index
    %c16_70 = arith.constant 16 : index
    %c0_71 = arith.constant 0 : index
    %50 = vector.load %arg7[%c2_69, %c16_70, %c0_71] : memref<18x33x4xbf16, #tpu.memory_space<vmem>>, vector<16x16x4xbf16>
    %51 = vector.shape_cast %50 : vector<16x16x4xbf16> to vector<256x4xbf16>
    %c2_72 = arith.constant 2 : index
    %c1_73 = arith.constant 1 : index
    %c0_74 = arith.constant 0 : index
    %c0_75 = arith.constant 0 : index
    %52 = vector.load %arg2[%c2_72, %c1_73, %c0_74, %c0_75] : memref<3x3x4x256xbf16, #tpu.memory_space<vmem>>, vector<1x1x4x256xbf16>
    %53 = vector.shape_cast %52 : vector<1x1x4x256xbf16> to vector<4x256xbf16>
    %cst_76 = arith.constant dense<0.000000e+00> : vector<256x256xf32>
    %54 = tpu.matmul %51, %53, %cst_76 {dimension_numbers = #tpu.dot_dimension_numbers<[1], [0], [0], [1], [0, 0, 1, 1], [], []>} : vector<256x4xbf16>, vector<4x256xbf16>, vector<256x256xf32> -> vector<256x256xf32>
    %55 = arith.addf %49, %54 : vector<256x256xf32>
    %c2_77 = arith.constant 2 : index
    %c17_78 = arith.constant 17 : index
    %c0_79 = arith.constant 0 : index
    %56 = vector.load %arg7[%c2_77, %c17_78, %c0_79] : memref<18x33x4xbf16, #tpu.memory_space<vmem>>, vector<16x16x4xbf16>
    %57 = vector.shape_cast %56 : vector<16x16x4xbf16> to vector<256x4xbf16>
    %c2_80 = arith.constant 2 : index
    %c2_81 = arith.constant 2 : index
    %c0_82 = arith.constant 0 : index
    %c0_83 = arith.constant 0 : index
    %58 = vector.load %arg2[%c2_80, %c2_81, %c0_82, %c0_83] : memref<3x3x4x256xbf16, #tpu.memory_space<vmem>>, vector<1x1x4x256xbf16>
    %59 = vector.shape_cast %58 : vector<1x1x4x256xbf16> to vector<4x256xbf16>
    %cst_84 = arith.constant dense<0.000000e+00> : vector<256x256xf32>
    %60 = tpu.matmul %57, %59, %cst_84 {dimension_numbers = #tpu.dot_dimension_numbers<[1], [0], [0], [1], [0, 0, 1, 1], [], []>} : vector<256x4xbf16>, vector<4x256xbf16>, vector<256x256xf32> -> vector<256x256xf32>
    %61 = arith.addf %55, %60 : vector<256x256xf32>
    %c0_85 = arith.constant 0 : index
    %c0_86 = arith.constant 0 : index
    %62 = vector.load %arg3[%c0_85, %c0_86] : memref<1x256xf32, #tpu.memory_space<vmem>>, vector<1x256xf32>
    %63 = vector.broadcast %62 : vector<1x256xf32> to vector<256x256xf32>
    %64 = arith.addf %61, %63 : vector<256x256xf32>
    %65 = vector.extract_strided_slice %64 {offsets = [0, 0], sizes = [256, 128], strides = [1, 1]} : vector<256x256xf32> to vector<256x128xf32>
    %cst_87 = arith.constant 0.000000e+00 : f32
    %66 = vector.broadcast %cst_87 : f32 to vector<256x128xf32>
    %67 = arith.maximumf %65, %66 : vector<256x128xf32>
    %cst_88 = arith.constant 0.000000e+00 : bf16
    %68 = vector.broadcast %cst_88 : bf16 to vector<1x33x128xbf16>
    %c0_89 = arith.constant 0 : index
    %c0_90 = arith.constant 0 : index
    %c0_91 = arith.constant 0 : index
    %69 = vector.load %arg8[%c0_89, %c0_90, %c0_91] : memref<18x33x128xbf16, #tpu.memory_space<vmem>>, vector<1x33x128xbf16>
    tpu.vector_store %arg8[%c0_89, %c0_90, %c0_91], %68 {strides = array<i32>} : memref<18x33x128xbf16, #tpu.memory_space<vmem>>, vector<1x33x128xbf16>,
    %c17_92 = arith.constant 17 : index
    %c0_93 = arith.constant 0 : index
    %c0_94 = arith.constant 0 : index
    %70 = vector.load %arg8[%c17_92, %c0_93, %c0_94] : memref<18x33x128xbf16, #tpu.memory_space<vmem>>, vector<1x33x128xbf16>
    tpu.vector_store %arg8[%c17_92, %c0_93, %c0_94], %68 {strides = array<i32>} : memref<18x33x128xbf16, #tpu.memory_space<vmem>>, vector<1x33x128xbf16>,
    %cst_95 = arith.constant 0.000000e+00 : bf16
    %71 = vector.broadcast %cst_95 : bf16 to vector<18x1x128xbf16>
    %c0_96 = arith.constant 0 : index
    %c15_97 = arith.constant 15 : index
    %c0_98 = arith.constant 0 : index
    %72 = vector.load %arg8[%c0_96, %c15_97, %c0_98] : memref<18x33x128xbf16, #tpu.memory_space<vmem>>, vector<18x1x128xbf16>
    tpu.vector_store %arg8[%c0_96, %c15_97, %c0_98], %71 {strides = array<i32>} : memref<18x33x128xbf16, #tpu.memory_space<vmem>>, vector<18x1x128xbf16>,
    %c0_99 = arith.constant 0 : index
    %c32_100 = arith.constant 32 : index
    %c0_101 = arith.constant 0 : index
    %73 = vector.load %arg8[%c0_99, %c32_100, %c0_101] : memref<18x33x128xbf16, #tpu.memory_space<vmem>>, vector<18x1x128xbf16>
    tpu.vector_store %arg8[%c0_99, %c32_100, %c0_101], %71 {strides = array<i32>} : memref<18x33x128xbf16, #tpu.memory_space<vmem>>, vector<18x1x128xbf16>,
    %74 = arith.truncf %67 : vector<256x128xf32> to vector<256x128xbf16>
    %75 = vector.shape_cast %74 : vector<256x128xbf16> to vector<16x16x128xbf16>
    %c1_102 = arith.constant 1 : index
    %c16_103 = arith.constant 16 : index
    %c0_104 = arith.constant 0 : index
    %76 = vector.load %arg8[%c1_102, %c16_103, %c0_104] : memref<18x33x128xbf16, #tpu.memory_space<vmem>>, vector<16x16x128xbf16>
    tpu.vector_store %arg8[%c1_102, %c16_103, %c0_104], %75 {strides = array<i32>} : memref<18x33x128xbf16, #tpu.memory_space<vmem>>, vector<16x16x128xbf16>,
    %c0_105 = arith.constant 0 : index
    %c15_106 = arith.constant 15 : index
    %c0_107 = arith.constant 0 : index
    %77 = vector.load %arg8[%c0_105, %c15_106, %c0_107] : memref<18x33x128xbf16, #tpu.memory_space<vmem>>, vector<16x16x128xbf16>
    %78 = vector.shape_cast %77 : vector<16x16x128xbf16> to vector<256x128xbf16>
    %c0_108 = arith.constant 0 : index
    %c0_109 = arith.constant 0 : index
    %c0_110 = arith.constant 0 : index
    %c0_111 = arith.constant 0 : index
    %79 = vector.load %arg4[%c0_108, %c0_109, %c0_110, %c0_111] : memref<3x3x128x128xbf16, #tpu.memory_space<vmem>>, vector<1x1x128x128xbf16>
    %80 = vector.shape_cast %79 : vector<1x1x128x128xbf16> to vector<128x128xbf16>
    %cst_112 = arith.constant dense<0.000000e+00> : vector<256x128xf32>
    %81 = tpu.matmul %78, %80, %cst_112 {dimension_numbers = #tpu.dot_dimension_numbers<[1], [0], [0], [1], [0, 0, 1, 1], [], []>} : vector<256x128xbf16>, vector<128x128xbf16>, vector<256x128xf32> -> vector<256x128xf32>
    %c0_113 = arith.constant 0 : index
    %c16_114 = arith.constant 16 : index
    %c0_115 = arith.constant 0 : index
    %82 = vector.load %arg8[%c0_113, %c16_114, %c0_115] : memref<18x33x128xbf16, #tpu.memory_space<vmem>>, vector<16x16x128xbf16>
    %83 = vector.shape_cast %82 : vector<16x16x128xbf16> to vector<256x128xbf16>
    %c0_116 = arith.constant 0 : index
    %c1_117 = arith.constant 1 : index
    %c0_118 = arith.constant 0 : index
    %c0_119 = arith.constant 0 : index
    %84 = vector.load %arg4[%c0_116, %c1_117, %c0_118, %c0_119] : memref<3x3x128x128xbf16, #tpu.memory_space<vmem>>, vector<1x1x128x128xbf16>
    %85 = vector.shape_cast %84 : vector<1x1x128x128xbf16> to vector<128x128xbf16>
    %cst_120 = arith.constant dense<0.000000e+00> : vector<256x128xf32>
    %86 = tpu.matmul %83, %85, %cst_120 {dimension_numbers = #tpu.dot_dimension_numbers<[1], [0], [0], [1], [0, 0, 1, 1], [], []>} : vector<256x128xbf16>, vector<128x128xbf16>, vector<256x128xf32> -> vector<256x128xf32>
    %87 = arith.addf %81, %86 : vector<256x128xf32>
    %c0_121 = arith.constant 0 : index
    %c17_122 = arith.constant 17 : index
    %c0_123 = arith.constant 0 : index
    %88 = vector.load %arg8[%c0_121, %c17_122, %c0_123] : memref<18x33x128xbf16, #tpu.memory_space<vmem>>, vector<16x16x128xbf16>
    %89 = vector.shape_cast %88 : vector<16x16x128xbf16> to vector<256x128xbf16>
    %c0_124 = arith.constant 0 : index
    %c2_125 = arith.constant 2 : index
    %c0_126 = arith.constant 0 : index
    %c0_127 = arith.constant 0 : index
    %90 = vector.load %arg4[%c0_124, %c2_125, %c0_126, %c0_127] : memref<3x3x128x128xbf16, #tpu.memory_space<vmem>>, vector<1x1x128x128xbf16>
    %91 = vector.shape_cast %90 : vector<1x1x128x128xbf16> to vector<128x128xbf16>
    %cst_128 = arith.constant dense<0.000000e+00> : vector<256x128xf32>
    %92 = tpu.matmul %89, %91, %cst_128 {dimension_numbers = #tpu.dot_dimension_numbers<[1], [0], [0], [1], [0, 0, 1, 1], [], []>} : vector<256x128xbf16>, vector<128x128xbf16>, vector<256x128xf32> -> vector<256x128xf32>
    %93 = arith.addf %87, %92 : vector<256x128xf32>
    %c1_129 = arith.constant 1 : index
    %c15_130 = arith.constant 15 : index
    %c0_131 = arith.constant 0 : index
    %94 = vector.load %arg8[%c1_129, %c15_130, %c0_131] : memref<18x33x128xbf16, #tpu.memory_space<vmem>>, vector<16x16x128xbf16>
    %95 = vector.shape_cast %94 : vector<16x16x128xbf16> to vector<256x128xbf16>
    %c1_132 = arith.constant 1 : index
    %c0_133 = arith.constant 0 : index
    %c0_134 = arith.constant 0 : index
    %c0_135 = arith.constant 0 : index
    %96 = vector.load %arg4[%c1_132, %c0_133, %c0_134, %c0_135] : memref<3x3x128x128xbf16, #tpu.memory_space<vmem>>, vector<1x1x128x128xbf16>
    %97 = vector.shape_cast %96 : vector<1x1x128x128xbf16> to vector<128x128xbf16>
    %cst_136 = arith.constant dense<0.000000e+00> : vector<256x128xf32>
    %98 = tpu.matmul %95, %97, %cst_136 {dimension_numbers = #tpu.dot_dimension_numbers<[1], [0], [0], [1], [0, 0, 1, 1], [], []>} : vector<256x128xbf16>, vector<128x128xbf16>, vector<256x128xf32> -> vector<256x128xf32>
    %99 = arith.addf %93, %98 : vector<256x128xf32>
    %c1_137 = arith.constant 1 : index
    %c16_138 = arith.constant 16 : index
    %c0_139 = arith.constant 0 : index
    %100 = vector.load %arg8[%c1_137, %c16_138, %c0_139] : memref<18x33x128xbf16, #tpu.memory_space<vmem>>, vector<16x16x128xbf16>
    %101 = vector.shape_cast %100 : vector<16x16x128xbf16> to vector<256x128xbf16>
    %c1_140 = arith.constant 1 : index
    %c1_141 = arith.constant 1 : index
    %c0_142 = arith.constant 0 : index
    %c0_143 = arith.constant 0 : index
    %102 = vector.load %arg4[%c1_140, %c1_141, %c0_142, %c0_143] : memref<3x3x128x128xbf16, #tpu.memory_space<vmem>>, vector<1x1x128x128xbf16>
    %103 = vector.shape_cast %102 : vector<1x1x128x128xbf16> to vector<128x128xbf16>
    %cst_144 = arith.constant dense<0.000000e+00> : vector<256x128xf32>
    %104 = tpu.matmul %101, %103, %cst_144 {dimension_numbers = #tpu.dot_dimension_numbers<[1], [0], [0], [1], [0, 0, 1, 1], [], []>} : vector<256x128xbf16>, vector<128x128xbf16>, vector<256x128xf32> -> vector<256x128xf32>
    %105 = arith.addf %99, %104 : vector<256x128xf32>
    %c1_145 = arith.constant 1 : index
    %c17_146 = arith.constant 17 : index
    %c0_147 = arith.constant 0 : index
    %106 = vector.load %arg8[%c1_145, %c17_146, %c0_147] : memref<18x33x128xbf16, #tpu.memory_space<vmem>>, vector<16x16x128xbf16>
    %107 = vector.shape_cast %106 : vector<16x16x128xbf16> to vector<256x128xbf16>
    %c1_148 = arith.constant 1 : index
    %c2_149 = arith.constant 2 : index
    %c0_150 = arith.constant 0 : index
    %c0_151 = arith.constant 0 : index
    %108 = vector.load %arg4[%c1_148, %c2_149, %c0_150, %c0_151] : memref<3x3x128x128xbf16, #tpu.memory_space<vmem>>, vector<1x1x128x128xbf16>
    %109 = vector.shape_cast %108 : vector<1x1x128x128xbf16> to vector<128x128xbf16>
    %cst_152 = arith.constant dense<0.000000e+00> : vector<256x128xf32>
    %110 = tpu.matmul %107, %109, %cst_152 {dimension_numbers = #tpu.dot_dimension_numbers<[1], [0], [0], [1], [0, 0, 1, 1], [], []>} : vector<256x128xbf16>, vector<128x128xbf16>, vector<256x128xf32> -> vector<256x128xf32>
    %111 = arith.addf %105, %110 : vector<256x128xf32>
    %c2_153 = arith.constant 2 : index
    %c15_154 = arith.constant 15 : index
    %c0_155 = arith.constant 0 : index
    %112 = vector.load %arg8[%c2_153, %c15_154, %c0_155] : memref<18x33x128xbf16, #tpu.memory_space<vmem>>, vector<16x16x128xbf16>
    %113 = vector.shape_cast %112 : vector<16x16x128xbf16> to vector<256x128xbf16>
    %c2_156 = arith.constant 2 : index
    %c0_157 = arith.constant 0 : index
    %c0_158 = arith.constant 0 : index
    %c0_159 = arith.constant 0 : index
    %114 = vector.load %arg4[%c2_156, %c0_157, %c0_158, %c0_159] : memref<3x3x128x128xbf16, #tpu.memory_space<vmem>>, vector<1x1x128x128xbf16>
    %115 = vector.shape_cast %114 : vector<1x1x128x128xbf16> to vector<128x128xbf16>
    %cst_160 = arith.constant dense<0.000000e+00> : vector<256x128xf32>
    %116 = tpu.matmul %113, %115, %cst_160 {dimension_numbers = #tpu.dot_dimension_numbers<[1], [0], [0], [1], [0, 0, 1, 1], [], []>} : vector<256x128xbf16>, vector<128x128xbf16>, vector<256x128xf32> -> vector<256x128xf32>
    %117 = arith.addf %111, %116 : vector<256x128xf32>
    %c2_161 = arith.constant 2 : index
    %c16_162 = arith.constant 16 : index
    %c0_163 = arith.constant 0 : index
    %118 = vector.load %arg8[%c2_161, %c16_162, %c0_163] : memref<18x33x128xbf16, #tpu.memory_space<vmem>>, vector<16x16x128xbf16>
    %119 = vector.shape_cast %118 : vector<16x16x128xbf16> to vector<256x128xbf16>
    %c2_164 = arith.constant 2 : index
    %c1_165 = arith.constant 1 : index
    %c0_166 = arith.constant 0 : index
    %c0_167 = arith.constant 0 : index
    %120 = vector.load %arg4[%c2_164, %c1_165, %c0_166, %c0_167] : memref<3x3x128x128xbf16, #tpu.memory_space<vmem>>, vector<1x1x128x128xbf16>
    %121 = vector.shape_cast %120 : vector<1x1x128x128xbf16> to vector<128x128xbf16>
    %cst_168 = arith.constant dense<0.000000e+00> : vector<256x128xf32>
    %122 = tpu.matmul %119, %121, %cst_168 {dimension_numbers = #tpu.dot_dimension_numbers<[1], [0], [0], [1], [0, 0, 1, 1], [], []>} : vector<256x128xbf16>, vector<128x128xbf16>, vector<256x128xf32> -> vector<256x128xf32>
    %123 = arith.addf %117, %122 : vector<256x128xf32>
    %c2_169 = arith.constant 2 : index
    %c17_170 = arith.constant 17 : index
    %c0_171 = arith.constant 0 : index
    %124 = vector.load %arg8[%c2_169, %c17_170, %c0_171] : memref<18x33x128xbf16, #tpu.memory_space<vmem>>, vector<16x16x128xbf16>
    %125 = vector.shape_cast %124 : vector<16x16x128xbf16> to vector<256x128xbf16>
    %c2_172 = arith.constant 2 : index
    %c2_173 = arith.constant 2 : index
    %c0_174 = arith.constant 0 : index
    %c0_175 = arith.constant 0 : index
    %126 = vector.load %arg4[%c2_172, %c2_173, %c0_174, %c0_175] : memref<3x3x128x128xbf16, #tpu.memory_space<vmem>>, vector<1x1x128x128xbf16>
    %127 = vector.shape_cast %126 : vector<1x1x128x128xbf16> to vector<128x128xbf16>
    %cst_176 = arith.constant dense<0.000000e+00> : vector<256x128xf32>
    %128 = tpu.matmul %125, %127, %cst_176 {dimension_numbers = #tpu.dot_dimension_numbers<[1], [0], [0], [1], [0, 0, 1, 1], [], []>} : vector<256x128xbf16>, vector<128x128xbf16>, vector<256x128xf32> -> vector<256x128xf32>
    %129 = arith.addf %123, %128 : vector<256x128xf32>
    %c0_177 = arith.constant 0 : index
    %c0_178 = arith.constant 0 : index
    %130 = vector.load %arg5[%c0_177, %c0_178] : memref<1x128xf32, #tpu.memory_space<vmem>>, vector<1x128xf32>
    %131 = vector.broadcast %130 : vector<1x128xf32> to vector<256x128xf32>
    %132 = arith.addf %129, %131 : vector<256x128xf32>
    %133 = vector.extract_strided_slice %64 {offsets = [0, 128], sizes = [256, 128], strides = [1, 1]} : vector<256x256xf32> to vector<256x128xf32>
    %134 = arith.addf %132, %133 : vector<256x128xf32>
    %cst_179 = arith.constant 0.707106769 : f32
    %135 = vector.broadcast %cst_179 : f32 to vector<256x128xf32>
    %136 = arith.mulf %134, %135 : vector<256x128xf32>
    %137 = vector.extract_strided_slice %136 {offsets = [0, 0], sizes = [256, 8], strides = [1, 1]} : vector<256x128xf32> to vector<256x8xf32>
    %138 = vector.shape_cast %137 : vector<256x8xf32> to vector<1x256x8xf32>
    %c0_180 = arith.constant 0 : index
    %c0_181 = arith.constant 0 : index
    %c0_182 = arith.constant 0 : index
    %139 = vector.load %arg6[%c0_180, %c0_181, %c0_182] : memref<1x256x8xf32, #tpu.memory_space<vmem>>, vector<1x256x8xf32>
    tpu.vector_store %arg6[%c0_180, %c0_181, %c0_182], %138 {strides = array<i32>} : memref<1x256x8xf32, #tpu.memory_space<vmem>>, vector<1x256x8xf32>,
    return
  }
  func.func @transform_0(%arg0: i32) -> (i32, i32, i32, i32) {
    %c0_i32 = arith.constant 0 : i32
    %c0_i32_0 = arith.constant 0 : i32
    %c0_i32_1 = arith.constant 0 : i32
    %c0_i32_2 = arith.constant 0 : i32
    return %arg0, %c0_i32, %c0_i32_0, %c0_i32_1 : i32, i32, i32, i32
  }
  func.func @transform_1(%arg0: i32) -> (i32, i32, i32, i32) {
    %c0_i32 = arith.constant 0 : i32
    %c0_i32_0 = arith.constant 0 : i32
    %c0_i32_1 = arith.constant 0 : i32
    %c0_i32_2 = arith.constant 0 : i32
    %c0_i32_3 = arith.constant 0 : i32
    return %c0_i32, %c0_i32_0, %c0_i32_1, %c0_i32_2 : i32, i32, i32, i32
  }
  func.func @transform_2(%arg0: i32) -> (i32, i32) {
    %c0_i32 = arith.constant 0 : i32
    %c0_i32_0 = arith.constant 0 : i32
    %c0_i32_1 = arith.constant 0 : i32
    return %c0_i32, %c0_i32_0 : i32, i32
  }
  func.func @transform_3(%arg0: i32) -> (i32, i32, i32, i32) {
    %c0_i32 = arith.constant 0 : i32
    %c0_i32_0 = arith.constant 0 : i32
    %c0_i32_1 = arith.constant 0 : i32
    %c0_i32_2 = arith.constant 0 : i32
    %c0_i32_3 = arith.constant 0 : i32
    return %c0_i32, %c0_i32_0, %c0_i32_1, %c0_i32_2 : i32, i32, i32, i32
  }
  func.func @transform_4(%arg0: i32) -> (i32, i32) {
    %c0_i32 = arith.constant 0 : i32
    %c0_i32_0 = arith.constant 0 : i32
    %c0_i32_1 = arith.constant 0 : i32
    return %c0_i32, %c0_i32_0 : i32, i32
  }
  func.func @transform_5(%arg0: i32) -> (i32, i32, i32) {
    %c0_i32 = arith.constant 0 : i32
    %c0_i32_0 = arith.constant 0 : i32
    %c0_i32_1 = arith.constant 0 : i32
    return %arg0, %c0_i32, %c0_i32_0 : i32, i32, i32
  }
}

</mosaic_0001>

<llo_original>
// kernel: tpu_custom_call.1
$region0: #{tpu_custom_call.1}
  #allocation0 [shape = 'u32[]', space=smem, size = 0x4, offset = 0x4, fixed_abs, tag = 'smem constant byte address 0x4 - core index']
  #allocation1 [shape = 'u32[72,128]{1,0:T(1,128)}', space=vmem, size = 0x9000, scoped, tag = 'internal scratch']
  #allocation2 [shape = 'bf16[18,33,4]{2,1,0:T(8,128)(2,1)}', space=vmem, size = 0x2d000, scoped, tag = 'scratch operand']
  #allocation3 [shape = 'bf16[18,33,128]{2,1,0:T(8,128)(2,1)}', space=vmem, size = 0x2d000, scoped, tag = 'scratch operand']
  %s0 = inlined_call_operand.vmem [shape: bf16[2,16,16,4], index: 0, kind: input, shape index: {}]
  %s1 = inlined_call_operand.vmem [shape: bf16[3,3,4,256], index: 1, kind: input, shape index: {}]
  %s2 = inlined_call_operand.vmem [shape: f32[1,256], index: 2, kind: input, shape index: {}]
  %s3 = inlined_call_operand.hbm [shape: bf16[3,3,128,128], index: 3, kind: input, shape index: {}]
  %s4 = inlined_call_operand.vmem [shape: f32[1,128], index: 4, kind: input, shape index: {}]
  %s5 = inlined_call_operand.vmem [shape: f32[2,256,8], index: 5, kind: output, shape index: {}]
  %s6 = sld [smem:[#allocation0]]
  $region57: #{tpu_custom_call.1} parent=0
    _
  %s8 = ssub.s32 1, %s6
  %s9 = scalar_select 0, %s8, %s6
  $region1: #{tpu_custom_call.1} parent=0
    #allocation4 [shape = 'u8[294912]{0}', space=vmem, size = 0x48000, scoped, tag = 'input window, operand 3, single buffered']
    #allocation5 [shape = 's32[2]{0}', space=sflag, size = 0x8, scoped, tag = 'scoped memory for tpu_custom_call.1']
    %10 = vsyncpa [#allocation5], 0
    loop: start=0, step=1, limit=4
    $region2: #{tpu_custom_call.1} parent=1 // loop_pre_header
      _
    $region3: #{tpu_custom_call.1} parent=1 // loop_header
      %s12 = sphi 0, %s16
      %p13 = scmp.ge.s32.totalorder %s12, 4
      %s22 = sphi 0, %s24
      %s25 = sphi 0, %s22
      %s26 = sphi 0, %s25
      %s42 = sphi 0, %s26
      %s46 = sphi 0, %s46
      %s48 = sphi 0, %s46
      %s49 = sphi 0, %s48
      %s63 = sphi 0, %s49
      %s67 = sphi 0, %s67
      %s69 = sphi 0, %s67
      %s70 = sphi 0, %s69
      %s84 = sphi 0, %s70
      %s88 = sphi 0, %s88
      %s90 = sphi 0, %s88
      %s91 = sphi 0, %s90
      %s105 = sphi 0, %s91
      %s109 = sphi 0, %s109
      %s111 = sphi 0, %s109
      %s112 = sphi 0, %s111
      %s126 = sphi 0, %s112
      %s132 = sphi 0, %s134
      %s135 = sphi 0, %s132
      %s136 = sphi 0, %s135
      %s152 = sphi 0, %s136
    $region4: #{tpu_custom_call.1} parent=1 // loop_header_branch
      %15 = sbr.rel (%p13) target = $region8
    $region5: #{tpu_custom_call.1} parent=1 // loop_body
      %s17 = ssub.s32 %s12, 1
      %s18 = ssub.s32 %s12, 2
      %s19 = sadd.s32 %s12, 1
      %s20 = ssub.s32 %s12, %s19
      %p21 = scmp.eq.s32.totalorder %s20, 0
      %s23 = sadd.s32 %s22, 1
      %s24 = scalar_select %p21, %s22, %s23
      %p27 = pneg %p21
      %p28 = scmp.eq.s32.totalorder %s12, 1
      %p29 = por %p27, %p28
      %p30 = scmp.ne.s32.totalorder %s22, %s25
      %p31 = scmp.eq.s32.totalorder %s12, 0
      %p32 = por %p30, %p31
      %p33 = scmp.ne.s32.totalorder %s22, %s25
      %p34 = scmp.eq.s32.totalorder %s17, 1
      %p35 = por %p33, %p34
      %p36 = scmp.ne.s32.totalorder %s25, %s26
      %p37 = scmp.eq.s32.totalorder %s17, 0
      %p38 = por %p36, %p37
      %p39 = scmp.ne.s32.totalorder %s25, %s26
      %p40 = scmp.eq.s32.totalorder %s18, 1
      %p41 = por %p39, %p40
      %p43 = scmp.ne.s32.totalorder %s26, %s42
      %p44 = scmp.eq.s32.totalorder %s18, 0
      %p45 = por %p43, %p44
      %s47 = sadd.s32 %s46, 1
      %p50 = scmp.eq.s32.totalorder %s12, 1
      %p51 = scmp.ne.s32.totalorder %s46, %s48
      %p52 = scmp.eq.s32.totalorder %s12, 0
      %p53 = por %p51, %p52
      %p54 = scmp.ne.s32.totalorder %s46, %s48
      %p55 = scmp.eq.s32.totalorder %s17, 1
      %p56 = por %p54, %p55
      %p57 = scmp.ne.s32.totalorder %s48, %s49
      %p58 = scmp.eq.s32.totalorder %s17, 0
      %p59 = por %p57, %p58
      %p60 = scmp.ne.s32.totalorder %s48, %s49
      %p61 = scmp.eq.s32.totalorder %s18, 1
      %p62 = por %p60, %p61
      %p64 = scmp.ne.s32.totalorder %s49, %s63
      %p65 = scmp.eq.s32.totalorder %s18, 0
      %p66 = por %p64, %p65
      %s68 = sadd.s32 %s67, 1
      %p71 = scmp.eq.s32.totalorder %s12, 1
      %p72 = scmp.ne.s32.totalorder %s67, %s69
      %p73 = scmp.eq.s32.totalorder %s12, 0
      %p74 = por %p72, %p73
      %p75 = scmp.ne.s32.totalorder %s67, %s69
      %p76 = scmp.eq.s32.totalorder %s17, 1
      %p77 = por %p75, %p76
      %p78 = scmp.ne.s32.totalorder %s69, %s70
      %p79 = scmp.eq.s32.totalorder %s17, 0
      %p80 = por %p78, %p79
      %p81 = scmp.ne.s32.totalorder %s69, %s70
      %p82 = scmp.eq.s32.totalorder %s18, 1
      %p83 = por %p81, %p82
      %p85 = scmp.ne.s32.totalorder %s70, %s84
      %p86 = scmp.eq.s32.totalorder %s18, 0
      %p87 = por %p85, %p86
      %s89 = sadd.s32 %s88, 1
      %p92 = scmp.eq.s32.totalorder %s12, 1
      %p93 = scmp.ne.s32.totalorder %s88, %s90
      %p94 = scmp.eq.s32.totalorder %s12, 0
      %p95 = por %p93, %p94
      %p96 = scmp.ne.s32.totalorder %s88, %s90
      %p97 = scmp.eq.s32.totalorder %s17, 1
      %p98 = por %p96, %p97
      %p99 = scmp.ne.s32.totalorder %s90, %s91
      %p100 = scmp.eq.s32.totalorder %s17, 0
      %p101 = por %p99, %p100
      %p102 = scmp.ne.s32.totalorder %s90, %s91
      %p103 = scmp.eq.s32.totalorder %s18, 1
      %p104 = por %p102, %p103
      %p106 = scmp.ne.s32.totalorder %s91, %s105
      %p107 = scmp.eq.s32.totalorder %s18, 0
      %p108 = por %p106, %p107
      %s110 = sadd.s32 %s109, 1
      %p113 = scmp.eq.s32.totalorder %s12, 1
      %p114 = scmp.ne.s32.totalorder %s109, %s111
      %p115 = scmp.eq.s32.totalorder %s12, 0
      %p116 = por %p114, %p115
      %p117 = scmp.ne.s32.totalorder %s109, %s111
      %p118 = scmp.eq.s32.totalorder %s17, 1
      %p119 = por %p117, %p118
      %p120 = scmp.ne.s32.totalorder %s111, %s112
      %p121 = scmp.eq.s32.totalorder %s17, 0
      %p122 = por %p120, %p121
      %p123 = scmp.ne.s32.totalorder %s111, %s112
      %p124 = scmp.eq.s32.totalorder %s18, 1
      %p125 = por %p123, %p124
      %p127 = scmp.ne.s32.totalorder %s112, %s126
      %p128 = scmp.eq.s32.totalorder %s18, 0
      %p129 = por %p127, %p128
      %s130 = ssub.s32 %s12, %s19
      %p131 = scmp.eq.s32.totalorder %s130, 0
      %s133 = sadd.s32 %s132, 1
      %s134 = scalar_select %p131, %s132, %s133
      %p137 = pneg %p131
      %p138 = scmp.eq.s32.totalorder %s12, 1
      %p139 = por %p137, %p138
      %p140 = scmp.ne.s32.totalorder %s132, %s135
      %p141 = scmp.eq.s32.totalorder %s12, 0
      %p142 = por %p140, %p141
      %p143 = scmp.ne.s32.totalorder %s132, %s135
      %p144 = scmp.eq.s32.totalorder %s17, 1
      %p145 = por %p143, %p144
      %p146 = scmp.ne.s32.totalorder %s135, %s136
      %p147 = scmp.eq.s32.totalorder %s17, 0
      %p148 = por %p146, %p147
      %p149 = scmp.ne.s32.totalorder %s135, %s136
      %p150 = scmp.eq.s32.totalorder %s18, 1
      %p151 = por %p149, %p150
      %p153 = scmp.ne.s32.totalorder %s136, %s152
      %p154 = scmp.eq.s32.totalorder %s18, 0
      %p155 = por %p153, %p154
      %p156 = scmp.le.s32.totalorder 1, %s12
      %p157 = scmp.lt.s32.totalorder %s12, 3
      %p158 = pnand %p156, %p157
      %p159 = pneg %p158
      // Predicated region
      $region9: #{tpu_custom_call.1} parent=5 // pred_check
        _
      $region10: #{tpu_custom_call.1} parent=5 // pred_check_branch
        %161 = sbr.rel (%p158) target = $region12
      $region11: #{tpu_custom_call.1} parent=5 // pred_region
        %s162 = ssub.s32 %s12, 1
        // Predicated region
        $region13: #{tpu_custom_call.1} parent=11 // pred_check
          %p163 = pneg %p59
        $region14: #{tpu_custom_call.1} parent=11 // pred_check_branch
          %165 = sbr.rel (%p163) target = $region16
        $region15: #{tpu_custom_call.1} parent=11 // pred_region
          _
        $region16: #{tpu_custom_call.1} parent=11 // pred_fallthru
          _
        // Predicated region
        $region17: #{tpu_custom_call.1} parent=11 // pred_check
          %p166 = pneg %p80
        $region18: #{tpu_custom_call.1} parent=11 // pred_check_branch
          %168 = sbr.rel (%p166) target = $region20
        $region19: #{tpu_custom_call.1} parent=11 // pred_region
          _
        $region20: #{tpu_custom_call.1} parent=11 // pred_fallthru
          _
        // Predicated region
        $region21: #{tpu_custom_call.1} parent=11 // pred_check
          %p169 = pneg %p101
        $region22: #{tpu_custom_call.1} parent=11 // pred_check_branch
          %171 = sbr.rel (%p169) target = $region24
        $region23: #{tpu_custom_call.1} parent=11 // pred_region
          %173 = vsyncadd [#allocation5], 0
          %s174 = sshll.u32 %s3, 4
          %s175 = int_to_ptr.hbm [resolvable:$true] %s174
          %s176 = sshll.u32 [#allocation4], 4
          %s177 = int_to_ptr.vmem [resolvable:$true] %s176
          %182 = dma.hbm_to_vmem [thread:$0]  %s175, 9216, %s177, [#allocation5], 64, 64, 4
        $region24: #{tpu_custom_call.1} parent=11 // pred_fallthru
          _
        // Predicated region
        $region25: #{tpu_custom_call.1} parent=11 // pred_check
          %p183 = pneg %p122
        $region26: #{tpu_custom_call.1} parent=11 // pred_check_branch
          %185 = sbr.rel (%p183) target = $region28
        $region27: #{tpu_custom_call.1} parent=11 // pred_region
          _
        $region28: #{tpu_custom_call.1} parent=11 // pred_fallthru
          _
      $region12: #{tpu_custom_call.1} parent=5 // pred_fallthru
        _
      %p186 = scmp.lt.s32.totalorder %s12, 2
      // Predicated region
      $region29: #{tpu_custom_call.1} parent=5 // pred_check
        %p187 = pneg %p186
      $region30: #{tpu_custom_call.1} parent=5 // pred_check_branch
        %189 = sbr.rel (%p187) target = $region32
      $region31: #{tpu_custom_call.1} parent=5 // pred_region
        // Predicated region
        $region33: #{tpu_custom_call.1} parent=31 // pred_check
          %p190 = pneg %p32
        $region34: #{tpu_custom_call.1} parent=31 // pred_check_branch
          %192 = sbr.rel (%p190) target = $region36
        $region35: #{tpu_custom_call.1} parent=31 // pred_region
          %p193 = scmp.lt.s32.totalorder %s12, 1
          %s194 = scalar_select %p193, %s12, 1
          %s195 = smul.addr %s194, 32
          %s196 = smul.addr %s195, 4
          %s197 = scalar_lea.vmem %s0, %s196
        $region36: #{tpu_custom_call.1} parent=31 // pred_fallthru
          _
      $region32: #{tpu_custom_call.1} parent=5 // pred_fallthru
        _
      %p198 = scmp.le.s32.totalorder 1, %s12
      %p199 = scmp.lt.s32.totalorder %s12, 3
      %p200 = pnand %p198, %p199
      %p201 = pneg %p200
      // Predicated region
      $region37: #{tpu_custom_call.1} parent=5 // pred_check
        _
      $region38: #{tpu_custom_call.1} parent=5 // pred_check_branch
        %203 = sbr.rel (%p200) target = $region40
      $region39: #{tpu_custom_call.1} parent=5 // pred_region
        %s204 = ssub.s32 %s12, 1
        // Predicated region
        $region41: #{tpu_custom_call.1} parent=39 // pred_check
          %p205 = pneg %p101
        $region42: #{tpu_custom_call.1} parent=39 // pred_check_branch
          %207 = sbr.rel (%p205) target = $region44
        $region43: #{tpu_custom_call.1} parent=39 // pred_region
          %209 = dma.done [#allocation5], 9216
        $region44: #{tpu_custom_call.1} parent=39 // pred_fallthru
          _
        %p210 = scmp.lt.s32.totalorder %s17, 1
        %s211 = scalar_select %p210, %s17, 1
        %s212 = smul.addr %s211, 32
        %s213 = smul.addr %s212, 4
        %s214 = scalar_lea.vmem %s0, %s213
        %p215 = pneg %p38
        %p216 = pneg %p35
        %p217 = pneg %p59
        %p218 = pneg %p56
        %p219 = pneg %p80
        %p220 = pneg %p77
        %p221 = pneg %p101
        %p222 = pneg %p98
        %p223 = pneg %p122
        %p224 = pneg %p119
        %p225 = pneg %p148
        %p226 = pneg %p145
        %p227 = scmp.lt.s32.totalorder %s17, 1
        %s228 = scalar_select %p227, %s17, 1
        %s229 = smul.addr %s228, 32
        %s230 = smul.addr %s229, 8
        %s231 = scalar_lea.vmem %s5, %s230
        %p232 = scmp.lt.s32.totalorder %s17, 1
        %s233 = scalar_select %p232, %s17, 1
        %s234 = smul.addr %s233, 32
        %s235 = smul.addr %s234, 4
        %s236 = scalar_lea.vmem %s0, %s235
        %p237 = scmp.lt.s32.totalorder %s17, 1
        %s238 = scalar_select %p237, %s17, 1
        %s239 = smul.addr %s238, 32
        %s240 = smul.addr %s239, 8
        %s241 = scalar_lea.vmem %s5, %s240
        %vm243 = vcmask 27648
        %244 = vst.msk [vmem:[#allocation2] sm:$0xf] %vm243, 0
        %245 = vst.msk [vmem:[#allocation2 + $0x4] sm:$0xf] %vm243, 0
        %246 = vst.msk [vmem:[#allocation2 + $0x8] sm:$0xf] %vm243, 0
        %247 = vst.msk [vmem:[#allocation2 + $0xc] sm:$0xf] %vm243, 0
        %vm248 = vcmask 24576
        %vm249 = vsmask.f32 256
        %vm250 = vmand %vm248, %vm249
        %v251 = vld [vmem:[#allocation2 + $0x10] sm:$0x1]
        %v252 = vsel %vm250, 0, %v251
        %253 = vst [vmem:[#allocation2 + $0x10] sm:$0x1] %v252
        %s254 = scalar_lea.vmem [#allocation2], 340
        %255 = vst.msk [vmem:[%s254] sm:$0xf] %vm243, 0
        %256 = vst.msk [vmem:[%s254 + $0x4] sm:$0xf] %vm243, 0
        %257 = vst.msk [vmem:[%s254 + $0x8] sm:$0xf] %vm243, 0
        %258 = vst.msk [vmem:[%s254 + $0xc] sm:$0xf] %vm243, 0
        %v259 = vld [vmem:[%s254 + $0x10] sm:$0x1]
        %v260 = vsel %vm250, 0, %v259
        %261 = vst [vmem:[%s254 + $0x10] sm:$0x1] %v260
        %vm262 = vcmask 27651
        %vm263 = vsmask.f32 7950
        %vm264 = vmand %vm262, %vm263
        %v265 = vld [vmem:[#allocation2 + $0x4] sm:$0x8]
        %v266 = vsel %vm264, 0, %v265
        %267 = vst [vmem:[#allocation2 + $0x4] sm:$0x8] %v266
        %v268 = vld [vmem:[#allocation2 + $0x18] sm:$0x8]
        %v269 = vsel %vm264, 0, %v268
        %270 = vst [vmem:[#allocation2 + $0x18] sm:$0x8] %v269
        %v271 = vld [vmem:[#allocation2 + $0x2c] sm:$0x8]
        %v272 = vsel %vm264, 0, %v271
        %273 = vst [vmem:[#allocation2 + $0x2c] sm:$0x8] %v272
        %v274 = vld [vmem:[#allocation2 + $0x40] sm:$0x8]
        %v275 = vsel %vm264, 0, %v274
        %276 = vst [vmem:[#allocation2 + $0x40] sm:$0x8] %v275
        %v277 = vld [vmem:[#allocation2 + $0x54] sm:$0x8]
        %v278 = vsel %vm264, 0, %v277
        %279 = vst [vmem:[#allocation2 + $0x54] sm:$0x8] %v278
        %v280 = vld [vmem:[#allocation2 + $0x68] sm:$0x8]
        %v281 = vsel %vm264, 0, %v280
        %282 = vst [vmem:[#allocation2 + $0x68] sm:$0x8] %v281
        %v283 = vld [vmem:[#allocation2 + $0x7c] sm:$0x8]
        %v284 = vsel %vm264, 0, %v283
        %285 = vst [vmem:[#allocation2 + $0x7c] sm:$0x8] %v284
        %v286 = vld [vmem:[#allocation2 + $0x90] sm:$0x8]
        %v287 = vsel %vm264, 0, %v286
        %288 = vst [vmem:[#allocation2 + $0x90] sm:$0x8] %v287
        %v289 = vld [vmem:[#allocation2 + $0xa4] sm:$0x8]
        %v290 = vsel %vm264, 0, %v289
        %291 = vst [vmem:[#allocation2 + $0xa4] sm:$0x8] %v290
        %v292 = vld [vmem:[#allocation2 + $0xb8] sm:$0x8]
        %v293 = vsel %vm264, 0, %v292
        %294 = vst [vmem:[#allocation2 + $0xb8] sm:$0x8] %v293
        %v295 = vld [vmem:[#allocation2 + $0xcc] sm:$0x8]
        %v296 = vsel %vm264, 0, %v295
        %297 = vst [vmem:[#allocation2 + $0xcc] sm:$0x8] %v296
        %v298 = vld [vmem:[#allocation2 + $0xe0] sm:$0x8]
        %v299 = vsel %vm264, 0, %v298
        %300 = vst [vmem:[#allocation2 + $0xe0] sm:$0x8] %v299
        %v301 = vld [vmem:[#allocation2 + $0xf4] sm:$0x8]
        %v302 = vsel %vm264, 0, %v301
        %303 = vst [vmem:[#allocation2 + $0xf4] sm:$0x8] %v302
        %v304 = vld [vmem:[#allocation2 + $0x108] sm:$0x8]
        %v305 = vsel %vm264, 0, %v304
        %306 = vst [vmem:[#allocation2 + $0x108] sm:$0x8] %v305
        %v307 = vld [vmem:[#allocation2 + $0x11c] sm:$0x8]
        %v308 = vsel %vm264, 0, %v307
        %309 = vst [vmem:[#allocation2 + $0x11c] sm:$0x8] %v308
        %v310 = vld [vmem:[#allocation2 + $0x130] sm:$0x8]
        %v311 = vsel %vm264, 0, %v310
        %312 = vst [vmem:[#allocation2 + $0x130] sm:$0x8] %v311
        %v313 = vld [vmem:[#allocation2 + $0x144] sm:$0x8]
        %v314 = vsel %vm264, 0, %v313
        %315 = vst [vmem:[#allocation2 + $0x144] sm:$0x8] %v314
        %v316 = vld [vmem:[#allocation2 + $0x158] sm:$0x8]
        %v317 = vsel %vm264, 0, %v316
        %318 = vst [vmem:[#allocation2 + $0x158] sm:$0x8] %v317
        %v319 = vld [vmem:[#allocation2 + $0x10] sm:$0x1]
        %v320 = vsel %vm250, 0, %v319
        %321 = vst [vmem:[#allocation2 + $0x10] sm:$0x1] %v320
        %v322 = vld [vmem:[#allocation2 + $0x24] sm:$0x1]
        %v323 = vsel %vm250, 0, %v322
        %324 = vst [vmem:[#allocation2 + $0x24] sm:$0x1] %v323
        %v325 = vld [vmem:[#allocation2 + $0x38] sm:$0x1]
        %v326 = vsel %vm250, 0, %v325
        %327 = vst [vmem:[#allocation2 + $0x38] sm:$0x1] %v326
        %v328 = vld [vmem:[#allocation2 + $0x4c] sm:$0x1]
        %v329 = vsel %vm250, 0, %v328
        %330 = vst [vmem:[#allocation2 + $0x4c] sm:$0x1] %v329
        %v331 = vld [vmem:[#allocation2 + $0x60] sm:$0x1]
        %v332 = vsel %vm250, 0, %v331
        %333 = vst [vmem:[#allocation2 + $0x60] sm:$0x1] %v332
        %v334 = vld [vmem:[#allocation2 + $0x74] sm:$0x1]
        %v335 = vsel %vm250, 0, %v334
        %336 = vst [vmem:[#allocation2 + $0x74] sm:$0x1] %v335
        %v337 = vld [vmem:[#allocation2 + $0x88] sm:$0x1]
        %v338 = vsel %vm250, 0, %v337
        %339 = vst [vmem:[#allocation2 + $0x88] sm:$0x1] %v338
        %v340 = vld [vmem:[#allocation2 + $0x9c] sm:$0x1]
        %v341 = vsel %vm250, 0, %v340
        %342 = vst [vmem:[#allocation2 + $0x9c] sm:$0x1] %v341
        %v343 = vld [vmem:[#allocation2 + $0xb0] sm:$0x1]
        %v344 = vsel %vm250, 0, %v343
        %345 = vst [vmem:[#allocation2 + $0xb0] sm:$0x1] %v344
        %v346 = vld [vmem:[#allocation2 + $0xc4] sm:$0x1]
        %v347 = vsel %vm250, 0, %v346
        %348 = vst [vmem:[#allocation2 + $0xc4] sm:$0x1] %v347
        %v349 = vld [vmem:[#allocation2 + $0xd8] sm:$0x1]
        %v350 = vsel %vm250, 0, %v349
        %351 = vst [vmem:[#allocation2 + $0xd8] sm:$0x1] %v350
        %v352 = vld [vmem:[#allocation2 + $0xec] sm:$0x1]
        %v353 = vsel %vm250, 0, %v352
        %354 = vst [vmem:[#allocation2 + $0xec] sm:$0x1] %v353
        %v355 = vld [vmem:[#allocation2 + $0x100] sm:$0x1]
        %v356 = vsel %vm250, 0, %v355
        %357 = vst [vmem:[#allocation2 + $0x100] sm:$0x1] %v356
        %v358 = vld [vmem:[#allocation2 + $0x114] sm:$0x1]
        %v359 = vsel %vm250, 0, %v358
        %360 = vst [vmem:[#allocation2 + $0x114] sm:$0x1] %v359
        %v361 = vld [vmem:[#allocation2 + $0x128] sm:$0x1]
        %v362 = vsel %vm250, 0, %v361
        %363 = vst [vmem:[#allocation2 + $0x128] sm:$0x1] %v362
        %v364 = vld [vmem:[#allocation2 + $0x13c] sm:$0x1]
        %v365 = vsel %vm250, 0, %v364
        %366 = vst [vmem:[#allocation2 + $0x13c] sm:$0x1] %v365
        %v367 = vld [vmem:[#allocation2 + $0x150] sm:$0x1]
        %v368 = vsel %vm250, 0, %v367
        %369 = vst [vmem:[#allocation2 + $0x150] sm:$0x1] %v368
        %v370 = vld [vmem:[#allocation2 + $0x164] sm:$0x1]
        %v371 = vsel %vm250, 0, %v370
        %372 = vst [vmem:[#allocation2 + $0x164] sm:$0x1] %v371
        %v373 = vld [vmem:[%s236] sm:$0xf]
        %v374 = vld [vmem:[%s236 + $0x4] sm:$0xf]
        %v375 = vld [vmem:[%s236 + $0x8] sm:$0xf]
        %v376 = vld [vmem:[%s236 + $0xc] sm:$0xf]
        %v377 = vld [vmem:[%s236 + $0x10] sm:$0xf]
        %v378 = vld [vmem:[%s236 + $0x14] sm:$0xf]
        %v379 = vld [vmem:[%s236 + $0x18] sm:$0xf]
        %v380 = vld [vmem:[%s236 + $0x1c] sm:$0xf]
        %v381 = vld [vmem:[%s236 + $0x20] sm:$0xf]
        %v382 = vld [vmem:[%s236 + $0x24] sm:$0xf]
        %v383 = vld [vmem:[%s236 + $0x28] sm:$0xf]
        %v384 = vld [vmem:[%s236 + $0x2c] sm:$0xf]
        %v385 = vld [vmem:[%s236 + $0x30] sm:$0xf]
        %v386 = vld [vmem:[%s236 + $0x34] sm:$0xf]
        %v387 = vld [vmem:[%s236 + $0x38] sm:$0xf]
        %v388 = vld [vmem:[%s236 + $0x3c] sm:$0xf]
        %v389 = vld [vmem:[%s236 + $0x40] sm:$0xf]
        %v390 = vld [vmem:[%s236 + $0x44] sm:$0xf]
        %v391 = vld [vmem:[%s236 + $0x48] sm:$0xf]
        %v392 = vld [vmem:[%s236 + $0x4c] sm:$0xf]
        %v393 = vld [vmem:[%s236 + $0x50] sm:$0xf]
        %v394 = vld [vmem:[%s236 + $0x54] sm:$0xf]
        %v395 = vld [vmem:[%s236 + $0x58] sm:$0xf]
        %v396 = vld [vmem:[%s236 + $0x5c] sm:$0xf]
        %v397 = vld [vmem:[%s236 + $0x60] sm:$0xf]
        %v398 = vld [vmem:[%s236 + $0x64] sm:$0xf]
        %v399 = vld [vmem:[%s236 + $0x68] sm:$0xf]
        %v400 = vld [vmem:[%s236 + $0x6c] sm:$0xf]
        %v401 = vld [vmem:[%s236 + $0x70] sm:$0xf]
        %v402 = vld [vmem:[%s236 + $0x74] sm:$0xf]
        %v403 = vld [vmem:[%s236 + $0x78] sm:$0xf]
        %v404 = vld [vmem:[%s236 + $0x7c] sm:$0xf]
        %s405 = scalar_lea.vmem [#allocation2], 20
        %406 = vst.msk [vmem:[%s405 + $0x8] sm:$0xf] %vm243, %v373
        %407 = vst.msk [vmem:[%s405 + $0xc] sm:$0xf] %vm243, %v374
        %408 = vst.msk [vmem:[%s405 + $0x1c] sm:$0xf] %vm243, %v375
        %409 = vst.msk [vmem:[%s405 + $0x20] sm:$0xf] %vm243, %v376
        %410 = vst.msk [vmem:[%s405 + $0x30] sm:$0xf] %vm243, %v377
        %411 = vst.msk [vmem:[%s405 + $0x34] sm:$0xf] %vm243, %v378
        %412 = vst.msk [vmem:[%s405 + $0x44] sm:$0xf] %vm243, %v379
        %413 = vst.msk [vmem:[%s405 + $0x48] sm:$0xf] %vm243, %v380
        %414 = vst.msk [vmem:[%s405 + $0x58] sm:$0xf] %vm243, %v381
        %415 = vst.msk [vmem:[%s405 + $0x5c] sm:$0xf] %vm243, %v382
        %416 = vst.msk [vmem:[%s405 + $0x6c] sm:$0xf] %vm243, %v383
        %417 = vst.msk [vmem:[%s405 + $0x70] sm:$0xf] %vm243, %v384
        %418 = vst.msk [vmem:[%s405 + $0x80] sm:$0xf] %vm243, %v385
        %419 = vst.msk [vmem:[%s405 + $0x84] sm:$0xf] %vm243, %v386
        %420 = vst.msk [vmem:[%s405 + $0x94] sm:$0xf] %vm243, %v387
        %421 = vst.msk [vmem:[%s405 + $0x98] sm:$0xf] %vm243, %v388
        %422 = vst.msk [vmem:[%s405 + $0xa8] sm:$0xf] %vm243, %v389
        %423 = vst.msk [vmem:[%s405 + $0xac] sm:$0xf] %vm243, %v390
        %424 = vst.msk [vmem:[%s405 + $0xbc] sm:$0xf] %vm243, %v391
        %425 = vst.msk [vmem:[%s405 + $0xc0] sm:$0xf] %vm243, %v392
        %426 = vst.msk [vmem:[%s405 + $0xd0] sm:$0xf] %vm243, %v393
        %427 = vst.msk [vmem:[%s405 + $0xd4] sm:$0xf] %vm243, %v394
        %428 = vst.msk [vmem:[%s405 + $0xe4] sm:$0xf] %vm243, %v395
        %429 = vst.msk [vmem:[%s405 + $0xe8] sm:$0xf] %vm243, %v396
        %430 = vst.msk [vmem:[%s405 + $0xf8] sm:$0xf] %vm243, %v397
        %431 = vst.msk [vmem:[%s405 + $0xfc] sm:$0xf] %vm243, %v398
        %432 = vst.msk [vmem:[%s405 + $0x10c] sm:$0xf] %vm243, %v399
        %433 = vst.msk [vmem:[%s405 + $0x110] sm:$0xf] %vm243, %v400
        %434 = vst.msk [vmem:[%s405 + $0x120] sm:$0xf] %vm243, %v401
        %435 = vst.msk [vmem:[%s405 + $0x124] sm:$0xf] %vm243, %v402
        %436 = vst.msk [vmem:[%s405 + $0x134] sm:$0xf] %vm243, %v403
        %437 = vst.msk [vmem:[%s405 + $0x138] sm:$0xf] %vm243, %v404
        %v438 = vld [vmem:[#allocation2 + $0x4] sm:$0x8]
        %v439 = vld [vmem:[#allocation2 + $0x8] sm:$0xf]
        %v440 = vld [vmem:[#allocation2 + $0xc] sm:$0xf]
        %v441 = vld [vmem:[#allocation2 + $0x18] sm:$0x8]
        %v442 = vld [vmem:[#allocation2 + $0x1c] sm:$0xf]
        %v443 = vld [vmem:[#allocation2 + $0x20] sm:$0xf]
        %v444 = vld [vmem:[#allocation2 + $0x2c] sm:$0x8]
        %v445 = vld [vmem:[#allocation2 + $0x30] sm:$0xf]
        %v446 = vld [vmem:[#allocation2 + $0x34] sm:$0xf]
        %v447 = vld [vmem:[#allocation2 + $0x40] sm:$0x8]
        %v448 = vld [vmem:[#allocation2 + $0x44] sm:$0xf]
        %v449 = vld [vmem:[#allocation2 + $0x48] sm:$0xf]
        %v450 = vld [vmem:[#allocation2 + $0x54] sm:$0x8]
        %v451 = vld [vmem:[#allocation2 + $0x58] sm:$0xf]
        %v452 = vld [vmem:[#allocation2 + $0x5c] sm:$0xf]
        %v453 = vld [vmem:[#allocation2 + $0x68] sm:$0x8]
        %v454 = vld [vmem:[#allocation2 + $0x6c] sm:$0xf]
        %v455 = vld [vmem:[#allocation2 + $0x70] sm:$0xf]
        %v456 = vld [vmem:[#allocation2 + $0x7c] sm:$0x8]
        %v457 = vld [vmem:[#allocation2 + $0x80] sm:$0xf]
        %v458 = vld [vmem:[#allocation2 + $0x84] sm:$0xf]
        %v459 = vld [vmem:[#allocation2 + $0x90] sm:$0x8]
        %v460 = vld [vmem:[#allocation2 + $0x94] sm:$0xf]
        %v461 = vld [vmem:[#allocation2 + $0x98] sm:$0xf]
        %v462 = vld [vmem:[#allocation2 + $0xa4] sm:$0x8]
        %v463 = vld [vmem:[#allocation2 + $0xa8] sm:$0xf]
        %v464 = vld [vmem:[#allocation2 + $0xac] sm:$0xf]
        %v465 = vld [vmem:[#allocation2 + $0xb8] sm:$0x8]
        %v466 = vld [vmem:[#allocation2 + $0xbc] sm:$0xf]
        %v467 = vld [vmem:[#allocation2 + $0xc0] sm:$0xf]
        %v468 = vld [vmem:[#allocation2 + $0xcc] sm:$0x8]
        %v469 = vld [vmem:[#allocation2 + $0xd0] sm:$0xf]
        %v470 = vld [vmem:[#allocation2 + $0xd4] sm:$0xf]
        %v471 = vld [vmem:[#allocation2 + $0xe0] sm:$0x8]
        %v472 = vld [vmem:[#allocation2 + $0xe4] sm:$0xf]
        %v473 = vld [vmem:[#allocation2 + $0xe8] sm:$0xf]
        %v474 = vld [vmem:[#allocation2 + $0xf4] sm:$0x8]
        %v475 = vld [vmem:[#allocation2 + $0xf8] sm:$0xf]
        %v476 = vld [vmem:[#allocation2 + $0xfc] sm:$0xf]
        %v477 = vld [vmem:[#allocation2 + $0x108] sm:$0x8]
        %v478 = vld [vmem:[#allocation2 + $0x10c] sm:$0xf]
        %v479 = vld [vmem:[#allocation2 + $0x110] sm:$0xf]
        %v480 = vld [vmem:[#allocation2 + $0x11c] sm:$0x8]
        %v481 = vld [vmem:[#allocation2 + $0x120] sm:$0xf]
        %v482 = vld [vmem:[#allocation2 + $0x124] sm:$0xf]
        %v483 = vld [vmem:[#allocation2 + $0x130] sm:$0x8]
        %v484 = vld [vmem:[#allocation2 + $0x134] sm:$0xf]
        %v485 = vld [vmem:[#allocation2 + $0x138] sm:$0xf]
        %vm486 = vsmask.f32 4368
        %vm487 = vmor %vm249, %vm486
        %v489 = vshrl.u32 %v438, 16
        %v491 = vrot.slane %v489, 7
        %v492 = vrot.slane %v491, 4
        %v494 = vshrl.u32 %v439, 16
        %v496 = vrot.slane %v494, 7
        %v497 = vshll.u32 %v439, 16
        %v499 = vor.u32 %v496, %v497
        %v500 = vsel %vm487, %v492, %v499
        %v501 = vrot.slane %v496, 4
        %v503 = vshrl.u32 %v440, 16
        %v505 = vrot.slane %v503, 7
        %v506 = vshll.u32 %v440, 16
        %v508 = vor.u32 %v505, %v506
        %v509 = vsel %vm487, %v501, %v508
        %v511 = vshrl.u32 %v441, 16
        %v513 = vrot.slane %v511, 7
        %v514 = vrot.slane %v513, 4
        %v516 = vshrl.u32 %v442, 16
        %v518 = vrot.slane %v516, 7
        %v519 = vshll.u32 %v442, 16
        %v521 = vor.u32 %v518, %v519
        %v522 = vsel %vm487, %v514, %v521
        %v523 = vrot.slane %v518, 4
        %v525 = vshrl.u32 %v443, 16
        %v527 = vrot.slane %v525, 7
        %v528 = vshll.u32 %v443, 16
        %v530 = vor.u32 %v527, %v528
        %v531 = vsel %vm487, %v523, %v530
        %v533 = vshrl.u32 %v444, 16
        %v535 = vrot.slane %v533, 7
        %v536 = vrot.slane %v535, 4
        %v538 = vshrl.u32 %v445, 16
        %v540 = vrot.slane %v538, 7
        %v541 = vshll.u32 %v445, 16
        %v543 = vor.u32 %v540, %v541
        %v544 = vsel %vm487, %v536, %v543
        %v545 = vrot.slane %v540, 4
        %v547 = vshrl.u32 %v446, 16
        %v549 = vrot.slane %v547, 7
        %v550 = vshll.u32 %v446, 16
        %v552 = vor.u32 %v549, %v550
        %v553 = vsel %vm487, %v545, %v552
        %v555 = vshrl.u32 %v447, 16
        %v557 = vrot.slane %v555, 7
        %v558 = vrot.slane %v557, 4
        %v560 = vshrl.u32 %v448, 16
        %v562 = vrot.slane %v560, 7
        %v563 = vshll.u32 %v448, 16
        %v565 = vor.u32 %v562, %v563
        %v566 = vsel %vm487, %v558, %v565
        %v567 = vrot.slane %v562, 4
        %v569 = vshrl.u32 %v449, 16
        %v571 = vrot.slane %v569, 7
        %v572 = vshll.u32 %v449, 16
        %v574 = vor.u32 %v571, %v572
        %v575 = vsel %vm487, %v567, %v574
        %v577 = vshrl.u32 %v450, 16
        %v579 = vrot.slane %v577, 7
        %v580 = vrot.slane %v579, 4
        %v582 = vshrl.u32 %v451, 16
        %v584 = vrot.slane %v582, 7
        %v585 = vshll.u32 %v451, 16
        %v587 = vor.u32 %v584, %v585
        %v588 = vsel %vm487, %v580, %v587
        %v589 = vrot.slane %v584, 4
        %v591 = vshrl.u32 %v452, 16
        %v593 = vrot.slane %v591, 7
        %v594 = vshll.u32 %v452, 16
        %v596 = vor.u32 %v593, %v594
        %v597 = vsel %vm487, %v589, %v596
        %v599 = vshrl.u32 %v453, 16
        %v601 = vrot.slane %v599, 7
        %v602 = vrot.slane %v601, 4
        %v604 = vshrl.u32 %v454, 16
        %v606 = vrot.slane %v604, 7
        %v607 = vshll.u32 %v454, 16
        %v609 = vor.u32 %v606, %v607
        %v610 = vsel %vm487, %v602, %v609
        %v611 = vrot.slane %v606, 4
        %v613 = vshrl.u32 %v455, 16
        %v615 = vrot.slane %v613, 7
        %v616 = vshll.u32 %v455, 16
        %v618 = vor.u32 %v615, %v616
        %v619 = vsel %vm487, %v611, %v618
        %v621 = vshrl.u32 %v456, 16
        %v623 = vrot.slane %v621, 7
        %v624 = vrot.slane %v623, 4
        %v626 = vshrl.u32 %v457, 16
        %v628 = vrot.slane %v626, 7
        %v629 = vshll.u32 %v457, 16
        %v631 = vor.u32 %v628, %v629
        %v632 = vsel %vm487, %v624, %v631
        %v633 = vrot.slane %v628, 4
        %v635 = vshrl.u32 %v458, 16
        %v637 = vrot.slane %v635, 7
        %v638 = vshll.u32 %v458, 16
        %v640 = vor.u32 %v637, %v638
        %v641 = vsel %vm487, %v633, %v640
        %v643 = vshrl.u32 %v459, 16
        %v645 = vrot.slane %v643, 7
        %v646 = vrot.slane %v645, 4
        %v648 = vshrl.u32 %v460, 16
        %v650 = vrot.slane %v648, 7
        %v651 = vshll.u32 %v460, 16
        %v653 = vor.u32 %v650, %v651
        %v654 = vsel %vm487, %v646, %v653
        %v655 = vrot.slane %v650, 4
        %v657 = vshrl.u32 %v461, 16
        %v659 = vrot.slane %v657, 7
        %v660 = vshll.u32 %v461, 16
        %v662 = vor.u32 %v659, %v660
        %v663 = vsel %vm487, %v655, %v662
        %v665 = vshrl.u32 %v462, 16
        %v667 = vrot.slane %v665, 7
        %v668 = vrot.slane %v667, 4
        %v670 = vshrl.u32 %v463, 16
        %v672 = vrot.slane %v670, 7
        %v673 = vshll.u32 %v463, 16
        %v675 = vor.u32 %v672, %v673
        %v676 = vsel %vm487, %v668, %v675
        %v677 = vrot.slane %v672, 4
        %v679 = vshrl.u32 %v464, 16
        %v681 = vrot.slane %v679, 7
        %v682 = vshll.u32 %v464, 16
        %v684 = vor.u32 %v681, %v682
        %v685 = vsel %vm487, %v677, %v684
        %v687 = vshrl.u32 %v465, 16
        %v689 = vrot.slane %v687, 7
        %v690 = vrot.slane %v689, 4
        %v692 = vshrl.u32 %v466, 16
        %v694 = vrot.slane %v692, 7
        %v695 = vshll.u32 %v466, 16
        %v697 = vor.u32 %v694, %v695
        %v698 = vsel %vm487, %v690, %v697
        %v699 = vrot.slane %v694, 4
        %v701 = vshrl.u32 %v467, 16
        %v703 = vrot.slane %v701, 7
        %v704 = vshll.u32 %v467, 16
        %v706 = vor.u32 %v703, %v704
        %v707 = vsel %vm487, %v699, %v706
        %v709 = vshrl.u32 %v468, 16
        %v711 = vrot.slane %v709, 7
        %v712 = vrot.slane %v711, 4
        %v714 = vshrl.u32 %v469, 16
        %v716 = vrot.slane %v714, 7
        %v717 = vshll.u32 %v469, 16
        %v719 = vor.u32 %v716, %v717
        %v720 = vsel %vm487, %v712, %v719
        %v721 = vrot.slane %v716, 4
        %v723 = vshrl.u32 %v470, 16
        %v725 = vrot.slane %v723, 7
        %v726 = vshll.u32 %v470, 16
        %v728 = vor.u32 %v725, %v726
        %v729 = vsel %vm487, %v721, %v728
        %v731 = vshrl.u32 %v471, 16
        %v733 = vrot.slane %v731, 7
        %v734 = vrot.slane %v733, 4
        %v736 = vshrl.u32 %v472, 16
        %v738 = vrot.slane %v736, 7
        %v739 = vshll.u32 %v472, 16
        %v741 = vor.u32 %v738, %v739
        %v742 = vsel %vm487, %v734, %v741
        %v743 = vrot.slane %v738, 4
        %v745 = vshrl.u32 %v473, 16
        %v747 = vrot.slane %v745, 7
        %v748 = vshll.u32 %v473, 16
        %v750 = vor.u32 %v747, %v748
        %v751 = vsel %vm487, %v743, %v750
        %v753 = vshrl.u32 %v474, 16
        %v755 = vrot.slane %v753, 7
        %v756 = vrot.slane %v755, 4
        %v758 = vshrl.u32 %v475, 16
        %v760 = vrot.slane %v758, 7
        %v761 = vshll.u32 %v475, 16
        %v763 = vor.u32 %v760, %v761
        %v764 = vsel %vm487, %v756, %v763
        %v765 = vrot.slane %v760, 4
        %v767 = vshrl.u32 %v476, 16
        %v769 = vrot.slane %v767, 7
        %v770 = vshll.u32 %v476, 16
        %v772 = vor.u32 %v769, %v770
        %v773 = vsel %vm487, %v765, %v772
        %v775 = vshrl.u32 %v477, 16
        %v777 = vrot.slane %v775, 7
        %v778 = vrot.slane %v777, 4
        %v780 = vshrl.u32 %v478, 16
        %v782 = vrot.slane %v780, 7
        %v783 = vshll.u32 %v478, 16
        %v785 = vor.u32 %v782, %v783
        %v786 = vsel %vm487, %v778, %v785
        %v787 = vrot.slane %v782, 4
        %v789 = vshrl.u32 %v479, 16
        %v791 = vrot.slane %v789, 7
        %v792 = vshll.u32 %v479, 16
        %v794 = vor.u32 %v791, %v792
        %v795 = vsel %vm487, %v787, %v794
        %v797 = vshrl.u32 %v480, 16
        %v799 = vrot.slane %v797, 7
        %v800 = vrot.slane %v799, 4
        %v802 = vshrl.u32 %v481, 16
        %v804 = vrot.slane %v802, 7
        %v805 = vshll.u32 %v481, 16
        %v807 = vor.u32 %v804, %v805
        %v808 = vsel %vm487, %v800, %v807
        %v809 = vrot.slane %v804, 4
        %v811 = vshrl.u32 %v482, 16
        %v813 = vrot.slane %v811, 7
        %v814 = vshll.u32 %v482, 16
        %v816 = vor.u32 %v813, %v814
        %v817 = vsel %vm487, %v809, %v816
        %v819 = vshrl.u32 %v483, 16
        %v821 = vrot.slane %v819, 7
        %v822 = vrot.slane %v821, 4
        %v824 = vshrl.u32 %v484, 16
        %v826 = vrot.slane %v824, 7
        %v827 = vshll.u32 %v484, 16
        %v829 = vor.u32 %v826, %v827
        %v830 = vsel %vm487, %v822, %v829
        %v831 = vrot.slane %v826, 4
        %v833 = vshrl.u32 %v485, 16
        %v835 = vrot.slane %v833, 7
        %v836 = vshll.u32 %v485, 16
        %v838 = vor.u32 %v835, %v836
        %v839 = vsel %vm487, %v831, %v838
        %v840 = vld [vmem:[%s1] sm:$0xf]
        %s841 = scalar_lea.vmem %s1, 4
        %v842 = vld [vmem:[%s841] sm:$0xf]
        %v875 = vunpack.c.l.b16 %v439
        %v876 = vunpack.c.l.b16 %v440
        %v877 = vunpack.c.l.b16 %v442
        %v878 = vunpack.c.l.b16 %v443
        %v879 = vunpack.c.l.b16 %v445
        %v880 = vunpack.c.l.b16 %v446
        %v881 = vunpack.c.l.b16 %v448
        %v882 = vunpack.c.l.b16 %v449
        %v883 = vunpack.c.l.b16 %v451
        %v884 = vunpack.c.l.b16 %v452
        %v885 = vunpack.c.l.b16 %v454
        %v886 = vunpack.c.l.b16 %v455
        %v887 = vunpack.c.l.b16 %v457
        %v888 = vunpack.c.l.b16 %v458
        %v889 = vunpack.c.l.b16 %v460
        %v890 = vunpack.c.l.b16 %v461
        %v891 = vunpack.c.l.b16 %v463
        %v892 = vunpack.c.l.b16 %v464
        %v893 = vunpack.c.l.b16 %v466
        %v894 = vunpack.c.l.b16 %v467
        %v895 = vunpack.c.l.b16 %v469
        %v896 = vunpack.c.l.b16 %v470
        %v897 = vunpack.c.l.b16 %v472
        %v898 = vunpack.c.l.b16 %v473
        %v899 = vunpack.c.l.b16 %v475
        %v900 = vunpack.c.l.b16 %v476
        %v901 = vunpack.c.l.b16 %v478
        %v902 = vunpack.c.l.b16 %v479
        %v903 = vunpack.c.l.b16 %v481
        %v904 = vunpack.c.l.b16 %v482
        %v905 = vunpack.c.l.b16 %v484
        %v906 = vunpack.c.l.b16 %v485
        %v907 = vpack.c.b16 %v876, %v875
        %v908 = vpack.c.b16 %v878, %v877
        %v909 = vpack.c.b16 %v880, %v879
        %v910 = vpack.c.b16 %v882, %v881
        %v911 = vpack.c.b16 %v884, %v883
        %v912 = vpack.c.b16 %v886, %v885
        %v913 = vpack.c.b16 %v888, %v887
        %v914 = vpack.c.b16 %v890, %v889
        %v915 = vpack.c.b16 %v892, %v891
        %v916 = vpack.c.b16 %v894, %v893
        %v917 = vpack.c.b16 %v896, %v895
        %v918 = vpack.c.b16 %v898, %v897
        %v919 = vpack.c.b16 %v900, %v899
        %v920 = vpack.c.b16 %v902, %v901
        %v921 = vpack.c.b16 %v904, %v903
        %v922 = vpack.c.b16 %v906, %v905
        %924 = vst [vmem:[#allocation1] ss:$4 sm:$0xff] %v842
        %v925 = vld.sshfl [vmem:[#allocation1] sm:$0xff pattern:$0x73625140]
        %v926 = vld.sshfl [vmem:[#allocation1 + $0x8] sm:$0xff pattern:$0x73625140]
        %vm927 = vcmask 31744
        %v929 = vsel %vm927, %v907, 0
        %v932 = vsel %vm927, %v908, 0
        %v935 = vsel %vm927, %v909, 0
        %v938 = vsel %vm927, %v910, 0
        %v941 = vsel %vm927, %v911, 0
        %v944 = vsel %vm927, %v912, 0
        %v947 = vsel %vm927, %v913, 0
        %v950 = vsel %vm927, %v914, 0
        %v953 = vsel %vm927, %v915, 0
        %v956 = vsel %vm927, %v916, 0
        %v959 = vsel %vm927, %v917, 0
        %v962 = vsel %vm927, %v918, 0
        %v965 = vsel %vm927, %v919, 0
        %v968 = vsel %vm927, %v920, 0
        %v971 = vsel %vm927, %v921, 0
        %v974 = vsel %vm927, %v922, 0
        %vm976 = vcmask 1041408
        %v977 = vsel %vm976, %v925, 0
        %v979 = vsel %vm976, %v926, 0
        %981 = vmatpush.bf16.msra.mxu0 0
        %982 = vmatpush.bf16.msra.mxu0 0
        %983 = vmatpush.bf16.msra.mxu0 0
        %984 = vmatpush.bf16.msra.mxu0 0
        %985 = vmatpush.bf16.msra.mxu0 0
        %986 = vmatpush.bf16.msra.mxu0 0
        %987 = vmatpush.bf16.msra.mxu0 0
        %988 = vmatpush.bf16.msra.mxu0 %v977
        %989 = vmatmul.bf16.gmra.mxu0 %v929
        %v990 = vpop.f32.mrf.mxu0
        %v991 = vadd.f32 0.0, %v990
        %v992 = vpop.f32.mrf.mxu0
        %v993 = vadd.f32 0.0, %v992
        %994 = vmatmul.bf16.gmra.mxu0 %v932
        %v995 = vpop.f32.mrf.mxu0
        %v996 = vadd.f32 0.0, %v995
        %v997 = vpop.f32.mrf.mxu0
        %v998 = vadd.f32 0.0, %v997
        %999 = vmatmul.bf16.gmra.mxu0 %v935
        %v1000 = vpop.f32.mrf.mxu0
        %v1001 = vadd.f32 0.0, %v1000
        %v1002 = vpop.f32.mrf.mxu0
        %v1003 = vadd.f32 0.0, %v1002
        %1004 = vmatmul.bf16.gmra.mxu0 %v938
        %v1005 = vpop.f32.mrf.mxu0
        %v1006 = vadd.f32 0.0, %v1005
        %v1007 = vpop.f32.mrf.mxu0
        %v1008 = vadd.f32 0.0, %v1007
        %1009 = vmatmul.bf16.gmra.mxu0 %v941
        %v1010 = vpop.f32.mrf.mxu0
        %v1011 = vadd.f32 0.0, %v1010
        %v1012 = vpop.f32.mrf.mxu0
        %v1013 = vadd.f32 0.0, %v1012
        %1014 = vmatmul.bf16.gmra.mxu0 %v944
        %v1015 = vpop.f32.mrf.mxu0
        %v1016 = vadd.f32 0.0, %v1015
        %v1017 = vpop.f32.mrf.mxu0
        %v1018 = vadd.f32 0.0, %v1017
        %1019 = vmatmul.bf16.gmra.mxu0 %v947
        %v1020 = vpop.f32.mrf.mxu0
        %v1021 = vadd.f32 0.0, %v1020
        %v1022 = vpop.f32.mrf.mxu0
        %v1023 = vadd.f32 0.0, %v1022
        %1024 = vmatmul.bf16.gmra.mxu0 %v950
        %v1025 = vpop.f32.mrf.mxu0
        %v1026 = vadd.f32 0.0, %v1025
        %v1027 = vpop.f32.mrf.mxu0
        %v1028 = vadd.f32 0.0, %v1027
        %1029 = vmatmul.bf16.gmra.mxu0 %v953
        %v1030 = vpop.f32.mrf.mxu0
        %v1031 = vadd.f32 0.0, %v1030
        %v1032 = vpop.f32.mrf.mxu0
        %v1033 = vadd.f32 0.0, %v1032
        %1034 = vmatmul.bf16.gmra.mxu0 %v956
        %v1035 = vpop.f32.mrf.mxu0
        %v1036 = vadd.f32 0.0, %v1035
        %v1037 = vpop.f32.mrf.mxu0
        %v1038 = vadd.f32 0.0, %v1037
        %1039 = vmatmul.bf16.gmra.mxu0 %v959
        %v1040 = vpop.f32.mrf.mxu0
        %v1041 = vadd.f32 0.0, %v1040
        %v1042 = vpop.f32.mrf.mxu0
        %v1043 = vadd.f32 0.0, %v1042
        %1044 = vmatmul.bf16.gmra.mxu0 %v962
        %v1045 = vpop.f32.mrf.mxu0
        %v1046 = vadd.f32 0.0, %v1045
        %v1047 = vpop.f32.mrf.mxu0
        %v1048 = vadd.f32 0.0, %v1047
        %1049 = vmatmul.bf16.gmra.mxu0 %v965
        %v1050 = vpop.f32.mrf.mxu0
        %v1051 = vadd.f32 0.0, %v1050
        %v1052 = vpop.f32.mrf.mxu0
        %v1053 = vadd.f32 0.0, %v1052
        %1054 = vmatmul.bf16.gmra.mxu0 %v968
        %v1055 = vpop.f32.mrf.mxu0
        %v1056 = vadd.f32 0.0, %v1055
        %v1057 = vpop.f32.mrf.mxu0
        %v1058 = vadd.f32 0.0, %v1057
        %1059 = vmatmul.bf16.gmra.mxu0 %v971
        %v1060 = vpop.f32.mrf.mxu0
        %v1061 = vadd.f32 0.0, %v1060
        %v1062 = vpop.f32.mrf.mxu0
        %v1063 = vadd.f32 0.0, %v1062
        %1064 = vmatmul.bf16.gmra.mxu0 %v974
        %v1065 = vpop.f32.mrf.mxu0
        %v1066 = vadd.f32 0.0, %v1065
        %v1067 = vpop.f32.mrf.mxu0
        %v1068 = vadd.f32 0.0, %v1067
        %1069 = vdwg.mxu0
        %1070 = vmatpush.bf16.msra.mxu0 0
        %1071 = vmatpush.bf16.msra.mxu0 0
        %1072 = vmatpush.bf16.msra.mxu0 0
        %1073 = vmatpush.bf16.msra.mxu0 0
        %1074 = vmatpush.bf16.msra.mxu0 0
        %1075 = vmatpush.bf16.msra.mxu0 0
        %1076 = vmatpush.bf16.msra.mxu0 0
        %1077 = vmatpush.bf16.msra.mxu0 %v979
        %1078 = vmatmul.bf16.gmra.mxu0 %v929
        %v1079 = vpop.f32.mrf.mxu0
        %v1080 = vadd.f32 0.0, %v1079
        %v1081 = vpop.f32.mrf.mxu0
        %v1082 = vadd.f32 0.0, %v1081
        %1083 = vmatmul.bf16.gmra.mxu0 %v932
        %v1084 = vpop.f32.mrf.mxu0
        %v1085 = vadd.f32 0.0, %v1084
        %v1086 = vpop.f32.mrf.mxu0
        %v1087 = vadd.f32 0.0, %v1086
        %1088 = vmatmul.bf16.gmra.mxu0 %v935
        %v1089 = vpop.f32.mrf.mxu0
        %v1090 = vadd.f32 0.0, %v1089
        %v1091 = vpop.f32.mrf.mxu0
        %v1092 = vadd.f32 0.0, %v1091
        %1093 = vmatmul.bf16.gmra.mxu0 %v938
        %v1094 = vpop.f32.mrf.mxu0
        %v1095 = vadd.f32 0.0, %v1094
        %v1096 = vpop.f32.mrf.mxu0
        %v1097 = vadd.f32 0.0, %v1096
        %1098 = vmatmul.bf16.gmra.mxu0 %v941
        %v1099 = vpop.f32.mrf.mxu0
        %v1100 = vadd.f32 0.0, %v1099
        %v1101 = vpop.f32.mrf.mxu0
        %v1102 = vadd.f32 0.0, %v1101
        %1103 = vmatmul.bf16.gmra.mxu0 %v944
        %v1104 = vpop.f32.mrf.mxu0
        %v1105 = vadd.f32 0.0, %v1104
        %v1106 = vpop.f32.mrf.mxu0
        %v1107 = vadd.f32 0.0, %v1106
        %1108 = vmatmul.bf16.gmra.mxu0 %v947
        %v1109 = vpop.f32.mrf.mxu0
        %v1110 = vadd.f32 0.0, %v1109
        %v1111 = vpop.f32.mrf.mxu0
        %v1112 = vadd.f32 0.0, %v1111
        %1113 = vmatmul.bf16.gmra.mxu0 %v950
        %v1114 = vpop.f32.mrf.mxu0
        %v1115 = vadd.f32 0.0, %v1114
        %v1116 = vpop.f32.mrf.mxu0
        %v1117 = vadd.f32 0.0, %v1116
        %1118 = vmatmul.bf16.gmra.mxu0 %v953
        %v1119 = vpop.f32.mrf.mxu0
        %v1120 = vadd.f32 0.0, %v1119
        %v1121 = vpop.f32.mrf.mxu0
        %v1122 = vadd.f32 0.0, %v1121
        %1123 = vmatmul.bf16.gmra.mxu0 %v956
        %v1124 = vpop.f32.mrf.mxu0
        %v1125 = vadd.f32 0.0, %v1124
        %v1126 = vpop.f32.mrf.mxu0
        %v1127 = vadd.f32 0.0, %v1126
        %1128 = vmatmul.bf16.gmra.mxu0 %v959
        %v1129 = vpop.f32.mrf.mxu0
        %v1130 = vadd.f32 0.0, %v1129
        %v1131 = vpop.f32.mrf.mxu0
        %v1132 = vadd.f32 0.0, %v1131
        %1133 = vmatmul.bf16.gmra.mxu0 %v962
        %v1134 = vpop.f32.mrf.mxu0
        %v1135 = vadd.f32 0.0, %v1134
        %v1136 = vpop.f32.mrf.mxu0
        %v1137 = vadd.f32 0.0, %v1136
        %1138 = vmatmul.bf16.gmra.mxu0 %v965
        %v1139 = vpop.f32.mrf.mxu0
        %v1140 = vadd.f32 0.0, %v1139
        %v1141 = vpop.f32.mrf.mxu0
        %v1142 = vadd.f32 0.0, %v1141
        %1143 = vmatmul.bf16.gmra.mxu0 %v968
        %v1144 = vpop.f32.mrf.mxu0
        %v1145 = vadd.f32 0.0, %v1144
        %v1146 = vpop.f32.mrf.mxu0
        %v1147 = vadd.f32 0.0, %v1146
        %1148 = vmatmul.bf16.gmra.mxu0 %v971
        %v1149 = vpop.f32.mrf.mxu0
        %v1150 = vadd.f32 0.0, %v1149
        %v1151 = vpop.f32.mrf.mxu0
        %v1152 = vadd.f32 0.0, %v1151
        %1153 = vmatmul.bf16.gmra.mxu0 %v974
        %v1154 = vpop.f32.mrf.mxu0
        %v1155 = vadd.f32 0.0, %v1154
        %v1156 = vpop.f32.mrf.mxu0
        %v1157 = vadd.f32 0.0, %v1156
        %1158 = vdwg.mxu0
        %v1159 = vunpack.c.l.b16 %v500
        %v1160 = vunpack.c.l.b16 %v509
        %v1161 = vunpack.c.l.b16 %v522
        %v1162 = vunpack.c.l.b16 %v531
        %v1163 = vunpack.c.l.b16 %v544
        %v1164 = vunpack.c.l.b16 %v553
        %v1165 = vunpack.c.l.b16 %v566
        %v1166 = vunpack.c.l.b16 %v575
        %v1167 = vunpack.c.l.b16 %v588
        %v1168 = vunpack.c.l.b16 %v597
        %v1169 = vunpack.c.l.b16 %v610
        %v1170 = vunpack.c.l.b16 %v619
        %v1171 = vunpack.c.l.b16 %v632
        %v1172 = vunpack.c.l.b16 %v641
        %v1173 = vunpack.c.l.b16 %v654
        %v1174 = vunpack.c.l.b16 %v663
        %v1175 = vunpack.c.l.b16 %v676
        %v1176 = vunpack.c.l.b16 %v685
        %v1177 = vunpack.c.l.b16 %v698
        %v1178 = vunpack.c.l.b16 %v707
        %v1179 = vunpack.c.l.b16 %v720
        %v1180 = vunpack.c.l.b16 %v729
        %v1181 = vunpack.c.l.b16 %v742
        %v1182 = vunpack.c.l.b16 %v751
        %v1183 = vunpack.c.l.b16 %v764
        %v1184 = vunpack.c.l.b16 %v773
        %v1185 = vunpack.c.l.b16 %v786
        %v1186 = vunpack.c.l.b16 %v795
        %v1187 = vunpack.c.l.b16 %v808
        %v1188 = vunpack.c.l.b16 %v817
        %v1189 = vunpack.c.l.b16 %v830
        %v1190 = vunpack.c.l.b16 %v839
        %v1191 = vpack.c.b16 %v1160, %v1159
        %v1192 = vpack.c.b16 %v1162, %v1161
        %v1193 = vpack.c.b16 %v1164, %v1163
        %v1194 = vpack.c.b16 %v1166, %v1165
        %v1195 = vpack.c.b16 %v1168, %v1167
        %v1196 = vpack.c.b16 %v1170, %v1169
        %v1197 = vpack.c.b16 %v1172, %v1171
        %v1198 = vpack.c.b16 %v1174, %v1173
        %v1199 = vpack.c.b16 %v1176, %v1175
        %v1200 = vpack.c.b16 %v1178, %v1177
        %v1201 = vpack.c.b16 %v1180, %v1179
        %v1202 = vpack.c.b16 %v1182, %v1181
        %v1203 = vpack.c.b16 %v1184, %v1183
        %v1204 = vpack.c.b16 %v1186, %v1185
        %v1205 = vpack.c.b16 %v1188, %v1187
        %v1206 = vpack.c.b16 %v1190, %v1189
        %1208 = vst [vmem:[#allocation1] ss:$4 sm:$0xff] %v840
        %v1209 = vld.sshfl [vmem:[#allocation1] sm:$0xff pattern:$0x73625140]
        %v1210 = vld.sshfl [vmem:[#allocation1 + $0x8] sm:$0xff pattern:$0x73625140]
        %v1212 = vsel %vm927, %v1191, 0
        %v1215 = vsel %vm927, %v1192, 0
        %v1218 = vsel %vm927, %v1193, 0
        %v1221 = vsel %vm927, %v1194, 0
        %v1224 = vsel %vm927, %v1195, 0
        %v1227 = vsel %vm927, %v1196, 0
        %v1230 = vsel %vm927, %v1197, 0
        %v1233 = vsel %vm927, %v1198, 0
        %v1236 = vsel %vm927, %v1199, 0
        %v1239 = vsel %vm927, %v1200, 0
        %v1242 = vsel %vm927, %v1201, 0
        %v1245 = vsel %vm927, %v1202, 0
        %v1248 = vsel %vm927, %v1203, 0
        %v1251 = vsel %vm927, %v1204, 0
        %v1254 = vsel %vm927, %v1205, 0
        %v1257 = vsel %vm927, %v1206, 0
        %v1259 = vsel %vm976, %v1209, 0
        %v1261 = vsel %vm976, %v1210, 0
        %1263 = vmatpush.bf16.msra.mxu0 0
        %1264 = vmatpush.bf16.msra.mxu0 0
        %1265 = vmatpush.bf16.msra.mxu0 0
        %1266 = vmatpush.bf16.msra.mxu0 0
        %1267 = vmatpush.bf16.msra.mxu0 0
        %1268 = vmatpush.bf16.msra.mxu0 0
        %1269 = vmatpush.bf16.msra.mxu0 0
        %1270 = vmatpush.bf16.msra.mxu0 %v1259
        %1271 = vmatmul.bf16.gmra.mxu0 %v1212
        %v1272 = vpop.f32.mrf.mxu0
        %v1273 = vadd.f32 %v991, %v1272
        %v1274 = vpop.f32.mrf.mxu0
        %v1275 = vadd.f32 %v993, %v1274
        %1276 = vmatmul.bf16.gmra.mxu0 %v1215
        %v1277 = vpop.f32.mrf.mxu0
        %v1278 = vadd.f32 %v996, %v1277
        %v1279 = vpop.f32.mrf.mxu0
        %v1280 = vadd.f32 %v998, %v1279
        %1281 = vmatmul.bf16.gmra.mxu0 %v1218
        %v1282 = vpop.f32.mrf.mxu0
        %v1283 = vadd.f32 %v1001, %v1282
        %v1284 = vpop.f32.mrf.mxu0
        %v1285 = vadd.f32 %v1003, %v1284
        %1286 = vmatmul.bf16.gmra.mxu0 %v1221
        %v1287 = vpop.f32.mrf.mxu0
        %v1288 = vadd.f32 %v1006, %v1287
        %v1289 = vpop.f32.mrf.mxu0
        %v1290 = vadd.f32 %v1008, %v1289
        %1291 = vmatmul.bf16.gmra.mxu0 %v1224
        %v1292 = vpop.f32.mrf.mxu0
        %v1293 = vadd.f32 %v1011, %v1292
        %v1294 = vpop.f32.mrf.mxu0
        %v1295 = vadd.f32 %v1013, %v1294
        %1296 = vmatmul.bf16.gmra.mxu0 %v1227
        %v1297 = vpop.f32.mrf.mxu0
        %v1298 = vadd.f32 %v1016, %v1297
        %v1299 = vpop.f32.mrf.mxu0
        %v1300 = vadd.f32 %v1018, %v1299
        %1301 = vmatmul.bf16.gmra.mxu0 %v1230
        %v1302 = vpop.f32.mrf.mxu0
        %v1303 = vadd.f32 %v1021, %v1302
        %v1304 = vpop.f32.mrf.mxu0
        %v1305 = vadd.f32 %v1023, %v1304
        %1306 = vmatmul.bf16.gmra.mxu0 %v1233
        %v1307 = vpop.f32.mrf.mxu0
        %v1308 = vadd.f32 %v1026, %v1307
        %v1309 = vpop.f32.mrf.mxu0
        %v1310 = vadd.f32 %v1028, %v1309
        %1311 = vmatmul.bf16.gmra.mxu0 %v1236
        %v1312 = vpop.f32.mrf.mxu0
        %v1313 = vadd.f32 %v1031, %v1312
        %v1314 = vpop.f32.mrf.mxu0
        %v1315 = vadd.f32 %v1033, %v1314
        %1316 = vmatmul.bf16.gmra.mxu0 %v1239
        %v1317 = vpop.f32.mrf.mxu0
        %v1318 = vadd.f32 %v1036, %v1317
        %v1319 = vpop.f32.mrf.mxu0
        %v1320 = vadd.f32 %v1038, %v1319
        %1321 = vmatmul.bf16.gmra.mxu0 %v1242
        %v1322 = vpop.f32.mrf.mxu0
        %v1323 = vadd.f32 %v1041, %v1322
        %v1324 = vpop.f32.mrf.mxu0
        %v1325 = vadd.f32 %v1043, %v1324
        %1326 = vmatmul.bf16.gmra.mxu0 %v1245
        %v1327 = vpop.f32.mrf.mxu0
        %v1328 = vadd.f32 %v1046, %v1327
        %v1329 = vpop.f32.mrf.mxu0
        %v1330 = vadd.f32 %v1048, %v1329
        %1331 = vmatmul.bf16.gmra.mxu0 %v1248
        %v1332 = vpop.f32.mrf.mxu0
        %v1333 = vadd.f32 %v1051, %v1332
        %v1334 = vpop.f32.mrf.mxu0
        %v1335 = vadd.f32 %v1053, %v1334
        %1336 = vmatmul.bf16.gmra.mxu0 %v1251
        %v1337 = vpop.f32.mrf.mxu0
        %v1338 = vadd.f32 %v1056, %v1337
        %v1339 = vpop.f32.mrf.mxu0
        %v1340 = vadd.f32 %v1058, %v1339
        %1341 = vmatmul.bf16.gmra.mxu0 %v1254
        %v1342 = vpop.f32.mrf.mxu0
        %v1343 = vadd.f32 %v1061, %v1342
        %v1344 = vpop.f32.mrf.mxu0
        %v1345 = vadd.f32 %v1063, %v1344
        %1346 = vmatmul.bf16.gmra.mxu0 %v1257
        %v1347 = vpop.f32.mrf.mxu0
        %v1348 = vadd.f32 %v1066, %v1347
        %v1349 = vpop.f32.mrf.mxu0
        %v1350 = vadd.f32 %v1068, %v1349
        %1351 = vdwg.mxu0
        %1352 = vmatpush.bf16.msra.mxu0 0
        %1353 = vmatpush.bf16.msra.mxu0 0
        %1354 = vmatpush.bf16.msra.mxu0 0
        %1355 = vmatpush.bf16.msra.mxu0 0
        %1356 = vmatpush.bf16.msra.mxu0 0
        %1357 = vmatpush.bf16.msra.mxu0 0
        %1358 = vmatpush.bf16.msra.mxu0 0
        %1359 = vmatpush.bf16.msra.mxu0 %v1261
        %1360 = vmatmul.bf16.gmra.mxu0 %v1212
        %v1361 = vpop.f32.mrf.mxu0
        %v1362 = vadd.f32 %v1080, %v1361
        %v1363 = vpop.f32.mrf.mxu0
        %v1364 = vadd.f32 %v1082, %v1363
        %1365 = vmatmul.bf16.gmra.mxu0 %v1215
        %v1366 = vpop.f32.mrf.mxu0
        %v1367 = vadd.f32 %v1085, %v1366
        %v1368 = vpop.f32.mrf.mxu0
        %v1369 = vadd.f32 %v1087, %v1368
        %1370 = vmatmul.bf16.gmra.mxu0 %v1218
        %v1371 = vpop.f32.mrf.mxu0
        %v1372 = vadd.f32 %v1090, %v1371
        %v1373 = vpop.f32.mrf.mxu0
        %v1374 = vadd.f32 %v1092, %v1373
        %1375 = vmatmul.bf16.gmra.mxu0 %v1221
        %v1376 = vpop.f32.mrf.mxu0
        %v1377 = vadd.f32 %v1095, %v1376
        %v1378 = vpop.f32.mrf.mxu0
        %v1379 = vadd.f32 %v1097, %v1378
        %1380 = vmatmul.bf16.gmra.mxu0 %v1224
        %v1381 = vpop.f32.mrf.mxu0
        %v1382 = vadd.f32 %v1100, %v1381
        %v1383 = vpop.f32.mrf.mxu0
        %v1384 = vadd.f32 %v1102, %v1383
        %1385 = vmatmul.bf16.gmra.mxu0 %v1227
        %v1386 = vpop.f32.mrf.mxu0
        %v1387 = vadd.f32 %v1105, %v1386
        %v1388 = vpop.f32.mrf.mxu0
        %v1389 = vadd.f32 %v1107, %v1388
        %1390 = vmatmul.bf16.gmra.mxu0 %v1230
        %v1391 = vpop.f32.mrf.mxu0
        %v1392 = vadd.f32 %v1110, %v1391
        %v1393 = vpop.f32.mrf.mxu0
        %v1394 = vadd.f32 %v1112, %v1393
        %1395 = vmatmul.bf16.gmra.mxu0 %v1233
        %v1396 = vpop.f32.mrf.mxu0
        %v1397 = vadd.f32 %v1115, %v1396
        %v1398 = vpop.f32.mrf.mxu0
        %v1399 = vadd.f32 %v1117, %v1398
        %1400 = vmatmul.bf16.gmra.mxu0 %v1236
        %v1401 = vpop.f32.mrf.mxu0
        %v1402 = vadd.f32 %v1120, %v1401
        %v1403 = vpop.f32.mrf.mxu0
        %v1404 = vadd.f32 %v1122, %v1403
        %1405 = vmatmul.bf16.gmra.mxu0 %v1239
        %v1406 = vpop.f32.mrf.mxu0
        %v1407 = vadd.f32 %v1125, %v1406
        %v1408 = vpop.f32.mrf.mxu0
        %v1409 = vadd.f32 %v1127, %v1408
        %1410 = vmatmul.bf16.gmra.mxu0 %v1242
        %v1411 = vpop.f32.mrf.mxu0
        %v1412 = vadd.f32 %v1130, %v1411
        %v1413 = vpop.f32.mrf.mxu0
        %v1414 = vadd.f32 %v1132, %v1413
        %1415 = vmatmul.bf16.gmra.mxu0 %v1245
        %v1416 = vpop.f32.mrf.mxu0
        %v1417 = vadd.f32 %v1135, %v1416
        %v1418 = vpop.f32.mrf.mxu0
        %v1419 = vadd.f32 %v1137, %v1418
        %1420 = vmatmul.bf16.gmra.mxu0 %v1248
        %v1421 = vpop.f32.mrf.mxu0
        %v1422 = vadd.f32 %v1140, %v1421
        %v1423 = vpop.f32.mrf.mxu0
        %v1424 = vadd.f32 %v1142, %v1423
        %1425 = vmatmul.bf16.gmra.mxu0 %v1251
        %v1426 = vpop.f32.mrf.mxu0
        %v1427 = vadd.f32 %v1145, %v1426
        %v1428 = vpop.f32.mrf.mxu0
        %v1429 = vadd.f32 %v1147, %v1428
        %1430 = vmatmul.bf16.gmra.mxu0 %v1254
        %v1431 = vpop.f32.mrf.mxu0
        %v1432 = vadd.f32 %v1150, %v1431
        %v1433 = vpop.f32.mrf.mxu0
        %v1434 = vadd.f32 %v1152, %v1433
        %1435 = vmatmul.bf16.gmra.mxu0 %v1257
        %v1436 = vpop.f32.mrf.mxu0
        %v1437 = vadd.f32 %v1155, %v1436
        %v1438 = vpop.f32.mrf.mxu0
        %v1439 = vadd.f32 %v1157, %v1438
        %1440 = vdwg.mxu0
        %v1441 = vld [vmem:[#allocation2 + $0x8] sm:$0xf]
        %v1442 = vld [vmem:[#allocation2 + $0xc] sm:$0xf]
        %v1443 = vld [vmem:[#allocation2 + $0x10] sm:$0x1]
        %v1444 = vld [vmem:[#allocation2 + $0x1c] sm:$0xf]
        %v1445 = vld [vmem:[#allocation2 + $0x20] sm:$0xf]
        %v1446 = vld [vmem:[#allocation2 + $0x24] sm:$0x1]
        %v1447 = vld [vmem:[#allocation2 + $0x30] sm:$0xf]
        %v1448 = vld [vmem:[#allocation2 + $0x34] sm:$0xf]
        %v1449 = vld [vmem:[#allocation2 + $0x38] sm:$0x1]
        %v1450 = vld [vmem:[#allocation2 + $0x44] sm:$0xf]
        %v1451 = vld [vmem:[#allocation2 + $0x48] sm:$0xf]
        %v1452 = vld [vmem:[#allocation2 + $0x4c] sm:$0x1]
        %v1453 = vld [vmem:[#allocation2 + $0x58] sm:$0xf]
        %v1454 = vld [vmem:[#allocation2 + $0x5c] sm:$0xf]
        %v1455 = vld [vmem:[#allocation2 + $0x60] sm:$0x1]
        %v1456 = vld [vmem:[#allocation2 + $0x6c] sm:$0xf]
        %v1457 = vld [vmem:[#allocation2 + $0x70] sm:$0xf]
        %v1458 = vld [vmem:[#allocation2 + $0x74] sm:$0x1]
        %v1459 = vld [vmem:[#allocation2 + $0x80] sm:$0xf]
        %v1460 = vld [vmem:[#allocation2 + $0x84] sm:$0xf]
        %v1461 = vld [vmem:[#allocation2 + $0x88] sm:$0x1]
        %v1462 = vld [vmem:[#allocation2 + $0x94] sm:$0xf]
        %v1463 = vld [vmem:[#allocation2 + $0x98] sm:$0xf]
        %v1464 = vld [vmem:[#allocation2 + $0x9c] sm:$0x1]
        %v1465 = vld [vmem:[#allocation2 + $0xa8] sm:$0xf]
        %v1466 = vld [vmem:[#allocation2 + $0xac] sm:$0xf]
        %v1467 = vld [vmem:[#allocation2 + $0xb0] sm:$0x1]
        %v1468 = vld [vmem:[#allocation2 + $0xbc] sm:$0xf]
        %v1469 = vld [vmem:[#allocation2 + $0xc0] sm:$0xf]
        %v1470 = vld [vmem:[#allocation2 + $0xc4] sm:$0x1]
        %v1471 = vld [vmem:[#allocation2 + $0xd0] sm:$0xf]
        %v1472 = vld [vmem:[#allocation2 + $0xd4] sm:$0xf]
        %v1473 = vld [vmem:[#allocation2 + $0xd8] sm:$0x1]
        %v1474 = vld [vmem:[#allocation2 + $0xe4] sm:$0xf]
        %v1475 = vld [vmem:[#allocation2 + $0xe8] sm:$0xf]
        %v1476 = vld [vmem:[#allocation2 + $0xec] sm:$0x1]
        %v1477 = vld [vmem:[#allocation2 + $0xf8] sm:$0xf]
        %v1478 = vld [vmem:[#allocation2 + $0xfc] sm:$0xf]
        %v1479 = vld [vmem:[#allocation2 + $0x100] sm:$0x1]
        %v1480 = vld [vmem:[#allocation2 + $0x10c] sm:$0xf]
        %v1481 = vld [vmem:[#allocation2 + $0x110] sm:$0xf]
        %v1482 = vld [vmem:[#allocation2 + $0x114] sm:$0x1]
        %v1483 = vld [vmem:[#allocation2 + $0x120] sm:$0xf]
        %v1484 = vld [vmem:[#allocation2 + $0x124] sm:$0xf]
        %v1485 = vld [vmem:[#allocation2 + $0x128] sm:$0x1]
        %v1486 = vld [vmem:[#allocation2 + $0x134] sm:$0xf]
        %v1487 = vld [vmem:[#allocation2 + $0x138] sm:$0xf]
        %v1488 = vld [vmem:[#allocation2 + $0x13c] sm:$0x1]
        %vm1489 = vsmask.f32 3328
        %vm1490 = vsmask.f32 7440
        %vm1491 = vmor %vm1489, %vm1490
        %v1493 = vshrl.u32 %v1441, 16
        %v1495 = vrot.slane %v1493, 4
        %v1496 = vshll.u32 %v1441, 16
        %v1498 = vrot.slane %v1496, 5
        %v1499 = vor.u32 %v1495, %v1498
        %v1500 = vrot.slane %v1499, 4
        %v1502 = vshll.u32 %v1442, 16
        %v1504 = vrot.slane %v1502, 5
        %v1505 = vsel %vm1491, %v1500, %v1504
        %v1506 = vshrl.u32 %v1442, 16
        %v1508 = vrot.slane %v1506, 4
        %v1509 = vor.u32 %v1508, %v1504
        %v1510 = vrot.slane %v1509, 4
        %v1512 = vshll.u32 %v1443, 16
        %v1514 = vrot.slane %v1512, 5
        %v1515 = vsel %vm1491, %v1510, %v1514
        %v1517 = vshrl.u32 %v1444, 16
        %v1519 = vrot.slane %v1517, 4
        %v1520 = vshll.u32 %v1444, 16
        %v1522 = vrot.slane %v1520, 5
        %v1523 = vor.u32 %v1519, %v1522
        %v1524 = vrot.slane %v1523, 4
        %v1526 = vshll.u32 %v1445, 16
        %v1528 = vrot.slane %v1526, 5
        %v1529 = vsel %vm1491, %v1524, %v1528
        %v1530 = vshrl.u32 %v1445, 16
        %v1532 = vrot.slane %v1530, 4
        %v1533 = vor.u32 %v1532, %v1528
        %v1534 = vrot.slane %v1533, 4
        %v1536 = vshll.u32 %v1446, 16
        %v1538 = vrot.slane %v1536, 5
        %v1539 = vsel %vm1491, %v1534, %v1538
        %v1541 = vshrl.u32 %v1447, 16
        %v1543 = vrot.slane %v1541, 4
        %v1544 = vshll.u32 %v1447, 16
        %v1546 = vrot.slane %v1544, 5
        %v1547 = vor.u32 %v1543, %v1546
        %v1548 = vrot.slane %v1547, 4
        %v1550 = vshll.u32 %v1448, 16
        %v1552 = vrot.slane %v1550, 5
        %v1553 = vsel %vm1491, %v1548, %v1552
        %v1554 = vshrl.u32 %v1448, 16
        %v1556 = vrot.slane %v1554, 4
        %v1557 = vor.u32 %v1556, %v1552
        %v1558 = vrot.slane %v1557, 4
        %v1560 = vshll.u32 %v1449, 16
        %v1562 = vrot.slane %v1560, 5
        %v1563 = vsel %vm1491, %v1558, %v1562
        %v1565 = vshrl.u32 %v1450, 16
        %v1567 = vrot.slane %v1565, 4
        %v1568 = vshll.u32 %v1450, 16
        %v1570 = vrot.slane %v1568, 5
        %v1571 = vor.u32 %v1567, %v1570
        %v1572 = vrot.slane %v1571, 4
        %v1574 = vshll.u32 %v1451, 16
        %v1576 = vrot.slane %v1574, 5
        %v1577 = vsel %vm1491, %v1572, %v1576
        %v1578 = vshrl.u32 %v1451, 16
        %v1580 = vrot.slane %v1578, 4
        %v1581 = vor.u32 %v1580, %v1576
        %v1582 = vrot.slane %v1581, 4
        %v1584 = vshll.u32 %v1452, 16
        %v1586 = vrot.slane %v1584, 5
        %v1587 = vsel %vm1491, %v1582, %v1586
        %v1589 = vshrl.u32 %v1453, 16
        %v1591 = vrot.slane %v1589, 4
        %v1592 = vshll.u32 %v1453, 16
        %v1594 = vrot.slane %v1592, 5
        %v1595 = vor.u32 %v1591, %v1594
        %v1596 = vrot.slane %v1595, 4
        %v1598 = vshll.u32 %v1454, 16
        %v1600 = vrot.slane %v1598, 5
        %v1601 = vsel %vm1491, %v1596, %v1600
        %v1602 = vshrl.u32 %v1454, 16
        %v1604 = vrot.slane %v1602, 4
        %v1605 = vor.u32 %v1604, %v1600
        %v1606 = vrot.slane %v1605, 4
        %v1608 = vshll.u32 %v1455, 16
        %v1610 = vrot.slane %v1608, 5
        %v1611 = vsel %vm1491, %v1606, %v1610
        %v1613 = vshrl.u32 %v1456, 16
        %v1615 = vrot.slane %v1613, 4
        %v1616 = vshll.u32 %v1456, 16
        %v1618 = vrot.slane %v1616, 5
        %v1619 = vor.u32 %v1615, %v1618
        %v1620 = vrot.slane %v1619, 4
        %v1622 = vshll.u32 %v1457, 16
        %v1624 = vrot.slane %v1622, 5
        %v1625 = vsel %vm1491, %v1620, %v1624
        %v1626 = vshrl.u32 %v1457, 16
        %v1628 = vrot.slane %v1626, 4
        %v1629 = vor.u32 %v1628, %v1624
        %v1630 = vrot.slane %v1629, 4
        %v1632 = vshll.u32 %v1458, 16
        %v1634 = vrot.slane %v1632, 5
        %v1635 = vsel %vm1491, %v1630, %v1634
        %v1637 = vshrl.u32 %v1459, 16
        %v1639 = vrot.slane %v1637, 4
        %v1640 = vshll.u32 %v1459, 16
        %v1642 = vrot.slane %v1640, 5
        %v1643 = vor.u32 %v1639, %v1642
        %v1644 = vrot.slane %v1643, 4
        %v1646 = vshll.u32 %v1460, 16
        %v1648 = vrot.slane %v1646, 5
        %v1649 = vsel %vm1491, %v1644, %v1648
        %v1650 = vshrl.u32 %v1460, 16
        %v1652 = vrot.slane %v1650, 4
        %v1653 = vor.u32 %v1652, %v1648
        %v1654 = vrot.slane %v1653, 4
        %v1656 = vshll.u32 %v1461, 16
        %v1658 = vrot.slane %v1656, 5
        %v1659 = vsel %vm1491, %v1654, %v1658
        %v1661 = vshrl.u32 %v1462, 16
        %v1663 = vrot.slane %v1661, 4
        %v1664 = vshll.u32 %v1462, 16
        %v1666 = vrot.slane %v1664, 5
        %v1667 = vor.u32 %v1663, %v1666
        %v1668 = vrot.slane %v1667, 4
        %v1670 = vshll.u32 %v1463, 16
        %v1672 = vrot.slane %v1670, 5
        %v1673 = vsel %vm1491, %v1668, %v1672
        %v1674 = vshrl.u32 %v1463, 16
        %v1676 = vrot.slane %v1674, 4
        %v1677 = vor.u32 %v1676, %v1672
        %v1678 = vrot.slane %v1677, 4
        %v1680 = vshll.u32 %v1464, 16
        %v1682 = vrot.slane %v1680, 5
        %v1683 = vsel %vm1491, %v1678, %v1682
        %v1685 = vshrl.u32 %v1465, 16
        %v1687 = vrot.slane %v1685, 4
        %v1688 = vshll.u32 %v1465, 16
        %v1690 = vrot.slane %v1688, 5
        %v1691 = vor.u32 %v1687, %v1690
        %v1692 = vrot.slane %v1691, 4
        %v1694 = vshll.u32 %v1466, 16
        %v1696 = vrot.slane %v1694, 5
        %v1697 = vsel %vm1491, %v1692, %v1696
        %v1698 = vshrl.u32 %v1466, 16
        %v1700 = vrot.slane %v1698, 4
        %v1701 = vor.u32 %v1700, %v1696
        %v1702 = vrot.slane %v1701, 4
        %v1704 = vshll.u32 %v1467, 16
        %v1706 = vrot.slane %v1704, 5
        %v1707 = vsel %vm1491, %v1702, %v1706
        %v1709 = vshrl.u32 %v1468, 16
        %v1711 = vrot.slane %v1709, 4
        %v1712 = vshll.u32 %v1468, 16
        %v1714 = vrot.slane %v1712, 5
        %v1715 = vor.u32 %v1711, %v1714
        %v1716 = vrot.slane %v1715, 4
        %v1718 = vshll.u32 %v1469, 16
        %v1720 = vrot.slane %v1718, 5
        %v1721 = vsel %vm1491, %v1716, %v1720
        %v1722 = vshrl.u32 %v1469, 16
        %v1724 = vrot.slane %v1722, 4
        %v1725 = vor.u32 %v1724, %v1720
        %v1726 = vrot.slane %v1725, 4
        %v1728 = vshll.u32 %v1470, 16
        %v1730 = vrot.slane %v1728, 5
        %v1731 = vsel %vm1491, %v1726, %v1730
        %v1733 = vshrl.u32 %v1471, 16
        %v1735 = vrot.slane %v1733, 4
        %v1736 = vshll.u32 %v1471, 16
        %v1738 = vrot.slane %v1736, 5
        %v1739 = vor.u32 %v1735, %v1738
        %v1740 = vrot.slane %v1739, 4
        %v1742 = vshll.u32 %v1472, 16
        %v1744 = vrot.slane %v1742, 5
        %v1745 = vsel %vm1491, %v1740, %v1744
        %v1746 = vshrl.u32 %v1472, 16
        %v1748 = vrot.slane %v1746, 4
        %v1749 = vor.u32 %v1748, %v1744
        %v1750 = vrot.slane %v1749, 4
        %v1752 = vshll.u32 %v1473, 16
        %v1754 = vrot.slane %v1752, 5
        %v1755 = vsel %vm1491, %v1750, %v1754
        %v1757 = vshrl.u32 %v1474, 16
        %v1759 = vrot.slane %v1757, 4
        %v1760 = vshll.u32 %v1474, 16
        %v1762 = vrot.slane %v1760, 5
        %v1763 = vor.u32 %v1759, %v1762
        %v1764 = vrot.slane %v1763, 4
        %v1766 = vshll.u32 %v1475, 16
        %v1768 = vrot.slane %v1766, 5
        %v1769 = vsel %vm1491, %v1764, %v1768
        %v1770 = vshrl.u32 %v1475, 16
        %v1772 = vrot.slane %v1770, 4
        %v1773 = vor.u32 %v1772, %v1768
        %v1774 = vrot.slane %v1773, 4
        %v1776 = vshll.u32 %v1476, 16
        %v1778 = vrot.slane %v1776, 5
        %v1779 = vsel %vm1491, %v1774, %v1778
        %v1781 = vshrl.u32 %v1477, 16
        %v1783 = vrot.slane %v1781, 4
        %v1784 = vshll.u32 %v1477, 16
        %v1786 = vrot.slane %v1784, 5
        %v1787 = vor.u32 %v1783, %v1786
        %v1788 = vrot.slane %v1787, 4
        %v1790 = vshll.u32 %v1478, 16
        %v1792 = vrot.slane %v1790, 5
        %v1793 = vsel %vm1491, %v1788, %v1792
        %v1794 = vshrl.u32 %v1478, 16
        %v1796 = vrot.slane %v1794, 4
        %v1797 = vor.u32 %v1796, %v1792
        %v1798 = vrot.slane %v1797, 4
        %v1800 = vshll.u32 %v1479, 16
        %v1802 = vrot.slane %v1800, 5
        %v1803 = vsel %vm1491, %v1798, %v1802
        %v1805 = vshrl.u32 %v1480, 16
        %v1807 = vrot.slane %v1805, 4
        %v1808 = vshll.u32 %v1480, 16
        %v1810 = vrot.slane %v1808, 5
        %v1811 = vor.u32 %v1807, %v1810
        %v1812 = vrot.slane %v1811, 4
        %v1814 = vshll.u32 %v1481, 16
        %v1816 = vrot.slane %v1814, 5
        %v1817 = vsel %vm1491, %v1812, %v1816
        %v1818 = vshrl.u32 %v1481, 16
        %v1820 = vrot.slane %v1818, 4
        %v1821 = vor.u32 %v1820, %v1816
        %v1822 = vrot.slane %v1821, 4
        %v1824 = vshll.u32 %v1482, 16
        %v1826 = vrot.slane %v1824, 5
        %v1827 = vsel %vm1491, %v1822, %v1826
        %v1829 = vshrl.u32 %v1483, 16
        %v1831 = vrot.slane %v1829, 4
        %v1832 = vshll.u32 %v1483, 16
        %v1834 = vrot.slane %v1832, 5
        %v1835 = vor.u32 %v1831, %v1834
        %v1836 = vrot.slane %v1835, 4
        %v1838 = vshll.u32 %v1484, 16
        %v1840 = vrot.slane %v1838, 5
        %v1841 = vsel %vm1491, %v1836, %v1840
        %v1842 = vshrl.u32 %v1484, 16
        %v1844 = vrot.slane %v1842, 4
        %v1845 = vor.u32 %v1844, %v1840
        %v1846 = vrot.slane %v1845, 4
        %v1848 = vshll.u32 %v1485, 16
        %v1850 = vrot.slane %v1848, 5
        %v1851 = vsel %vm1491, %v1846, %v1850
        %v1853 = vshrl.u32 %v1486, 16
        %v1855 = vrot.slane %v1853, 4
        %v1856 = vshll.u32 %v1486, 16
        %v1858 = vrot.slane %v1856, 5
        %v1859 = vor.u32 %v1855, %v1858
        %v1860 = vrot.slane %v1859, 4
        %v1862 = vshll.u32 %v1487, 16
        %v1864 = vrot.slane %v1862, 5
        %v1865 = vsel %vm1491, %v1860, %v1864
        %v1866 = vshrl.u32 %v1487, 16
        %v1868 = vrot.slane %v1866, 4
        %v1869 = vor.u32 %v1868, %v1864
        %v1870 = vrot.slane %v1869, 4
        %v1872 = vshll.u32 %v1488, 16
        %v1874 = vrot.slane %v1872, 5
        %v1875 = vsel %vm1491, %v1870, %v1874
        %s1876 = scalar_lea.vmem %s1, 8
        %v1877 = vld [vmem:[%s1876] sm:$0xf]
        %v1878 = vunpack.c.l.b16 %v1505
        %v1879 = vunpack.c.l.b16 %v1515
        %v1880 = vunpack.c.l.b16 %v1529
        %v1881 = vunpack.c.l.b16 %v1539
        %v1882 = vunpack.c.l.b16 %v1553
        %v1883 = vunpack.c.l.b16 %v1563
        %v1884 = vunpack.c.l.b16 %v1577
        %v1885 = vunpack.c.l.b16 %v1587
        %v1886 = vunpack.c.l.b16 %v1601
        %v1887 = vunpack.c.l.b16 %v1611
        %v1888 = vunpack.c.l.b16 %v1625
        %v1889 = vunpack.c.l.b16 %v1635
        %v1890 = vunpack.c.l.b16 %v1649
        %v1891 = vunpack.c.l.b16 %v1659
        %v1892 = vunpack.c.l.b16 %v1673
        %v1893 = vunpack.c.l.b16 %v1683
        %v1894 = vunpack.c.l.b16 %v1697
        %v1895 = vunpack.c.l.b16 %v1707
        %v1896 = vunpack.c.l.b16 %v1721
        %v1897 = vunpack.c.l.b16 %v1731
        %v1898 = vunpack.c.l.b16 %v1745
        %v1899 = vunpack.c.l.b16 %v1755
        %v1900 = vunpack.c.l.b16 %v1769
        %v1901 = vunpack.c.l.b16 %v1779
        %v1902 = vunpack.c.l.b16 %v1793
        %v1903 = vunpack.c.l.b16 %v1803
        %v1904 = vunpack.c.l.b16 %v1817
        %v1905 = vunpack.c.l.b16 %v1827
        %v1906 = vunpack.c.l.b16 %v1841
        %v1907 = vunpack.c.l.b16 %v1851
        %v1908 = vunpack.c.l.b16 %v1865
        %v1909 = vunpack.c.l.b16 %v1875
        %v1910 = vpack.c.b16 %v1879, %v1878
        %v1911 = vpack.c.b16 %v1881, %v1880
        %v1912 = vpack.c.b16 %v1883, %v1882
        %v1913 = vpack.c.b16 %v1885, %v1884
        %v1914 = vpack.c.b16 %v1887, %v1886
        %v1915 = vpack.c.b16 %v1889, %v1888
        %v1916 = vpack.c.b16 %v1891, %v1890
        %v1917 = vpack.c.b16 %v1893, %v1892
        %v1918 = vpack.c.b16 %v1895, %v1894
        %v1919 = vpack.c.b16 %v1897, %v1896
        %v1920 = vpack.c.b16 %v1899, %v1898
        %v1921 = vpack.c.b16 %v1901, %v1900
        %v1922 = vpack.c.b16 %v1903, %v1902
        %v1923 = vpack.c.b16 %v1905, %v1904
        %v1924 = vpack.c.b16 %v1907, %v1906
        %v1925 = vpack.c.b16 %v1909, %v1908
        %1927 = vst [vmem:[#allocation1] ss:$4 sm:$0xff] %v1877
        %v1928 = vld.sshfl [vmem:[#allocation1] sm:$0xff pattern:$0x73625140]
        %v1929 = vld.sshfl [vmem:[#allocation1 + $0x8] sm:$0xff pattern:$0x73625140]
        %v1931 = vsel %vm927, %v1910, 0
        %v1934 = vsel %vm927, %v1911, 0
        %v1937 = vsel %vm927, %v1912, 0
        %v1940 = vsel %vm927, %v1913, 0
        %v1943 = vsel %vm927, %v1914, 0
        %v1946 = vsel %vm927, %v1915, 0
        %v1949 = vsel %vm927, %v1916, 0
        %v1952 = vsel %vm927, %v1917, 0
        %v1955 = vsel %vm927, %v1918, 0
        %v1958 = vsel %vm927, %v1919, 0
        %v1961 = vsel %vm927, %v1920, 0
        %v1964 = vsel %vm927, %v1921, 0
        %v1967 = vsel %vm927, %v1922, 0
        %v1970 = vsel %vm927, %v1923, 0
        %v1973 = vsel %vm927, %v1924, 0
        %v1976 = vsel %vm927, %v1925, 0
        %v1978 = vsel %vm976, %v1928, 0
        %v1980 = vsel %vm976, %v1929, 0
        %1982 = vmatpush.bf16.msra.mxu0 0
        %1983 = vmatpush.bf16.msra.mxu0 0
        %1984 = vmatpush.bf16.msra.mxu0 0
        %1985 = vmatpush.bf16.msra.mxu0 0
        %1986 = vmatpush.bf16.msra.mxu0 0
        %1987 = vmatpush.bf16.msra.mxu0 0
        %1988 = vmatpush.bf16.msra.mxu0 0
        %1989 = vmatpush.bf16.msra.mxu0 %v1978
        %1990 = vmatmul.bf16.gmra.mxu0 %v1931
        %v1991 = vpop.f32.mrf.mxu0
        %v1992 = vadd.f32 0.0, %v1991
        %v1993 = vpop.f32.mrf.mxu0
        %v1994 = vadd.f32 0.0, %v1993
        %1995 = vmatmul.bf16.gmra.mxu0 %v1934
        %v1996 = vpop.f32.mrf.mxu0
        %v1997 = vadd.f32 0.0, %v1996
        %v1998 = vpop.f32.mrf.mxu0
        %v1999 = vadd.f32 0.0, %v1998
        %2000 = vmatmul.bf16.gmra.mxu0 %v1937
        %v2001 = vpop.f32.mrf.mxu0
        %v2002 = vadd.f32 0.0, %v2001
        %v2003 = vpop.f32.mrf.mxu0
        %v2004 = vadd.f32 0.0, %v2003
        %2005 = vmatmul.bf16.gmra.mxu0 %v1940
        %v2006 = vpop.f32.mrf.mxu0
        %v2007 = vadd.f32 0.0, %v2006
        %v2008 = vpop.f32.mrf.mxu0
        %v2009 = vadd.f32 0.0, %v2008
        %2010 = vmatmul.bf16.gmra.mxu0 %v1943
        %v2011 = vpop.f32.mrf.mxu0
        %v2012 = vadd.f32 0.0, %v2011
        %v2013 = vpop.f32.mrf.mxu0
        %v2014 = vadd.f32 0.0, %v2013
        %2015 = vmatmul.bf16.gmra.mxu0 %v1946
        %v2016 = vpop.f32.mrf.mxu0
        %v2017 = vadd.f32 0.0, %v2016
        %v2018 = vpop.f32.mrf.mxu0
        %v2019 = vadd.f32 0.0, %v2018
        %2020 = vmatmul.bf16.gmra.mxu0 %v1949
        %v2021 = vpop.f32.mrf.mxu0
        %v2022 = vadd.f32 0.0, %v2021
        %v2023 = vpop.f32.mrf.mxu0
        %v2024 = vadd.f32 0.0, %v2023
        %2025 = vmatmul.bf16.gmra.mxu0 %v1952
        %v2026 = vpop.f32.mrf.mxu0
        %v2027 = vadd.f32 0.0, %v2026
        %v2028 = vpop.f32.mrf.mxu0
        %v2029 = vadd.f32 0.0, %v2028
        %2030 = vmatmul.bf16.gmra.mxu0 %v1955
        %v2031 = vpop.f32.mrf.mxu0
        %v2032 = vadd.f32 0.0, %v2031
        %v2033 = vpop.f32.mrf.mxu0
        %v2034 = vadd.f32 0.0, %v2033
        %2035 = vmatmul.bf16.gmra.mxu0 %v1958
        %v2036 = vpop.f32.mrf.mxu0
        %v2037 = vadd.f32 0.0, %v2036
        %v2038 = vpop.f32.mrf.mxu0
        %v2039 = vadd.f32 0.0, %v2038
        %2040 = vmatmul.bf16.gmra.mxu0 %v1961
        %v2041 = vpop.f32.mrf.mxu0
        %v2042 = vadd.f32 0.0, %v2041
        %v2043 = vpop.f32.mrf.mxu0
        %v2044 = vadd.f32 0.0, %v2043
        %2045 = vmatmul.bf16.gmra.mxu0 %v1964
        %v2046 = vpop.f32.mrf.mxu0
        %v2047 = vadd.f32 0.0, %v2046
        %v2048 = vpop.f32.mrf.mxu0
        %v2049 = vadd.f32 0.0, %v2048
        %2050 = vmatmul.bf16.gmra.mxu0 %v1967
        %v2051 = vpop.f32.mrf.mxu0
        %v2052 = vadd.f32 0.0, %v2051
        %v2053 = vpop.f32.mrf.mxu0
        %v2054 = vadd.f32 0.0, %v2053
        %2055 = vmatmul.bf16.gmra.mxu0 %v1970
        %v2056 = vpop.f32.mrf.mxu0
        %v2057 = vadd.f32 0.0, %v2056
        %v2058 = vpop.f32.mrf.mxu0
        %v2059 = vadd.f32 0.0, %v2058
        %2060 = vmatmul.bf16.gmra.mxu0 %v1973
        %v2061 = vpop.f32.mrf.mxu0
        %v2062 = vadd.f32 0.0, %v2061
        %v2063 = vpop.f32.mrf.mxu0
        %v2064 = vadd.f32 0.0, %v2063
        %2065 = vmatmul.bf16.gmra.mxu0 %v1976
        %v2066 = vpop.f32.mrf.mxu0
        %v2067 = vadd.f32 0.0, %v2066
        %v2068 = vpop.f32.mrf.mxu0
        %v2069 = vadd.f32 0.0, %v2068
        %2070 = vdwg.mxu0
        %2071 = vmatpush.bf16.msra.mxu0 0
        %2072 = vmatpush.bf16.msra.mxu0 0
        %2073 = vmatpush.bf16.msra.mxu0 0
        %2074 = vmatpush.bf16.msra.mxu0 0
        %2075 = vmatpush.bf16.msra.mxu0 0
        %2076 = vmatpush.bf16.msra.mxu0 0
        %2077 = vmatpush.bf16.msra.mxu0 0
        %2078 = vmatpush.bf16.msra.mxu0 %v1980
        %2079 = vmatmul.bf16.gmra.mxu0 %v1931
        %v2080 = vpop.f32.mrf.mxu0
        %v2081 = vadd.f32 0.0, %v2080
        %v2082 = vpop.f32.mrf.mxu0
        %v2083 = vadd.f32 0.0, %v2082
        %2084 = vmatmul.bf16.gmra.mxu0 %v1934
        %v2085 = vpop.f32.mrf.mxu0
        %v2086 = vadd.f32 0.0, %v2085
        %v2087 = vpop.f32.mrf.mxu0
        %v2088 = vadd.f32 0.0, %v2087
        %2089 = vmatmul.bf16.gmra.mxu0 %v1937
        %v2090 = vpop.f32.mrf.mxu0
        %v2091 = vadd.f32 0.0, %v2090
        %v2092 = vpop.f32.mrf.mxu0
        %v2093 = vadd.f32 0.0, %v2092
        %2094 = vmatmul.bf16.gmra.mxu0 %v1940
        %v2095 = vpop.f32.mrf.mxu0
        %v2096 = vadd.f32 0.0, %v2095
        %v2097 = vpop.f32.mrf.mxu0
        %v2098 = vadd.f32 0.0, %v2097
        %2099 = vmatmul.bf16.gmra.mxu0 %v1943
        %v2100 = vpop.f32.mrf.mxu0
        %v2101 = vadd.f32 0.0, %v2100
        %v2102 = vpop.f32.mrf.mxu0
        %v2103 = vadd.f32 0.0, %v2102
        %2104 = vmatmul.bf16.gmra.mxu0 %v1946
        %v2105 = vpop.f32.mrf.mxu0
        %v2106 = vadd.f32 0.0, %v2105
        %v2107 = vpop.f32.mrf.mxu0
        %v2108 = vadd.f32 0.0, %v2107
        %2109 = vmatmul.bf16.gmra.mxu0 %v1949
        %v2110 = vpop.f32.mrf.mxu0
        %v2111 = vadd.f32 0.0, %v2110
        %v2112 = vpop.f32.mrf.mxu0
        %v2113 = vadd.f32 0.0, %v2112
        %2114 = vmatmul.bf16.gmra.mxu0 %v1952
        %v2115 = vpop.f32.mrf.mxu0
        %v2116 = vadd.f32 0.0, %v2115
        %v2117 = vpop.f32.mrf.mxu0
        %v2118 = vadd.f32 0.0, %v2117
        %2119 = vmatmul.bf16.gmra.mxu0 %v1955
        %v2120 = vpop.f32.mrf.mxu0
        %v2121 = vadd.f32 0.0, %v2120
        %v2122 = vpop.f32.mrf.mxu0
        %v2123 = vadd.f32 0.0, %v2122
        %2124 = vmatmul.bf16.gmra.mxu0 %v1958
        %v2125 = vpop.f32.mrf.mxu0
        %v2126 = vadd.f32 0.0, %v2125
        %v2127 = vpop.f32.mrf.mxu0
        %v2128 = vadd.f32 0.0, %v2127
        %2129 = vmatmul.bf16.gmra.mxu0 %v1961
        %v2130 = vpop.f32.mrf.mxu0
        %v2131 = vadd.f32 0.0, %v2130
        %v2132 = vpop.f32.mrf.mxu0
        %v2133 = vadd.f32 0.0, %v2132
        %2134 = vmatmul.bf16.gmra.mxu0 %v1964
        %v2135 = vpop.f32.mrf.mxu0
        %v2136 = vadd.f32 0.0, %v2135
        %v2137 = vpop.f32.mrf.mxu0
        %v2138 = vadd.f32 0.0, %v2137
        %2139 = vmatmul.bf16.gmra.mxu0 %v1967
        %v2140 = vpop.f32.mrf.mxu0
        %v2141 = vadd.f32 0.0, %v2140
        %v2142 = vpop.f32.mrf.mxu0
        %v2143 = vadd.f32 0.0, %v2142
        %2144 = vmatmul.bf16.gmra.mxu0 %v1970
        %v2145 = vpop.f32.mrf.mxu0
        %v2146 = vadd.f32 0.0, %v2145
        %v2147 = vpop.f32.mrf.mxu0
        %v2148 = vadd.f32 0.0, %v2147
        %2149 = vmatmul.bf16.gmra.mxu0 %v1973
        %v2150 = vpop.f32.mrf.mxu0
        %v2151 = vadd.f32 0.0, %v2150
        %v2152 = vpop.f32.mrf.mxu0
        %v2153 = vadd.f32 0.0, %v2152
        %2154 = vmatmul.bf16.gmra.mxu0 %v1976
        %v2155 = vpop.f32.mrf.mxu0
        %v2156 = vadd.f32 0.0, %v2155
        %v2157 = vpop.f32.mrf.mxu0
        %v2158 = vadd.f32 0.0, %v2157
        %2159 = vdwg.mxu0
        %v2160 = vadd.f32 %v1273, %v1992
        %v2161 = vadd.f32 %v1362, %v2081
        %v2162 = vadd.f32 %v1275, %v1994
        %v2163 = vadd.f32 %v1364, %v2083
        %v2164 = vadd.f32 %v1278, %v1997
        %v2165 = vadd.f32 %v1367, %v2086
        %v2166 = vadd.f32 %v1280, %v1999
        %v2167 = vadd.f32 %v1369, %v2088
        %v2168 = vadd.f32 %v1283, %v2002
        %v2169 = vadd.f32 %v1372, %v2091
        %v2170 = vadd.f32 %v1285, %v2004
        %v2171 = vadd.f32 %v1374, %v2093
        %v2172 = vadd.f32 %v1288, %v2007
        %v2173 = vadd.f32 %v1377, %v2096
        %v2174 = vadd.f32 %v1290, %v2009
        %v2175 = vadd.f32 %v1379, %v2098
        %v2176 = vadd.f32 %v1293, %v2012
        %v2177 = vadd.f32 %v1382, %v2101
        %v2178 = vadd.f32 %v1295, %v2014
        %v2179 = vadd.f32 %v1384, %v2103
        %v2180 = vadd.f32 %v1298, %v2017
        %v2181 = vadd.f32 %v1387, %v2106
        %v2182 = vadd.f32 %v1300, %v2019
        %v2183 = vadd.f32 %v1389, %v2108
        %v2184 = vadd.f32 %v1303, %v2022
        %v2185 = vadd.f32 %v1392, %v2111
        %v2186 = vadd.f32 %v1305, %v2024
        %v2187 = vadd.f32 %v1394, %v2113
        %v2188 = vadd.f32 %v1308, %v2027
        %v2189 = vadd.f32 %v1397, %v2116
        %v2190 = vadd.f32 %v1310, %v2029
        %v2191 = vadd.f32 %v1399, %v2118
        %v2192 = vadd.f32 %v1313, %v2032
        %v2193 = vadd.f32 %v1402, %v2121
        %v2194 = vadd.f32 %v1315, %v2034
        %v2195 = vadd.f32 %v1404, %v2123
        %v2196 = vadd.f32 %v1318, %v2037
        %v2197 = vadd.f32 %v1407, %v2126
        %v2198 = vadd.f32 %v1320, %v2039
        %v2199 = vadd.f32 %v1409, %v2128
        %v2200 = vadd.f32 %v1323, %v2042
        %v2201 = vadd.f32 %v1412, %v2131
        %v2202 = vadd.f32 %v1325, %v2044
        %v2203 = vadd.f32 %v1414, %v2133
        %v2204 = vadd.f32 %v1328, %v2047
        %v2205 = vadd.f32 %v1417, %v2136
        %v2206 = vadd.f32 %v1330, %v2049
        %v2207 = vadd.f32 %v1419, %v2138
        %v2208 = vadd.f32 %v1333, %v2052
        %v2209 = vadd.f32 %v1422, %v2141
        %v2210 = vadd.f32 %v1335, %v2054
        %v2211 = vadd.f32 %v1424, %v2143
        %v2212 = vadd.f32 %v1338, %v2057
        %v2213 = vadd.f32 %v1427, %v2146
        %v2214 = vadd.f32 %v1340, %v2059
        %v2215 = vadd.f32 %v1429, %v2148
        %v2216 = vadd.f32 %v1343, %v2062
        %v2217 = vadd.f32 %v1432, %v2151
        %v2218 = vadd.f32 %v1345, %v2064
        %v2219 = vadd.f32 %v1434, %v2153
        %v2220 = vadd.f32 %v1348, %v2067
        %v2221 = vadd.f32 %v1437, %v2156
        %v2222 = vadd.f32 %v1350, %v2069
        %v2223 = vadd.f32 %v1439, %v2158
        %v2224 = vld [vmem:[%s405 + $0x4] sm:$0x8]
        %v2225 = vld [vmem:[%s405 + $0x8] sm:$0xf]
        %v2226 = vld [vmem:[%s405 + $0xc] sm:$0xf]
        %v2227 = vld [vmem:[%s405 + $0x18] sm:$0x8]
        %v2228 = vld [vmem:[%s405 + $0x1c] sm:$0xf]
        %v2229 = vld [vmem:[%s405 + $0x20] sm:$0xf]
        %v2230 = vld [vmem:[%s405 + $0x2c] sm:$0x8]
        %v2231 = vld [vmem:[%s405 + $0x30] sm:$0xf]
        %v2232 = vld [vmem:[%s405 + $0x34] sm:$0xf]
        %v2233 = vld [vmem:[%s405 + $0x40] sm:$0x8]
        %v2234 = vld [vmem:[%s405 + $0x44] sm:$0xf]
        %v2235 = vld [vmem:[%s405 + $0x48] sm:$0xf]
        %v2236 = vld [vmem:[%s405 + $0x54] sm:$0x8]
        %v2237 = vld [vmem:[%s405 + $0x58] sm:$0xf]
        %v2238 = vld [vmem:[%s405 + $0x5c] sm:$0xf]
        %v2239 = vld [vmem:[%s405 + $0x68] sm:$0x8]
        %v2240 = vld [vmem:[%s405 + $0x6c] sm:$0xf]
        %v2241 = vld [vmem:[%s405 + $0x70] sm:$0xf]
        %v2242 = vld [vmem:[%s405 + $0x7c] sm:$0x8]
        %v2243 = vld [vmem:[%s405 + $0x80] sm:$0xf]
        %v2244 = vld [vmem:[%s405 + $0x84] sm:$0xf]
        %v2245 = vld [vmem:[%s405 + $0x90] sm:$0x8]
        %v2246 = vld [vmem:[%s405 + $0x94] sm:$0xf]
        %v2247 = vld [vmem:[%s405 + $0x98] sm:$0xf]
        %v2248 = vld [vmem:[%s405 + $0xa4] sm:$0x8]
        %v2249 = vld [vmem:[%s405 + $0xa8] sm:$0xf]
        %v2250 = vld [vmem:[%s405 + $0xac] sm:$0xf]
        %v2251 = vld [vmem:[%s405 + $0xb8] sm:$0x8]
        %v2252 = vld [vmem:[%s405 + $0xbc] sm:$0xf]
        %v2253 = vld [vmem:[%s405 + $0xc0] sm:$0xf]
        %v2254 = vld [vmem:[%s405 + $0xcc] sm:$0x8]
        %v2255 = vld [vmem:[%s405 + $0xd0] sm:$0xf]
        %v2256 = vld [vmem:[%s405 + $0xd4] sm:$0xf]
        %v2257 = vld [vmem:[%s405 + $0xe0] sm:$0x8]
        %v2258 = vld [vmem:[%s405 + $0xe4] sm:$0xf]
        %v2259 = vld [vmem:[%s405 + $0xe8] sm:$0xf]
        %v2260 = vld [vmem:[%s405 + $0xf4] sm:$0x8]
        %v2261 = vld [vmem:[%s405 + $0xf8] sm:$0xf]
        %v2262 = vld [vmem:[%s405 + $0xfc] sm:$0xf]
        %v2263 = vld [vmem:[%s405 + $0x108] sm:$0x8]
        %v2264 = vld [vmem:[%s405 + $0x10c] sm:$0xf]
        %v2265 = vld [vmem:[%s405 + $0x110] sm:$0xf]
        %v2266 = vld [vmem:[%s405 + $0x11c] sm:$0x8]
        %v2267 = vld [vmem:[%s405 + $0x120] sm:$0xf]
        %v2268 = vld [vmem:[%s405 + $0x124] sm:$0xf]
        %v2269 = vld [vmem:[%s405 + $0x130] sm:$0x8]
        %v2270 = vld [vmem:[%s405 + $0x134] sm:$0xf]
        %v2271 = vld [vmem:[%s405 + $0x138] sm:$0xf]
        %v2273 = vshrl.u32 %v2224, 16
        %v2275 = vrot.slane %v2273, 7
        %v2276 = vrot.slane %v2275, 4
        %v2278 = vshrl.u32 %v2225, 16
        %v2280 = vrot.slane %v2278, 7
        %v2281 = vshll.u32 %v2225, 16
        %v2283 = vor.u32 %v2280, %v2281
        %v2284 = vsel %vm487, %v2276, %v2283
        %v2285 = vrot.slane %v2280, 4
        %v2287 = vshrl.u32 %v2226, 16
        %v2289 = vrot.slane %v2287, 7
        %v2290 = vshll.u32 %v2226, 16
        %v2292 = vor.u32 %v2289, %v2290
        %v2293 = vsel %vm487, %v2285, %v2292
        %v2295 = vshrl.u32 %v2227, 16
        %v2297 = vrot.slane %v2295, 7
        %v2298 = vrot.slane %v2297, 4
        %v2300 = vshrl.u32 %v2228, 16
        %v2302 = vrot.slane %v2300, 7
        %v2303 = vshll.u32 %v2228, 16
        %v2305 = vor.u32 %v2302, %v2303
        %v2306 = vsel %vm487, %v2298, %v2305
        %v2307 = vrot.slane %v2302, 4
        %v2309 = vshrl.u32 %v2229, 16
        %v2311 = vrot.slane %v2309, 7
        %v2312 = vshll.u32 %v2229, 16
        %v2314 = vor.u32 %v2311, %v2312
        %v2315 = vsel %vm487, %v2307, %v2314
        %v2317 = vshrl.u32 %v2230, 16
        %v2319 = vrot.slane %v2317, 7
        %v2320 = vrot.slane %v2319, 4
        %v2322 = vshrl.u32 %v2231, 16
        %v2324 = vrot.slane %v2322, 7
        %v2325 = vshll.u32 %v2231, 16
        %v2327 = vor.u32 %v2324, %v2325
        %v2328 = vsel %vm487, %v2320, %v2327
        %v2329 = vrot.slane %v2324, 4
        %v2331 = vshrl.u32 %v2232, 16
        %v2333 = vrot.slane %v2331, 7
        %v2334 = vshll.u32 %v2232, 16
        %v2336 = vor.u32 %v2333, %v2334
        %v2337 = vsel %vm487, %v2329, %v2336
        %v2339 = vshrl.u32 %v2233, 16
        %v2341 = vrot.slane %v2339, 7
        %v2342 = vrot.slane %v2341, 4
        %v2344 = vshrl.u32 %v2234, 16
        %v2346 = vrot.slane %v2344, 7
        %v2347 = vshll.u32 %v2234, 16
        %v2349 = vor.u32 %v2346, %v2347
        %v2350 = vsel %vm487, %v2342, %v2349
        %v2351 = vrot.slane %v2346, 4
        %v2353 = vshrl.u32 %v2235, 16
        %v2355 = vrot.slane %v2353, 7
        %v2356 = vshll.u32 %v2235, 16
        %v2358 = vor.u32 %v2355, %v2356
        %v2359 = vsel %vm487, %v2351, %v2358
        %v2361 = vshrl.u32 %v2236, 16
        %v2363 = vrot.slane %v2361, 7
        %v2364 = vrot.slane %v2363, 4
        %v2366 = vshrl.u32 %v2237, 16
        %v2368 = vrot.slane %v2366, 7
        %v2369 = vshll.u32 %v2237, 16
        %v2371 = vor.u32 %v2368, %v2369
        %v2372 = vsel %vm487, %v2364, %v2371
        %v2373 = vrot.slane %v2368, 4
        %v2375 = vshrl.u32 %v2238, 16
        %v2377 = vrot.slane %v2375, 7
        %v2378 = vshll.u32 %v2238, 16
        %v2380 = vor.u32 %v2377, %v2378
        %v2381 = vsel %vm487, %v2373, %v2380
        %v2383 = vshrl.u32 %v2239, 16
        %v2385 = vrot.slane %v2383, 7
        %v2386 = vrot.slane %v2385, 4
        %v2388 = vshrl.u32 %v2240, 16
        %v2390 = vrot.slane %v2388, 7
        %v2391 = vshll.u32 %v2240, 16
        %v2393 = vor.u32 %v2390, %v2391
        %v2394 = vsel %vm487, %v2386, %v2393
        %v2395 = vrot.slane %v2390, 4
        %v2397 = vshrl.u32 %v2241, 16
        %v2399 = vrot.slane %v2397, 7
        %v2400 = vshll.u32 %v2241, 16
        %v2402 = vor.u32 %v2399, %v2400
        %v2403 = vsel %vm487, %v2395, %v2402
        %v2405 = vshrl.u32 %v2242, 16
        %v2407 = vrot.slane %v2405, 7
        %v2408 = vrot.slane %v2407, 4
        %v2410 = vshrl.u32 %v2243, 16
        %v2412 = vrot.slane %v2410, 7
        %v2413 = vshll.u32 %v2243, 16
        %v2415 = vor.u32 %v2412, %v2413
        %v2416 = vsel %vm487, %v2408, %v2415
        %v2417 = vrot.slane %v2412, 4
        %v2419 = vshrl.u32 %v2244, 16
        %v2421 = vrot.slane %v2419, 7
        %v2422 = vshll.u32 %v2244, 16
        %v2424 = vor.u32 %v2421, %v2422
        %v2425 = vsel %vm487, %v2417, %v2424
        %v2427 = vshrl.u32 %v2245, 16
        %v2429 = vrot.slane %v2427, 7
        %v2430 = vrot.slane %v2429, 4
        %v2432 = vshrl.u32 %v2246, 16
        %v2434 = vrot.slane %v2432, 7
        %v2435 = vshll.u32 %v2246, 16
        %v2437 = vor.u32 %v2434, %v2435
        %v2438 = vsel %vm487, %v2430, %v2437
        %v2439 = vrot.slane %v2434, 4
        %v2441 = vshrl.u32 %v2247, 16
        %v2443 = vrot.slane %v2441, 7
        %v2444 = vshll.u32 %v2247, 16
        %v2446 = vor.u32 %v2443, %v2444
        %v2447 = vsel %vm487, %v2439, %v2446
        %v2449 = vshrl.u32 %v2248, 16
        %v2451 = vrot.slane %v2449, 7
        %v2452 = vrot.slane %v2451, 4
        %v2454 = vshrl.u32 %v2249, 16
        %v2456 = vrot.slane %v2454, 7
        %v2457 = vshll.u32 %v2249, 16
        %v2459 = vor.u32 %v2456, %v2457
        %v2460 = vsel %vm487, %v2452, %v2459
        %v2461 = vrot.slane %v2456, 4
        %v2463 = vshrl.u32 %v2250, 16
        %v2465 = vrot.slane %v2463, 7
        %v2466 = vshll.u32 %v2250, 16
        %v2468 = vor.u32 %v2465, %v2466
        %v2469 = vsel %vm487, %v2461, %v2468
        %v2471 = vshrl.u32 %v2251, 16
        %v2473 = vrot.slane %v2471, 7
        %v2474 = vrot.slane %v2473, 4
        %v2476 = vshrl.u32 %v2252, 16
        %v2478 = vrot.slane %v2476, 7
        %v2479 = vshll.u32 %v2252, 16
        %v2481 = vor.u32 %v2478, %v2479
        %v2482 = vsel %vm487, %v2474, %v2481
        %v2483 = vrot.slane %v2478, 4
        %v2485 = vshrl.u32 %v2253, 16
        %v2487 = vrot.slane %v2485, 7
        %v2488 = vshll.u32 %v2253, 16
        %v2490 = vor.u32 %v2487, %v2488
        %v2491 = vsel %vm487, %v2483, %v2490
        %v2493 = vshrl.u32 %v2254, 16
        %v2495 = vrot.slane %v2493, 7
        %v2496 = vrot.slane %v2495, 4
        %v2498 = vshrl.u32 %v2255, 16
        %v2500 = vrot.slane %v2498, 7
        %v2501 = vshll.u32 %v2255, 16
        %v2503 = vor.u32 %v2500, %v2501
        %v2504 = vsel %vm487, %v2496, %v2503
        %v2505 = vrot.slane %v2500, 4
        %v2507 = vshrl.u32 %v2256, 16
        %v2509 = vrot.slane %v2507, 7
        %v2510 = vshll.u32 %v2256, 16
        %v2512 = vor.u32 %v2509, %v2510
        %v2513 = vsel %vm487, %v2505, %v2512
        %v2515 = vshrl.u32 %v2257, 16
        %v2517 = vrot.slane %v2515, 7
        %v2518 = vrot.slane %v2517, 4
        %v2520 = vshrl.u32 %v2258, 16
        %v2522 = vrot.slane %v2520, 7
        %v2523 = vshll.u32 %v2258, 16
        %v2525 = vor.u32 %v2522, %v2523
        %v2526 = vsel %vm487, %v2518, %v2525
        %v2527 = vrot.slane %v2522, 4
        %v2529 = vshrl.u32 %v2259, 16
        %v2531 = vrot.slane %v2529, 7
        %v2532 = vshll.u32 %v2259, 16
        %v2534 = vor.u32 %v2531, %v2532
        %v2535 = vsel %vm487, %v2527, %v2534
        %v2537 = vshrl.u32 %v2260, 16
        %v2539 = vrot.slane %v2537, 7
        %v2540 = vrot.slane %v2539, 4
        %v2542 = vshrl.u32 %v2261, 16
        %v2544 = vrot.slane %v2542, 7
        %v2545 = vshll.u32 %v2261, 16
        %v2547 = vor.u32 %v2544, %v2545
        %v2548 = vsel %vm487, %v2540, %v2547
        %v2549 = vrot.slane %v2544, 4
        %v2551 = vshrl.u32 %v2262, 16
        %v2553 = vrot.slane %v2551, 7
        %v2554 = vshll.u32 %v2262, 16
        %v2556 = vor.u32 %v2553, %v2554
        %v2557 = vsel %vm487, %v2549, %v2556
        %v2559 = vshrl.u32 %v2263, 16
        %v2561 = vrot.slane %v2559, 7
        %v2562 = vrot.slane %v2561, 4
        %v2564 = vshrl.u32 %v2264, 16
        %v2566 = vrot.slane %v2564, 7
        %v2567 = vshll.u32 %v2264, 16
        %v2569 = vor.u32 %v2566, %v2567
        %v2570 = vsel %vm487, %v2562, %v2569
        %v2571 = vrot.slane %v2566, 4
        %v2573 = vshrl.u32 %v2265, 16
        %v2575 = vrot.slane %v2573, 7
        %v2576 = vshll.u32 %v2265, 16
        %v2578 = vor.u32 %v2575, %v2576
        %v2579 = vsel %vm487, %v2571, %v2578
        %v2581 = vshrl.u32 %v2266, 16
        %v2583 = vrot.slane %v2581, 7
        %v2584 = vrot.slane %v2583, 4
        %v2586 = vshrl.u32 %v2267, 16
        %v2588 = vrot.slane %v2586, 7
        %v2589 = vshll.u32 %v2267, 16
        %v2591 = vor.u32 %v2588, %v2589
        %v2592 = vsel %vm487, %v2584, %v2591
        %v2593 = vrot.slane %v2588, 4
        %v2595 = vshrl.u32 %v2268, 16
        %v2597 = vrot.slane %v2595, 7
        %v2598 = vshll.u32 %v2268, 16
        %v2600 = vor.u32 %v2597, %v2598
        %v2601 = vsel %vm487, %v2593, %v2600
        %v2603 = vshrl.u32 %v2269, 16
        %v2605 = vrot.slane %v2603, 7
        %v2606 = vrot.slane %v2605, 4
        %v2608 = vshrl.u32 %v2270, 16
        %v2610 = vrot.slane %v2608, 7
        %v2611 = vshll.u32 %v2270, 16
        %v2613 = vor.u32 %v2610, %v2611
        %v2614 = vsel %vm487, %v2606, %v2613
        %v2615 = vrot.slane %v2610, 4
        %v2617 = vshrl.u32 %v2271, 16
        %v2619 = vrot.slane %v2617, 7
        %v2620 = vshll.u32 %v2271, 16
        %v2622 = vor.u32 %v2619, %v2620
        %v2623 = vsel %vm487, %v2615, %v2622
        %s2624 = scalar_lea.vmem %s1, 12
        %v2625 = vld [vmem:[%s2624] sm:$0xf]
        %v2626 = vunpack.c.l.b16 %v2284
        %v2627 = vunpack.c.l.b16 %v2293
        %v2628 = vunpack.c.l.b16 %v2306
        %v2629 = vunpack.c.l.b16 %v2315
        %v2630 = vunpack.c.l.b16 %v2328
        %v2631 = vunpack.c.l.b16 %v2337
        %v2632 = vunpack.c.l.b16 %v2350
        %v2633 = vunpack.c.l.b16 %v2359
        %v2634 = vunpack.c.l.b16 %v2372
        %v2635 = vunpack.c.l.b16 %v2381
        %v2636 = vunpack.c.l.b16 %v2394
        %v2637 = vunpack.c.l.b16 %v2403
        %v2638 = vunpack.c.l.b16 %v2416
        %v2639 = vunpack.c.l.b16 %v2425
        %v2640 = vunpack.c.l.b16 %v2438
        %v2641 = vunpack.c.l.b16 %v2447
        %v2642 = vunpack.c.l.b16 %v2460
        %v2643 = vunpack.c.l.b16 %v2469
        %v2644 = vunpack.c.l.b16 %v2482
        %v2645 = vunpack.c.l.b16 %v2491
        %v2646 = vunpack.c.l.b16 %v2504
        %v2647 = vunpack.c.l.b16 %v2513
        %v2648 = vunpack.c.l.b16 %v2526
        %v2649 = vunpack.c.l.b16 %v2535
        %v2650 = vunpack.c.l.b16 %v2548
        %v2651 = vunpack.c.l.b16 %v2557
        %v2652 = vunpack.c.l.b16 %v2570
        %v2653 = vunpack.c.l.b16 %v2579
        %v2654 = vunpack.c.l.b16 %v2592
        %v2655 = vunpack.c.l.b16 %v2601
        %v2656 = vunpack.c.l.b16 %v2614
        %v2657 = vunpack.c.l.b16 %v2623
        %v2658 = vpack.c.b16 %v2627, %v2626
        %v2659 = vpack.c.b16 %v2629, %v2628
        %v2660 = vpack.c.b16 %v2631, %v2630
        %v2661 = vpack.c.b16 %v2633, %v2632
        %v2662 = vpack.c.b16 %v2635, %v2634
        %v2663 = vpack.c.b16 %v2637, %v2636
        %v2664 = vpack.c.b16 %v2639, %v2638
        %v2665 = vpack.c.b16 %v2641, %v2640
        %v2666 = vpack.c.b16 %v2643, %v2642
        %v2667 = vpack.c.b16 %v2645, %v2644
        %v2668 = vpack.c.b16 %v2647, %v2646
        %v2669 = vpack.c.b16 %v2649, %v2648
        %v2670 = vpack.c.b16 %v2651, %v2650
        %v2671 = vpack.c.b16 %v2653, %v2652
        %v2672 = vpack.c.b16 %v2655, %v2654
        %v2673 = vpack.c.b16 %v2657, %v2656
        %2675 = vst [vmem:[#allocation1] ss:$4 sm:$0xff] %v2625
        %v2676 = vld.sshfl [vmem:[#allocation1] sm:$0xff pattern:$0x73625140]
        %v2677 = vld.sshfl [vmem:[#allocation1 + $0x8] sm:$0xff pattern:$0x73625140]
        %v2679 = vsel %vm927, %v2658, 0
        %v2682 = vsel %vm927, %v2659, 0
        %v2685 = vsel %vm927, %v2660, 0
        %v2688 = vsel %vm927, %v2661, 0
        %v2691 = vsel %vm927, %v2662, 0
        %v2694 = vsel %vm927, %v2663, 0
        %v2697 = vsel %vm927, %v2664, 0
        %v2700 = vsel %vm927, %v2665, 0
        %v2703 = vsel %vm927, %v2666, 0
        %v2706 = vsel %vm927, %v2667, 0
        %v2709 = vsel %vm927, %v2668, 0
        %v2712 = vsel %vm927, %v2669, 0
        %v2715 = vsel %vm927, %v2670, 0
        %v2718 = vsel %vm927, %v2671, 0
        %v2721 = vsel %vm927, %v2672, 0
        %v2724 = vsel %vm927, %v2673, 0
        %v2726 = vsel %vm976, %v2676, 0
        %v2728 = vsel %vm976, %v2677, 0
        %2730 = vmatpush.bf16.msra.mxu0 0
        %2731 = vmatpush.bf16.msra.mxu0 0
        %2732 = vmatpush.bf16.msra.mxu0 0
        %2733 = vmatpush.bf16.msra.mxu0 0
        %2734 = vmatpush.bf16.msra.mxu0 0
        %2735 = vmatpush.bf16.msra.mxu0 0
        %2736 = vmatpush.bf16.msra.mxu0 0
        %2737 = vmatpush.bf16.msra.mxu0 %v2726
        %2738 = vmatmul.bf16.gmra.mxu0 %v2679
        %v2739 = vpop.f32.mrf.mxu0
        %v2740 = vadd.f32 0.0, %v2739
        %v2741 = vpop.f32.mrf.mxu0
        %v2742 = vadd.f32 0.0, %v2741
        %2743 = vmatmul.bf16.gmra.mxu0 %v2682
        %v2744 = vpop.f32.mrf.mxu0
        %v2745 = vadd.f32 0.0, %v2744
        %v2746 = vpop.f32.mrf.mxu0
        %v2747 = vadd.f32 0.0, %v2746
        %2748 = vmatmul.bf16.gmra.mxu0 %v2685
        %v2749 = vpop.f32.mrf.mxu0
        %v2750 = vadd.f32 0.0, %v2749
        %v2751 = vpop.f32.mrf.mxu0
        %v2752 = vadd.f32 0.0, %v2751
        %2753 = vmatmul.bf16.gmra.mxu0 %v2688
        %v2754 = vpop.f32.mrf.mxu0
        %v2755 = vadd.f32 0.0, %v2754
        %v2756 = vpop.f32.mrf.mxu0
        %v2757 = vadd.f32 0.0, %v2756
        %2758 = vmatmul.bf16.gmra.mxu0 %v2691
        %v2759 = vpop.f32.mrf.mxu0
        %v2760 = vadd.f32 0.0, %v2759
        %v2761 = vpop.f32.mrf.mxu0
        %v2762 = vadd.f32 0.0, %v2761
        %2763 = vmatmul.bf16.gmra.mxu0 %v2694
        %v2764 = vpop.f32.mrf.mxu0
        %v2765 = vadd.f32 0.0, %v2764
        %v2766 = vpop.f32.mrf.mxu0
        %v2767 = vadd.f32 0.0, %v2766
        %2768 = vmatmul.bf16.gmra.mxu0 %v2697
        %v2769 = vpop.f32.mrf.mxu0
        %v2770 = vadd.f32 0.0, %v2769
        %v2771 = vpop.f32.mrf.mxu0
        %v2772 = vadd.f32 0.0, %v2771
        %2773 = vmatmul.bf16.gmra.mxu0 %v2700
        %v2774 = vpop.f32.mrf.mxu0
        %v2775 = vadd.f32 0.0, %v2774
        %v2776 = vpop.f32.mrf.mxu0
        %v2777 = vadd.f32 0.0, %v2776
        %2778 = vmatmul.bf16.gmra.mxu0 %v2703
        %v2779 = vpop.f32.mrf.mxu0
        %v2780 = vadd.f32 0.0, %v2779
        %v2781 = vpop.f32.mrf.mxu0
        %v2782 = vadd.f32 0.0, %v2781
        %2783 = vmatmul.bf16.gmra.mxu0 %v2706
        %v2784 = vpop.f32.mrf.mxu0
        %v2785 = vadd.f32 0.0, %v2784
        %v2786 = vpop.f32.mrf.mxu0
        %v2787 = vadd.f32 0.0, %v2786
        %2788 = vmatmul.bf16.gmra.mxu0 %v2709
        %v2789 = vpop.f32.mrf.mxu0
        %v2790 = vadd.f32 0.0, %v2789
        %v2791 = vpop.f32.mrf.mxu0
        %v2792 = vadd.f32 0.0, %v2791
        %2793 = vmatmul.bf16.gmra.mxu0 %v2712
        %v2794 = vpop.f32.mrf.mxu0
        %v2795 = vadd.f32 0.0, %v2794
        %v2796 = vpop.f32.mrf.mxu0
        %v2797 = vadd.f32 0.0, %v2796
        %2798 = vmatmul.bf16.gmra.mxu0 %v2715
        %v2799 = vpop.f32.mrf.mxu0
        %v2800 = vadd.f32 0.0, %v2799
        %v2801 = vpop.f32.mrf.mxu0
        %v2802 = vadd.f32 0.0, %v2801
        %2803 = vmatmul.bf16.gmra.mxu0 %v2718
        %v2804 = vpop.f32.mrf.mxu0
        %v2805 = vadd.f32 0.0, %v2804
        %v2806 = vpop.f32.mrf.mxu0
        %v2807 = vadd.f32 0.0, %v2806
        %2808 = vmatmul.bf16.gmra.mxu0 %v2721
        %v2809 = vpop.f32.mrf.mxu0
        %v2810 = vadd.f32 0.0, %v2809
        %v2811 = vpop.f32.mrf.mxu0
        %v2812 = vadd.f32 0.0, %v2811
        %2813 = vmatmul.bf16.gmra.mxu0 %v2724
        %v2814 = vpop.f32.mrf.mxu0
        %v2815 = vadd.f32 0.0, %v2814
        %v2816 = vpop.f32.mrf.mxu0
        %v2817 = vadd.f32 0.0, %v2816
        %2818 = vdwg.mxu0
        %2819 = vmatpush.bf16.msra.mxu0 0
        %2820 = vmatpush.bf16.msra.mxu0 0
        %2821 = vmatpush.bf16.msra.mxu0 0
        %2822 = vmatpush.bf16.msra.mxu0 0
        %2823 = vmatpush.bf16.msra.mxu0 0
        %2824 = vmatpush.bf16.msra.mxu0 0
        %2825 = vmatpush.bf16.msra.mxu0 0
        %2826 = vmatpush.bf16.msra.mxu0 %v2728
        %2827 = vmatmul.bf16.gmra.mxu0 %v2679
        %v2828 = vpop.f32.mrf.mxu0
        %v2829 = vadd.f32 0.0, %v2828
        %v2830 = vpop.f32.mrf.mxu0
        %v2831 = vadd.f32 0.0, %v2830
        %2832 = vmatmul.bf16.gmra.mxu0 %v2682
        %v2833 = vpop.f32.mrf.mxu0
        %v2834 = vadd.f32 0.0, %v2833
        %v2835 = vpop.f32.mrf.mxu0
        %v2836 = vadd.f32 0.0, %v2835
        %2837 = vmatmul.bf16.gmra.mxu0 %v2685
        %v2838 = vpop.f32.mrf.mxu0
        %v2839 = vadd.f32 0.0, %v2838
        %v2840 = vpop.f32.mrf.mxu0
        %v2841 = vadd.f32 0.0, %v2840
        %2842 = vmatmul.bf16.gmra.mxu0 %v2688
        %v2843 = vpop.f32.mrf.mxu0
        %v2844 = vadd.f32 0.0, %v2843
        %v2845 = vpop.f32.mrf.mxu0
        %v2846 = vadd.f32 0.0, %v2845
        %2847 = vmatmul.bf16.gmra.mxu0 %v2691
        %v2848 = vpop.f32.mrf.mxu0
        %v2849 = vadd.f32 0.0, %v2848
        %v2850 = vpop.f32.mrf.mxu0
        %v2851 = vadd.f32 0.0, %v2850
        %2852 = vmatmul.bf16.gmra.mxu0 %v2694
        %v2853 = vpop.f32.mrf.mxu0
        %v2854 = vadd.f32 0.0, %v2853
        %v2855 = vpop.f32.mrf.mxu0
        %v2856 = vadd.f32 0.0, %v2855
        %2857 = vmatmul.bf16.gmra.mxu0 %v2697
        %v2858 = vpop.f32.mrf.mxu0
        %v2859 = vadd.f32 0.0, %v2858
        %v2860 = vpop.f32.mrf.mxu0
        %v2861 = vadd.f32 0.0, %v2860
        %2862 = vmatmul.bf16.gmra.mxu0 %v2700
        %v2863 = vpop.f32.mrf.mxu0
        %v2864 = vadd.f32 0.0, %v2863
        %v2865 = vpop.f32.mrf.mxu0
        %v2866 = vadd.f32 0.0, %v2865
        %2867 = vmatmul.bf16.gmra.mxu0 %v2703
        %v2868 = vpop.f32.mrf.mxu0
        %v2869 = vadd.f32 0.0, %v2868
        %v2870 = vpop.f32.mrf.mxu0
        %v2871 = vadd.f32 0.0, %v2870
        %2872 = vmatmul.bf16.gmra.mxu0 %v2706
        %v2873 = vpop.f32.mrf.mxu0
        %v2874 = vadd.f32 0.0, %v2873
        %v2875 = vpop.f32.mrf.mxu0
        %v2876 = vadd.f32 0.0, %v2875
        %2877 = vmatmul.bf16.gmra.mxu0 %v2709
        %v2878 = vpop.f32.mrf.mxu0
        %v2879 = vadd.f32 0.0, %v2878
        %v2880 = vpop.f32.mrf.mxu0
        %v2881 = vadd.f32 0.0, %v2880
        %2882 = vmatmul.bf16.gmra.mxu0 %v2712
        %v2883 = vpop.f32.mrf.mxu0
        %v2884 = vadd.f32 0.0, %v2883
        %v2885 = vpop.f32.mrf.mxu0
        %v2886 = vadd.f32 0.0, %v2885
        %2887 = vmatmul.bf16.gmra.mxu0 %v2715
        %v2888 = vpop.f32.mrf.mxu0
        %v2889 = vadd.f32 0.0, %v2888
        %v2890 = vpop.f32.mrf.mxu0
        %v2891 = vadd.f32 0.0, %v2890
        %2892 = vmatmul.bf16.gmra.mxu0 %v2718
        %v2893 = vpop.f32.mrf.mxu0
        %v2894 = vadd.f32 0.0, %v2893
        %v2895 = vpop.f32.mrf.mxu0
        %v2896 = vadd.f32 0.0, %v2895
        %2897 = vmatmul.bf16.gmra.mxu0 %v2721
        %v2898 = vpop.f32.mrf.mxu0
        %v2899 = vadd.f32 0.0, %v2898
        %v2900 = vpop.f32.mrf.mxu0
        %v2901 = vadd.f32 0.0, %v2900
        %2902 = vmatmul.bf16.gmra.mxu0 %v2724
        %v2903 = vpop.f32.mrf.mxu0
        %v2904 = vadd.f32 0.0, %v2903
        %v2905 = vpop.f32.mrf.mxu0
        %v2906 = vadd.f32 0.0, %v2905
        %2907 = vdwg.mxu0
        %v2908 = vadd.f32 %v2160, %v2740
        %v2909 = vadd.f32 %v2161, %v2829
        %v2910 = vadd.f32 %v2162, %v2742
        %v2911 = vadd.f32 %v2163, %v2831
        %v2912 = vadd.f32 %v2164, %v2745
        %v2913 = vadd.f32 %v2165, %v2834
        %v2914 = vadd.f32 %v2166, %v2747
        %v2915 = vadd.f32 %v2167, %v2836
        %v2916 = vadd.f32 %v2168, %v2750
        %v2917 = vadd.f32 %v2169, %v2839
        %v2918 = vadd.f32 %v2170, %v2752
        %v2919 = vadd.f32 %v2171, %v2841
        %v2920 = vadd.f32 %v2172, %v2755
        %v2921 = vadd.f32 %v2173, %v2844
        %v2922 = vadd.f32 %v2174, %v2757
        %v2923 = vadd.f32 %v2175, %v2846
        %v2924 = vadd.f32 %v2176, %v2760
        %v2925 = vadd.f32 %v2177, %v2849
        %v2926 = vadd.f32 %v2178, %v2762
        %v2927 = vadd.f32 %v2179, %v2851
        %v2928 = vadd.f32 %v2180, %v2765
        %v2929 = vadd.f32 %v2181, %v2854
        %v2930 = vadd.f32 %v2182, %v2767
        %v2931 = vadd.f32 %v2183, %v2856
        %v2932 = vadd.f32 %v2184, %v2770
        %v2933 = vadd.f32 %v2185, %v2859
        %v2934 = vadd.f32 %v2186, %v2772
        %v2935 = vadd.f32 %v2187, %v2861
        %v2936 = vadd.f32 %v2188, %v2775
        %v2937 = vadd.f32 %v2189, %v2864
        %v2938 = vadd.f32 %v2190, %v2777
        %v2939 = vadd.f32 %v2191, %v2866
        %v2940 = vadd.f32 %v2192, %v2780
        %v2941 = vadd.f32 %v2193, %v2869
        %v2942 = vadd.f32 %v2194, %v2782
        %v2943 = vadd.f32 %v2195, %v2871
        %v2944 = vadd.f32 %v2196, %v2785
        %v2945 = vadd.f32 %v2197, %v2874
        %v2946 = vadd.f32 %v2198, %v2787
        %v2947 = vadd.f32 %v2199, %v2876
        %v2948 = vadd.f32 %v2200, %v2790
        %v2949 = vadd.f32 %v2201, %v2879
        %v2950 = vadd.f32 %v2202, %v2792
        %v2951 = vadd.f32 %v2203, %v2881
        %v2952 = vadd.f32 %v2204, %v2795
        %v2953 = vadd.f32 %v2205, %v2884
        %v2954 = vadd.f32 %v2206, %v2797
        %v2955 = vadd.f32 %v2207, %v2886
        %v2956 = vadd.f32 %v2208, %v2800
        %v2957 = vadd.f32 %v2209, %v2889
        %v2958 = vadd.f32 %v2210, %v2802
        %v2959 = vadd.f32 %v2211, %v2891
        %v2960 = vadd.f32 %v2212, %v2805
        %v2961 = vadd.f32 %v2213, %v2894
        %v2962 = vadd.f32 %v2214, %v2807
        %v2963 = vadd.f32 %v2215, %v2896
        %v2964 = vadd.f32 %v2216, %v2810
        %v2965 = vadd.f32 %v2217, %v2899
        %v2966 = vadd.f32 %v2218, %v2812
        %v2967 = vadd.f32 %v2219, %v2901
        %v2968 = vadd.f32 %v2220, %v2815
        %v2969 = vadd.f32 %v2221, %v2904
        %v2970 = vadd.f32 %v2222, %v2817
        %v2971 = vadd.f32 %v2223, %v2906
        %v2972 = vld [vmem:[%s405 + $0x8] sm:$0xf]
        %v2973 = vld [vmem:[%s405 + $0xc] sm:$0xf]
        %v2974 = vld [vmem:[%s405 + $0x1c] sm:$0xf]
        %v2975 = vld [vmem:[%s405 + $0x20] sm:$0xf]
        %v2976 = vld [vmem:[%s405 + $0x30] sm:$0xf]
        %v2977 = vld [vmem:[%s405 + $0x34] sm:$0xf]
        %v2978 = vld [vmem:[%s405 + $0x44] sm:$0xf]
        %v2979 = vld [vmem:[%s405 + $0x48] sm:$0xf]
        %v2980 = vld [vmem:[%s405 + $0x58] sm:$0xf]
        %v2981 = vld [vmem:[%s405 + $0x5c] sm:$0xf]
        %v2982 = vld [vmem:[%s405 + $0x6c] sm:$0xf]
        %v2983 = vld [vmem:[%s405 + $0x70] sm:$0xf]
        %v2984 = vld [vmem:[%s405 + $0x80] sm:$0xf]
        %v2985 = vld [vmem:[%s405 + $0x84] sm:$0xf]
        %v2986 = vld [vmem:[%s405 + $0x94] sm:$0xf]
        %v2987 = vld [vmem:[%s405 + $0x98] sm:$0xf]
        %v2988 = vld [vmem:[%s405 + $0xa8] sm:$0xf]
        %v2989 = vld [vmem:[%s405 + $0xac] sm:$0xf]
        %v2990 = vld [vmem:[%s405 + $0xbc] sm:$0xf]
        %v2991 = vld [vmem:[%s405 + $0xc0] sm:$0xf]
        %v2992 = vld [vmem:[%s405 + $0xd0] sm:$0xf]
        %v2993 = vld [vmem:[%s405 + $0xd4] sm:$0xf]
        %v2994 = vld [vmem:[%s405 + $0xe4] sm:$0xf]
        %v2995 = vld [vmem:[%s405 + $0xe8] sm:$0xf]
        %v2996 = vld [vmem:[%s405 + $0xf8] sm:$0xf]
        %v2997 = vld [vmem:[%s405 + $0xfc] sm:$0xf]
        %v2998 = vld [vmem:[%s405 + $0x10c] sm:$0xf]
        %v2999 = vld [vmem:[%s405 + $0x110] sm:$0xf]
        %v3000 = vld [vmem:[%s405 + $0x120] sm:$0xf]
        %v3001 = vld [vmem:[%s405 + $0x124] sm:$0xf]
        %v3002 = vld [vmem:[%s405 + $0x134] sm:$0xf]
        %v3003 = vld [vmem:[%s405 + $0x138] sm:$0xf]
        %s3004 = scalar_lea.vmem %s1, 16
        %v3005 = vld [vmem:[%s3004] sm:$0xf]
        %v3038 = vunpack.c.l.b16 %v2972
        %v3039 = vunpack.c.l.b16 %v2973
        %v3040 = vunpack.c.l.b16 %v2974
        %v3041 = vunpack.c.l.b16 %v2975
        %v3042 = vunpack.c.l.b16 %v2976
        %v3043 = vunpack.c.l.b16 %v2977
        %v3044 = vunpack.c.l.b16 %v2978
        %v3045 = vunpack.c.l.b16 %v2979
        %v3046 = vunpack.c.l.b16 %v2980
        %v3047 = vunpack.c.l.b16 %v2981
        %v3048 = vunpack.c.l.b16 %v2982
        %v3049 = vunpack.c.l.b16 %v2983
        %v3050 = vunpack.c.l.b16 %v2984
        %v3051 = vunpack.c.l.b16 %v2985
        %v3052 = vunpack.c.l.b16 %v2986
        %v3053 = vunpack.c.l.b16 %v2987
        %v3054 = vunpack.c.l.b16 %v2988
        %v3055 = vunpack.c.l.b16 %v2989
        %v3056 = vunpack.c.l.b16 %v2990
        %v3057 = vunpack.c.l.b16 %v2991
        %v3058 = vunpack.c.l.b16 %v2992
        %v3059 = vunpack.c.l.b16 %v2993
        %v3060 = vunpack.c.l.b16 %v2994
        %v3061 = vunpack.c.l.b16 %v2995
        %v3062 = vunpack.c.l.b16 %v2996
        %v3063 = vunpack.c.l.b16 %v2997
        %v3064 = vunpack.c.l.b16 %v2998
        %v3065 = vunpack.c.l.b16 %v2999
        %v3066 = vunpack.c.l.b16 %v3000
        %v3067 = vunpack.c.l.b16 %v3001
        %v3068 = vunpack.c.l.b16 %v3002
        %v3069 = vunpack.c.l.b16 %v3003
        %v3070 = vpack.c.b16 %v3039, %v3038
        %v3071 = vpack.c.b16 %v3041, %v3040
        %v3072 = vpack.c.b16 %v3043, %v3042
        %v3073 = vpack.c.b16 %v3045, %v3044
        %v3074 = vpack.c.b16 %v3047, %v3046
        %v3075 = vpack.c.b16 %v3049, %v3048
        %v3076 = vpack.c.b16 %v3051, %v3050
        %v3077 = vpack.c.b16 %v3053, %v3052
        %v3078 = vpack.c.b16 %v3055, %v3054
        %v3079 = vpack.c.b16 %v3057, %v3056
        %v3080 = vpack.c.b16 %v3059, %v3058
        %v3081 = vpack.c.b16 %v3061, %v3060
        %v3082 = vpack.c.b16 %v3063, %v3062
        %v3083 = vpack.c.b16 %v3065, %v3064
        %v3084 = vpack.c.b16 %v3067, %v3066
        %v3085 = vpack.c.b16 %v3069, %v3068
        %3087 = vst [vmem:[#allocation1] ss:$4 sm:$0xff] %v3005
        %v3088 = vld.sshfl [vmem:[#allocation1] sm:$0xff pattern:$0x73625140]
        %v3089 = vld.sshfl [vmem:[#allocation1 + $0x8] sm:$0xff pattern:$0x73625140]
        %v3091 = vsel %vm927, %v3070, 0
        %v3094 = vsel %vm927, %v3071, 0
        %v3097 = vsel %vm927, %v3072, 0
        %v3100 = vsel %vm927, %v3073, 0
        %v3103 = vsel %vm927, %v3074, 0
        %v3106 = vsel %vm927, %v3075, 0
        %v3109 = vsel %vm927, %v3076, 0
        %v3112 = vsel %vm927, %v3077, 0
        %v3115 = vsel %vm927, %v3078, 0
        %v3118 = vsel %vm927, %v3079, 0
        %v3121 = vsel %vm927, %v3080, 0
        %v3124 = vsel %vm927, %v3081, 0
        %v3127 = vsel %vm927, %v3082, 0
        %v3130 = vsel %vm927, %v3083, 0
        %v3133 = vsel %vm927, %v3084, 0
        %v3136 = vsel %vm927, %v3085, 0
        %v3138 = vsel %vm976, %v3088, 0
        %v3140 = vsel %vm976, %v3089, 0
        %3142 = vmatpush.bf16.msra.mxu0 0
        %3143 = vmatpush.bf16.msra.mxu0 0
        %3144 = vmatpush.bf16.msra.mxu0 0
        %3145 = vmatpush.bf16.msra.mxu0 0
        %3146 = vmatpush.bf16.msra.mxu0 0
        %3147 = vmatpush.bf16.msra.mxu0 0
        %3148 = vmatpush.bf16.msra.mxu0 0
        %3149 = vmatpush.bf16.msra.mxu0 %v3138
        %3150 = vmatmul.bf16.gmra.mxu0 %v3091
        %v3151 = vpop.f32.mrf.mxu0
        %v3152 = vadd.f32 0.0, %v3151
        %v3153 = vpop.f32.mrf.mxu0
        %v3154 = vadd.f32 0.0, %v3153
        %3155 = vmatmul.bf16.gmra.mxu0 %v3094
        %v3156 = vpop.f32.mrf.mxu0
        %v3157 = vadd.f32 0.0, %v3156
        %v3158 = vpop.f32.mrf.mxu0
        %v3159 = vadd.f32 0.0, %v3158
        %3160 = vmatmul.bf16.gmra.mxu0 %v3097
        %v3161 = vpop.f32.mrf.mxu0
        %v3162 = vadd.f32 0.0, %v3161
        %v3163 = vpop.f32.mrf.mxu0
        %v3164 = vadd.f32 0.0, %v3163
        %3165 = vmatmul.bf16.gmra.mxu0 %v3100
        %v3166 = vpop.f32.mrf.mxu0
        %v3167 = vadd.f32 0.0, %v3166
        %v3168 = vpop.f32.mrf.mxu0
        %v3169 = vadd.f32 0.0, %v3168
        %3170 = vmatmul.bf16.gmra.mxu0 %v3103
        %v3171 = vpop.f32.mrf.mxu0
        %v3172 = vadd.f32 0.0, %v3171
        %v3173 = vpop.f32.mrf.mxu0
        %v3174 = vadd.f32 0.0, %v3173
        %3175 = vmatmul.bf16.gmra.mxu0 %v3106
        %v3176 = vpop.f32.mrf.mxu0
        %v3177 = vadd.f32 0.0, %v3176
        %v3178 = vpop.f32.mrf.mxu0
        %v3179 = vadd.f32 0.0, %v3178
        %3180 = vmatmul.bf16.gmra.mxu0 %v3109
        %v3181 = vpop.f32.mrf.mxu0
        %v3182 = vadd.f32 0.0, %v3181
        %v3183 = vpop.f32.mrf.mxu0
        %v3184 = vadd.f32 0.0, %v3183
        %3185 = vmatmul.bf16.gmra.mxu0 %v3112
        %v3186 = vpop.f32.mrf.mxu0
        %v3187 = vadd.f32 0.0, %v3186
        %v3188 = vpop.f32.mrf.mxu0
        %v3189 = vadd.f32 0.0, %v3188
        %3190 = vmatmul.bf16.gmra.mxu0 %v3115
        %v3191 = vpop.f32.mrf.mxu0
        %v3192 = vadd.f32 0.0, %v3191
        %v3193 = vpop.f32.mrf.mxu0
        %v3194 = vadd.f32 0.0, %v3193
        %3195 = vmatmul.bf16.gmra.mxu0 %v3118
        %v3196 = vpop.f32.mrf.mxu0
        %v3197 = vadd.f32 0.0, %v3196
        %v3198 = vpop.f32.mrf.mxu0
        %v3199 = vadd.f32 0.0, %v3198
        %3200 = vmatmul.bf16.gmra.mxu0 %v3121
        %v3201 = vpop.f32.mrf.mxu0
        %v3202 = vadd.f32 0.0, %v3201
        %v3203 = vpop.f32.mrf.mxu0
        %v3204 = vadd.f32 0.0, %v3203
        %3205 = vmatmul.bf16.gmra.mxu0 %v3124
        %v3206 = vpop.f32.mrf.mxu0
        %v3207 = vadd.f32 0.0, %v3206
        %v3208 = vpop.f32.mrf.mxu0
        %v3209 = vadd.f32 0.0, %v3208
        %3210 = vmatmul.bf16.gmra.mxu0 %v3127
        %v3211 = vpop.f32.mrf.mxu0
        %v3212 = vadd.f32 0.0, %v3211
        %v3213 = vpop.f32.mrf.mxu0
        %v3214 = vadd.f32 0.0, %v3213
        %3215 = vmatmul.bf16.gmra.mxu0 %v3130
        %v3216 = vpop.f32.mrf.mxu0
        %v3217 = vadd.f32 0.0, %v3216
        %v3218 = vpop.f32.mrf.mxu0
        %v3219 = vadd.f32 0.0, %v3218
        %3220 = vmatmul.bf16.gmra.mxu0 %v3133
        %v3221 = vpop.f32.mrf.mxu0
        %v3222 = vadd.f32 0.0, %v3221
        %v3223 = vpop.f32.mrf.mxu0
        %v3224 = vadd.f32 0.0, %v3223
        %3225 = vmatmul.bf16.gmra.mxu0 %v3136
        %v3226 = vpop.f32.mrf.mxu0
        %v3227 = vadd.f32 0.0, %v3226
        %v3228 = vpop.f32.mrf.mxu0
        %v3229 = vadd.f32 0.0, %v3228
        %3230 = vdwg.mxu0
        %3231 = vmatpush.bf16.msra.mxu0 0
        %3232 = vmatpush.bf16.msra.mxu0 0
        %3233 = vmatpush.bf16.msra.mxu0 0
        %3234 = vmatpush.bf16.msra.mxu0 0
        %3235 = vmatpush.bf16.msra.mxu0 0
        %3236 = vmatpush.bf16.msra.mxu0 0
        %3237 = vmatpush.bf16.msra.mxu0 0
        %3238 = vmatpush.bf16.msra.mxu0 %v3140
        %3239 = vmatmul.bf16.gmra.mxu0 %v3091
        %v3240 = vpop.f32.mrf.mxu0
        %v3241 = vadd.f32 0.0, %v3240
        %v3242 = vpop.f32.mrf.mxu0
        %v3243 = vadd.f32 0.0, %v3242
        %3244 = vmatmul.bf16.gmra.mxu0 %v3094
        %v3245 = vpop.f32.mrf.mxu0
        %v3246 = vadd.f32 0.0, %v3245
        %v3247 = vpop.f32.mrf.mxu0
        %v3248 = vadd.f32 0.0, %v3247
        %3249 = vmatmul.bf16.gmra.mxu0 %v3097
        %v3250 = vpop.f32.mrf.mxu0
        %v3251 = vadd.f32 0.0, %v3250
        %v3252 = vpop.f32.mrf.mxu0
        %v3253 = vadd.f32 0.0, %v3252
        %3254 = vmatmul.bf16.gmra.mxu0 %v3100
        %v3255 = vpop.f32.mrf.mxu0
        %v3256 = vadd.f32 0.0, %v3255
        %v3257 = vpop.f32.mrf.mxu0
        %v3258 = vadd.f32 0.0, %v3257
        %3259 = vmatmul.bf16.gmra.mxu0 %v3103
        %v3260 = vpop.f32.mrf.mxu0
        %v3261 = vadd.f32 0.0, %v3260
        %v3262 = vpop.f32.mrf.mxu0
        %v3263 = vadd.f32 0.0, %v3262
        %3264 = vmatmul.bf16.gmra.mxu0 %v3106
        %v3265 = vpop.f32.mrf.mxu0
        %v3266 = vadd.f32 0.0, %v3265
        %v3267 = vpop.f32.mrf.mxu0
        %v3268 = vadd.f32 0.0, %v3267
        %3269 = vmatmul.bf16.gmra.mxu0 %v3109
        %v3270 = vpop.f32.mrf.mxu0
        %v3271 = vadd.f32 0.0, %v3270
        %v3272 = vpop.f32.mrf.mxu0
        %v3273 = vadd.f32 0.0, %v3272
        %3274 = vmatmul.bf16.gmra.mxu0 %v3112
        %v3275 = vpop.f32.mrf.mxu0
        %v3276 = vadd.f32 0.0, %v3275
        %v3277 = vpop.f32.mrf.mxu0
        %v3278 = vadd.f32 0.0, %v3277
        %3279 = vmatmul.bf16.gmra.mxu0 %v3115
        %v3280 = vpop.f32.mrf.mxu0
        %v3281 = vadd.f32 0.0, %v3280
        %v3282 = vpop.f32.mrf.mxu0
        %v3283 = vadd.f32 0.0, %v3282
        %3284 = vmatmul.bf16.gmra.mxu0 %v3118
        %v3285 = vpop.f32.mrf.mxu0
        %v3286 = vadd.f32 0.0, %v3285
        %v3287 = vpop.f32.mrf.mxu0
        %v3288 = vadd.f32 0.0, %v3287
        %3289 = vmatmul.bf16.gmra.mxu0 %v3121
        %v3290 = vpop.f32.mrf.mxu0
        %v3291 = vadd.f32 0.0, %v3290
        %v3292 = vpop.f32.mrf.mxu0
        %v3293 = vadd.f32 0.0, %v3292
        %3294 = vmatmul.bf16.gmra.mxu0 %v3124
        %v3295 = vpop.f32.mrf.mxu0
        %v3296 = vadd.f32 0.0, %v3295
        %v3297 = vpop.f32.mrf.mxu0
        %v3298 = vadd.f32 0.0, %v3297
        %3299 = vmatmul.bf16.gmra.mxu0 %v3127
        %v3300 = vpop.f32.mrf.mxu0
        %v3301 = vadd.f32 0.0, %v3300
        %v3302 = vpop.f32.mrf.mxu0
        %v3303 = vadd.f32 0.0, %v3302
        %3304 = vmatmul.bf16.gmra.mxu0 %v3130
        %v3305 = vpop.f32.mrf.mxu0
        %v3306 = vadd.f32 0.0, %v3305
        %v3307 = vpop.f32.mrf.mxu0
        %v3308 = vadd.f32 0.0, %v3307
        %3309 = vmatmul.bf16.gmra.mxu0 %v3133
        %v3310 = vpop.f32.mrf.mxu0
        %v3311 = vadd.f32 0.0, %v3310
        %v3312 = vpop.f32.mrf.mxu0
        %v3313 = vadd.f32 0.0, %v3312
        %3314 = vmatmul.bf16.gmra.mxu0 %v3136
        %v3315 = vpop.f32.mrf.mxu0
        %v3316 = vadd.f32 0.0, %v3315
        %v3317 = vpop.f32.mrf.mxu0
        %v3318 = vadd.f32 0.0, %v3317
        %3319 = vdwg.mxu0
        %v3320 = vadd.f32 %v2908, %v3152
        %v3321 = vadd.f32 %v2909, %v3241
        %v3322 = vadd.f32 %v2910, %v3154
        %v3323 = vadd.f32 %v2911, %v3243
        %v3324 = vadd.f32 %v2912, %v3157
        %v3325 = vadd.f32 %v2913, %v3246
        %v3326 = vadd.f32 %v2914, %v3159
        %v3327 = vadd.f32 %v2915, %v3248
        %v3328 = vadd.f32 %v2916, %v3162
        %v3329 = vadd.f32 %v2917, %v3251
        %v3330 = vadd.f32 %v2918, %v3164
        %v3331 = vadd.f32 %v2919, %v3253
        %v3332 = vadd.f32 %v2920, %v3167
        %v3333 = vadd.f32 %v2921, %v3256
        %v3334 = vadd.f32 %v2922, %v3169
        %v3335 = vadd.f32 %v2923, %v3258
        %v3336 = vadd.f32 %v2924, %v3172
        %v3337 = vadd.f32 %v2925, %v3261
        %v3338 = vadd.f32 %v2926, %v3174
        %v3339 = vadd.f32 %v2927, %v3263
        %v3340 = vadd.f32 %v2928, %v3177
        %v3341 = vadd.f32 %v2929, %v3266
        %v3342 = vadd.f32 %v2930, %v3179
        %v3343 = vadd.f32 %v2931, %v3268
        %v3344 = vadd.f32 %v2932, %v3182
        %v3345 = vadd.f32 %v2933, %v3271
        %v3346 = vadd.f32 %v2934, %v3184
        %v3347 = vadd.f32 %v2935, %v3273
        %v3348 = vadd.f32 %v2936, %v3187
        %v3349 = vadd.f32 %v2937, %v3276
        %v3350 = vadd.f32 %v2938, %v3189
        %v3351 = vadd.f32 %v2939, %v3278
        %v3352 = vadd.f32 %v2940, %v3192
        %v3353 = vadd.f32 %v2941, %v3281
        %v3354 = vadd.f32 %v2942, %v3194
        %v3355 = vadd.f32 %v2943, %v3283
        %v3356 = vadd.f32 %v2944, %v3197
        %v3357 = vadd.f32 %v2945, %v3286
        %v3358 = vadd.f32 %v2946, %v3199
        %v3359 = vadd.f32 %v2947, %v3288
        %v3360 = vadd.f32 %v2948, %v3202
        %v3361 = vadd.f32 %v2949, %v3291
        %v3362 = vadd.f32 %v2950, %v3204
        %v3363 = vadd.f32 %v2951, %v3293
        %v3364 = vadd.f32 %v2952, %v3207
        %v3365 = vadd.f32 %v2953, %v3296
        %v3366 = vadd.f32 %v2954, %v3209
        %v3367 = vadd.f32 %v2955, %v3298
        %v3368 = vadd.f32 %v2956, %v3212
        %v3369 = vadd.f32 %v2957, %v3301
        %v3370 = vadd.f32 %v2958, %v3214
        %v3371 = vadd.f32 %v2959, %v3303
        %v3372 = vadd.f32 %v2960, %v3217
        %v3373 = vadd.f32 %v2961, %v3306
        %v3374 = vadd.f32 %v2962, %v3219
        %v3375 = vadd.f32 %v2963, %v3308
        %v3376 = vadd.f32 %v2964, %v3222
        %v3377 = vadd.f32 %v2965, %v3311
        %v3378 = vadd.f32 %v2966, %v3224
        %v3379 = vadd.f32 %v2967, %v3313
        %v3380 = vadd.f32 %v2968, %v3227
        %v3381 = vadd.f32 %v2969, %v3316
        %v3382 = vadd.f32 %v2970, %v3229
        %v3383 = vadd.f32 %v2971, %v3318
        %v3384 = vld [vmem:[%s405 + $0x8] sm:$0xf]
        %v3385 = vld [vmem:[%s405 + $0xc] sm:$0xf]
        %v3386 = vld [vmem:[%s405 + $0x10] sm:$0x1]
        %v3387 = vld [vmem:[%s405 + $0x1c] sm:$0xf]
        %v3388 = vld [vmem:[%s405 + $0x20] sm:$0xf]
        %v3389 = vld [vmem:[%s405 + $0x24] sm:$0x1]
        %v3390 = vld [vmem:[%s405 + $0x30] sm:$0xf]
        %v3391 = vld [vmem:[%s405 + $0x34] sm:$0xf]
        %v3392 = vld [vmem:[%s405 + $0x38] sm:$0x1]
        %v3393 = vld [vmem:[%s405 + $0x44] sm:$0xf]
        %v3394 = vld [vmem:[%s405 + $0x48] sm:$0xf]
        %v3395 = vld [vmem:[%s405 + $0x4c] sm:$0x1]
        %v3396 = vld [vmem:[%s405 + $0x58] sm:$0xf]
        %v3397 = vld [vmem:[%s405 + $0x5c] sm:$0xf]
        %v3398 = vld [vmem:[%s405 + $0x60] sm:$0x1]
        %v3399 = vld [vmem:[%s405 + $0x6c] sm:$0xf]
        %v3400 = vld [vmem:[%s405 + $0x70] sm:$0xf]
        %v3401 = vld [vmem:[%s405 + $0x74] sm:$0x1]
        %v3402 = vld [vmem:[%s405 + $0x80] sm:$0xf]
        %v3403 = vld [vmem:[%s405 + $0x84] sm:$0xf]
        %v3404 = vld [vmem:[%s405 + $0x88] sm:$0x1]
        %v3405 = vld [vmem:[%s405 + $0x94] sm:$0xf]
        %v3406 = vld [vmem:[%s405 + $0x98] sm:$0xf]
        %v3407 = vld [vmem:[%s405 + $0x9c] sm:$0x1]
        %v3408 = vld [vmem:[%s405 + $0xa8] sm:$0xf]
        %v3409 = vld [vmem:[%s405 + $0xac] sm:$0xf]
        %v3410 = vld [vmem:[%s405 + $0xb0] sm:$0x1]
        %v3411 = vld [vmem:[%s405 + $0xbc] sm:$0xf]
        %v3412 = vld [vmem:[%s405 + $0xc0] sm:$0xf]
        %v3413 = vld [vmem:[%s405 + $0xc4] sm:$0x1]
        %v3414 = vld [vmem:[%s405 + $0xd0] sm:$0xf]
        %v3415 = vld [vmem:[%s405 + $0xd4] sm:$0xf]
        %v3416 = vld [vmem:[%s405 + $0xd8] sm:$0x1]
        %v3417 = vld [vmem:[%s405 + $0xe4] sm:$0xf]
        %v3418 = vld [vmem:[%s405 + $0xe8] sm:$0xf]
        %v3419 = vld [vmem:[%s405 + $0xec] sm:$0x1]
        %v3420 = vld [vmem:[%s405 + $0xf8] sm:$0xf]
        %v3421 = vld [vmem:[%s405 + $0xfc] sm:$0xf]
        %v3422 = vld [vmem:[%s405 + $0x100] sm:$0x1]
        %v3423 = vld [vmem:[%s405 + $0x10c] sm:$0xf]
        %v3424 = vld [vmem:[%s405 + $0x110] sm:$0xf]
        %v3425 = vld [vmem:[%s405 + $0x114] sm:$0x1]
        %v3426 = vld [vmem:[%s405 + $0x120] sm:$0xf]
        %v3427 = vld [vmem:[%s405 + $0x124] sm:$0xf]
        %v3428 = vld [vmem:[%s405 + $0x128] sm:$0x1]
        %v3429 = vld [vmem:[%s405 + $0x134] sm:$0xf]
        %v3430 = vld [vmem:[%s405 + $0x138] sm:$0xf]
        %v3431 = vld [vmem:[%s405 + $0x13c] sm:$0x1]
        %v3433 = vshrl.u32 %v3384, 16
        %v3435 = vrot.slane %v3433, 4
        %v3436 = vshll.u32 %v3384, 16
        %v3438 = vrot.slane %v3436, 5
        %v3439 = vor.u32 %v3435, %v3438
        %v3440 = vrot.slane %v3439, 4
        %v3442 = vshll.u32 %v3385, 16
        %v3444 = vrot.slane %v3442, 5
        %v3445 = vsel %vm1491, %v3440, %v3444
        %v3446 = vshrl.u32 %v3385, 16
        %v3448 = vrot.slane %v3446, 4
        %v3449 = vor.u32 %v3448, %v3444
        %v3450 = vrot.slane %v3449, 4
        %v3452 = vshll.u32 %v3386, 16
        %v3454 = vrot.slane %v3452, 5
        %v3455 = vsel %vm1491, %v3450, %v3454
        %v3457 = vshrl.u32 %v3387, 16
        %v3459 = vrot.slane %v3457, 4
        %v3460 = vshll.u32 %v3387, 16
        %v3462 = vrot.slane %v3460, 5
        %v3463 = vor.u32 %v3459, %v3462
        %v3464 = vrot.slane %v3463, 4
        %v3466 = vshll.u32 %v3388, 16
        %v3468 = vrot.slane %v3466, 5
        %v3469 = vsel %vm1491, %v3464, %v3468
        %v3470 = vshrl.u32 %v3388, 16
        %v3472 = vrot.slane %v3470, 4
        %v3473 = vor.u32 %v3472, %v3468
        %v3474 = vrot.slane %v3473, 4
        %v3476 = vshll.u32 %v3389, 16
        %v3478 = vrot.slane %v3476, 5
        %v3479 = vsel %vm1491, %v3474, %v3478
        %v3481 = vshrl.u32 %v3390, 16
        %v3483 = vrot.slane %v3481, 4
        %v3484 = vshll.u32 %v3390, 16
        %v3486 = vrot.slane %v3484, 5
        %v3487 = vor.u32 %v3483, %v3486
        %v3488 = vrot.slane %v3487, 4
        %v3490 = vshll.u32 %v3391, 16
        %v3492 = vrot.slane %v3490, 5
        %v3493 = vsel %vm1491, %v3488, %v3492
        %v3494 = vshrl.u32 %v3391, 16
        %v3496 = vrot.slane %v3494, 4
        %v3497 = vor.u32 %v3496, %v3492
        %v3498 = vrot.slane %v3497, 4
        %v3500 = vshll.u32 %v3392, 16
        %v3502 = vrot.slane %v3500, 5
        %v3503 = vsel %vm1491, %v3498, %v3502
        %v3505 = vshrl.u32 %v3393, 16
        %v3507 = vrot.slane %v3505, 4
        %v3508 = vshll.u32 %v3393, 16
        %v3510 = vrot.slane %v3508, 5
        %v3511 = vor.u32 %v3507, %v3510
        %v3512 = vrot.slane %v3511, 4
        %v3514 = vshll.u32 %v3394, 16
        %v3516 = vrot.slane %v3514, 5
        %v3517 = vsel %vm1491, %v3512, %v3516
        %v3518 = vshrl.u32 %v3394, 16
        %v3520 = vrot.slane %v3518, 4
        %v3521 = vor.u32 %v3520, %v3516
        %v3522 = vrot.slane %v3521, 4
        %v3524 = vshll.u32 %v3395, 16
        %v3526 = vrot.slane %v3524, 5
        %v3527 = vsel %vm1491, %v3522, %v3526
        %v3529 = vshrl.u32 %v3396, 16
        %v3531 = vrot.slane %v3529, 4
        %v3532 = vshll.u32 %v3396, 16
        %v3534 = vrot.slane %v3532, 5
        %v3535 = vor.u32 %v3531, %v3534
        %v3536 = vrot.slane %v3535, 4
        %v3538 = vshll.u32 %v3397, 16
        %v3540 = vrot.slane %v3538, 5
        %v3541 = vsel %vm1491, %v3536, %v3540
        %v3542 = vshrl.u32 %v3397, 16
        %v3544 = vrot.slane %v3542, 4
        %v3545 = vor.u32 %v3544, %v3540
        %v3546 = vrot.slane %v3545, 4
        %v3548 = vshll.u32 %v3398, 16
        %v3550 = vrot.slane %v3548, 5
        %v3551 = vsel %vm1491, %v3546, %v3550
        %v3553 = vshrl.u32 %v3399, 16
        %v3555 = vrot.slane %v3553, 4
        %v3556 = vshll.u32 %v3399, 16
        %v3558 = vrot.slane %v3556, 5
        %v3559 = vor.u32 %v3555, %v3558
        %v3560 = vrot.slane %v3559, 4
        %v3562 = vshll.u32 %v3400, 16
        %v3564 = vrot.slane %v3562, 5
        %v3565 = vsel %vm1491, %v3560, %v3564
        %v3566 = vshrl.u32 %v3400, 16
        %v3568 = vrot.slane %v3566, 4
        %v3569 = vor.u32 %v3568, %v3564
        %v3570 = vrot.slane %v3569, 4
        %v3572 = vshll.u32 %v3401, 16
        %v3574 = vrot.slane %v3572, 5
        %v3575 = vsel %vm1491, %v3570, %v3574
        %v3577 = vshrl.u32 %v3402, 16
        %v3579 = vrot.slane %v3577, 4
        %v3580 = vshll.u32 %v3402, 16
        %v3582 = vrot.slane %v3580, 5
        %v3583 = vor.u32 %v3579, %v3582
        %v3584 = vrot.slane %v3583, 4
        %v3586 = vshll.u32 %v3403, 16
        %v3588 = vrot.slane %v3586, 5
        %v3589 = vsel %vm1491, %v3584, %v3588
        %v3590 = vshrl.u32 %v3403, 16
        %v3592 = vrot.slane %v3590, 4
        %v3593 = vor.u32 %v3592, %v3588
        %v3594 = vrot.slane %v3593, 4
        %v3596 = vshll.u32 %v3404, 16
        %v3598 = vrot.slane %v3596, 5
        %v3599 = vsel %vm1491, %v3594, %v3598
        %v3601 = vshrl.u32 %v3405, 16
        %v3603 = vrot.slane %v3601, 4
        %v3604 = vshll.u32 %v3405, 16
        %v3606 = vrot.slane %v3604, 5
        %v3607 = vor.u32 %v3603, %v3606
        %v3608 = vrot.slane %v3607, 4
        %v3610 = vshll.u32 %v3406, 16
        %v3612 = vrot.slane %v3610, 5
        %v3613 = vsel %vm1491, %v3608, %v3612
        %v3614 = vshrl.u32 %v3406, 16
        %v3616 = vrot.slane %v3614, 4
        %v3617 = vor.u32 %v3616, %v3612
        %v3618 = vrot.slane %v3617, 4
        %v3620 = vshll.u32 %v3407, 16
        %v3622 = vrot.slane %v3620, 5
        %v3623 = vsel %vm1491, %v3618, %v3622
        %v3625 = vshrl.u32 %v3408, 16
        %v3627 = vrot.slane %v3625, 4
        %v3628 = vshll.u32 %v3408, 16
        %v3630 = vrot.slane %v3628, 5
        %v3631 = vor.u32 %v3627, %v3630
        %v3632 = vrot.slane %v3631, 4
        %v3634 = vshll.u32 %v3409, 16
        %v3636 = vrot.slane %v3634, 5
        %v3637 = vsel %vm1491, %v3632, %v3636
        %v3638 = vshrl.u32 %v3409, 16
        %v3640 = vrot.slane %v3638, 4
        %v3641 = vor.u32 %v3640, %v3636
        %v3642 = vrot.slane %v3641, 4
        %v3644 = vshll.u32 %v3410, 16
        %v3646 = vrot.slane %v3644, 5
        %v3647 = vsel %vm1491, %v3642, %v3646
        %v3649 = vshrl.u32 %v3411, 16
        %v3651 = vrot.slane %v3649, 4
        %v3652 = vshll.u32 %v3411, 16
        %v3654 = vrot.slane %v3652, 5
        %v3655 = vor.u32 %v3651, %v3654
        %v3656 = vrot.slane %v3655, 4
        %v3658 = vshll.u32 %v3412, 16
        %v3660 = vrot.slane %v3658, 5
        %v3661 = vsel %vm1491, %v3656, %v3660
        %v3662 = vshrl.u32 %v3412, 16
        %v3664 = vrot.slane %v3662, 4
        %v3665 = vor.u32 %v3664, %v3660
        %v3666 = vrot.slane %v3665, 4
        %v3668 = vshll.u32 %v3413, 16
        %v3670 = vrot.slane %v3668, 5
        %v3671 = vsel %vm1491, %v3666, %v3670
        %v3673 = vshrl.u32 %v3414, 16
        %v3675 = vrot.slane %v3673, 4
        %v3676 = vshll.u32 %v3414, 16
        %v3678 = vrot.slane %v3676, 5
        %v3679 = vor.u32 %v3675, %v3678
        %v3680 = vrot.slane %v3679, 4
        %v3682 = vshll.u32 %v3415, 16
        %v3684 = vrot.slane %v3682, 5
        %v3685 = vsel %vm1491, %v3680, %v3684
        %v3686 = vshrl.u32 %v3415, 16
        %v3688 = vrot.slane %v3686, 4
        %v3689 = vor.u32 %v3688, %v3684
        %v3690 = vrot.slane %v3689, 4
        %v3692 = vshll.u32 %v3416, 16
        %v3694 = vrot.slane %v3692, 5
        %v3695 = vsel %vm1491, %v3690, %v3694
        %v3697 = vshrl.u32 %v3417, 16
        %v3699 = vrot.slane %v3697, 4
        %v3700 = vshll.u32 %v3417, 16
        %v3702 = vrot.slane %v3700, 5
        %v3703 = vor.u32 %v3699, %v3702
        %v3704 = vrot.slane %v3703, 4
        %v3706 = vshll.u32 %v3418, 16
        %v3708 = vrot.slane %v3706, 5
        %v3709 = vsel %vm1491, %v3704, %v3708
        %v3710 = vshrl.u32 %v3418, 16
        %v3712 = vrot.slane %v3710, 4
        %v3713 = vor.u32 %v3712, %v3708
        %v3714 = vrot.slane %v3713, 4
        %v3716 = vshll.u32 %v3419, 16
        %v3718 = vrot.slane %v3716, 5
        %v3719 = vsel %vm1491, %v3714, %v3718
        %v3721 = vshrl.u32 %v3420, 16
        %v3723 = vrot.slane %v3721, 4
        %v3724 = vshll.u32 %v3420, 16
        %v3726 = vrot.slane %v3724, 5
        %v3727 = vor.u32 %v3723, %v3726
        %v3728 = vrot.slane %v3727, 4
        %v3730 = vshll.u32 %v3421, 16
        %v3732 = vrot.slane %v3730, 5
        %v3733 = vsel %vm1491, %v3728, %v3732
        %v3734 = vshrl.u32 %v3421, 16
        %v3736 = vrot.slane %v3734, 4
        %v3737 = vor.u32 %v3736, %v3732
        %v3738 = vrot.slane %v3737, 4
        %v3740 = vshll.u32 %v3422, 16
        %v3742 = vrot.slane %v3740, 5
        %v3743 = vsel %vm1491, %v3738, %v3742
        %v3745 = vshrl.u32 %v3423, 16
        %v3747 = vrot.slane %v3745, 4
        %v3748 = vshll.u32 %v3423, 16
        %v3750 = vrot.slane %v3748, 5
        %v3751 = vor.u32 %v3747, %v3750
        %v3752 = vrot.slane %v3751, 4
        %v3754 = vshll.u32 %v3424, 16
        %v3756 = vrot.slane %v3754, 5
        %v3757 = vsel %vm1491, %v3752, %v3756
        %v3758 = vshrl.u32 %v3424, 16
        %v3760 = vrot.slane %v3758, 4
        %v3761 = vor.u32 %v3760, %v3756
        %v3762 = vrot.slane %v3761, 4
        %v3764 = vshll.u32 %v3425, 16
        %v3766 = vrot.slane %v3764, 5
        %v3767 = vsel %vm1491, %v3762, %v3766
        %v3769 = vshrl.u32 %v3426, 16
        %v3771 = vrot.slane %v3769, 4
        %v3772 = vshll.u32 %v3426, 16
        %v3774 = vrot.slane %v3772, 5
        %v3775 = vor.u32 %v3771, %v3774
        %v3776 = vrot.slane %v3775, 4
        %v3778 = vshll.u32 %v3427, 16
        %v3780 = vrot.slane %v3778, 5
        %v3781 = vsel %vm1491, %v3776, %v3780
        %v3782 = vshrl.u32 %v3427, 16
        %v3784 = vrot.slane %v3782, 4
        %v3785 = vor.u32 %v3784, %v3780
        %v3786 = vrot.slane %v3785, 4
        %v3788 = vshll.u32 %v3428, 16
        %v3790 = vrot.slane %v3788, 5
        %v3791 = vsel %vm1491, %v3786, %v3790
        %v3793 = vshrl.u32 %v3429, 16
        %v3795 = vrot.slane %v3793, 4
        %v3796 = vshll.u32 %v3429, 16
        %v3798 = vrot.slane %v3796, 5
        %v3799 = vor.u32 %v3795, %v3798
        %v3800 = vrot.slane %v3799, 4
        %v3802 = vshll.u32 %v3430, 16
        %v3804 = vrot.slane %v3802, 5
        %v3805 = vsel %vm1491, %v3800, %v3804
        %v3806 = vshrl.u32 %v3430, 16
        %v3808 = vrot.slane %v3806, 4
        %v3809 = vor.u32 %v3808, %v3804
        %v3810 = vrot.slane %v3809, 4
        %v3812 = vshll.u32 %v3431, 16
        %v3814 = vrot.slane %v3812, 5
        %v3815 = vsel %vm1491, %v3810, %v3814
        %s3816 = scalar_lea.vmem %s1, 20
        %v3817 = vld [vmem:[%s3816] sm:$0xf]
        %v3818 = vunpack.c.l.b16 %v3445
        %v3819 = vunpack.c.l.b16 %v3455
        %v3820 = vunpack.c.l.b16 %v3469
        %v3821 = vunpack.c.l.b16 %v3479
        %v3822 = vunpack.c.l.b16 %v3493
        %v3823 = vunpack.c.l.b16 %v3503
        %v3824 = vunpack.c.l.b16 %v3517
        %v3825 = vunpack.c.l.b16 %v3527
        %v3826 = vunpack.c.l.b16 %v3541
        %v3827 = vunpack.c.l.b16 %v3551
        %v3828 = vunpack.c.l.b16 %v3565
        %v3829 = vunpack.c.l.b16 %v3575
        %v3830 = vunpack.c.l.b16 %v3589
        %v3831 = vunpack.c.l.b16 %v3599
        %v3832 = vunpack.c.l.b16 %v3613
        %v3833 = vunpack.c.l.b16 %v3623
        %v3834 = vunpack.c.l.b16 %v3637
        %v3835 = vunpack.c.l.b16 %v3647
        %v3836 = vunpack.c.l.b16 %v3661
        %v3837 = vunpack.c.l.b16 %v3671
        %v3838 = vunpack.c.l.b16 %v3685
        %v3839 = vunpack.c.l.b16 %v3695
        %v3840 = vunpack.c.l.b16 %v3709
        %v3841 = vunpack.c.l.b16 %v3719
        %v3842 = vunpack.c.l.b16 %v3733
        %v3843 = vunpack.c.l.b16 %v3743
        %v3844 = vunpack.c.l.b16 %v3757
        %v3845 = vunpack.c.l.b16 %v3767
        %v3846 = vunpack.c.l.b16 %v3781
        %v3847 = vunpack.c.l.b16 %v3791
        %v3848 = vunpack.c.l.b16 %v3805
        %v3849 = vunpack.c.l.b16 %v3815
        %v3850 = vpack.c.b16 %v3819, %v3818
        %v3851 = vpack.c.b16 %v3821, %v3820
        %v3852 = vpack.c.b16 %v3823, %v3822
        %v3853 = vpack.c.b16 %v3825, %v3824
        %v3854 = vpack.c.b16 %v3827, %v3826
        %v3855 = vpack.c.b16 %v3829, %v3828
        %v3856 = vpack.c.b16 %v3831, %v3830
        %v3857 = vpack.c.b16 %v3833, %v3832
        %v3858 = vpack.c.b16 %v3835, %v3834
        %v3859 = vpack.c.b16 %v3837, %v3836
        %v3860 = vpack.c.b16 %v3839, %v3838
        %v3861 = vpack.c.b16 %v3841, %v3840
        %v3862 = vpack.c.b16 %v3843, %v3842
        %v3863 = vpack.c.b16 %v3845, %v3844
        %v3864 = vpack.c.b16 %v3847, %v3846
        %v3865 = vpack.c.b16 %v3849, %v3848
        %3867 = vst [vmem:[#allocation1] ss:$4 sm:$0xff] %v3817
        %v3868 = vld.sshfl [vmem:[#allocation1] sm:$0xff pattern:$0x73625140]
        %v3869 = vld.sshfl [vmem:[#allocation1 + $0x8] sm:$0xff pattern:$0x73625140]
        %v3871 = vsel %vm927, %v3850, 0
        %v3874 = vsel %vm927, %v3851, 0
        %v3877 = vsel %vm927, %v3852, 0
        %v3880 = vsel %vm927, %v3853, 0
        %v3883 = vsel %vm927, %v3854, 0
        %v3886 = vsel %vm927, %v3855, 0
        %v3889 = vsel %vm927, %v3856, 0
        %v3892 = vsel %vm927, %v3857, 0
        %v3895 = vsel %vm927, %v3858, 0
        %v3898 = vsel %vm927, %v3859, 0
        %v3901 = vsel %vm927, %v3860, 0
        %v3904 = vsel %vm927, %v3861, 0
        %v3907 = vsel %vm927, %v3862, 0
        %v3910 = vsel %vm927, %v3863, 0
        %v3913 = vsel %vm927, %v3864, 0
        %v3916 = vsel %vm927, %v3865, 0
        %v3918 = vsel %vm976, %v3868, 0
        %v3920 = vsel %vm976, %v3869, 0
        %3922 = vmatpush.bf16.msra.mxu0 0
        %3923 = vmatpush.bf16.msra.mxu0 0
        %3924 = vmatpush.bf16.msra.mxu0 0
        %3925 = vmatpush.bf16.msra.mxu0 0
        %3926 = vmatpush.bf16.msra.mxu0 0
        %3927 = vmatpush.bf16.msra.mxu0 0
        %3928 = vmatpush.bf16.msra.mxu0 0
        %3929 = vmatpush.bf16.msra.mxu0 %v3918
        %3930 = vmatmul.bf16.gmra.mxu0 %v3871
        %v3931 = vpop.f32.mrf.mxu0
        %v3932 = vadd.f32 0.0, %v3931
        %v3933 = vpop.f32.mrf.mxu0
        %v3934 = vadd.f32 0.0, %v3933
        %3935 = vmatmul.bf16.gmra.mxu0 %v3874
        %v3936 = vpop.f32.mrf.mxu0
        %v3937 = vadd.f32 0.0, %v3936
        %v3938 = vpop.f32.mrf.mxu0
        %v3939 = vadd.f32 0.0, %v3938
        %3940 = vmatmul.bf16.gmra.mxu0 %v3877
        %v3941 = vpop.f32.mrf.mxu0
        %v3942 = vadd.f32 0.0, %v3941
        %v3943 = vpop.f32.mrf.mxu0
        %v3944 = vadd.f32 0.0, %v3943
        %3945 = vmatmul.bf16.gmra.mxu0 %v3880
        %v3946 = vpop.f32.mrf.mxu0
        %v3947 = vadd.f32 0.0, %v3946
        %v3948 = vpop.f32.mrf.mxu0
        %v3949 = vadd.f32 0.0, %v3948
        %3950 = vmatmul.bf16.gmra.mxu0 %v3883
        %v3951 = vpop.f32.mrf.mxu0
        %v3952 = vadd.f32 0.0, %v3951
        %v3953 = vpop.f32.mrf.mxu0
        %v3954 = vadd.f32 0.0, %v3953
        %3955 = vmatmul.bf16.gmra.mxu0 %v3886
        %v3956 = vpop.f32.mrf.mxu0
        %v3957 = vadd.f32 0.0, %v3956
        %v3958 = vpop.f32.mrf.mxu0
        %v3959 = vadd.f32 0.0, %v3958
        %3960 = vmatmul.bf16.gmra.mxu0 %v3889
        %v3961 = vpop.f32.mrf.mxu0
        %v3962 = vadd.f32 0.0, %v3961
        %v3963 = vpop.f32.mrf.mxu0
        %v3964 = vadd.f32 0.0, %v3963
        %3965 = vmatmul.bf16.gmra.mxu0 %v3892
        %v3966 = vpop.f32.mrf.mxu0
        %v3967 = vadd.f32 0.0, %v3966
        %v3968 = vpop.f32.mrf.mxu0
        %v3969 = vadd.f32 0.0, %v3968
        %3970 = vmatmul.bf16.gmra.mxu0 %v3895
        %v3971 = vpop.f32.mrf.mxu0
        %v3972 = vadd.f32 0.0, %v3971
        %v3973 = vpop.f32.mrf.mxu0
        %v3974 = vadd.f32 0.0, %v3973
        %3975 = vmatmul.bf16.gmra.mxu0 %v3898
        %v3976 = vpop.f32.mrf.mxu0
        %v3977 = vadd.f32 0.0, %v3976
        %v3978 = vpop.f32.mrf.mxu0
        %v3979 = vadd.f32 0.0, %v3978
        %3980 = vmatmul.bf16.gmra.mxu0 %v3901
        %v3981 = vpop.f32.mrf.mxu0
        %v3982 = vadd.f32 0.0, %v3981
        %v3983 = vpop.f32.mrf.mxu0
        %v3984 = vadd.f32 0.0, %v3983
        %3985 = vmatmul.bf16.gmra.mxu0 %v3904
        %v3986 = vpop.f32.mrf.mxu0
        %v3987 = vadd.f32 0.0, %v3986
        %v3988 = vpop.f32.mrf.mxu0
        %v3989 = vadd.f32 0.0, %v3988
        %3990 = vmatmul.bf16.gmra.mxu0 %v3907
        %v3991 = vpop.f32.mrf.mxu0
        %v3992 = vadd.f32 0.0, %v3991
        %v3993 = vpop.f32.mrf.mxu0
        %v3994 = vadd.f32 0.0, %v3993
        %3995 = vmatmul.bf16.gmra.mxu0 %v3910
        %v3996 = vpop.f32.mrf.mxu0
        %v3997 = vadd.f32 0.0, %v3996
        %v3998 = vpop.f32.mrf.mxu0
        %v3999 = vadd.f32 0.0, %v3998
        %4000 = vmatmul.bf16.gmra.mxu0 %v3913
        %v4001 = vpop.f32.mrf.mxu0
        %v4002 = vadd.f32 0.0, %v4001
        %v4003 = vpop.f32.mrf.mxu0
        %v4004 = vadd.f32 0.0, %v4003
        %4005 = vmatmul.bf16.gmra.mxu0 %v3916
        %v4006 = vpop.f32.mrf.mxu0
        %v4007 = vadd.f32 0.0, %v4006
        %v4008 = vpop.f32.mrf.mxu0
        %v4009 = vadd.f32 0.0, %v4008
        %4010 = vdwg.mxu0
        %4011 = vmatpush.bf16.msra.mxu0 0
        %4012 = vmatpush.bf16.msra.mxu0 0
        %4013 = vmatpush.bf16.msra.mxu0 0
        %4014 = vmatpush.bf16.msra.mxu0 0
        %4015 = vmatpush.bf16.msra.mxu0 0
        %4016 = vmatpush.bf16.msra.mxu0 0
        %4017 = vmatpush.bf16.msra.mxu0 0
        %4018 = vmatpush.bf16.msra.mxu0 %v3920
        %4019 = vmatmul.bf16.gmra.mxu0 %v3871
        %v4020 = vpop.f32.mrf.mxu0
        %v4021 = vadd.f32 0.0, %v4020
        %v4022 = vpop.f32.mrf.mxu0
        %v4023 = vadd.f32 0.0, %v4022
        %4024 = vmatmul.bf16.gmra.mxu0 %v3874
        %v4025 = vpop.f32.mrf.mxu0
        %v4026 = vadd.f32 0.0, %v4025
        %v4027 = vpop.f32.mrf.mxu0
        %v4028 = vadd.f32 0.0, %v4027
        %4029 = vmatmul.bf16.gmra.mxu0 %v3877
        %v4030 = vpop.f32.mrf.mxu0
        %v4031 = vadd.f32 0.0, %v4030
        %v4032 = vpop.f32.mrf.mxu0
        %v4033 = vadd.f32 0.0, %v4032
        %4034 = vmatmul.bf16.gmra.mxu0 %v3880
        %v4035 = vpop.f32.mrf.mxu0
        %v4036 = vadd.f32 0.0, %v4035
        %v4037 = vpop.f32.mrf.mxu0
        %v4038 = vadd.f32 0.0, %v4037
        %4039 = vmatmul.bf16.gmra.mxu0 %v3883
        %v4040 = vpop.f32.mrf.mxu0
        %v4041 = vadd.f32 0.0, %v4040
        %v4042 = vpop.f32.mrf.mxu0
        %v4043 = vadd.f32 0.0, %v4042
        %4044 = vmatmul.bf16.gmra.mxu0 %v3886
        %v4045 = vpop.f32.mrf.mxu0
        %v4046 = vadd.f32 0.0, %v4045
        %v4047 = vpop.f32.mrf.mxu0
        %v4048 = vadd.f32 0.0, %v4047
        %4049 = vmatmul.bf16.gmra.mxu0 %v3889
        %v4050 = vpop.f32.mrf.mxu0
        %v4051 = vadd.f32 0.0, %v4050
        %v4052 = vpop.f32.mrf.mxu0
        %v4053 = vadd.f32 0.0, %v4052
        %4054 = vmatmul.bf16.gmra.mxu0 %v3892
        %v4055 = vpop.f32.mrf.mxu0
        %v4056 = vadd.f32 0.0, %v4055
        %v4057 = vpop.f32.mrf.mxu0
        %v4058 = vadd.f32 0.0, %v4057
        %4059 = vmatmul.bf16.gmra.mxu0 %v3895
        %v4060 = vpop.f32.mrf.mxu0
        %v4061 = vadd.f32 0.0, %v4060
        %v4062 = vpop.f32.mrf.mxu0
        %v4063 = vadd.f32 0.0, %v4062
        %4064 = vmatmul.bf16.gmra.mxu0 %v3898
        %v4065 = vpop.f32.mrf.mxu0
        %v4066 = vadd.f32 0.0, %v4065
        %v4067 = vpop.f32.mrf.mxu0
        %v4068 = vadd.f32 0.0, %v4067
        %4069 = vmatmul.bf16.gmra.mxu0 %v3901
        %v4070 = vpop.f32.mrf.mxu0
        %v4071 = vadd.f32 0.0, %v4070
        %v4072 = vpop.f32.mrf.mxu0
        %v4073 = vadd.f32 0.0, %v4072
        %4074 = vmatmul.bf16.gmra.mxu0 %v3904
        %v4075 = vpop.f32.mrf.mxu0
        %v4076 = vadd.f32 0.0, %v4075
        %v4077 = vpop.f32.mrf.mxu0
        %v4078 = vadd.f32 0.0, %v4077
        %4079 = vmatmul.bf16.gmra.mxu0 %v3907
        %v4080 = vpop.f32.mrf.mxu0
        %v4081 = vadd.f32 0.0, %v4080
        %v4082 = vpop.f32.mrf.mxu0
        %v4083 = vadd.f32 0.0, %v4082
        %4084 = vmatmul.bf16.gmra.mxu0 %v3910
        %v4085 = vpop.f32.mrf.mxu0
        %v4086 = vadd.f32 0.0, %v4085
        %v4087 = vpop.f32.mrf.mxu0
        %v4088 = vadd.f32 0.0, %v4087
        %4089 = vmatmul.bf16.gmra.mxu0 %v3913
        %v4090 = vpop.f32.mrf.mxu0
        %v4091 = vadd.f32 0.0, %v4090
        %v4092 = vpop.f32.mrf.mxu0
        %v4093 = vadd.f32 0.0, %v4092
        %4094 = vmatmul.bf16.gmra.mxu0 %v3916
        %v4095 = vpop.f32.mrf.mxu0
        %v4096 = vadd.f32 0.0, %v4095
        %v4097 = vpop.f32.mrf.mxu0
        %v4098 = vadd.f32 0.0, %v4097
        %4099 = vdwg.mxu0
        %v4100 = vadd.f32 %v3320, %v3932
        %v4101 = vadd.f32 %v3321, %v4021
        %v4102 = vadd.f32 %v3322, %v3934
        %v4103 = vadd.f32 %v3323, %v4023
        %v4104 = vadd.f32 %v3324, %v3937
        %v4105 = vadd.f32 %v3325, %v4026
        %v4106 = vadd.f32 %v3326, %v3939
        %v4107 = vadd.f32 %v3327, %v4028
        %v4108 = vadd.f32 %v3328, %v3942
        %v4109 = vadd.f32 %v3329, %v4031
        %v4110 = vadd.f32 %v3330, %v3944
        %v4111 = vadd.f32 %v3331, %v4033
        %v4112 = vadd.f32 %v3332, %v3947
        %v4113 = vadd.f32 %v3333, %v4036
        %v4114 = vadd.f32 %v3334, %v3949
        %v4115 = vadd.f32 %v3335, %v4038
        %v4116 = vadd.f32 %v3336, %v3952
        %v4117 = vadd.f32 %v3337, %v4041
        %v4118 = vadd.f32 %v3338, %v3954
        %v4119 = vadd.f32 %v3339, %v4043
        %v4120 = vadd.f32 %v3340, %v3957
        %v4121 = vadd.f32 %v3341, %v4046
        %v4122 = vadd.f32 %v3342, %v3959
        %v4123 = vadd.f32 %v3343, %v4048
        %v4124 = vadd.f32 %v3344, %v3962
        %v4125 = vadd.f32 %v3345, %v4051
        %v4126 = vadd.f32 %v3346, %v3964
        %v4127 = vadd.f32 %v3347, %v4053
        %v4128 = vadd.f32 %v3348, %v3967
        %v4129 = vadd.f32 %v3349, %v4056
        %v4130 = vadd.f32 %v3350, %v3969
        %v4131 = vadd.f32 %v3351, %v4058
        %v4132 = vadd.f32 %v3352, %v3972
        %v4133 = vadd.f32 %v3353, %v4061
        %v4134 = vadd.f32 %v3354, %v3974
        %v4135 = vadd.f32 %v3355, %v4063
        %v4136 = vadd.f32 %v3356, %v3977
        %v4137 = vadd.f32 %v3357, %v4066
        %v4138 = vadd.f32 %v3358, %v3979
        %v4139 = vadd.f32 %v3359, %v4068
        %v4140 = vadd.f32 %v3360, %v3982
        %v4141 = vadd.f32 %v3361, %v4071
        %v4142 = vadd.f32 %v3362, %v3984
        %v4143 = vadd.f32 %v3363, %v4073
        %v4144 = vadd.f32 %v3364, %v3987
        %v4145 = vadd.f32 %v3365, %v4076
        %v4146 = vadd.f32 %v3366, %v3989
        %v4147 = vadd.f32 %v3367, %v4078
        %v4148 = vadd.f32 %v3368, %v3992
        %v4149 = vadd.f32 %v3369, %v4081
        %v4150 = vadd.f32 %v3370, %v3994
        %v4151 = vadd.f32 %v3371, %v4083
        %v4152 = vadd.f32 %v3372, %v3997
        %v4153 = vadd.f32 %v3373, %v4086
        %v4154 = vadd.f32 %v3374, %v3999
        %v4155 = vadd.f32 %v3375, %v4088
        %v4156 = vadd.f32 %v3376, %v4002
        %v4157 = vadd.f32 %v3377, %v4091
        %v4158 = vadd.f32 %v3378, %v4004
        %v4159 = vadd.f32 %v3379, %v4093
        %v4160 = vadd.f32 %v3380, %v4007
        %v4161 = vadd.f32 %v3381, %v4096
        %v4162 = vadd.f32 %v3382, %v4009
        %v4163 = vadd.f32 %v3383, %v4098
        %s4164 = scalar_lea.vmem [#allocation2], 40
        %v4165 = vld [vmem:[%s4164 + $0x4] sm:$0x8]
        %v4166 = vld [vmem:[%s4164 + $0x8] sm:$0xf]
        %v4167 = vld [vmem:[%s4164 + $0xc] sm:$0xf]
        %v4168 = vld [vmem:[%s4164 + $0x18] sm:$0x8]
        %v4169 = vld [vmem:[%s4164 + $0x1c] sm:$0xf]
        %v4170 = vld [vmem:[%s4164 + $0x20] sm:$0xf]
        %v4171 = vld [vmem:[%s4164 + $0x2c] sm:$0x8]
        %v4172 = vld [vmem:[%s4164 + $0x30] sm:$0xf]
        %v4173 = vld [vmem:[%s4164 + $0x34] sm:$0xf]
        %v4174 = vld [vmem:[%s4164 + $0x40] sm:$0x8]
        %v4175 = vld [vmem:[%s4164 + $0x44] sm:$0xf]
        %v4176 = vld [vmem:[%s4164 + $0x48] sm:$0xf]
        %v4177 = vld [vmem:[%s4164 + $0x54] sm:$0x8]
        %v4178 = vld [vmem:[%s4164 + $0x58] sm:$0xf]
        %v4179 = vld [vmem:[%s4164 + $0x5c] sm:$0xf]
        %v4180 = vld [vmem:[%s4164 + $0x68] sm:$0x8]
        %v4181 = vld [vmem:[%s4164 + $0x6c] sm:$0xf]
        %v4182 = vld [vmem:[%s4164 + $0x70] sm:$0xf]
        %v4183 = vld [vmem:[%s4164 + $0x7c] sm:$0x8]
        %v4184 = vld [vmem:[%s4164 + $0x80] sm:$0xf]
        %v4185 = vld [vmem:[%s4164 + $0x84] sm:$0xf]
        %v4186 = vld [vmem:[%s4164 + $0x90] sm:$0x8]
        %v4187 = vld [vmem:[%s4164 + $0x94] sm:$0xf]
        %v4188 = vld [vmem:[%s4164 + $0x98] sm:$0xf]
        %v4189 = vld [vmem:[%s4164 + $0xa4] sm:$0x8]
        %v4190 = vld [vmem:[%s4164 + $0xa8] sm:$0xf]
        %v4191 = vld [vmem:[%s4164 + $0xac] sm:$0xf]
        %v4192 = vld [vmem:[%s4164 + $0xb8] sm:$0x8]
        %v4193 = vld [vmem:[%s4164 + $0xbc] sm:$0xf]
        %v4194 = vld [vmem:[%s4164 + $0xc0] sm:$0xf]
        %v4195 = vld [vmem:[%s4164 + $0xcc] sm:$0x8]
        %v4196 = vld [vmem:[%s4164 + $0xd0] sm:$0xf]
        %v4197 = vld [vmem:[%s4164 + $0xd4] sm:$0xf]
        %v4198 = vld [vmem:[%s4164 + $0xe0] sm:$0x8]
        %v4199 = vld [vmem:[%s4164 + $0xe4] sm:$0xf]
        %v4200 = vld [vmem:[%s4164 + $0xe8] sm:$0xf]
        %v4201 = vld [vmem:[%s4164 + $0xf4] sm:$0x8]
        %v4202 = vld [vmem:[%s4164 + $0xf8] sm:$0xf]
        %v4203 = vld [vmem:[%s4164 + $0xfc] sm:$0xf]
        %v4204 = vld [vmem:[%s4164 + $0x108] sm:$0x8]
        %v4205 = vld [vmem:[%s4164 + $0x10c] sm:$0xf]
        %v4206 = vld [vmem:[%s4164 + $0x110] sm:$0xf]
        %v4207 = vld [vmem:[%s4164 + $0x11c] sm:$0x8]
        %v4208 = vld [vmem:[%s4164 + $0x120] sm:$0xf]
        %v4209 = vld [vmem:[%s4164 + $0x124] sm:$0xf]
        %v4210 = vld [vmem:[%s4164 + $0x130] sm:$0x8]
        %v4211 = vld [vmem:[%s4164 + $0x134] sm:$0xf]
        %v4212 = vld [vmem:[%s4164 + $0x138] sm:$0xf]
        %v4214 = vshrl.u32 %v4165, 16
        %v4216 = vrot.slane %v4214, 7
        %v4217 = vrot.slane %v4216, 4
        %v4219 = vshrl.u32 %v4166, 16
        %v4221 = vrot.slane %v4219, 7
        %v4222 = vshll.u32 %v4166, 16
        %v4224 = vor.u32 %v4221, %v4222
        %v4225 = vsel %vm487, %v4217, %v4224
        %v4226 = vrot.slane %v4221, 4
        %v4228 = vshrl.u32 %v4167, 16
        %v4230 = vrot.slane %v4228, 7
        %v4231 = vshll.u32 %v4167, 16
        %v4233 = vor.u32 %v4230, %v4231
        %v4234 = vsel %vm487, %v4226, %v4233
        %v4236 = vshrl.u32 %v4168, 16
        %v4238 = vrot.slane %v4236, 7
        %v4239 = vrot.slane %v4238, 4
        %v4241 = vshrl.u32 %v4169, 16
        %v4243 = vrot.slane %v4241, 7
        %v4244 = vshll.u32 %v4169, 16
        %v4246 = vor.u32 %v4243, %v4244
        %v4247 = vsel %vm487, %v4239, %v4246
        %v4248 = vrot.slane %v4243, 4
        %v4250 = vshrl.u32 %v4170, 16
        %v4252 = vrot.slane %v4250, 7
        %v4253 = vshll.u32 %v4170, 16
        %v4255 = vor.u32 %v4252, %v4253
        %v4256 = vsel %vm487, %v4248, %v4255
        %v4258 = vshrl.u32 %v4171, 16
        %v4260 = vrot.slane %v4258, 7
        %v4261 = vrot.slane %v4260, 4
        %v4263 = vshrl.u32 %v4172, 16
        %v4265 = vrot.slane %v4263, 7
        %v4266 = vshll.u32 %v4172, 16
        %v4268 = vor.u32 %v4265, %v4266
        %v4269 = vsel %vm487, %v4261, %v4268
        %v4270 = vrot.slane %v4265, 4
        %v4272 = vshrl.u32 %v4173, 16
        %v4274 = vrot.slane %v4272, 7
        %v4275 = vshll.u32 %v4173, 16
        %v4277 = vor.u32 %v4274, %v4275
        %v4278 = vsel %vm487, %v4270, %v4277
        %v4280 = vshrl.u32 %v4174, 16
        %v4282 = vrot.slane %v4280, 7
        %v4283 = vrot.slane %v4282, 4
        %v4285 = vshrl.u32 %v4175, 16
        %v4287 = vrot.slane %v4285, 7
        %v4288 = vshll.u32 %v4175, 16
        %v4290 = vor.u32 %v4287, %v4288
        %v4291 = vsel %vm487, %v4283, %v4290
        %v4292 = vrot.slane %v4287, 4
        %v4294 = vshrl.u32 %v4176, 16
        %v4296 = vrot.slane %v4294, 7
        %v4297 = vshll.u32 %v4176, 16
        %v4299 = vor.u32 %v4296, %v4297
        %v4300 = vsel %vm487, %v4292, %v4299
        %v4302 = vshrl.u32 %v4177, 16
        %v4304 = vrot.slane %v4302, 7
        %v4305 = vrot.slane %v4304, 4
        %v4307 = vshrl.u32 %v4178, 16
        %v4309 = vrot.slane %v4307, 7
        %v4310 = vshll.u32 %v4178, 16
        %v4312 = vor.u32 %v4309, %v4310
        %v4313 = vsel %vm487, %v4305, %v4312
        %v4314 = vrot.slane %v4309, 4
        %v4316 = vshrl.u32 %v4179, 16
        %v4318 = vrot.slane %v4316, 7
        %v4319 = vshll.u32 %v4179, 16
        %v4321 = vor.u32 %v4318, %v4319
        %v4322 = vsel %vm487, %v4314, %v4321
        %v4324 = vshrl.u32 %v4180, 16
        %v4326 = vrot.slane %v4324, 7
        %v4327 = vrot.slane %v4326, 4
        %v4329 = vshrl.u32 %v4181, 16
        %v4331 = vrot.slane %v4329, 7
        %v4332 = vshll.u32 %v4181, 16
        %v4334 = vor.u32 %v4331, %v4332
        %v4335 = vsel %vm487, %v4327, %v4334
        %v4336 = vrot.slane %v4331, 4
        %v4338 = vshrl.u32 %v4182, 16
        %v4340 = vrot.slane %v4338, 7
        %v4341 = vshll.u32 %v4182, 16
        %v4343 = vor.u32 %v4340, %v4341
        %v4344 = vsel %vm487, %v4336, %v4343
        %v4346 = vshrl.u32 %v4183, 16
        %v4348 = vrot.slane %v4346, 7
        %v4349 = vrot.slane %v4348, 4
        %v4351 = vshrl.u32 %v4184, 16
        %v4353 = vrot.slane %v4351, 7
        %v4354 = vshll.u32 %v4184, 16
        %v4356 = vor.u32 %v4353, %v4354
        %v4357 = vsel %vm487, %v4349, %v4356
        %v4358 = vrot.slane %v4353, 4
        %v4360 = vshrl.u32 %v4185, 16
        %v4362 = vrot.slane %v4360, 7
        %v4363 = vshll.u32 %v4185, 16
        %v4365 = vor.u32 %v4362, %v4363
        %v4366 = vsel %vm487, %v4358, %v4365
        %v4368 = vshrl.u32 %v4186, 16
        %v4370 = vrot.slane %v4368, 7
        %v4371 = vrot.slane %v4370, 4
        %v4373 = vshrl.u32 %v4187, 16
        %v4375 = vrot.slane %v4373, 7
        %v4376 = vshll.u32 %v4187, 16
        %v4378 = vor.u32 %v4375, %v4376
        %v4379 = vsel %vm487, %v4371, %v4378
        %v4380 = vrot.slane %v4375, 4
        %v4382 = vshrl.u32 %v4188, 16
        %v4384 = vrot.slane %v4382, 7
        %v4385 = vshll.u32 %v4188, 16
        %v4387 = vor.u32 %v4384, %v4385
        %v4388 = vsel %vm487, %v4380, %v4387
        %v4390 = vshrl.u32 %v4189, 16
        %v4392 = vrot.slane %v4390, 7
        %v4393 = vrot.slane %v4392, 4
        %v4395 = vshrl.u32 %v4190, 16
        %v4397 = vrot.slane %v4395, 7
        %v4398 = vshll.u32 %v4190, 16
        %v4400 = vor.u32 %v4397, %v4398
        %v4401 = vsel %vm487, %v4393, %v4400
        %v4402 = vrot.slane %v4397, 4
        %v4404 = vshrl.u32 %v4191, 16
        %v4406 = vrot.slane %v4404, 7
        %v4407 = vshll.u32 %v4191, 16
        %v4409 = vor.u32 %v4406, %v4407
        %v4410 = vsel %vm487, %v4402, %v4409
        %v4412 = vshrl.u32 %v4192, 16
        %v4414 = vrot.slane %v4412, 7
        %v4415 = vrot.slane %v4414, 4
        %v4417 = vshrl.u32 %v4193, 16
        %v4419 = vrot.slane %v4417, 7
        %v4420 = vshll.u32 %v4193, 16
        %v4422 = vor.u32 %v4419, %v4420
        %v4423 = vsel %vm487, %v4415, %v4422
        %v4424 = vrot.slane %v4419, 4
        %v4426 = vshrl.u32 %v4194, 16
        %v4428 = vrot.slane %v4426, 7
        %v4429 = vshll.u32 %v4194, 16
        %v4431 = vor.u32 %v4428, %v4429
        %v4432 = vsel %vm487, %v4424, %v4431
        %v4434 = vshrl.u32 %v4195, 16
        %v4436 = vrot.slane %v4434, 7
        %v4437 = vrot.slane %v4436, 4
        %v4439 = vshrl.u32 %v4196, 16
        %v4441 = vrot.slane %v4439, 7
        %v4442 = vshll.u32 %v4196, 16
        %v4444 = vor.u32 %v4441, %v4442
        %v4445 = vsel %vm487, %v4437, %v4444
        %v4446 = vrot.slane %v4441, 4
        %v4448 = vshrl.u32 %v4197, 16
        %v4450 = vrot.slane %v4448, 7
        %v4451 = vshll.u32 %v4197, 16
        %v4453 = vor.u32 %v4450, %v4451
        %v4454 = vsel %vm487, %v4446, %v4453
        %v4456 = vshrl.u32 %v4198, 16
        %v4458 = vrot.slane %v4456, 7
        %v4459 = vrot.slane %v4458, 4
        %v4461 = vshrl.u32 %v4199, 16
        %v4463 = vrot.slane %v4461, 7
        %v4464 = vshll.u32 %v4199, 16
        %v4466 = vor.u32 %v4463, %v4464
        %v4467 = vsel %vm487, %v4459, %v4466
        %v4468 = vrot.slane %v4463, 4
        %v4470 = vshrl.u32 %v4200, 16
        %v4472 = vrot.slane %v4470, 7
        %v4473 = vshll.u32 %v4200, 16
        %v4475 = vor.u32 %v4472, %v4473
        %v4476 = vsel %vm487, %v4468, %v4475
        %v4478 = vshrl.u32 %v4201, 16
        %v4480 = vrot.slane %v4478, 7
        %v4481 = vrot.slane %v4480, 4
        %v4483 = vshrl.u32 %v4202, 16
        %v4485 = vrot.slane %v4483, 7
        %v4486 = vshll.u32 %v4202, 16
        %v4488 = vor.u32 %v4485, %v4486
        %v4489 = vsel %vm487, %v4481, %v4488
        %v4490 = vrot.slane %v4485, 4
        %v4492 = vshrl.u32 %v4203, 16
        %v4494 = vrot.slane %v4492, 7
        %v4495 = vshll.u32 %v4203, 16
        %v4497 = vor.u32 %v4494, %v4495
        %v4498 = vsel %vm487, %v4490, %v4497
        %v4500 = vshrl.u32 %v4204, 16
        %v4502 = vrot.slane %v4500, 7
        %v4503 = vrot.slane %v4502, 4
        %v4505 = vshrl.u32 %v4205, 16
        %v4507 = vrot.slane %v4505, 7
        %v4508 = vshll.u32 %v4205, 16
        %v4510 = vor.u32 %v4507, %v4508
        %v4511 = vsel %vm487, %v4503, %v4510
        %v4512 = vrot.slane %v4507, 4
        %v4514 = vshrl.u32 %v4206, 16
        %v4516 = vrot.slane %v4514, 7
        %v4517 = vshll.u32 %v4206, 16
        %v4519 = vor.u32 %v4516, %v4517
        %v4520 = vsel %vm487, %v4512, %v4519
        %v4522 = vshrl.u32 %v4207, 16
        %v4524 = vrot.slane %v4522, 7
        %v4525 = vrot.slane %v4524, 4
        %v4527 = vshrl.u32 %v4208, 16
        %v4529 = vrot.slane %v4527, 7
        %v4530 = vshll.u32 %v4208, 16
        %v4532 = vor.u32 %v4529, %v4530
        %v4533 = vsel %vm487, %v4525, %v4532
        %v4534 = vrot.slane %v4529, 4
        %v4536 = vshrl.u32 %v4209, 16
        %v4538 = vrot.slane %v4536, 7
        %v4539 = vshll.u32 %v4209, 16
        %v4541 = vor.u32 %v4538, %v4539
        %v4542 = vsel %vm487, %v4534, %v4541
        %v4544 = vshrl.u32 %v4210, 16
        %v4546 = vrot.slane %v4544, 7
        %v4547 = vrot.slane %v4546, 4
        %v4549 = vshrl.u32 %v4211, 16
        %v4551 = vrot.slane %v4549, 7
        %v4552 = vshll.u32 %v4211, 16
        %v4554 = vor.u32 %v4551, %v4552
        %v4555 = vsel %vm487, %v4547, %v4554
        %v4556 = vrot.slane %v4551, 4
        %v4558 = vshrl.u32 %v4212, 16
        %v4560 = vrot.slane %v4558, 7
        %v4561 = vshll.u32 %v4212, 16
        %v4563 = vor.u32 %v4560, %v4561
        %v4564 = vsel %vm487, %v4556, %v4563
        %s4565 = scalar_lea.vmem %s1, 24
        %v4566 = vld [vmem:[%s4565] sm:$0xf]
        %v4567 = vunpack.c.l.b16 %v4225
        %v4568 = vunpack.c.l.b16 %v4234
        %v4569 = vunpack.c.l.b16 %v4247
        %v4570 = vunpack.c.l.b16 %v4256
        %v4571 = vunpack.c.l.b16 %v4269
        %v4572 = vunpack.c.l.b16 %v4278
        %v4573 = vunpack.c.l.b16 %v4291
        %v4574 = vunpack.c.l.b16 %v4300
        %v4575 = vunpack.c.l.b16 %v4313
        %v4576 = vunpack.c.l.b16 %v4322
        %v4577 = vunpack.c.l.b16 %v4335
        %v4578 = vunpack.c.l.b16 %v4344
        %v4579 = vunpack.c.l.b16 %v4357
        %v4580 = vunpack.c.l.b16 %v4366
        %v4581 = vunpack.c.l.b16 %v4379
        %v4582 = vunpack.c.l.b16 %v4388
        %v4583 = vunpack.c.l.b16 %v4401
        %v4584 = vunpack.c.l.b16 %v4410
        %v4585 = vunpack.c.l.b16 %v4423
        %v4586 = vunpack.c.l.b16 %v4432
        %v4587 = vunpack.c.l.b16 %v4445
        %v4588 = vunpack.c.l.b16 %v4454
        %v4589 = vunpack.c.l.b16 %v4467
        %v4590 = vunpack.c.l.b16 %v4476
        %v4591 = vunpack.c.l.b16 %v4489
        %v4592 = vunpack.c.l.b16 %v4498
        %v4593 = vunpack.c.l.b16 %v4511
        %v4594 = vunpack.c.l.b16 %v4520
        %v4595 = vunpack.c.l.b16 %v4533
        %v4596 = vunpack.c.l.b16 %v4542
        %v4597 = vunpack.c.l.b16 %v4555
        %v4598 = vunpack.c.l.b16 %v4564
        %v4599 = vpack.c.b16 %v4568, %v4567
        %v4600 = vpack.c.b16 %v4570, %v4569
        %v4601 = vpack.c.b16 %v4572, %v4571
        %v4602 = vpack.c.b16 %v4574, %v4573
        %v4603 = vpack.c.b16 %v4576, %v4575
        %v4604 = vpack.c.b16 %v4578, %v4577
        %v4605 = vpack.c.b16 %v4580, %v4579
        %v4606 = vpack.c.b16 %v4582, %v4581
        %v4607 = vpack.c.b16 %v4584, %v4583
        %v4608 = vpack.c.b16 %v4586, %v4585
        %v4609 = vpack.c.b16 %v4588, %v4587
        %v4610 = vpack.c.b16 %v4590, %v4589
        %v4611 = vpack.c.b16 %v4592, %v4591
        %v4612 = vpack.c.b16 %v4594, %v4593
        %v4613 = vpack.c.b16 %v4596, %v4595
        %v4614 = vpack.c.b16 %v4598, %v4597
        %4616 = vst [vmem:[#allocation1] ss:$4 sm:$0xff] %v4566
        %v4617 = vld.sshfl [vmem:[#allocation1] sm:$0xff pattern:$0x73625140]
        %v4618 = vld.sshfl [vmem:[#allocation1 + $0x8] sm:$0xff pattern:$0x73625140]
        %v4620 = vsel %vm927, %v4599, 0
        %v4623 = vsel %vm927, %v4600, 0
        %v4626 = vsel %vm927, %v4601, 0
        %v4629 = vsel %vm927, %v4602, 0
        %v4632 = vsel %vm927, %v4603, 0
        %v4635 = vsel %vm927, %v4604, 0
        %v4638 = vsel %vm927, %v4605, 0
        %v4641 = vsel %vm927, %v4606, 0
        %v4644 = vsel %vm927, %v4607, 0
        %v4647 = vsel %vm927, %v4608, 0
        %v4650 = vsel %vm927, %v4609, 0
        %v4653 = vsel %vm927, %v4610, 0
        %v4656 = vsel %vm927, %v4611, 0
        %v4659 = vsel %vm927, %v4612, 0
        %v4662 = vsel %vm927, %v4613, 0
        %v4665 = vsel %vm927, %v4614, 0
        %v4667 = vsel %vm976, %v4617, 0
        %v4669 = vsel %vm976, %v4618, 0
        %4671 = vmatpush.bf16.msra.mxu0 0
        %4672 = vmatpush.bf16.msra.mxu0 0
        %4673 = vmatpush.bf16.msra.mxu0 0
        %4674 = vmatpush.bf16.msra.mxu0 0
        %4675 = vmatpush.bf16.msra.mxu0 0
        %4676 = vmatpush.bf16.msra.mxu0 0
        %4677 = vmatpush.bf16.msra.mxu0 0
        %4678 = vmatpush.bf16.msra.mxu0 %v4667
        %4679 = vmatmul.bf16.gmra.mxu0 %v4620
        %v4680 = vpop.f32.mrf.mxu0
        %v4681 = vadd.f32 0.0, %v4680
        %v4682 = vpop.f32.mrf.mxu0
        %v4683 = vadd.f32 0.0, %v4682
        %4684 = vmatmul.bf16.gmra.mxu0 %v4623
        %v4685 = vpop.f32.mrf.mxu0
        %v4686 = vadd.f32 0.0, %v4685
        %v4687 = vpop.f32.mrf.mxu0
        %v4688 = vadd.f32 0.0, %v4687
        %4689 = vmatmul.bf16.gmra.mxu0 %v4626
        %v4690 = vpop.f32.mrf.mxu0
        %v4691 = vadd.f32 0.0, %v4690
        %v4692 = vpop.f32.mrf.mxu0
        %v4693 = vadd.f32 0.0, %v4692
        %4694 = vmatmul.bf16.gmra.mxu0 %v4629
        %v4695 = vpop.f32.mrf.mxu0
        %v4696 = vadd.f32 0.0, %v4695
        %v4697 = vpop.f32.mrf.mxu0
        %v4698 = vadd.f32 0.0, %v4697
        %4699 = vmatmul.bf16.gmra.mxu0 %v4632
        %v4700 = vpop.f32.mrf.mxu0
        %v4701 = vadd.f32 0.0, %v4700
        %v4702 = vpop.f32.mrf.mxu0
        %v4703 = vadd.f32 0.0, %v4702
        %4704 = vmatmul.bf16.gmra.mxu0 %v4635
        %v4705 = vpop.f32.mrf.mxu0
        %v4706 = vadd.f32 0.0, %v4705
        %v4707 = vpop.f32.mrf.mxu0
        %v4708 = vadd.f32 0.0, %v4707
        %4709 = vmatmul.bf16.gmra.mxu0 %v4638
        %v4710 = vpop.f32.mrf.mxu0
        %v4711 = vadd.f32 0.0, %v4710
        %v4712 = vpop.f32.mrf.mxu0
        %v4713 = vadd.f32 0.0, %v4712
        %4714 = vmatmul.bf16.gmra.mxu0 %v4641
        %v4715 = vpop.f32.mrf.mxu0
        %v4716 = vadd.f32 0.0, %v4715
        %v4717 = vpop.f32.mrf.mxu0
        %v4718 = vadd.f32 0.0, %v4717
        %4719 = vmatmul.bf16.gmra.mxu0 %v4644
        %v4720 = vpop.f32.mrf.mxu0
        %v4721 = vadd.f32 0.0, %v4720
        %v4722 = vpop.f32.mrf.mxu0
        %v4723 = vadd.f32 0.0, %v4722
        %4724 = vmatmul.bf16.gmra.mxu0 %v4647
        %v4725 = vpop.f32.mrf.mxu0
        %v4726 = vadd.f32 0.0, %v4725
        %v4727 = vpop.f32.mrf.mxu0
        %v4728 = vadd.f32 0.0, %v4727
        %4729 = vmatmul.bf16.gmra.mxu0 %v4650
        %v4730 = vpop.f32.mrf.mxu0
        %v4731 = vadd.f32 0.0, %v4730
        %v4732 = vpop.f32.mrf.mxu0
        %v4733 = vadd.f32 0.0, %v4732
        %4734 = vmatmul.bf16.gmra.mxu0 %v4653
        %v4735 = vpop.f32.mrf.mxu0
        %v4736 = vadd.f32 0.0, %v4735
        %v4737 = vpop.f32.mrf.mxu0
        %v4738 = vadd.f32 0.0, %v4737
        %4739 = vmatmul.bf16.gmra.mxu0 %v4656
        %v4740 = vpop.f32.mrf.mxu0
        %v4741 = vadd.f32 0.0, %v4740
        %v4742 = vpop.f32.mrf.mxu0
        %v4743 = vadd.f32 0.0, %v4742
        %4744 = vmatmul.bf16.gmra.mxu0 %v4659
        %v4745 = vpop.f32.mrf.mxu0
        %v4746 = vadd.f32 0.0, %v4745
        %v4747 = vpop.f32.mrf.mxu0
        %v4748 = vadd.f32 0.0, %v4747
        %4749 = vmatmul.bf16.gmra.mxu0 %v4662
        %v4750 = vpop.f32.mrf.mxu0
        %v4751 = vadd.f32 0.0, %v4750
        %v4752 = vpop.f32.mrf.mxu0
        %v4753 = vadd.f32 0.0, %v4752
        %4754 = vmatmul.bf16.gmra.mxu0 %v4665
        %v4755 = vpop.f32.mrf.mxu0
        %v4756 = vadd.f32 0.0, %v4755
        %v4757 = vpop.f32.mrf.mxu0
        %v4758 = vadd.f32 0.0, %v4757
        %4759 = vdwg.mxu0
        %4760 = vmatpush.bf16.msra.mxu0 0
        %4761 = vmatpush.bf16.msra.mxu0 0
        %4762 = vmatpush.bf16.msra.mxu0 0
        %4763 = vmatpush.bf16.msra.mxu0 0
        %4764 = vmatpush.bf16.msra.mxu0 0
        %4765 = vmatpush.bf16.msra.mxu0 0
        %4766 = vmatpush.bf16.msra.mxu0 0
        %4767 = vmatpush.bf16.msra.mxu0 %v4669
        %4768 = vmatmul.bf16.gmra.mxu0 %v4620
        %v4769 = vpop.f32.mrf.mxu0
        %v4770 = vadd.f32 0.0, %v4769
        %v4771 = vpop.f32.mrf.mxu0
        %v4772 = vadd.f32 0.0, %v4771
        %4773 = vmatmul.bf16.gmra.mxu0 %v4623
        %v4774 = vpop.f32.mrf.mxu0
        %v4775 = vadd.f32 0.0, %v4774
        %v4776 = vpop.f32.mrf.mxu0
        %v4777 = vadd.f32 0.0, %v4776
        %4778 = vmatmul.bf16.gmra.mxu0 %v4626
        %v4779 = vpop.f32.mrf.mxu0
        %v4780 = vadd.f32 0.0, %v4779
        %v4781 = vpop.f32.mrf.mxu0
        %v4782 = vadd.f32 0.0, %v4781
        %4783 = vmatmul.bf16.gmra.mxu0 %v4629
        %v4784 = vpop.f32.mrf.mxu0
        %v4785 = vadd.f32 0.0, %v4784
        %v4786 = vpop.f32.mrf.mxu0
        %v4787 = vadd.f32 0.0, %v4786
        %4788 = vmatmul.bf16.gmra.mxu0 %v4632
        %v4789 = vpop.f32.mrf.mxu0
        %v4790 = vadd.f32 0.0, %v4789
        %v4791 = vpop.f32.mrf.mxu0
        %v4792 = vadd.f32 0.0, %v4791
        %4793 = vmatmul.bf16.gmra.mxu0 %v4635
        %v4794 = vpop.f32.mrf.mxu0
        %v4795 = vadd.f32 0.0, %v4794
        %v4796 = vpop.f32.mrf.mxu0
        %v4797 = vadd.f32 0.0, %v4796
        %4798 = vmatmul.bf16.gmra.mxu0 %v4638
        %v4799 = vpop.f32.mrf.mxu0
        %v4800 = vadd.f32 0.0, %v4799
        %v4801 = vpop.f32.mrf.mxu0
        %v4802 = vadd.f32 0.0, %v4801
        %4803 = vmatmul.bf16.gmra.mxu0 %v4641
        %v4804 = vpop.f32.mrf.mxu0
        %v4805 = vadd.f32 0.0, %v4804
        %v4806 = vpop.f32.mrf.mxu0
        %v4807 = vadd.f32 0.0, %v4806
        %4808 = vmatmul.bf16.gmra.mxu0 %v4644
        %v4809 = vpop.f32.mrf.mxu0
        %v4810 = vadd.f32 0.0, %v4809
        %v4811 = vpop.f32.mrf.mxu0
        %v4812 = vadd.f32 0.0, %v4811
        %4813 = vmatmul.bf16.gmra.mxu0 %v4647
        %v4814 = vpop.f32.mrf.mxu0
        %v4815 = vadd.f32 0.0, %v4814
        %v4816 = vpop.f32.mrf.mxu0
        %v4817 = vadd.f32 0.0, %v4816
        %4818 = vmatmul.bf16.gmra.mxu0 %v4650
        %v4819 = vpop.f32.mrf.mxu0
        %v4820 = vadd.f32 0.0, %v4819
        %v4821 = vpop.f32.mrf.mxu0
        %v4822 = vadd.f32 0.0, %v4821
        %4823 = vmatmul.bf16.gmra.mxu0 %v4653
        %v4824 = vpop.f32.mrf.mxu0
        %v4825 = vadd.f32 0.0, %v4824
        %v4826 = vpop.f32.mrf.mxu0
        %v4827 = vadd.f32 0.0, %v4826
        %4828 = vmatmul.bf16.gmra.mxu0 %v4656
        %v4829 = vpop.f32.mrf.mxu0
        %v4830 = vadd.f32 0.0, %v4829
        %v4831 = vpop.f32.mrf.mxu0
        %v4832 = vadd.f32 0.0, %v4831
        %4833 = vmatmul.bf16.gmra.mxu0 %v4659
        %v4834 = vpop.f32.mrf.mxu0
        %v4835 = vadd.f32 0.0, %v4834
        %v4836 = vpop.f32.mrf.mxu0
        %v4837 = vadd.f32 0.0, %v4836
        %4838 = vmatmul.bf16.gmra.mxu0 %v4662
        %v4839 = vpop.f32.mrf.mxu0
        %v4840 = vadd.f32 0.0, %v4839
        %v4841 = vpop.f32.mrf.mxu0
        %v4842 = vadd.f32 0.0, %v4841
        %4843 = vmatmul.bf16.gmra.mxu0 %v4665
        %v4844 = vpop.f32.mrf.mxu0
        %v4845 = vadd.f32 0.0, %v4844
        %v4846 = vpop.f32.mrf.mxu0
        %v4847 = vadd.f32 0.0, %v4846
        %4848 = vdwg.mxu0
        %v4849 = vadd.f32 %v4100, %v4681
        %v4850 = vadd.f32 %v4101, %v4770
        %v4851 = vadd.f32 %v4102, %v4683
        %v4852 = vadd.f32 %v4103, %v4772
        %v4853 = vadd.f32 %v4104, %v4686
        %v4854 = vadd.f32 %v4105, %v4775
        %v4855 = vadd.f32 %v4106, %v4688
        %v4856 = vadd.f32 %v4107, %v4777
        %v4857 = vadd.f32 %v4108, %v4691
        %v4858 = vadd.f32 %v4109, %v4780
        %v4859 = vadd.f32 %v4110, %v4693
        %v4860 = vadd.f32 %v4111, %v4782
        %v4861 = vadd.f32 %v4112, %v4696
        %v4862 = vadd.f32 %v4113, %v4785
        %v4863 = vadd.f32 %v4114, %v4698
        %v4864 = vadd.f32 %v4115, %v4787
        %v4865 = vadd.f32 %v4116, %v4701
        %v4866 = vadd.f32 %v4117, %v4790
        %v4867 = vadd.f32 %v4118, %v4703
        %v4868 = vadd.f32 %v4119, %v4792
        %v4869 = vadd.f32 %v4120, %v4706
        %v4870 = vadd.f32 %v4121, %v4795
        %v4871 = vadd.f32 %v4122, %v4708
        %v4872 = vadd.f32 %v4123, %v4797
        %v4873 = vadd.f32 %v4124, %v4711
        %v4874 = vadd.f32 %v4125, %v4800
        %v4875 = vadd.f32 %v4126, %v4713
        %v4876 = vadd.f32 %v4127, %v4802
        %v4877 = vadd.f32 %v4128, %v4716
        %v4878 = vadd.f32 %v4129, %v4805
        %v4879 = vadd.f32 %v4130, %v4718
        %v4880 = vadd.f32 %v4131, %v4807
        %v4881 = vadd.f32 %v4132, %v4721
        %v4882 = vadd.f32 %v4133, %v4810
        %v4883 = vadd.f32 %v4134, %v4723
        %v4884 = vadd.f32 %v4135, %v4812
        %v4885 = vadd.f32 %v4136, %v4726
        %v4886 = vadd.f32 %v4137, %v4815
        %v4887 = vadd.f32 %v4138, %v4728
        %v4888 = vadd.f32 %v4139, %v4817
        %v4889 = vadd.f32 %v4140, %v4731
        %v4890 = vadd.f32 %v4141, %v4820
        %v4891 = vadd.f32 %v4142, %v4733
        %v4892 = vadd.f32 %v4143, %v4822
        %v4893 = vadd.f32 %v4144, %v4736
        %v4894 = vadd.f32 %v4145, %v4825
        %v4895 = vadd.f32 %v4146, %v4738
        %v4896 = vadd.f32 %v4147, %v4827
        %v4897 = vadd.f32 %v4148, %v4741
        %v4898 = vadd.f32 %v4149, %v4830
        %v4899 = vadd.f32 %v4150, %v4743
        %v4900 = vadd.f32 %v4151, %v4832
        %v4901 = vadd.f32 %v4152, %v4746
        %v4902 = vadd.f32 %v4153, %v4835
        %v4903 = vadd.f32 %v4154, %v4748
        %v4904 = vadd.f32 %v4155, %v4837
        %v4905 = vadd.f32 %v4156, %v4751
        %v4906 = vadd.f32 %v4157, %v4840
        %v4907 = vadd.f32 %v4158, %v4753
        %v4908 = vadd.f32 %v4159, %v4842
        %v4909 = vadd.f32 %v4160, %v4756
        %v4910 = vadd.f32 %v4161, %v4845
        %v4911 = vadd.f32 %v4162, %v4758
        %v4912 = vadd.f32 %v4163, %v4847
        %v4913 = vld [vmem:[%s4164 + $0x8] sm:$0xf]
        %v4914 = vld [vmem:[%s4164 + $0xc] sm:$0xf]
        %v4915 = vld [vmem:[%s4164 + $0x1c] sm:$0xf]
        %v4916 = vld [vmem:[%s4164 + $0x20] sm:$0xf]
        %v4917 = vld [vmem:[%s4164 + $0x30] sm:$0xf]
        %v4918 = vld [vmem:[%s4164 + $0x34] sm:$0xf]
        %v4919 = vld [vmem:[%s4164 + $0x44] sm:$0xf]
        %v4920 = vld [vmem:[%s4164 + $0x48] sm:$0xf]
        %v4921 = vld [vmem:[%s4164 + $0x58] sm:$0xf]
        %v4922 = vld [vmem:[%s4164 + $0x5c] sm:$0xf]
        %v4923 = vld [vmem:[%s4164 + $0x6c] sm:$0xf]
        %v4924 = vld [vmem:[%s4164 + $0x70] sm:$0xf]
        %v4925 = vld [vmem:[%s4164 + $0x80] sm:$0xf]
        %v4926 = vld [vmem:[%s4164 + $0x84] sm:$0xf]
        %v4927 = vld [vmem:[%s4164 + $0x94] sm:$0xf]
        %v4928 = vld [vmem:[%s4164 + $0x98] sm:$0xf]
        %v4929 = vld [vmem:[%s4164 + $0xa8] sm:$0xf]
        %v4930 = vld [vmem:[%s4164 + $0xac] sm:$0xf]
        %v4931 = vld [vmem:[%s4164 + $0xbc] sm:$0xf]
        %v4932 = vld [vmem:[%s4164 + $0xc0] sm:$0xf]
        %v4933 = vld [vmem:[%s4164 + $0xd0] sm:$0xf]
        %v4934 = vld [vmem:[%s4164 + $0xd4] sm:$0xf]
        %v4935 = vld [vmem:[%s4164 + $0xe4] sm:$0xf]
        %v4936 = vld [vmem:[%s4164 + $0xe8] sm:$0xf]
        %v4937 = vld [vmem:[%s4164 + $0xf8] sm:$0xf]
        %v4938 = vld [vmem:[%s4164 + $0xfc] sm:$0xf]
        %v4939 = vld [vmem:[%s4164 + $0x10c] sm:$0xf]
        %v4940 = vld [vmem:[%s4164 + $0x110] sm:$0xf]
        %v4941 = vld [vmem:[%s4164 + $0x120] sm:$0xf]
        %v4942 = vld [vmem:[%s4164 + $0x124] sm:$0xf]
        %v4943 = vld [vmem:[%s4164 + $0x134] sm:$0xf]
        %v4944 = vld [vmem:[%s4164 + $0x138] sm:$0xf]
        %s4945 = scalar_lea.vmem %s1, 28
        %v4946 = vld [vmem:[%s4945] sm:$0xf]
        %v4979 = vunpack.c.l.b16 %v4913
        %v4980 = vunpack.c.l.b16 %v4914
        %v4981 = vunpack.c.l.b16 %v4915
        %v4982 = vunpack.c.l.b16 %v4916
        %v4983 = vunpack.c.l.b16 %v4917
        %v4984 = vunpack.c.l.b16 %v4918
        %v4985 = vunpack.c.l.b16 %v4919
        %v4986 = vunpack.c.l.b16 %v4920
        %v4987 = vunpack.c.l.b16 %v4921
        %v4988 = vunpack.c.l.b16 %v4922
        %v4989 = vunpack.c.l.b16 %v4923
        %v4990 = vunpack.c.l.b16 %v4924
        %v4991 = vunpack.c.l.b16 %v4925
        %v4992 = vunpack.c.l.b16 %v4926
        %v4993 = vunpack.c.l.b16 %v4927
        %v4994 = vunpack.c.l.b16 %v4928
        %v4995 = vunpack.c.l.b16 %v4929
        %v4996 = vunpack.c.l.b16 %v4930
        %v4997 = vunpack.c.l.b16 %v4931
        %v4998 = vunpack.c.l.b16 %v4932
        %v4999 = vunpack.c.l.b16 %v4933
        %v5000 = vunpack.c.l.b16 %v4934
        %v5001 = vunpack.c.l.b16 %v4935
        %v5002 = vunpack.c.l.b16 %v4936
        %v5003 = vunpack.c.l.b16 %v4937
        %v5004 = vunpack.c.l.b16 %v4938
        %v5005 = vunpack.c.l.b16 %v4939
        %v5006 = vunpack.c.l.b16 %v4940
        %v5007 = vunpack.c.l.b16 %v4941
        %v5008 = vunpack.c.l.b16 %v4942
        %v5009 = vunpack.c.l.b16 %v4943
        %v5010 = vunpack.c.l.b16 %v4944
        %v5011 = vpack.c.b16 %v4980, %v4979
        %v5012 = vpack.c.b16 %v4982, %v4981
        %v5013 = vpack.c.b16 %v4984, %v4983
        %v5014 = vpack.c.b16 %v4986, %v4985
        %v5015 = vpack.c.b16 %v4988, %v4987
        %v5016 = vpack.c.b16 %v4990, %v4989
        %v5017 = vpack.c.b16 %v4992, %v4991
        %v5018 = vpack.c.b16 %v4994, %v4993
        %v5019 = vpack.c.b16 %v4996, %v4995
        %v5020 = vpack.c.b16 %v4998, %v4997
        %v5021 = vpack.c.b16 %v5000, %v4999
        %v5022 = vpack.c.b16 %v5002, %v5001
        %v5023 = vpack.c.b16 %v5004, %v5003
        %v5024 = vpack.c.b16 %v5006, %v5005
        %v5025 = vpack.c.b16 %v5008, %v5007
        %v5026 = vpack.c.b16 %v5010, %v5009
        %5028 = vst [vmem:[#allocation1] ss:$4 sm:$0xff] %v4946
        %v5029 = vld.sshfl [vmem:[#allocation1] sm:$0xff pattern:$0x73625140]
        %v5030 = vld.sshfl [vmem:[#allocation1 + $0x8] sm:$0xff pattern:$0x73625140]
        %v5032 = vsel %vm927, %v5011, 0
        %v5035 = vsel %vm927, %v5012, 0
        %v5038 = vsel %vm927, %v5013, 0
        %v5041 = vsel %vm927, %v5014, 0
        %v5044 = vsel %vm927, %v5015, 0
        %v5047 = vsel %vm927, %v5016, 0
        %v5050 = vsel %vm927, %v5017, 0
        %v5053 = vsel %vm927, %v5018, 0
        %v5056 = vsel %vm927, %v5019, 0
        %v5059 = vsel %vm927, %v5020, 0
        %v5062 = vsel %vm927, %v5021, 0
        %v5065 = vsel %vm927, %v5022, 0
        %v5068 = vsel %vm927, %v5023, 0
        %v5071 = vsel %vm927, %v5024, 0
        %v5074 = vsel %vm927, %v5025, 0
        %v5077 = vsel %vm927, %v5026, 0
        %v5079 = vsel %vm976, %v5029, 0
        %v5081 = vsel %vm976, %v5030, 0
        %5083 = vmatpush.bf16.msra.mxu0 0
        %5084 = vmatpush.bf16.msra.mxu0 0
        %5085 = vmatpush.bf16.msra.mxu0 0
        %5086 = vmatpush.bf16.msra.mxu0 0
        %5087 = vmatpush.bf16.msra.mxu0 0
        %5088 = vmatpush.bf16.msra.mxu0 0
        %5089 = vmatpush.bf16.msra.mxu0 0
        %5090 = vmatpush.bf16.msra.mxu0 %v5079
        %5091 = vmatmul.bf16.gmra.mxu0 %v5032
        %v5092 = vpop.f32.mrf.mxu0
        %v5093 = vadd.f32 0.0, %v5092
        %v5094 = vpop.f32.mrf.mxu0
        %v5095 = vadd.f32 0.0, %v5094
        %5096 = vmatmul.bf16.gmra.mxu0 %v5035
        %v5097 = vpop.f32.mrf.mxu0
        %v5098 = vadd.f32 0.0, %v5097
        %v5099 = vpop.f32.mrf.mxu0
        %v5100 = vadd.f32 0.0, %v5099
        %5101 = vmatmul.bf16.gmra.mxu0 %v5038
        %v5102 = vpop.f32.mrf.mxu0
        %v5103 = vadd.f32 0.0, %v5102
        %v5104 = vpop.f32.mrf.mxu0
        %v5105 = vadd.f32 0.0, %v5104
        %5106 = vmatmul.bf16.gmra.mxu0 %v5041
        %v5107 = vpop.f32.mrf.mxu0
        %v5108 = vadd.f32 0.0, %v5107
        %v5109 = vpop.f32.mrf.mxu0
        %v5110 = vadd.f32 0.0, %v5109
        %5111 = vmatmul.bf16.gmra.mxu0 %v5044
        %v5112 = vpop.f32.mrf.mxu0
        %v5113 = vadd.f32 0.0, %v5112
        %v5114 = vpop.f32.mrf.mxu0
        %v5115 = vadd.f32 0.0, %v5114
        %5116 = vmatmul.bf16.gmra.mxu0 %v5047
        %v5117 = vpop.f32.mrf.mxu0
        %v5118 = vadd.f32 0.0, %v5117
        %v5119 = vpop.f32.mrf.mxu0
        %v5120 = vadd.f32 0.0, %v5119
        %5121 = vmatmul.bf16.gmra.mxu0 %v5050
        %v5122 = vpop.f32.mrf.mxu0
        %v5123 = vadd.f32 0.0, %v5122
        %v5124 = vpop.f32.mrf.mxu0
        %v5125 = vadd.f32 0.0, %v5124
        %5126 = vmatmul.bf16.gmra.mxu0 %v5053
        %v5127 = vpop.f32.mrf.mxu0
        %v5128 = vadd.f32 0.0, %v5127
        %v5129 = vpop.f32.mrf.mxu0
        %v5130 = vadd.f32 0.0, %v5129
        %5131 = vmatmul.bf16.gmra.mxu0 %v5056
        %v5132 = vpop.f32.mrf.mxu0
        %v5133 = vadd.f32 0.0, %v5132
        %v5134 = vpop.f32.mrf.mxu0
        %v5135 = vadd.f32 0.0, %v5134
        %5136 = vmatmul.bf16.gmra.mxu0 %v5059
        %v5137 = vpop.f32.mrf.mxu0
        %v5138 = vadd.f32 0.0, %v5137
        %v5139 = vpop.f32.mrf.mxu0
        %v5140 = vadd.f32 0.0, %v5139
        %5141 = vmatmul.bf16.gmra.mxu0 %v5062
        %v5142 = vpop.f32.mrf.mxu0
        %v5143 = vadd.f32 0.0, %v5142
        %v5144 = vpop.f32.mrf.mxu0
        %v5145 = vadd.f32 0.0, %v5144
        %5146 = vmatmul.bf16.gmra.mxu0 %v5065
        %v5147 = vpop.f32.mrf.mxu0
        %v5148 = vadd.f32 0.0, %v5147
        %v5149 = vpop.f32.mrf.mxu0
        %v5150 = vadd.f32 0.0, %v5149
        %5151 = vmatmul.bf16.gmra.mxu0 %v5068
        %v5152 = vpop.f32.mrf.mxu0
        %v5153 = vadd.f32 0.0, %v5152
        %v5154 = vpop.f32.mrf.mxu0
        %v5155 = vadd.f32 0.0, %v5154
        %5156 = vmatmul.bf16.gmra.mxu0 %v5071
        %v5157 = vpop.f32.mrf.mxu0
        %v5158 = vadd.f32 0.0, %v5157
        %v5159 = vpop.f32.mrf.mxu0
        %v5160 = vadd.f32 0.0, %v5159
        %5161 = vmatmul.bf16.gmra.mxu0 %v5074
        %v5162 = vpop.f32.mrf.mxu0
        %v5163 = vadd.f32 0.0, %v5162
        %v5164 = vpop.f32.mrf.mxu0
        %v5165 = vadd.f32 0.0, %v5164
        %5166 = vmatmul.bf16.gmra.mxu0 %v5077
        %v5167 = vpop.f32.mrf.mxu0
        %v5168 = vadd.f32 0.0, %v5167
        %v5169 = vpop.f32.mrf.mxu0
        %v5170 = vadd.f32 0.0, %v5169
        %5171 = vdwg.mxu0
        %5172 = vmatpush.bf16.msra.mxu0 0
        %5173 = vmatpush.bf16.msra.mxu0 0
        %5174 = vmatpush.bf16.msra.mxu0 0
        %5175 = vmatpush.bf16.msra.mxu0 0
        %5176 = vmatpush.bf16.msra.mxu0 0
        %5177 = vmatpush.bf16.msra.mxu0 0
        %5178 = vmatpush.bf16.msra.mxu0 0
        %5179 = vmatpush.bf16.msra.mxu0 %v5081
        %5180 = vmatmul.bf16.gmra.mxu0 %v5032
        %v5181 = vpop.f32.mrf.mxu0
        %v5182 = vadd.f32 0.0, %v5181
        %v5183 = vpop.f32.mrf.mxu0
        %v5184 = vadd.f32 0.0, %v5183
        %5185 = vmatmul.bf16.gmra.mxu0 %v5035
        %v5186 = vpop.f32.mrf.mxu0
        %v5187 = vadd.f32 0.0, %v5186
        %v5188 = vpop.f32.mrf.mxu0
        %v5189 = vadd.f32 0.0, %v5188
        %5190 = vmatmul.bf16.gmra.mxu0 %v5038
        %v5191 = vpop.f32.mrf.mxu0
        %v5192 = vadd.f32 0.0, %v5191
        %v5193 = vpop.f32.mrf.mxu0
        %v5194 = vadd.f32 0.0, %v5193
        %5195 = vmatmul.bf16.gmra.mxu0 %v5041
        %v5196 = vpop.f32.mrf.mxu0
        %v5197 = vadd.f32 0.0, %v5196
        %v5198 = vpop.f32.mrf.mxu0
        %v5199 = vadd.f32 0.0, %v5198
        %5200 = vmatmul.bf16.gmra.mxu0 %v5044
        %v5201 = vpop.f32.mrf.mxu0
        %v5202 = vadd.f32 0.0, %v5201
        %v5203 = vpop.f32.mrf.mxu0
        %v5204 = vadd.f32 0.0, %v5203
        %5205 = vmatmul.bf16.gmra.mxu0 %v5047
        %v5206 = vpop.f32.mrf.mxu0
        %v5207 = vadd.f32 0.0, %v5206
        %v5208 = vpop.f32.mrf.mxu0
        %v5209 = vadd.f32 0.0, %v5208
        %5210 = vmatmul.bf16.gmra.mxu0 %v5050
        %v5211 = vpop.f32.mrf.mxu0
        %v5212 = vadd.f32 0.0, %v5211
        %v5213 = vpop.f32.mrf.mxu0
        %v5214 = vadd.f32 0.0, %v5213
        %5215 = vmatmul.bf16.gmra.mxu0 %v5053
        %v5216 = vpop.f32.mrf.mxu0
        %v5217 = vadd.f32 0.0, %v5216
        %v5218 = vpop.f32.mrf.mxu0
        %v5219 = vadd.f32 0.0, %v5218
        %5220 = vmatmul.bf16.gmra.mxu0 %v5056
        %v5221 = vpop.f32.mrf.mxu0
        %v5222 = vadd.f32 0.0, %v5221
        %v5223 = vpop.f32.mrf.mxu0
        %v5224 = vadd.f32 0.0, %v5223
        %5225 = vmatmul.bf16.gmra.mxu0 %v5059
        %v5226 = vpop.f32.mrf.mxu0
        %v5227 = vadd.f32 0.0, %v5226
        %v5228 = vpop.f32.mrf.mxu0
        %v5229 = vadd.f32 0.0, %v5228
        %5230 = vmatmul.bf16.gmra.mxu0 %v5062
        %v5231 = vpop.f32.mrf.mxu0
        %v5232 = vadd.f32 0.0, %v5231
        %v5233 = vpop.f32.mrf.mxu0
        %v5234 = vadd.f32 0.0, %v5233
        %5235 = vmatmul.bf16.gmra.mxu0 %v5065
        %v5236 = vpop.f32.mrf.mxu0
        %v5237 = vadd.f32 0.0, %v5236
        %v5238 = vpop.f32.mrf.mxu0
        %v5239 = vadd.f32 0.0, %v5238
        %5240 = vmatmul.bf16.gmra.mxu0 %v5068
        %v5241 = vpop.f32.mrf.mxu0
        %v5242 = vadd.f32 0.0, %v5241
        %v5243 = vpop.f32.mrf.mxu0
        %v5244 = vadd.f32 0.0, %v5243
        %5245 = vmatmul.bf16.gmra.mxu0 %v5071
        %v5246 = vpop.f32.mrf.mxu0
        %v5247 = vadd.f32 0.0, %v5246
        %v5248 = vpop.f32.mrf.mxu0
        %v5249 = vadd.f32 0.0, %v5248
        %5250 = vmatmul.bf16.gmra.mxu0 %v5074
        %v5251 = vpop.f32.mrf.mxu0
        %v5252 = vadd.f32 0.0, %v5251
        %v5253 = vpop.f32.mrf.mxu0
        %v5254 = vadd.f32 0.0, %v5253
        %5255 = vmatmul.bf16.gmra.mxu0 %v5077
        %v5256 = vpop.f32.mrf.mxu0
        %v5257 = vadd.f32 0.0, %v5256
        %v5258 = vpop.f32.mrf.mxu0
        %v5259 = vadd.f32 0.0, %v5258
        %5260 = vdwg.mxu0
        %v5261 = vadd.f32 %v4849, %v5093
        %v5262 = vadd.f32 %v4850, %v5182
        %v5263 = vadd.f32 %v4851, %v5095
        %v5264 = vadd.f32 %v4852, %v5184
        %v5265 = vadd.f32 %v4853, %v5098
        %v5266 = vadd.f32 %v4854, %v5187
        %v5267 = vadd.f32 %v4855, %v5100
        %v5268 = vadd.f32 %v4856, %v5189
        %v5269 = vadd.f32 %v4857, %v5103
        %v5270 = vadd.f32 %v4858, %v5192
        %v5271 = vadd.f32 %v4859, %v5105
        %v5272 = vadd.f32 %v4860, %v5194
        %v5273 = vadd.f32 %v4861, %v5108
        %v5274 = vadd.f32 %v4862, %v5197
        %v5275 = vadd.f32 %v4863, %v5110
        %v5276 = vadd.f32 %v4864, %v5199
        %v5277 = vadd.f32 %v4865, %v5113
        %v5278 = vadd.f32 %v4866, %v5202
        %v5279 = vadd.f32 %v4867, %v5115
        %v5280 = vadd.f32 %v4868, %v5204
        %v5281 = vadd.f32 %v4869, %v5118
        %v5282 = vadd.f32 %v4870, %v5207
        %v5283 = vadd.f32 %v4871, %v5120
        %v5284 = vadd.f32 %v4872, %v5209
        %v5285 = vadd.f32 %v4873, %v5123
        %v5286 = vadd.f32 %v4874, %v5212
        %v5287 = vadd.f32 %v4875, %v5125
        %v5288 = vadd.f32 %v4876, %v5214
        %v5289 = vadd.f32 %v4877, %v5128
        %v5290 = vadd.f32 %v4878, %v5217
        %v5291 = vadd.f32 %v4879, %v5130
        %v5292 = vadd.f32 %v4880, %v5219
        %v5293 = vadd.f32 %v4881, %v5133
        %v5294 = vadd.f32 %v4882, %v5222
        %v5295 = vadd.f32 %v4883, %v5135
        %v5296 = vadd.f32 %v4884, %v5224
        %v5297 = vadd.f32 %v4885, %v5138
        %v5298 = vadd.f32 %v4886, %v5227
        %v5299 = vadd.f32 %v4887, %v5140
        %v5300 = vadd.f32 %v4888, %v5229
        %v5301 = vadd.f32 %v4889, %v5143
        %v5302 = vadd.f32 %v4890, %v5232
        %v5303 = vadd.f32 %v4891, %v5145
        %v5304 = vadd.f32 %v4892, %v5234
        %v5305 = vadd.f32 %v4893, %v5148
        %v5306 = vadd.f32 %v4894, %v5237
        %v5307 = vadd.f32 %v4895, %v5150
        %v5308 = vadd.f32 %v4896, %v5239
        %v5309 = vadd.f32 %v4897, %v5153
        %v5310 = vadd.f32 %v4898, %v5242
        %v5311 = vadd.f32 %v4899, %v5155
        %v5312 = vadd.f32 %v4900, %v5244
        %v5313 = vadd.f32 %v4901, %v5158
        %v5314 = vadd.f32 %v4902, %v5247
        %v5315 = vadd.f32 %v4903, %v5160
        %v5316 = vadd.f32 %v4904, %v5249
        %v5317 = vadd.f32 %v4905, %v5163
        %v5318 = vadd.f32 %v4906, %v5252
        %v5319 = vadd.f32 %v4907, %v5165
        %v5320 = vadd.f32 %v4908, %v5254
        %v5321 = vadd.f32 %v4909, %v5168
        %v5322 = vadd.f32 %v4910, %v5257
        %v5323 = vadd.f32 %v4911, %v5170
        %v5324 = vadd.f32 %v4912, %v5259
        %v5325 = vld [vmem:[%s4164 + $0x8] sm:$0xf]
        %v5326 = vld [vmem:[%s4164 + $0xc] sm:$0xf]
        %v5327 = vld [vmem:[%s4164 + $0x10] sm:$0x1]
        %v5328 = vld [vmem:[%s4164 + $0x1c] sm:$0xf]
        %v5329 = vld [vmem:[%s4164 + $0x20] sm:$0xf]
        %v5330 = vld [vmem:[%s4164 + $0x24] sm:$0x1]
        %v5331 = vld [vmem:[%s4164 + $0x30] sm:$0xf]
        %v5332 = vld [vmem:[%s4164 + $0x34] sm:$0xf]
        %v5333 = vld [vmem:[%s4164 + $0x38] sm:$0x1]
        %v5334 = vld [vmem:[%s4164 + $0x44] sm:$0xf]
        %v5335 = vld [vmem:[%s4164 + $0x48] sm:$0xf]
        %v5336 = vld [vmem:[%s4164 + $0x4c] sm:$0x1]
        %v5337 = vld [vmem:[%s4164 + $0x58] sm:$0xf]
        %v5338 = vld [vmem:[%s4164 + $0x5c] sm:$0xf]
        %v5339 = vld [vmem:[%s4164 + $0x60] sm:$0x1]
        %v5340 = vld [vmem:[%s4164 + $0x6c] sm:$0xf]
        %v5341 = vld [vmem:[%s4164 + $0x70] sm:$0xf]
        %v5342 = vld [vmem:[%s4164 + $0x74] sm:$0x1]
        %v5343 = vld [vmem:[%s4164 + $0x80] sm:$0xf]
        %v5344 = vld [vmem:[%s4164 + $0x84] sm:$0xf]
        %v5345 = vld [vmem:[%s4164 + $0x88] sm:$0x1]
        %v5346 = vld [vmem:[%s4164 + $0x94] sm:$0xf]
        %v5347 = vld [vmem:[%s4164 + $0x98] sm:$0xf]
        %v5348 = vld [vmem:[%s4164 + $0x9c] sm:$0x1]
        %v5349 = vld [vmem:[%s4164 + $0xa8] sm:$0xf]
        %v5350 = vld [vmem:[%s4164 + $0xac] sm:$0xf]
        %v5351 = vld [vmem:[%s4164 + $0xb0] sm:$0x1]
        %v5352 = vld [vmem:[%s4164 + $0xbc] sm:$0xf]
        %v5353 = vld [vmem:[%s4164 + $0xc0] sm:$0xf]
        %v5354 = vld [vmem:[%s4164 + $0xc4] sm:$0x1]
        %v5355 = vld [vmem:[%s4164 + $0xd0] sm:$0xf]
        %v5356 = vld [vmem:[%s4164 + $0xd4] sm:$0xf]
        %v5357 = vld [vmem:[%s4164 + $0xd8] sm:$0x1]
        %v5358 = vld [vmem:[%s4164 + $0xe4] sm:$0xf]
        %v5359 = vld [vmem:[%s4164 + $0xe8] sm:$0xf]
        %v5360 = vld [vmem:[%s4164 + $0xec] sm:$0x1]
        %v5361 = vld [vmem:[%s4164 + $0xf8] sm:$0xf]
        %v5362 = vld [vmem:[%s4164 + $0xfc] sm:$0xf]
        %v5363 = vld [vmem:[%s4164 + $0x100] sm:$0x1]
        %v5364 = vld [vmem:[%s4164 + $0x10c] sm:$0xf]
        %v5365 = vld [vmem:[%s4164 + $0x110] sm:$0xf]
        %v5366 = vld [vmem:[%s4164 + $0x114] sm:$0x1]
        %v5367 = vld [vmem:[%s4164 + $0x120] sm:$0xf]
        %v5368 = vld [vmem:[%s4164 + $0x124] sm:$0xf]
        %v5369 = vld [vmem:[%s4164 + $0x128] sm:$0x1]
        %v5370 = vld [vmem:[%s4164 + $0x134] sm:$0xf]
        %v5371 = vld [vmem:[%s4164 + $0x138] sm:$0xf]
        %v5372 = vld [vmem:[%s4164 + $0x13c] sm:$0x1]
        %v5374 = vshrl.u32 %v5325, 16
        %v5376 = vrot.slane %v5374, 4
        %v5377 = vshll.u32 %v5325, 16
        %v5379 = vrot.slane %v5377, 5
        %v5380 = vor.u32 %v5376, %v5379
        %v5381 = vrot.slane %v5380, 4
        %v5383 = vshll.u32 %v5326, 16
        %v5385 = vrot.slane %v5383, 5
        %v5386 = vsel %vm1491, %v5381, %v5385
        %v5387 = vshrl.u32 %v5326, 16
        %v5389 = vrot.slane %v5387, 4
        %v5390 = vor.u32 %v5389, %v5385
        %v5391 = vrot.slane %v5390, 4
        %v5393 = vshll.u32 %v5327, 16
        %v5395 = vrot.slane %v5393, 5
        %v5396 = vsel %vm1491, %v5391, %v5395
        %v5398 = vshrl.u32 %v5328, 16
        %v5400 = vrot.slane %v5398, 4
        %v5401 = vshll.u32 %v5328, 16
        %v5403 = vrot.slane %v5401, 5
        %v5404 = vor.u32 %v5400, %v5403
        %v5405 = vrot.slane %v5404, 4
        %v5407 = vshll.u32 %v5329, 16
        %v5409 = vrot.slane %v5407, 5
        %v5410 = vsel %vm1491, %v5405, %v5409
        %v5411 = vshrl.u32 %v5329, 16
        %v5413 = vrot.slane %v5411, 4
        %v5414 = vor.u32 %v5413, %v5409
        %v5415 = vrot.slane %v5414, 4
        %v5417 = vshll.u32 %v5330, 16
        %v5419 = vrot.slane %v5417, 5
        %v5420 = vsel %vm1491, %v5415, %v5419
        %v5422 = vshrl.u32 %v5331, 16
        %v5424 = vrot.slane %v5422, 4
        %v5425 = vshll.u32 %v5331, 16
        %v5427 = vrot.slane %v5425, 5
        %v5428 = vor.u32 %v5424, %v5427
        %v5429 = vrot.slane %v5428, 4
        %v5431 = vshll.u32 %v5332, 16
        %v5433 = vrot.slane %v5431, 5
        %v5434 = vsel %vm1491, %v5429, %v5433
        %v5435 = vshrl.u32 %v5332, 16
        %v5437 = vrot.slane %v5435, 4
        %v5438 = vor.u32 %v5437, %v5433
        %v5439 = vrot.slane %v5438, 4
        %v5441 = vshll.u32 %v5333, 16
        %v5443 = vrot.slane %v5441, 5
        %v5444 = vsel %vm1491, %v5439, %v5443
        %v5446 = vshrl.u32 %v5334, 16
        %v5448 = vrot.slane %v5446, 4
        %v5449 = vshll.u32 %v5334, 16
        %v5451 = vrot.slane %v5449, 5
        %v5452 = vor.u32 %v5448, %v5451
        %v5453 = vrot.slane %v5452, 4
        %v5455 = vshll.u32 %v5335, 16
        %v5457 = vrot.slane %v5455, 5
        %v5458 = vsel %vm1491, %v5453, %v5457
        %v5459 = vshrl.u32 %v5335, 16
        %v5461 = vrot.slane %v5459, 4
        %v5462 = vor.u32 %v5461, %v5457
        %v5463 = vrot.slane %v5462, 4
        %v5465 = vshll.u32 %v5336, 16
        %v5467 = vrot.slane %v5465, 5
        %v5468 = vsel %vm1491, %v5463, %v5467
        %v5470 = vshrl.u32 %v5337, 16
        %v5472 = vrot.slane %v5470, 4
        %v5473 = vshll.u32 %v5337, 16
        %v5475 = vrot.slane %v5473, 5
        %v5476 = vor.u32 %v5472, %v5475
        %v5477 = vrot.slane %v5476, 4
        %v5479 = vshll.u32 %v5338, 16
        %v5481 = vrot.slane %v5479, 5
        %v5482 = vsel %vm1491, %v5477, %v5481
        %v5483 = vshrl.u32 %v5338, 16
        %v5485 = vrot.slane %v5483, 4
        %v5486 = vor.u32 %v5485, %v5481
        %v5487 = vrot.slane %v5486, 4
        %v5489 = vshll.u32 %v5339, 16
        %v5491 = vrot.slane %v5489, 5
        %v5492 = vsel %vm1491, %v5487, %v5491
        %v5494 = vshrl.u32 %v5340, 16
        %v5496 = vrot.slane %v5494, 4
        %v5497 = vshll.u32 %v5340, 16
        %v5499 = vrot.slane %v5497, 5
        %v5500 = vor.u32 %v5496, %v5499
        %v5501 = vrot.slane %v5500, 4
        %v5503 = vshll.u32 %v5341, 16
        %v5505 = vrot.slane %v5503, 5
        %v5506 = vsel %vm1491, %v5501, %v5505
        %v5507 = vshrl.u32 %v5341, 16
        %v5509 = vrot.slane %v5507, 4
        %v5510 = vor.u32 %v5509, %v5505
        %v5511 = vrot.slane %v5510, 4
        %v5513 = vshll.u32 %v5342, 16
        %v5515 = vrot.slane %v5513, 5
        %v5516 = vsel %vm1491, %v5511, %v5515
        %v5518 = vshrl.u32 %v5343, 16
        %v5520 = vrot.slane %v5518, 4
        %v5521 = vshll.u32 %v5343, 16
        %v5523 = vrot.slane %v5521, 5
        %v5524 = vor.u32 %v5520, %v5523
        %v5525 = vrot.slane %v5524, 4
        %v5527 = vshll.u32 %v5344, 16
        %v5529 = vrot.slane %v5527, 5
        %v5530 = vsel %vm1491, %v5525, %v5529
        %v5531 = vshrl.u32 %v5344, 16
        %v5533 = vrot.slane %v5531, 4
        %v5534 = vor.u32 %v5533, %v5529
        %v5535 = vrot.slane %v5534, 4
        %v5537 = vshll.u32 %v5345, 16
        %v5539 = vrot.slane %v5537, 5
        %v5540 = vsel %vm1491, %v5535, %v5539
        %v5542 = vshrl.u32 %v5346, 16
        %v5544 = vrot.slane %v5542, 4
        %v5545 = vshll.u32 %v5346, 16
        %v5547 = vrot.slane %v5545, 5
        %v5548 = vor.u32 %v5544, %v5547
        %v5549 = vrot.slane %v5548, 4
        %v5551 = vshll.u32 %v5347, 16
        %v5553 = vrot.slane %v5551, 5
        %v5554 = vsel %vm1491, %v5549, %v5553
        %v5555 = vshrl.u32 %v5347, 16
        %v5557 = vrot.slane %v5555, 4
        %v5558 = vor.u32 %v5557, %v5553
        %v5559 = vrot.slane %v5558, 4
        %v5561 = vshll.u32 %v5348, 16
        %v5563 = vrot.slane %v5561, 5
        %v5564 = vsel %vm1491, %v5559, %v5563
        %v5566 = vshrl.u32 %v5349, 16
        %v5568 = vrot.slane %v5566, 4
        %v5569 = vshll.u32 %v5349, 16
        %v5571 = vrot.slane %v5569, 5
        %v5572 = vor.u32 %v5568, %v5571
        %v5573 = vrot.slane %v5572, 4
        %v5575 = vshll.u32 %v5350, 16
        %v5577 = vrot.slane %v5575, 5
        %v5578 = vsel %vm1491, %v5573, %v5577
        %v5579 = vshrl.u32 %v5350, 16
        %v5581 = vrot.slane %v5579, 4
        %v5582 = vor.u32 %v5581, %v5577
        %v5583 = vrot.slane %v5582, 4
        %v5585 = vshll.u32 %v5351, 16
        %v5587 = vrot.slane %v5585, 5
        %v5588 = vsel %vm1491, %v5583, %v5587
        %v5590 = vshrl.u32 %v5352, 16
        %v5592 = vrot.slane %v5590, 4
        %v5593 = vshll.u32 %v5352, 16
        %v5595 = vrot.slane %v5593, 5
        %v5596 = vor.u32 %v5592, %v5595
        %v5597 = vrot.slane %v5596, 4
        %v5599 = vshll.u32 %v5353, 16
        %v5601 = vrot.slane %v5599, 5
        %v5602 = vsel %vm1491, %v5597, %v5601
        %v5603 = vshrl.u32 %v5353, 16
        %v5605 = vrot.slane %v5603, 4
        %v5606 = vor.u32 %v5605, %v5601
        %v5607 = vrot.slane %v5606, 4
        %v5609 = vshll.u32 %v5354, 16
        %v5611 = vrot.slane %v5609, 5
        %v5612 = vsel %vm1491, %v5607, %v5611
        %v5614 = vshrl.u32 %v5355, 16
        %v5616 = vrot.slane %v5614, 4
        %v5617 = vshll.u32 %v5355, 16
        %v5619 = vrot.slane %v5617, 5
        %v5620 = vor.u32 %v5616, %v5619
        %v5621 = vrot.slane %v5620, 4
        %v5623 = vshll.u32 %v5356, 16
        %v5625 = vrot.slane %v5623, 5
        %v5626 = vsel %vm1491, %v5621, %v5625
        %v5627 = vshrl.u32 %v5356, 16
        %v5629 = vrot.slane %v5627, 4
        %v5630 = vor.u32 %v5629, %v5625
        %v5631 = vrot.slane %v5630, 4
        %v5633 = vshll.u32 %v5357, 16
        %v5635 = vrot.slane %v5633, 5
        %v5636 = vsel %vm1491, %v5631, %v5635
        %v5638 = vshrl.u32 %v5358, 16
        %v5640 = vrot.slane %v5638, 4
        %v5641 = vshll.u32 %v5358, 16
        %v5643 = vrot.slane %v5641, 5
        %v5644 = vor.u32 %v5640, %v5643
        %v5645 = vrot.slane %v5644, 4
        %v5647 = vshll.u32 %v5359, 16
        %v5649 = vrot.slane %v5647, 5
        %v5650 = vsel %vm1491, %v5645, %v5649
        %v5651 = vshrl.u32 %v5359, 16
        %v5653 = vrot.slane %v5651, 4
        %v5654 = vor.u32 %v5653, %v5649
        %v5655 = vrot.slane %v5654, 4
        %v5657 = vshll.u32 %v5360, 16
        %v5659 = vrot.slane %v5657, 5
        %v5660 = vsel %vm1491, %v5655, %v5659
        %v5662 = vshrl.u32 %v5361, 16
        %v5664 = vrot.slane %v5662, 4
        %v5665 = vshll.u32 %v5361, 16
        %v5667 = vrot.slane %v5665, 5
        %v5668 = vor.u32 %v5664, %v5667
        %v5669 = vrot.slane %v5668, 4
        %v5671 = vshll.u32 %v5362, 16
        %v5673 = vrot.slane %v5671, 5
        %v5674 = vsel %vm1491, %v5669, %v5673
        %v5675 = vshrl.u32 %v5362, 16
        %v5677 = vrot.slane %v5675, 4
        %v5678 = vor.u32 %v5677, %v5673
        %v5679 = vrot.slane %v5678, 4
        %v5681 = vshll.u32 %v5363, 16
        %v5683 = vrot.slane %v5681, 5
        %v5684 = vsel %vm1491, %v5679, %v5683
        %v5686 = vshrl.u32 %v5364, 16
        %v5688 = vrot.slane %v5686, 4
        %v5689 = vshll.u32 %v5364, 16
        %v5691 = vrot.slane %v5689, 5
        %v5692 = vor.u32 %v5688, %v5691
        %v5693 = vrot.slane %v5692, 4
        %v5695 = vshll.u32 %v5365, 16
        %v5697 = vrot.slane %v5695, 5
        %v5698 = vsel %vm1491, %v5693, %v5697
        %v5699 = vshrl.u32 %v5365, 16
        %v5701 = vrot.slane %v5699, 4
        %v5702 = vor.u32 %v5701, %v5697
        %v5703 = vrot.slane %v5702, 4
        %v5705 = vshll.u32 %v5366, 16
        %v5707 = vrot.slane %v5705, 5
        %v5708 = vsel %vm1491, %v5703, %v5707
        %v5710 = vshrl.u32 %v5367, 16
        %v5712 = vrot.slane %v5710, 4
        %v5713 = vshll.u32 %v5367, 16
        %v5715 = vrot.slane %v5713, 5
        %v5716 = vor.u32 %v5712, %v5715
        %v5717 = vrot.slane %v5716, 4
        %v5719 = vshll.u32 %v5368, 16
        %v5721 = vrot.slane %v5719, 5
        %v5722 = vsel %vm1491, %v5717, %v5721
        %v5723 = vshrl.u32 %v5368, 16
        %v5725 = vrot.slane %v5723, 4
        %v5726 = vor.u32 %v5725, %v5721
        %v5727 = vrot.slane %v5726, 4
        %v5729 = vshll.u32 %v5369, 16
        %v5731 = vrot.slane %v5729, 5
        %v5732 = vsel %vm1491, %v5727, %v5731
        %v5734 = vshrl.u32 %v5370, 16
        %v5736 = vrot.slane %v5734, 4
        %v5737 = vshll.u32 %v5370, 16
        %v5739 = vrot.slane %v5737, 5
        %v5740 = vor.u32 %v5736, %v5739
        %v5741 = vrot.slane %v5740, 4
        %v5743 = vshll.u32 %v5371, 16
        %v5745 = vrot.slane %v5743, 5
        %v5746 = vsel %vm1491, %v5741, %v5745
        %v5747 = vshrl.u32 %v5371, 16
        %v5749 = vrot.slane %v5747, 4
        %v5750 = vor.u32 %v5749, %v5745
        %v5751 = vrot.slane %v5750, 4
        %v5753 = vshll.u32 %v5372, 16
        %v5755 = vrot.slane %v5753, 5
        %v5756 = vsel %vm1491, %v5751, %v5755
        %s5757 = scalar_lea.vmem %s1, 32
        %v5758 = vld [vmem:[%s5757] sm:$0xf]
        %v5759 = vunpack.c.l.b16 %v5386
        %v5760 = vunpack.c.l.b16 %v5396
        %v5761 = vunpack.c.l.b16 %v5410
        %v5762 = vunpack.c.l.b16 %v5420
        %v5763 = vunpack.c.l.b16 %v5434
        %v5764 = vunpack.c.l.b16 %v5444
        %v5765 = vunpack.c.l.b16 %v5458
        %v5766 = vunpack.c.l.b16 %v5468
        %v5767 = vunpack.c.l.b16 %v5482
        %v5768 = vunpack.c.l.b16 %v5492
        %v5769 = vunpack.c.l.b16 %v5506
        %v5770 = vunpack.c.l.b16 %v5516
        %v5771 = vunpack.c.l.b16 %v5530
        %v5772 = vunpack.c.l.b16 %v5540
        %v5773 = vunpack.c.l.b16 %v5554
        %v5774 = vunpack.c.l.b16 %v5564
        %v5775 = vunpack.c.l.b16 %v5578
        %v5776 = vunpack.c.l.b16 %v5588
        %v5777 = vunpack.c.l.b16 %v5602
        %v5778 = vunpack.c.l.b16 %v5612
        %v5779 = vunpack.c.l.b16 %v5626
        %v5780 = vunpack.c.l.b16 %v5636
        %v5781 = vunpack.c.l.b16 %v5650
        %v5782 = vunpack.c.l.b16 %v5660
        %v5783 = vunpack.c.l.b16 %v5674
        %v5784 = vunpack.c.l.b16 %v5684
        %v5785 = vunpack.c.l.b16 %v5698
        %v5786 = vunpack.c.l.b16 %v5708
        %v5787 = vunpack.c.l.b16 %v5722
        %v5788 = vunpack.c.l.b16 %v5732
        %v5789 = vunpack.c.l.b16 %v5746
        %v5790 = vunpack.c.l.b16 %v5756
        %v5791 = vpack.c.b16 %v5760, %v5759
        %v5792 = vpack.c.b16 %v5762, %v5761
        %v5793 = vpack.c.b16 %v5764, %v5763
        %v5794 = vpack.c.b16 %v5766, %v5765
        %v5795 = vpack.c.b16 %v5768, %v5767
        %v5796 = vpack.c.b16 %v5770, %v5769
        %v5797 = vpack.c.b16 %v5772, %v5771
        %v5798 = vpack.c.b16 %v5774, %v5773
        %v5799 = vpack.c.b16 %v5776, %v5775
        %v5800 = vpack.c.b16 %v5778, %v5777
        %v5801 = vpack.c.b16 %v5780, %v5779
        %v5802 = vpack.c.b16 %v5782, %v5781
        %v5803 = vpack.c.b16 %v5784, %v5783
        %v5804 = vpack.c.b16 %v5786, %v5785
        %v5805 = vpack.c.b16 %v5788, %v5787
        %v5806 = vpack.c.b16 %v5790, %v5789
        %5808 = vst [vmem:[#allocation1] ss:$4 sm:$0xff] %v5758
        %v5809 = vld.sshfl [vmem:[#allocation1] sm:$0xff pattern:$0x73625140]
        %v5810 = vld.sshfl [vmem:[#allocation1 + $0x8] sm:$0xff pattern:$0x73625140]
        %v5812 = vsel %vm927, %v5791, 0
        %v5815 = vsel %vm927, %v5792, 0
        %v5818 = vsel %vm927, %v5793, 0
        %v5821 = vsel %vm927, %v5794, 0
        %v5824 = vsel %vm927, %v5795, 0
        %v5827 = vsel %vm927, %v5796, 0
        %v5830 = vsel %vm927, %v5797, 0
        %v5833 = vsel %vm927, %v5798, 0
        %v5836 = vsel %vm927, %v5799, 0
        %v5839 = vsel %vm927, %v5800, 0
        %v5842 = vsel %vm927, %v5801, 0
        %v5845 = vsel %vm927, %v5802, 0
        %v5848 = vsel %vm927, %v5803, 0
        %v5851 = vsel %vm927, %v5804, 0
        %v5854 = vsel %vm927, %v5805, 0
        %v5857 = vsel %vm927, %v5806, 0
        %v5859 = vsel %vm976, %v5809, 0
        %v5861 = vsel %vm976, %v5810, 0
        %5863 = vmatpush.bf16.msra.mxu0 0
        %5864 = vmatpush.bf16.msra.mxu0 0
        %5865 = vmatpush.bf16.msra.mxu0 0
        %5866 = vmatpush.bf16.msra.mxu0 0
        %5867 = vmatpush.bf16.msra.mxu0 0
        %5868 = vmatpush.bf16.msra.mxu0 0
        %5869 = vmatpush.bf16.msra.mxu0 0
        %5870 = vmatpush.bf16.msra.mxu0 %v5859
        %5871 = vmatmul.bf16.gmra.mxu0 %v5812
        %v5872 = vpop.f32.mrf.mxu0
        %v5873 = vadd.f32 0.0, %v5872
        %v5874 = vpop.f32.mrf.mxu0
        %v5875 = vadd.f32 0.0, %v5874
        %5876 = vmatmul.bf16.gmra.mxu0 %v5815
        %v5877 = vpop.f32.mrf.mxu0
        %v5878 = vadd.f32 0.0, %v5877
        %v5879 = vpop.f32.mrf.mxu0
        %v5880 = vadd.f32 0.0, %v5879
        %5881 = vmatmul.bf16.gmra.mxu0 %v5818
        %v5882 = vpop.f32.mrf.mxu0
        %v5883 = vadd.f32 0.0, %v5882
        %v5884 = vpop.f32.mrf.mxu0
        %v5885 = vadd.f32 0.0, %v5884
        %5886 = vmatmul.bf16.gmra.mxu0 %v5821
        %v5887 = vpop.f32.mrf.mxu0
        %v5888 = vadd.f32 0.0, %v5887
        %v5889 = vpop.f32.mrf.mxu0
        %v5890 = vadd.f32 0.0, %v5889
        %5891 = vmatmul.bf16.gmra.mxu0 %v5824
        %v5892 = vpop.f32.mrf.mxu0
        %v5893 = vadd.f32 0.0, %v5892
        %v5894 = vpop.f32.mrf.mxu0
        %v5895 = vadd.f32 0.0, %v5894
        %5896 = vmatmul.bf16.gmra.mxu0 %v5827
        %v5897 = vpop.f32.mrf.mxu0
        %v5898 = vadd.f32 0.0, %v5897
        %v5899 = vpop.f32.mrf.mxu0
        %v5900 = vadd.f32 0.0, %v5899
        %5901 = vmatmul.bf16.gmra.mxu0 %v5830
        %v5902 = vpop.f32.mrf.mxu0
        %v5903 = vadd.f32 0.0, %v5902
        %v5904 = vpop.f32.mrf.mxu0
        %v5905 = vadd.f32 0.0, %v5904
        %5906 = vmatmul.bf16.gmra.mxu0 %v5833
        %v5907 = vpop.f32.mrf.mxu0
        %v5908 = vadd.f32 0.0, %v5907
        %v5909 = vpop.f32.mrf.mxu0
        %v5910 = vadd.f32 0.0, %v5909
        %5911 = vmatmul.bf16.gmra.mxu0 %v5836
        %v5912 = vpop.f32.mrf.mxu0
        %v5913 = vadd.f32 0.0, %v5912
        %v5914 = vpop.f32.mrf.mxu0
        %v5915 = vadd.f32 0.0, %v5914
        %5916 = vmatmul.bf16.gmra.mxu0 %v5839
        %v5917 = vpop.f32.mrf.mxu0
        %v5918 = vadd.f32 0.0, %v5917
        %v5919 = vpop.f32.mrf.mxu0
        %v5920 = vadd.f32 0.0, %v5919
        %5921 = vmatmul.bf16.gmra.mxu0 %v5842
        %v5922 = vpop.f32.mrf.mxu0
        %v5923 = vadd.f32 0.0, %v5922
        %v5924 = vpop.f32.mrf.mxu0
        %v5925 = vadd.f32 0.0, %v5924
        %5926 = vmatmul.bf16.gmra.mxu0 %v5845
        %v5927 = vpop.f32.mrf.mxu0
        %v5928 = vadd.f32 0.0, %v5927
        %v5929 = vpop.f32.mrf.mxu0
        %v5930 = vadd.f32 0.0, %v5929
        %5931 = vmatmul.bf16.gmra.mxu0 %v5848
        %v5932 = vpop.f32.mrf.mxu0
        %v5933 = vadd.f32 0.0, %v5932
        %v5934 = vpop.f32.mrf.mxu0
        %v5935 = vadd.f32 0.0, %v5934
        %5936 = vmatmul.bf16.gmra.mxu0 %v5851
        %v5937 = vpop.f32.mrf.mxu0
        %v5938 = vadd.f32 0.0, %v5937
        %v5939 = vpop.f32.mrf.mxu0
        %v5940 = vadd.f32 0.0, %v5939
        %5941 = vmatmul.bf16.gmra.mxu0 %v5854
        %v5942 = vpop.f32.mrf.mxu0
        %v5943 = vadd.f32 0.0, %v5942
        %v5944 = vpop.f32.mrf.mxu0
        %v5945 = vadd.f32 0.0, %v5944
        %5946 = vmatmul.bf16.gmra.mxu0 %v5857
        %v5947 = vpop.f32.mrf.mxu0
        %v5948 = vadd.f32 0.0, %v5947
        %v5949 = vpop.f32.mrf.mxu0
        %v5950 = vadd.f32 0.0, %v5949
        %5951 = vdwg.mxu0
        %5952 = vmatpush.bf16.msra.mxu0 0
        %5953 = vmatpush.bf16.msra.mxu0 0
        %5954 = vmatpush.bf16.msra.mxu0 0
        %5955 = vmatpush.bf16.msra.mxu0 0
        %5956 = vmatpush.bf16.msra.mxu0 0
        %5957 = vmatpush.bf16.msra.mxu0 0
        %5958 = vmatpush.bf16.msra.mxu0 0
        %5959 = vmatpush.bf16.msra.mxu0 %v5861
        %5960 = vmatmul.bf16.gmra.mxu0 %v5812
        %v5961 = vpop.f32.mrf.mxu0
        %v5962 = vadd.f32 0.0, %v5961
        %v5963 = vpop.f32.mrf.mxu0
        %v5964 = vadd.f32 0.0, %v5963
        %5965 = vmatmul.bf16.gmra.mxu0 %v5815
        %v5966 = vpop.f32.mrf.mxu0
        %v5967 = vadd.f32 0.0, %v5966
        %v5968 = vpop.f32.mrf.mxu0
        %v5969 = vadd.f32 0.0, %v5968
        %5970 = vmatmul.bf16.gmra.mxu0 %v5818
        %v5971 = vpop.f32.mrf.mxu0
        %v5972 = vadd.f32 0.0, %v5971
        %v5973 = vpop.f32.mrf.mxu0
        %v5974 = vadd.f32 0.0, %v5973
        %5975 = vmatmul.bf16.gmra.mxu0 %v5821
        %v5976 = vpop.f32.mrf.mxu0
        %v5977 = vadd.f32 0.0, %v5976
        %v5978 = vpop.f32.mrf.mxu0
        %v5979 = vadd.f32 0.0, %v5978
        %5980 = vmatmul.bf16.gmra.mxu0 %v5824
        %v5981 = vpop.f32.mrf.mxu0
        %v5982 = vadd.f32 0.0, %v5981
        %v5983 = vpop.f32.mrf.mxu0
        %v5984 = vadd.f32 0.0, %v5983
        %5985 = vmatmul.bf16.gmra.mxu0 %v5827
        %v5986 = vpop.f32.mrf.mxu0
        %v5987 = vadd.f32 0.0, %v5986
        %v5988 = vpop.f32.mrf.mxu0
        %v5989 = vadd.f32 0.0, %v5988
        %5990 = vmatmul.bf16.gmra.mxu0 %v5830
        %v5991 = vpop.f32.mrf.mxu0
        %v5992 = vadd.f32 0.0, %v5991
        %v5993 = vpop.f32.mrf.mxu0
        %v5994 = vadd.f32 0.0, %v5993
        %5995 = vmatmul.bf16.gmra.mxu0 %v5833
        %v5996 = vpop.f32.mrf.mxu0
        %v5997 = vadd.f32 0.0, %v5996
        %v5998 = vpop.f32.mrf.mxu0
        %v5999 = vadd.f32 0.0, %v5998
        %6000 = vmatmul.bf16.gmra.mxu0 %v5836
        %v6001 = vpop.f32.mrf.mxu0
        %v6002 = vadd.f32 0.0, %v6001
        %v6003 = vpop.f32.mrf.mxu0
        %v6004 = vadd.f32 0.0, %v6003
        %6005 = vmatmul.bf16.gmra.mxu0 %v5839
        %v6006 = vpop.f32.mrf.mxu0
        %v6007 = vadd.f32 0.0, %v6006
        %v6008 = vpop.f32.mrf.mxu0
        %v6009 = vadd.f32 0.0, %v6008
        %6010 = vmatmul.bf16.gmra.mxu0 %v5842
        %v6011 = vpop.f32.mrf.mxu0
        %v6012 = vadd.f32 0.0, %v6011
        %v6013 = vpop.f32.mrf.mxu0
        %v6014 = vadd.f32 0.0, %v6013
        %6015 = vmatmul.bf16.gmra.mxu0 %v5845
        %v6016 = vpop.f32.mrf.mxu0
        %v6017 = vadd.f32 0.0, %v6016
        %v6018 = vpop.f32.mrf.mxu0
        %v6019 = vadd.f32 0.0, %v6018
        %6020 = vmatmul.bf16.gmra.mxu0 %v5848
        %v6021 = vpop.f32.mrf.mxu0
        %v6022 = vadd.f32 0.0, %v6021
        %v6023 = vpop.f32.mrf.mxu0
        %v6024 = vadd.f32 0.0, %v6023
        %6025 = vmatmul.bf16.gmra.mxu0 %v5851
        %v6026 = vpop.f32.mrf.mxu0
        %v6027 = vadd.f32 0.0, %v6026
        %v6028 = vpop.f32.mrf.mxu0
        %v6029 = vadd.f32 0.0, %v6028
        %6030 = vmatmul.bf16.gmra.mxu0 %v5854
        %v6031 = vpop.f32.mrf.mxu0
        %v6032 = vadd.f32 0.0, %v6031
        %v6033 = vpop.f32.mrf.mxu0
        %v6034 = vadd.f32 0.0, %v6033
        %6035 = vmatmul.bf16.gmra.mxu0 %v5857
        %v6036 = vpop.f32.mrf.mxu0
        %v6037 = vadd.f32 0.0, %v6036
        %v6038 = vpop.f32.mrf.mxu0
        %v6039 = vadd.f32 0.0, %v6038
        %6040 = vdwg.mxu0
        %v6041 = vadd.f32 %v5261, %v5873
        %v6042 = vadd.f32 %v5262, %v5962
        %v6043 = vadd.f32 %v5263, %v5875
        %v6044 = vadd.f32 %v5264, %v5964
        %v6045 = vadd.f32 %v5265, %v5878
        %v6046 = vadd.f32 %v5266, %v5967
        %v6047 = vadd.f32 %v5267, %v5880
        %v6048 = vadd.f32 %v5268, %v5969
        %v6049 = vadd.f32 %v5269, %v5883
        %v6050 = vadd.f32 %v5270, %v5972
        %v6051 = vadd.f32 %v5271, %v5885
        %v6052 = vadd.f32 %v5272, %v5974
        %v6053 = vadd.f32 %v5273, %v5888
        %v6054 = vadd.f32 %v5274, %v5977
        %v6055 = vadd.f32 %v5275, %v5890
        %v6056 = vadd.f32 %v5276, %v5979
        %v6057 = vadd.f32 %v5277, %v5893
        %v6058 = vadd.f32 %v5278, %v5982
        %v6059 = vadd.f32 %v5279, %v5895
        %v6060 = vadd.f32 %v5280, %v5984
        %v6061 = vadd.f32 %v5281, %v5898
        %v6062 = vadd.f32 %v5282, %v5987
        %v6063 = vadd.f32 %v5283, %v5900
        %v6064 = vadd.f32 %v5284, %v5989
        %v6065 = vadd.f32 %v5285, %v5903
        %v6066 = vadd.f32 %v5286, %v5992
        %v6067 = vadd.f32 %v5287, %v5905
        %v6068 = vadd.f32 %v5288, %v5994
        %v6069 = vadd.f32 %v5289, %v5908
        %v6070 = vadd.f32 %v5290, %v5997
        %v6071 = vadd.f32 %v5291, %v5910
        %v6072 = vadd.f32 %v5292, %v5999
        %v6073 = vadd.f32 %v5293, %v5913
        %v6074 = vadd.f32 %v5294, %v6002
        %v6075 = vadd.f32 %v5295, %v5915
        %v6076 = vadd.f32 %v5296, %v6004
        %v6077 = vadd.f32 %v5297, %v5918
        %v6078 = vadd.f32 %v5298, %v6007
        %v6079 = vadd.f32 %v5299, %v5920
        %v6080 = vadd.f32 %v5300, %v6009
        %v6081 = vadd.f32 %v5301, %v5923
        %v6082 = vadd.f32 %v5302, %v6012
        %v6083 = vadd.f32 %v5303, %v5925
        %v6084 = vadd.f32 %v5304, %v6014
        %v6085 = vadd.f32 %v5305, %v5928
        %v6086 = vadd.f32 %v5306, %v6017
        %v6087 = vadd.f32 %v5307, %v5930
        %v6088 = vadd.f32 %v5308, %v6019
        %v6089 = vadd.f32 %v5309, %v5933
        %v6090 = vadd.f32 %v5310, %v6022
        %v6091 = vadd.f32 %v5311, %v5935
        %v6092 = vadd.f32 %v5312, %v6024
        %v6093 = vadd.f32 %v5313, %v5938
        %v6094 = vadd.f32 %v5314, %v6027
        %v6095 = vadd.f32 %v5315, %v5940
        %v6096 = vadd.f32 %v5316, %v6029
        %v6097 = vadd.f32 %v5317, %v5943
        %v6098 = vadd.f32 %v5318, %v6032
        %v6099 = vadd.f32 %v5319, %v5945
        %v6100 = vadd.f32 %v5320, %v6034
        %v6101 = vadd.f32 %v5321, %v5948
        %v6102 = vadd.f32 %v5322, %v6037
        %v6103 = vadd.f32 %v5323, %v5950
        %v6104 = vadd.f32 %v5324, %v6039
        %v6105 = vld [vmem:[%s2] sm:$0x3]
        %v6107 = vperm.slane %v6105, 0
        %v6108 = vperm.slane %v6105, 1
        %v6111 = vadd.f32 %v6041, %v6107
        %v6112 = vadd.f32 %v6042, %v6108
        %v6113 = vadd.f32 %v6043, %v6107
        %v6114 = vadd.f32 %v6044, %v6108
        %v6115 = vadd.f32 %v6045, %v6107
        %v6116 = vadd.f32 %v6046, %v6108
        %v6117 = vadd.f32 %v6047, %v6107
        %v6118 = vadd.f32 %v6048, %v6108
        %v6119 = vadd.f32 %v6049, %v6107
        %v6120 = vadd.f32 %v6050, %v6108
        %v6121 = vadd.f32 %v6051, %v6107
        %v6122 = vadd.f32 %v6052, %v6108
        %v6123 = vadd.f32 %v6053, %v6107
        %v6124 = vadd.f32 %v6054, %v6108
        %v6125 = vadd.f32 %v6055, %v6107
        %v6126 = vadd.f32 %v6056, %v6108
        %v6127 = vadd.f32 %v6057, %v6107
        %v6128 = vadd.f32 %v6058, %v6108
        %v6129 = vadd.f32 %v6059, %v6107
        %v6130 = vadd.f32 %v6060, %v6108
        %v6131 = vadd.f32 %v6061, %v6107
        %v6132 = vadd.f32 %v6062, %v6108
        %v6133 = vadd.f32 %v6063, %v6107
        %v6134 = vadd.f32 %v6064, %v6108
        %v6135 = vadd.f32 %v6065, %v6107
        %v6136 = vadd.f32 %v6066, %v6108
        %v6137 = vadd.f32 %v6067, %v6107
        %v6138 = vadd.f32 %v6068, %v6108
        %v6139 = vadd.f32 %v6069, %v6107
        %v6140 = vadd.f32 %v6070, %v6108
        %v6141 = vadd.f32 %v6071, %v6107
        %v6142 = vadd.f32 %v6072, %v6108
        %v6143 = vadd.f32 %v6073, %v6107
        %v6144 = vadd.f32 %v6074, %v6108
        %v6145 = vadd.f32 %v6075, %v6107
        %v6146 = vadd.f32 %v6076, %v6108
        %v6147 = vadd.f32 %v6077, %v6107
        %v6148 = vadd.f32 %v6078, %v6108
        %v6149 = vadd.f32 %v6079, %v6107
        %v6150 = vadd.f32 %v6080, %v6108
        %v6151 = vadd.f32 %v6081, %v6107
        %v6152 = vadd.f32 %v6082, %v6108
        %v6153 = vadd.f32 %v6083, %v6107
        %v6154 = vadd.f32 %v6084, %v6108
        %v6155 = vadd.f32 %v6085, %v6107
        %v6156 = vadd.f32 %v6086, %v6108
        %v6157 = vadd.f32 %v6087, %v6107
        %v6158 = vadd.f32 %v6088, %v6108
        %v6159 = vadd.f32 %v6089, %v6107
        %v6160 = vadd.f32 %v6090, %v6108
        %v6161 = vadd.f32 %v6091, %v6107
        %v6162 = vadd.f32 %v6092, %v6108
        %v6163 = vadd.f32 %v6093, %v6107
        %v6164 = vadd.f32 %v6094, %v6108
        %v6165 = vadd.f32 %v6095, %v6107
        %v6166 = vadd.f32 %v6096, %v6108
        %v6167 = vadd.f32 %v6097, %v6107
        %v6168 = vadd.f32 %v6098, %v6108
        %v6169 = vadd.f32 %v6099, %v6107
        %v6170 = vadd.f32 %v6100, %v6108
        %v6171 = vadd.f32 %v6101, %v6107
        %v6172 = vadd.f32 %v6102, %v6108
        %v6173 = vadd.f32 %v6103, %v6107
        %v6174 = vadd.f32 %v6104, %v6108
        %v6175 = vmax.f32 %v6111, 0.0
        %v6176 = vmax.f32 %v6113, 0.0
        %v6177 = vmax.f32 %v6115, 0.0
        %v6178 = vmax.f32 %v6117, 0.0
        %v6179 = vmax.f32 %v6119, 0.0
        %v6180 = vmax.f32 %v6121, 0.0
        %v6181 = vmax.f32 %v6123, 0.0
        %v6182 = vmax.f32 %v6125, 0.0
        %v6183 = vmax.f32 %v6127, 0.0
        %v6184 = vmax.f32 %v6129, 0.0
        %v6185 = vmax.f32 %v6131, 0.0
        %v6186 = vmax.f32 %v6133, 0.0
        %v6187 = vmax.f32 %v6135, 0.0
        %v6188 = vmax.f32 %v6137, 0.0
        %v6189 = vmax.f32 %v6139, 0.0
        %v6190 = vmax.f32 %v6141, 0.0
        %v6191 = vmax.f32 %v6143, 0.0
        %v6192 = vmax.f32 %v6145, 0.0
        %v6193 = vmax.f32 %v6147, 0.0
        %v6194 = vmax.f32 %v6149, 0.0
        %v6195 = vmax.f32 %v6151, 0.0
        %v6196 = vmax.f32 %v6153, 0.0
        %v6197 = vmax.f32 %v6155, 0.0
        %v6198 = vmax.f32 %v6157, 0.0
        %v6199 = vmax.f32 %v6159, 0.0
        %v6200 = vmax.f32 %v6161, 0.0
        %v6201 = vmax.f32 %v6163, 0.0
        %v6202 = vmax.f32 %v6165, 0.0
        %v6203 = vmax.f32 %v6167, 0.0
        %v6204 = vmax.f32 %v6169, 0.0
        %v6205 = vmax.f32 %v6171, 0.0
        %v6206 = vmax.f32 %v6173, 0.0
        %6207 = vst [vmem:[#allocation3] sm:$0xf] 0
        %6208 = vst [vmem:[#allocation3 + $0x4] sm:$0xf] 0
        %6209 = vst [vmem:[#allocation3 + $0x8] sm:$0xf] 0
        %6210 = vst [vmem:[#allocation3 + $0xc] sm:$0xf] 0
        %vm6211 = vcmask 1040384
        %vm6212 = vmand %vm6211, %vm249
        %v6213 = vld [vmem:[#allocation3 + $0x10] sm:$0x1]
        %v6214 = vsel %vm6212, 0, %v6213
        %6215 = vst [vmem:[#allocation3 + $0x10] sm:$0x1] %v6214
        %s6216 = scalar_lea.vmem [#allocation3], 340
        %6217 = vst [vmem:[%s6216] sm:$0xf] 0
        %6218 = vst [vmem:[%s6216 + $0x4] sm:$0xf] 0
        %6219 = vst [vmem:[%s6216 + $0x8] sm:$0xf] 0
        %6220 = vst [vmem:[%s6216 + $0xc] sm:$0xf] 0
        %v6221 = vld [vmem:[%s6216 + $0x10] sm:$0x1]
        %v6222 = vsel %vm6212, 0, %v6221
        %6223 = vst [vmem:[%s6216 + $0x10] sm:$0x1] %v6222
        %vm6224 = vcmask 1043459
        %vm6225 = vmand %vm6224, %vm263
        %v6226 = vld [vmem:[#allocation3 + $0x4] sm:$0x8]
        %v6227 = vsel %vm6225, 0, %v6226
        %6228 = vst [vmem:[#allocation3 + $0x4] sm:$0x8] %v6227
        %v6229 = vld [vmem:[#allocation3 + $0x18] sm:$0x8]
        %v6230 = vsel %vm6225, 0, %v6229
        %6231 = vst [vmem:[#allocation3 + $0x18] sm:$0x8] %v6230
        %v6232 = vld [vmem:[#allocation3 + $0x2c] sm:$0x8]
        %v6233 = vsel %vm6225, 0, %v6232
        %6234 = vst [vmem:[#allocation3 + $0x2c] sm:$0x8] %v6233
        %v6235 = vld [vmem:[#allocation3 + $0x40] sm:$0x8]
        %v6236 = vsel %vm6225, 0, %v6235
        %6237 = vst [vmem:[#allocation3 + $0x40] sm:$0x8] %v6236
        %v6238 = vld [vmem:[#allocation3 + $0x54] sm:$0x8]
        %v6239 = vsel %vm6225, 0, %v6238
        %6240 = vst [vmem:[#allocation3 + $0x54] sm:$0x8] %v6239
        %v6241 = vld [vmem:[#allocation3 + $0x68] sm:$0x8]
        %v6242 = vsel %vm6225, 0, %v6241
        %6243 = vst [vmem:[#allocation3 + $0x68] sm:$0x8] %v6242
        %v6244 = vld [vmem:[#allocation3 + $0x7c] sm:$0x8]
        %v6245 = vsel %vm6225, 0, %v6244
        %6246 = vst [vmem:[#allocation3 + $0x7c] sm:$0x8] %v6245
        %v6247 = vld [vmem:[#allocation3 + $0x90] sm:$0x8]
        %v6248 = vsel %vm6225, 0, %v6247
        %6249 = vst [vmem:[#allocation3 + $0x90] sm:$0x8] %v6248
        %v6250 = vld [vmem:[#allocation3 + $0xa4] sm:$0x8]
        %v6251 = vsel %vm6225, 0, %v6250
        %6252 = vst [vmem:[#allocation3 + $0xa4] sm:$0x8] %v6251
        %v6253 = vld [vmem:[#allocation3 + $0xb8] sm:$0x8]
        %v6254 = vsel %vm6225, 0, %v6253
        %6255 = vst [vmem:[#allocation3 + $0xb8] sm:$0x8] %v6254
        %v6256 = vld [vmem:[#allocation3 + $0xcc] sm:$0x8]
        %v6257 = vsel %vm6225, 0, %v6256
        %6258 = vst [vmem:[#allocation3 + $0xcc] sm:$0x8] %v6257
        %v6259 = vld [vmem:[#allocation3 + $0xe0] sm:$0x8]
        %v6260 = vsel %vm6225, 0, %v6259
        %6261 = vst [vmem:[#allocation3 + $0xe0] sm:$0x8] %v6260
        %v6262 = vld [vmem:[#allocation3 + $0xf4] sm:$0x8]
        %v6263 = vsel %vm6225, 0, %v6262
        %6264 = vst [vmem:[#allocation3 + $0xf4] sm:$0x8] %v6263
        %v6265 = vld [vmem:[#allocation3 + $0x108] sm:$0x8]
        %v6266 = vsel %vm6225, 0, %v6265
        %6267 = vst [vmem:[#allocation3 + $0x108] sm:$0x8] %v6266
        %v6268 = vld [vmem:[#allocation3 + $0x11c] sm:$0x8]
        %v6269 = vsel %vm6225, 0, %v6268
        %6270 = vst [vmem:[#allocation3 + $0x11c] sm:$0x8] %v6269
        %v6271 = vld [vmem:[#allocation3 + $0x130] sm:$0x8]
        %v6272 = vsel %vm6225, 0, %v6271
        %6273 = vst [vmem:[#allocation3 + $0x130] sm:$0x8] %v6272
        %v6274 = vld [vmem:[#allocation3 + $0x144] sm:$0x8]
        %v6275 = vsel %vm6225, 0, %v6274
        %6276 = vst [vmem:[#allocation3 + $0x144] sm:$0x8] %v6275
        %v6277 = vld [vmem:[#allocation3 + $0x158] sm:$0x8]
        %v6278 = vsel %vm6225, 0, %v6277
        %6279 = vst [vmem:[#allocation3 + $0x158] sm:$0x8] %v6278
        %v6280 = vld [vmem:[#allocation3 + $0x10] sm:$0x1]
        %v6281 = vsel %vm6212, 0, %v6280
        %6282 = vst [vmem:[#allocation3 + $0x10] sm:$0x1] %v6281
        %v6283 = vld [vmem:[#allocation3 + $0x24] sm:$0x1]
        %v6284 = vsel %vm6212, 0, %v6283
        %6285 = vst [vmem:[#allocation3 + $0x24] sm:$0x1] %v6284
        %v6286 = vld [vmem:[#allocation3 + $0x38] sm:$0x1]
        %v6287 = vsel %vm6212, 0, %v6286
        %6288 = vst [vmem:[#allocation3 + $0x38] sm:$0x1] %v6287
        %v6289 = vld [vmem:[#allocation3 + $0x4c] sm:$0x1]
        %v6290 = vsel %vm6212, 0, %v6289
        %6291 = vst [vmem:[#allocation3 + $0x4c] sm:$0x1] %v6290
        %v6292 = vld [vmem:[#allocation3 + $0x60] sm:$0x1]
        %v6293 = vsel %vm6212, 0, %v6292
        %6294 = vst [vmem:[#allocation3 + $0x60] sm:$0x1] %v6293
        %v6295 = vld [vmem:[#allocation3 + $0x74] sm:$0x1]
        %v6296 = vsel %vm6212, 0, %v6295
        %6297 = vst [vmem:[#allocation3 + $0x74] sm:$0x1] %v6296
        %v6298 = vld [vmem:[#allocation3 + $0x88] sm:$0x1]
        %v6299 = vsel %vm6212, 0, %v6298
        %6300 = vst [vmem:[#allocation3 + $0x88] sm:$0x1] %v6299
        %v6301 = vld [vmem:[#allocation3 + $0x9c] sm:$0x1]
        %v6302 = vsel %vm6212, 0, %v6301
        %6303 = vst [vmem:[#allocation3 + $0x9c] sm:$0x1] %v6302
        %v6304 = vld [vmem:[#allocation3 + $0xb0] sm:$0x1]
        %v6305 = vsel %vm6212, 0, %v6304
        %6306 = vst [vmem:[#allocation3 + $0xb0] sm:$0x1] %v6305
        %v6307 = vld [vmem:[#allocation3 + $0xc4] sm:$0x1]
        %v6308 = vsel %vm6212, 0, %v6307
        %6309 = vst [vmem:[#allocation3 + $0xc4] sm:$0x1] %v6308
        %v6310 = vld [vmem:[#allocation3 + $0xd8] sm:$0x1]
        %v6311 = vsel %vm6212, 0, %v6310
        %6312 = vst [vmem:[#allocation3 + $0xd8] sm:$0x1] %v6311
        %v6313 = vld [vmem:[#allocation3 + $0xec] sm:$0x1]
        %v6314 = vsel %vm6212, 0, %v6313
        %6315 = vst [vmem:[#allocation3 + $0xec] sm:$0x1] %v6314
        %v6316 = vld [vmem:[#allocation3 + $0x100] sm:$0x1]
        %v6317 = vsel %vm6212, 0, %v6316
        %6318 = vst [vmem:[#allocation3 + $0x100] sm:$0x1] %v6317
        %v6319 = vld [vmem:[#allocation3 + $0x114] sm:$0x1]
        %v6320 = vsel %vm6212, 0, %v6319
        %6321 = vst [vmem:[#allocation3 + $0x114] sm:$0x1] %v6320
        %v6322 = vld [vmem:[#allocation3 + $0x128] sm:$0x1]
        %v6323 = vsel %vm6212, 0, %v6322
        %6324 = vst [vmem:[#allocation3 + $0x128] sm:$0x1] %v6323
        %v6325 = vld [vmem:[#allocation3 + $0x13c] sm:$0x1]
        %v6326 = vsel %vm6212, 0, %v6325
        %6327 = vst [vmem:[#allocation3 + $0x13c] sm:$0x1] %v6326
        %v6328 = vld [vmem:[#allocation3 + $0x150] sm:$0x1]
        %v6329 = vsel %vm6212, 0, %v6328
        %6330 = vst [vmem:[#allocation3 + $0x150] sm:$0x1] %v6329
        %v6331 = vld [vmem:[#allocation3 + $0x164] sm:$0x1]
        %v6332 = vsel %vm6212, 0, %v6331
        %6333 = vst [vmem:[#allocation3 + $0x164] sm:$0x1] %v6332
        %v6334 = vpack.c.bf16 %v6175, %v6175
        %v6335 = vpack.c.bf16 %v6176, %v6176
        %v6336 = vpack.c.bf16 %v6177, %v6177
        %v6337 = vpack.c.bf16 %v6178, %v6178
        %v6338 = vpack.c.bf16 %v6179, %v6179
        %v6339 = vpack.c.bf16 %v6180, %v6180
        %v6340 = vpack.c.bf16 %v6181, %v6181
        %v6341 = vpack.c.bf16 %v6182, %v6182
        %v6342 = vpack.c.bf16 %v6183, %v6183
        %v6343 = vpack.c.bf16 %v6184, %v6184
        %v6344 = vpack.c.bf16 %v6185, %v6185
        %v6345 = vpack.c.bf16 %v6186, %v6186
        %v6346 = vpack.c.bf16 %v6187, %v6187
        %v6347 = vpack.c.bf16 %v6188, %v6188
        %v6348 = vpack.c.bf16 %v6189, %v6189
        %v6349 = vpack.c.bf16 %v6190, %v6190
        %v6350 = vpack.c.bf16 %v6191, %v6191
        %v6351 = vpack.c.bf16 %v6192, %v6192
        %v6352 = vpack.c.bf16 %v6193, %v6193
        %v6353 = vpack.c.bf16 %v6194, %v6194
        %v6354 = vpack.c.bf16 %v6195, %v6195
        %v6355 = vpack.c.bf16 %v6196, %v6196
        %v6356 = vpack.c.bf16 %v6197, %v6197
        %v6357 = vpack.c.bf16 %v6198, %v6198
        %v6358 = vpack.c.bf16 %v6199, %v6199
        %v6359 = vpack.c.bf16 %v6200, %v6200
        %v6360 = vpack.c.bf16 %v6201, %v6201
        %v6361 = vpack.c.bf16 %v6202, %v6202
        %v6362 = vpack.c.bf16 %v6203, %v6203
        %v6363 = vpack.c.bf16 %v6204, %v6204
        %v6364 = vpack.c.bf16 %v6205, %v6205
        %v6365 = vpack.c.bf16 %v6206, %v6206
        %s6366 = scalar_lea.vmem [#allocation3], 20
        %6367 = vst [vmem:[%s6366 + $0x8] sm:$0xf] %v6334
        %6368 = vst [vmem:[%s6366 + $0xc] sm:$0xf] %v6335
        %6369 = vst [vmem:[%s6366 + $0x1c] sm:$0xf] %v6336
        %6370 = vst [vmem:[%s6366 + $0x20] sm:$0xf] %v6337
        %6371 = vst [vmem:[%s6366 + $0x30] sm:$0xf] %v6338
        %6372 = vst [vmem:[%s6366 + $0x34] sm:$0xf] %v6339
        %6373 = vst [vmem:[%s6366 + $0x44] sm:$0xf] %v6340
        %6374 = vst [vmem:[%s6366 + $0x48] sm:$0xf] %v6341
        %6375 = vst [vmem:[%s6366 + $0x58] sm:$0xf] %v6342
        %6376 = vst [vmem:[%s6366 + $0x5c] sm:$0xf] %v6343
        %6377 = vst [vmem:[%s6366 + $0x6c] sm:$0xf] %v6344
        %6378 = vst [vmem:[%s6366 + $0x70] sm:$0xf] %v6345
        %6379 = vst [vmem:[%s6366 + $0x80] sm:$0xf] %v6346
        %6380 = vst [vmem:[%s6366 + $0x84] sm:$0xf] %v6347
        %6381 = vst [vmem:[%s6366 + $0x94] sm:$0xf] %v6348
        %6382 = vst [vmem:[%s6366 + $0x98] sm:$0xf] %v6349
        %6383 = vst [vmem:[%s6366 + $0xa8] sm:$0xf] %v6350
        %6384 = vst [vmem:[%s6366 + $0xac] sm:$0xf] %v6351
        %6385 = vst [vmem:[%s6366 + $0xbc] sm:$0xf] %v6352
        %6386 = vst [vmem:[%s6366 + $0xc0] sm:$0xf] %v6353
        %6387 = vst [vmem:[%s6366 + $0xd0] sm:$0xf] %v6354
        %6388 = vst [vmem:[%s6366 + $0xd4] sm:$0xf] %v6355
        %6389 = vst [vmem:[%s6366 + $0xe4] sm:$0xf] %v6356
        %6390 = vst [vmem:[%s6366 + $0xe8] sm:$0xf] %v6357
        %6391 = vst [vmem:[%s6366 + $0xf8] sm:$0xf] %v6358
        %6392 = vst [vmem:[%s6366 + $0xfc] sm:$0xf] %v6359
        %6393 = vst [vmem:[%s6366 + $0x10c] sm:$0xf] %v6360
        %6394 = vst [vmem:[%s6366 + $0x110] sm:$0xf] %v6361
        %6395 = vst [vmem:[%s6366 + $0x120] sm:$0xf] %v6362
        %6396 = vst [vmem:[%s6366 + $0x124] sm:$0xf] %v6363
        %6397 = vst [vmem:[%s6366 + $0x134] sm:$0xf] %v6364
        %6398 = vst [vmem:[%s6366 + $0x138] sm:$0xf] %v6365
        %v6399 = vld [vmem:[#allocation3 + $0x4] sm:$0x8]
        %v6400 = vld [vmem:[#allocation3 + $0x8] sm:$0xf]
        %v6401 = vld [vmem:[#allocation3 + $0xc] sm:$0xf]
        %v6402 = vld [vmem:[#allocation3 + $0x18] sm:$0x8]
        %v6403 = vld [vmem:[#allocation3 + $0x1c] sm:$0xf]
        %v6404 = vld [vmem:[#allocation3 + $0x20] sm:$0xf]
        %v6405 = vld [vmem:[#allocation3 + $0x2c] sm:$0x8]
        %v6406 = vld [vmem:[#allocation3 + $0x30] sm:$0xf]
        %v6407 = vld [vmem:[#allocation3 + $0x34] sm:$0xf]
        %v6408 = vld [vmem:[#allocation3 + $0x40] sm:$0x8]
        %v6409 = vld [vmem:[#allocation3 + $0x44] sm:$0xf]
        %v6410 = vld [vmem:[#allocation3 + $0x48] sm:$0xf]
        %v6411 = vld [vmem:[#allocation3 + $0x54] sm:$0x8]
        %v6412 = vld [vmem:[#allocation3 + $0x58] sm:$0xf]
        %v6413 = vld [vmem:[#allocation3 + $0x5c] sm:$0xf]
        %v6414 = vld [vmem:[#allocation3 + $0x68] sm:$0x8]
        %v6415 = vld [vmem:[#allocation3 + $0x6c] sm:$0xf]
        %v6416 = vld [vmem:[#allocation3 + $0x70] sm:$0xf]
        %v6417 = vld [vmem:[#allocation3 + $0x7c] sm:$0x8]
        %v6418 = vld [vmem:[#allocation3 + $0x80] sm:$0xf]
        %v6419 = vld [vmem:[#allocation3 + $0x84] sm:$0xf]
        %v6420 = vld [vmem:[#allocation3 + $0x90] sm:$0x8]
        %v6421 = vld [vmem:[#allocation3 + $0x94] sm:$0xf]
        %v6422 = vld [vmem:[#allocation3 + $0x98] sm:$0xf]
        %v6423 = vld [vmem:[#allocation3 + $0xa4] sm:$0x8]
        %v6424 = vld [vmem:[#allocation3 + $0xa8] sm:$0xf]
        %v6425 = vld [vmem:[#allocation3 + $0xac] sm:$0xf]
        %v6426 = vld [vmem:[#allocation3 + $0xb8] sm:$0x8]
        %v6427 = vld [vmem:[#allocation3 + $0xbc] sm:$0xf]
        %v6428 = vld [vmem:[#allocation3 + $0xc0] sm:$0xf]
        %v6429 = vld [vmem:[#allocation3 + $0xcc] sm:$0x8]
        %v6430 = vld [vmem:[#allocation3 + $0xd0] sm:$0xf]
        %v6431 = vld [vmem:[#allocation3 + $0xd4] sm:$0xf]
        %v6432 = vld [vmem:[#allocation3 + $0xe0] sm:$0x8]
        %v6433 = vld [vmem:[#allocation3 + $0xe4] sm:$0xf]
        %v6434 = vld [vmem:[#allocation3 + $0xe8] sm:$0xf]
        %v6435 = vld [vmem:[#allocation3 + $0xf4] sm:$0x8]
        %v6436 = vld [vmem:[#allocation3 + $0xf8] sm:$0xf]
        %v6437 = vld [vmem:[#allocation3 + $0xfc] sm:$0xf]
        %v6438 = vld [vmem:[#allocation3 + $0x108] sm:$0x8]
        %v6439 = vld [vmem:[#allocation3 + $0x10c] sm:$0xf]
        %v6440 = vld [vmem:[#allocation3 + $0x110] sm:$0xf]
        %v6441 = vld [vmem:[#allocation3 + $0x11c] sm:$0x8]
        %v6442 = vld [vmem:[#allocation3 + $0x120] sm:$0xf]
        %v6443 = vld [vmem:[#allocation3 + $0x124] sm:$0xf]
        %v6444 = vld [vmem:[#allocation3 + $0x130] sm:$0x8]
        %v6445 = vld [vmem:[#allocation3 + $0x134] sm:$0xf]
        %v6446 = vld [vmem:[#allocation3 + $0x138] sm:$0xf]
        %v6448 = vshrl.u32 %v6399, 16
        %v6450 = vrot.slane %v6448, 7
        %v6451 = vrot.slane %v6450, 4
        %v6453 = vshrl.u32 %v6400, 16
        %v6455 = vrot.slane %v6453, 7
        %v6456 = vshll.u32 %v6400, 16
        %v6458 = vor.u32 %v6455, %v6456
        %v6459 = vsel %vm487, %v6451, %v6458
        %v6460 = vrot.slane %v6455, 4
        %v6462 = vshrl.u32 %v6401, 16
        %v6464 = vrot.slane %v6462, 7
        %v6465 = vshll.u32 %v6401, 16
        %v6467 = vor.u32 %v6464, %v6465
        %v6468 = vsel %vm487, %v6460, %v6467
        %v6470 = vshrl.u32 %v6402, 16
        %v6472 = vrot.slane %v6470, 7
        %v6473 = vrot.slane %v6472, 4
        %v6475 = vshrl.u32 %v6403, 16
        %v6477 = vrot.slane %v6475, 7
        %v6478 = vshll.u32 %v6403, 16
        %v6480 = vor.u32 %v6477, %v6478
        %v6481 = vsel %vm487, %v6473, %v6480
        %v6482 = vrot.slane %v6477, 4
        %v6484 = vshrl.u32 %v6404, 16
        %v6486 = vrot.slane %v6484, 7
        %v6487 = vshll.u32 %v6404, 16
        %v6489 = vor.u32 %v6486, %v6487
        %v6490 = vsel %vm487, %v6482, %v6489
        %v6492 = vshrl.u32 %v6405, 16
        %v6494 = vrot.slane %v6492, 7
        %v6495 = vrot.slane %v6494, 4
        %v6497 = vshrl.u32 %v6406, 16
        %v6499 = vrot.slane %v6497, 7
        %v6500 = vshll.u32 %v6406, 16
        %v6502 = vor.u32 %v6499, %v6500
        %v6503 = vsel %vm487, %v6495, %v6502
        %v6504 = vrot.slane %v6499, 4
        %v6506 = vshrl.u32 %v6407, 16
        %v6508 = vrot.slane %v6506, 7
        %v6509 = vshll.u32 %v6407, 16
        %v6511 = vor.u32 %v6508, %v6509
        %v6512 = vsel %vm487, %v6504, %v6511
        %v6514 = vshrl.u32 %v6408, 16
        %v6516 = vrot.slane %v6514, 7
        %v6517 = vrot.slane %v6516, 4
        %v6519 = vshrl.u32 %v6409, 16
        %v6521 = vrot.slane %v6519, 7
        %v6522 = vshll.u32 %v6409, 16
        %v6524 = vor.u32 %v6521, %v6522
        %v6525 = vsel %vm487, %v6517, %v6524
        %v6526 = vrot.slane %v6521, 4
        %v6528 = vshrl.u32 %v6410, 16
        %v6530 = vrot.slane %v6528, 7
        %v6531 = vshll.u32 %v6410, 16
        %v6533 = vor.u32 %v6530, %v6531
        %v6534 = vsel %vm487, %v6526, %v6533
        %v6536 = vshrl.u32 %v6411, 16
        %v6538 = vrot.slane %v6536, 7
        %v6539 = vrot.slane %v6538, 4
        %v6541 = vshrl.u32 %v6412, 16
        %v6543 = vrot.slane %v6541, 7
        %v6544 = vshll.u32 %v6412, 16
        %v6546 = vor.u32 %v6543, %v6544
        %v6547 = vsel %vm487, %v6539, %v6546
        %v6548 = vrot.slane %v6543, 4
        %v6550 = vshrl.u32 %v6413, 16
        %v6552 = vrot.slane %v6550, 7
        %v6553 = vshll.u32 %v6413, 16
        %v6555 = vor.u32 %v6552, %v6553
        %v6556 = vsel %vm487, %v6548, %v6555
        %v6558 = vshrl.u32 %v6414, 16
        %v6560 = vrot.slane %v6558, 7
        %v6561 = vrot.slane %v6560, 4
        %v6563 = vshrl.u32 %v6415, 16
        %v6565 = vrot.slane %v6563, 7
        %v6566 = vshll.u32 %v6415, 16
        %v6568 = vor.u32 %v6565, %v6566
        %v6569 = vsel %vm487, %v6561, %v6568
        %v6570 = vrot.slane %v6565, 4
        %v6572 = vshrl.u32 %v6416, 16
        %v6574 = vrot.slane %v6572, 7
        %v6575 = vshll.u32 %v6416, 16
        %v6577 = vor.u32 %v6574, %v6575
        %v6578 = vsel %vm487, %v6570, %v6577
        %v6580 = vshrl.u32 %v6417, 16
        %v6582 = vrot.slane %v6580, 7
        %v6583 = vrot.slane %v6582, 4
        %v6585 = vshrl.u32 %v6418, 16
        %v6587 = vrot.slane %v6585, 7
        %v6588 = vshll.u32 %v6418, 16
        %v6590 = vor.u32 %v6587, %v6588
        %v6591 = vsel %vm487, %v6583, %v6590
        %v6592 = vrot.slane %v6587, 4
        %v6594 = vshrl.u32 %v6419, 16
        %v6596 = vrot.slane %v6594, 7
        %v6597 = vshll.u32 %v6419, 16
        %v6599 = vor.u32 %v6596, %v6597
        %v6600 = vsel %vm487, %v6592, %v6599
        %v6602 = vshrl.u32 %v6420, 16
        %v6604 = vrot.slane %v6602, 7
        %v6605 = vrot.slane %v6604, 4
        %v6607 = vshrl.u32 %v6421, 16
        %v6609 = vrot.slane %v6607, 7
        %v6610 = vshll.u32 %v6421, 16
        %v6612 = vor.u32 %v6609, %v6610
        %v6613 = vsel %vm487, %v6605, %v6612
        %v6614 = vrot.slane %v6609, 4
        %v6616 = vshrl.u32 %v6422, 16
        %v6618 = vrot.slane %v6616, 7
        %v6619 = vshll.u32 %v6422, 16
        %v6621 = vor.u32 %v6618, %v6619
        %v6622 = vsel %vm487, %v6614, %v6621
        %v6624 = vshrl.u32 %v6423, 16
        %v6626 = vrot.slane %v6624, 7
        %v6627 = vrot.slane %v6626, 4
        %v6629 = vshrl.u32 %v6424, 16
        %v6631 = vrot.slane %v6629, 7
        %v6632 = vshll.u32 %v6424, 16
        %v6634 = vor.u32 %v6631, %v6632
        %v6635 = vsel %vm487, %v6627, %v6634
        %v6636 = vrot.slane %v6631, 4
        %v6638 = vshrl.u32 %v6425, 16
        %v6640 = vrot.slane %v6638, 7
        %v6641 = vshll.u32 %v6425, 16
        %v6643 = vor.u32 %v6640, %v6641
        %v6644 = vsel %vm487, %v6636, %v6643
        %v6646 = vshrl.u32 %v6426, 16
        %v6648 = vrot.slane %v6646, 7
        %v6649 = vrot.slane %v6648, 4
        %v6651 = vshrl.u32 %v6427, 16
        %v6653 = vrot.slane %v6651, 7
        %v6654 = vshll.u32 %v6427, 16
        %v6656 = vor.u32 %v6653, %v6654
        %v6657 = vsel %vm487, %v6649, %v6656
        %v6658 = vrot.slane %v6653, 4
        %v6660 = vshrl.u32 %v6428, 16
        %v6662 = vrot.slane %v6660, 7
        %v6663 = vshll.u32 %v6428, 16
        %v6665 = vor.u32 %v6662, %v6663
        %v6666 = vsel %vm487, %v6658, %v6665
        %v6668 = vshrl.u32 %v6429, 16
        %v6670 = vrot.slane %v6668, 7
        %v6671 = vrot.slane %v6670, 4
        %v6673 = vshrl.u32 %v6430, 16
        %v6675 = vrot.slane %v6673, 7
        %v6676 = vshll.u32 %v6430, 16
        %v6678 = vor.u32 %v6675, %v6676
        %v6679 = vsel %vm487, %v6671, %v6678
        %v6680 = vrot.slane %v6675, 4
        %v6682 = vshrl.u32 %v6431, 16
        %v6684 = vrot.slane %v6682, 7
        %v6685 = vshll.u32 %v6431, 16
        %v6687 = vor.u32 %v6684, %v6685
        %v6688 = vsel %vm487, %v6680, %v6687
        %v6690 = vshrl.u32 %v6432, 16
        %v6692 = vrot.slane %v6690, 7
        %v6693 = vrot.slane %v6692, 4
        %v6695 = vshrl.u32 %v6433, 16
        %v6697 = vrot.slane %v6695, 7
        %v6698 = vshll.u32 %v6433, 16
        %v6700 = vor.u32 %v6697, %v6698
        %v6701 = vsel %vm487, %v6693, %v6700
        %v6702 = vrot.slane %v6697, 4
        %v6704 = vshrl.u32 %v6434, 16
        %v6706 = vrot.slane %v6704, 7
        %v6707 = vshll.u32 %v6434, 16
        %v6709 = vor.u32 %v6706, %v6707
        %v6710 = vsel %vm487, %v6702, %v6709
        %v6712 = vshrl.u32 %v6435, 16
        %v6714 = vrot.slane %v6712, 7
        %v6715 = vrot.slane %v6714, 4
        %v6717 = vshrl.u32 %v6436, 16
        %v6719 = vrot.slane %v6717, 7
        %v6720 = vshll.u32 %v6436, 16
        %v6722 = vor.u32 %v6719, %v6720
        %v6723 = vsel %vm487, %v6715, %v6722
        %v6724 = vrot.slane %v6719, 4
        %v6726 = vshrl.u32 %v6437, 16
        %v6728 = vrot.slane %v6726, 7
        %v6729 = vshll.u32 %v6437, 16
        %v6731 = vor.u32 %v6728, %v6729
        %v6732 = vsel %vm487, %v6724, %v6731
        %v6734 = vshrl.u32 %v6438, 16
        %v6736 = vrot.slane %v6734, 7
        %v6737 = vrot.slane %v6736, 4
        %v6739 = vshrl.u32 %v6439, 16
        %v6741 = vrot.slane %v6739, 7
        %v6742 = vshll.u32 %v6439, 16
        %v6744 = vor.u32 %v6741, %v6742
        %v6745 = vsel %vm487, %v6737, %v6744
        %v6746 = vrot.slane %v6741, 4
        %v6748 = vshrl.u32 %v6440, 16
        %v6750 = vrot.slane %v6748, 7
        %v6751 = vshll.u32 %v6440, 16
        %v6753 = vor.u32 %v6750, %v6751
        %v6754 = vsel %vm487, %v6746, %v6753
        %v6756 = vshrl.u32 %v6441, 16
        %v6758 = vrot.slane %v6756, 7
        %v6759 = vrot.slane %v6758, 4
        %v6761 = vshrl.u32 %v6442, 16
        %v6763 = vrot.slane %v6761, 7
        %v6764 = vshll.u32 %v6442, 16
        %v6766 = vor.u32 %v6763, %v6764
        %v6767 = vsel %vm487, %v6759, %v6766
        %v6768 = vrot.slane %v6763, 4
        %v6770 = vshrl.u32 %v6443, 16
        %v6772 = vrot.slane %v6770, 7
        %v6773 = vshll.u32 %v6443, 16
        %v6775 = vor.u32 %v6772, %v6773
        %v6776 = vsel %vm487, %v6768, %v6775
        %v6778 = vshrl.u32 %v6444, 16
        %v6780 = vrot.slane %v6778, 7
        %v6781 = vrot.slane %v6780, 4
        %v6783 = vshrl.u32 %v6445, 16
        %v6785 = vrot.slane %v6783, 7
        %v6786 = vshll.u32 %v6445, 16
        %v6788 = vor.u32 %v6785, %v6786
        %v6789 = vsel %vm487, %v6781, %v6788
        %v6790 = vrot.slane %v6785, 4
        %v6792 = vshrl.u32 %v6446, 16
        %v6794 = vrot.slane %v6792, 7
        %v6795 = vshll.u32 %v6446, 16
        %v6797 = vor.u32 %v6794, %v6795
        %v6798 = vsel %vm487, %v6790, %v6797
        %v6799 = vld [vmem:[#allocation4] sm:$0xf]
        %v6800 = vld [vmem:[#allocation4 + $0x4] sm:$0xf]
        %v6801 = vld [vmem:[#allocation4 + $0x8] sm:$0xf]
        %v6802 = vld [vmem:[#allocation4 + $0xc] sm:$0xf]
        %v6803 = vld [vmem:[#allocation4 + $0x10] sm:$0xf]
        %v6804 = vld [vmem:[#allocation4 + $0x14] sm:$0xf]
        %v6805 = vld [vmem:[#allocation4 + $0x18] sm:$0xf]
        %v6806 = vld [vmem:[#allocation4 + $0x1c] sm:$0xf]
        %v6807 = vld [vmem:[#allocation4 + $0x20] sm:$0xf]
        %v6808 = vld [vmem:[#allocation4 + $0x24] sm:$0xf]
        %v6809 = vld [vmem:[#allocation4 + $0x28] sm:$0xf]
        %v6810 = vld [vmem:[#allocation4 + $0x2c] sm:$0xf]
        %v6811 = vld [vmem:[#allocation4 + $0x30] sm:$0xf]
        %v6812 = vld [vmem:[#allocation4 + $0x34] sm:$0xf]
        %v6813 = vld [vmem:[#allocation4 + $0x38] sm:$0xf]
        %v6814 = vld [vmem:[#allocation4 + $0x3c] sm:$0xf]
        %s6815 = scalar_lea.vmem [#allocation4], 64
        %v6816 = vld [vmem:[%s6815] sm:$0xf]
        %v6817 = vld [vmem:[%s6815 + $0x4] sm:$0xf]
        %v6818 = vld [vmem:[%s6815 + $0x8] sm:$0xf]
        %v6819 = vld [vmem:[%s6815 + $0xc] sm:$0xf]
        %v6820 = vld [vmem:[%s6815 + $0x10] sm:$0xf]
        %v6821 = vld [vmem:[%s6815 + $0x14] sm:$0xf]
        %v6822 = vld [vmem:[%s6815 + $0x18] sm:$0xf]
        %v6823 = vld [vmem:[%s6815 + $0x1c] sm:$0xf]
        %v6824 = vld [vmem:[%s6815 + $0x20] sm:$0xf]
        %v6825 = vld [vmem:[%s6815 + $0x24] sm:$0xf]
        %v6826 = vld [vmem:[%s6815 + $0x28] sm:$0xf]
        %v6827 = vld [vmem:[%s6815 + $0x2c] sm:$0xf]
        %v6828 = vld [vmem:[%s6815 + $0x30] sm:$0xf]
        %v6829 = vld [vmem:[%s6815 + $0x34] sm:$0xf]
        %v6830 = vld [vmem:[%s6815 + $0x38] sm:$0xf]
        %v6831 = vld [vmem:[%s6815 + $0x3c] sm:$0xf]
        %v6864 = vunpack.c.l.b16 %v6400
        %v6865 = vunpack.c.l.b16 %v6401
        %v6866 = vunpack.c.l.b16 %v6403
        %v6867 = vunpack.c.l.b16 %v6404
        %v6868 = vunpack.c.l.b16 %v6406
        %v6869 = vunpack.c.l.b16 %v6407
        %v6870 = vunpack.c.l.b16 %v6409
        %v6871 = vunpack.c.l.b16 %v6410
        %v6872 = vunpack.c.l.b16 %v6412
        %v6873 = vunpack.c.l.b16 %v6413
        %v6874 = vunpack.c.l.b16 %v6415
        %v6875 = vunpack.c.l.b16 %v6416
        %v6876 = vunpack.c.l.b16 %v6418
        %v6877 = vunpack.c.l.b16 %v6419
        %v6878 = vunpack.c.l.b16 %v6421
        %v6879 = vunpack.c.l.b16 %v6422
        %v6880 = vunpack.c.l.b16 %v6424
        %v6881 = vunpack.c.l.b16 %v6425
        %v6882 = vunpack.c.l.b16 %v6427
        %v6883 = vunpack.c.l.b16 %v6428
        %v6884 = vunpack.c.l.b16 %v6430
        %v6885 = vunpack.c.l.b16 %v6431
        %v6886 = vunpack.c.l.b16 %v6433
        %v6887 = vunpack.c.l.b16 %v6434
        %v6888 = vunpack.c.l.b16 %v6436
        %v6889 = vunpack.c.l.b16 %v6437
        %v6890 = vunpack.c.l.b16 %v6439
        %v6891 = vunpack.c.l.b16 %v6440
        %v6892 = vunpack.c.l.b16 %v6442
        %v6893 = vunpack.c.l.b16 %v6443
        %v6894 = vunpack.c.l.b16 %v6445
        %v6895 = vunpack.c.l.b16 %v6446
        %v6896 = vpack.c.b16 %v6865, %v6864
        %v6897 = vpack.c.b16 %v6867, %v6866
        %v6898 = vpack.c.b16 %v6869, %v6868
        %v6899 = vpack.c.b16 %v6871, %v6870
        %v6900 = vpack.c.b16 %v6873, %v6872
        %v6901 = vpack.c.b16 %v6875, %v6874
        %v6902 = vpack.c.b16 %v6877, %v6876
        %v6903 = vpack.c.b16 %v6879, %v6878
        %v6904 = vpack.c.b16 %v6881, %v6880
        %v6905 = vpack.c.b16 %v6883, %v6882
        %v6906 = vpack.c.b16 %v6885, %v6884
        %v6907 = vpack.c.b16 %v6887, %v6886
        %v6908 = vpack.c.b16 %v6889, %v6888
        %v6909 = vpack.c.b16 %v6891, %v6890
        %v6910 = vpack.c.b16 %v6893, %v6892
        %v6911 = vpack.c.b16 %v6895, %v6894
        %v6944 = vunpack.c.l.b16 %v6816
        %v6945 = vunpack.c.l.b16 %v6817
        %v6946 = vunpack.c.l.b16 %v6818
        %v6947 = vunpack.c.l.b16 %v6819
        %v6948 = vunpack.c.l.b16 %v6820
        %v6949 = vunpack.c.l.b16 %v6821
        %v6950 = vunpack.c.l.b16 %v6822
        %v6951 = vunpack.c.l.b16 %v6823
        %v6952 = vunpack.c.l.b16 %v6824
        %v6953 = vunpack.c.l.b16 %v6825
        %v6954 = vunpack.c.l.b16 %v6826
        %v6955 = vunpack.c.l.b16 %v6827
        %v6956 = vunpack.c.l.b16 %v6828
        %v6957 = vunpack.c.l.b16 %v6829
        %v6958 = vunpack.c.l.b16 %v6830
        %v6959 = vunpack.c.l.b16 %v6831
        %v6960 = vpack.c.b16 %v6945, %v6944
        %v6961 = vpack.c.b16 %v6947, %v6946
        %v6962 = vpack.c.b16 %v6949, %v6948
        %v6963 = vpack.c.b16 %v6951, %v6950
        %v6964 = vpack.c.b16 %v6953, %v6952
        %v6965 = vpack.c.b16 %v6955, %v6954
        %v6966 = vpack.c.b16 %v6957, %v6956
        %v6967 = vpack.c.b16 %v6959, %v6958
        %6976 = vmatpush.bf16.msra.mxu0 %v6967
        %6977 = vmatpush.bf16.msra.mxu0 %v6966
        %6978 = vmatpush.bf16.msra.mxu0 %v6965
        %6979 = vmatpush.bf16.msra.mxu0 %v6964
        %6980 = vmatpush.bf16.msra.mxu0 %v6963
        %6981 = vmatpush.bf16.msra.mxu0 %v6962
        %6982 = vmatpush.bf16.msra.mxu0 %v6961
        %6983 = vmatpush.bf16.msra.mxu0 %v6960
        %6984 = vmatmul.bf16.gmra.mxu0 %v6896
        %v6985 = vpop.f32.mrf.mxu0
        %v6986 = vadd.f32 0.0, %v6985
        %v6987 = vpop.f32.mrf.mxu0
        %v6988 = vadd.f32 0.0, %v6987
        %6989 = vmatmul.bf16.gmra.mxu0 %v6897
        %v6990 = vpop.f32.mrf.mxu0
        %v6991 = vadd.f32 0.0, %v6990
        %v6992 = vpop.f32.mrf.mxu0
        %v6993 = vadd.f32 0.0, %v6992
        %6994 = vmatmul.bf16.gmra.mxu0 %v6898
        %v6995 = vpop.f32.mrf.mxu0
        %v6996 = vadd.f32 0.0, %v6995
        %v6997 = vpop.f32.mrf.mxu0
        %v6998 = vadd.f32 0.0, %v6997
        %6999 = vmatmul.bf16.gmra.mxu0 %v6899
        %v7000 = vpop.f32.mrf.mxu0
        %v7001 = vadd.f32 0.0, %v7000
        %v7002 = vpop.f32.mrf.mxu0
        %v7003 = vadd.f32 0.0, %v7002
        %7004 = vmatmul.bf16.gmra.mxu0 %v6900
        %v7005 = vpop.f32.mrf.mxu0
        %v7006 = vadd.f32 0.0, %v7005
        %v7007 = vpop.f32.mrf.mxu0
        %v7008 = vadd.f32 0.0, %v7007
        %7009 = vmatmul.bf16.gmra.mxu0 %v6901
        %v7010 = vpop.f32.mrf.mxu0
        %v7011 = vadd.f32 0.0, %v7010
        %v7012 = vpop.f32.mrf.mxu0
        %v7013 = vadd.f32 0.0, %v7012
        %7014 = vmatmul.bf16.gmra.mxu0 %v6902
        %v7015 = vpop.f32.mrf.mxu0
        %v7016 = vadd.f32 0.0, %v7015
        %v7017 = vpop.f32.mrf.mxu0
        %v7018 = vadd.f32 0.0, %v7017
        %7019 = vmatmul.bf16.gmra.mxu0 %v6903
        %v7020 = vpop.f32.mrf.mxu0
        %v7021 = vadd.f32 0.0, %v7020
        %v7022 = vpop.f32.mrf.mxu0
        %v7023 = vadd.f32 0.0, %v7022
        %7024 = vmatmul.bf16.gmra.mxu0 %v6904
        %v7025 = vpop.f32.mrf.mxu0
        %v7026 = vadd.f32 0.0, %v7025
        %v7027 = vpop.f32.mrf.mxu0
        %v7028 = vadd.f32 0.0, %v7027
        %7029 = vmatmul.bf16.gmra.mxu0 %v6905
        %v7030 = vpop.f32.mrf.mxu0
        %v7031 = vadd.f32 0.0, %v7030
        %v7032 = vpop.f32.mrf.mxu0
        %v7033 = vadd.f32 0.0, %v7032
        %7034 = vmatmul.bf16.gmra.mxu0 %v6906
        %v7035 = vpop.f32.mrf.mxu0
        %v7036 = vadd.f32 0.0, %v7035
        %v7037 = vpop.f32.mrf.mxu0
        %v7038 = vadd.f32 0.0, %v7037
        %7039 = vmatmul.bf16.gmra.mxu0 %v6907
        %v7040 = vpop.f32.mrf.mxu0
        %v7041 = vadd.f32 0.0, %v7040
        %v7042 = vpop.f32.mrf.mxu0
        %v7043 = vadd.f32 0.0, %v7042
        %7044 = vmatmul.bf16.gmra.mxu0 %v6908
        %v7045 = vpop.f32.mrf.mxu0
        %v7046 = vadd.f32 0.0, %v7045
        %v7047 = vpop.f32.mrf.mxu0
        %v7048 = vadd.f32 0.0, %v7047
        %7049 = vmatmul.bf16.gmra.mxu0 %v6909
        %v7050 = vpop.f32.mrf.mxu0
        %v7051 = vadd.f32 0.0, %v7050
        %v7052 = vpop.f32.mrf.mxu0
        %v7053 = vadd.f32 0.0, %v7052
        %7054 = vmatmul.bf16.gmra.mxu0 %v6910
        %v7055 = vpop.f32.mrf.mxu0
        %v7056 = vadd.f32 0.0, %v7055
        %v7057 = vpop.f32.mrf.mxu0
        %v7058 = vadd.f32 0.0, %v7057
        %7059 = vmatmul.bf16.gmra.mxu0 %v6911
        %v7060 = vpop.f32.mrf.mxu0
        %v7061 = vadd.f32 0.0, %v7060
        %v7062 = vpop.f32.mrf.mxu0
        %v7063 = vadd.f32 0.0, %v7062
        %7064 = vdwg.mxu0
        %v7065 = vunpack.c.l.b16 %v6459
        %v7066 = vunpack.c.l.b16 %v6468
        %v7067 = vunpack.c.l.b16 %v6481
        %v7068 = vunpack.c.l.b16 %v6490
        %v7069 = vunpack.c.l.b16 %v6503
        %v7070 = vunpack.c.l.b16 %v6512
        %v7071 = vunpack.c.l.b16 %v6525
        %v7072 = vunpack.c.l.b16 %v6534
        %v7073 = vunpack.c.l.b16 %v6547
        %v7074 = vunpack.c.l.b16 %v6556
        %v7075 = vunpack.c.l.b16 %v6569
        %v7076 = vunpack.c.l.b16 %v6578
        %v7077 = vunpack.c.l.b16 %v6591
        %v7078 = vunpack.c.l.b16 %v6600
        %v7079 = vunpack.c.l.b16 %v6613
        %v7080 = vunpack.c.l.b16 %v6622
        %v7081 = vunpack.c.l.b16 %v6635
        %v7082 = vunpack.c.l.b16 %v6644
        %v7083 = vunpack.c.l.b16 %v6657
        %v7084 = vunpack.c.l.b16 %v6666
        %v7085 = vunpack.c.l.b16 %v6679
        %v7086 = vunpack.c.l.b16 %v6688
        %v7087 = vunpack.c.l.b16 %v6701
        %v7088 = vunpack.c.l.b16 %v6710
        %v7089 = vunpack.c.l.b16 %v6723
        %v7090 = vunpack.c.l.b16 %v6732
        %v7091 = vunpack.c.l.b16 %v6745
        %v7092 = vunpack.c.l.b16 %v6754
        %v7093 = vunpack.c.l.b16 %v6767
        %v7094 = vunpack.c.l.b16 %v6776
        %v7095 = vunpack.c.l.b16 %v6789
        %v7096 = vunpack.c.l.b16 %v6798
        %v7097 = vpack.c.b16 %v7066, %v7065
        %v7098 = vpack.c.b16 %v7068, %v7067
        %v7099 = vpack.c.b16 %v7070, %v7069
        %v7100 = vpack.c.b16 %v7072, %v7071
        %v7101 = vpack.c.b16 %v7074, %v7073
        %v7102 = vpack.c.b16 %v7076, %v7075
        %v7103 = vpack.c.b16 %v7078, %v7077
        %v7104 = vpack.c.b16 %v7080, %v7079
        %v7105 = vpack.c.b16 %v7082, %v7081
        %v7106 = vpack.c.b16 %v7084, %v7083
        %v7107 = vpack.c.b16 %v7086, %v7085
        %v7108 = vpack.c.b16 %v7088, %v7087
        %v7109 = vpack.c.b16 %v7090, %v7089
        %v7110 = vpack.c.b16 %v7092, %v7091
        %v7111 = vpack.c.b16 %v7094, %v7093
        %v7112 = vpack.c.b16 %v7096, %v7095
        %v7145 = vunpack.c.l.b16 %v6799
        %v7146 = vunpack.c.l.b16 %v6800
        %v7147 = vunpack.c.l.b16 %v6801
        %v7148 = vunpack.c.l.b16 %v6802
        %v7149 = vunpack.c.l.b16 %v6803
        %v7150 = vunpack.c.l.b16 %v6804
        %v7151 = vunpack.c.l.b16 %v6805
        %v7152 = vunpack.c.l.b16 %v6806
        %v7153 = vunpack.c.l.b16 %v6807
        %v7154 = vunpack.c.l.b16 %v6808
        %v7155 = vunpack.c.l.b16 %v6809
        %v7156 = vunpack.c.l.b16 %v6810
        %v7157 = vunpack.c.l.b16 %v6811
        %v7158 = vunpack.c.l.b16 %v6812
        %v7159 = vunpack.c.l.b16 %v6813
        %v7160 = vunpack.c.l.b16 %v6814
        %v7161 = vpack.c.b16 %v7146, %v7145
        %v7162 = vpack.c.b16 %v7148, %v7147
        %v7163 = vpack.c.b16 %v7150, %v7149
        %v7164 = vpack.c.b16 %v7152, %v7151
        %v7165 = vpack.c.b16 %v7154, %v7153
        %v7166 = vpack.c.b16 %v7156, %v7155
        %v7167 = vpack.c.b16 %v7158, %v7157
        %v7168 = vpack.c.b16 %v7160, %v7159
        %7177 = vmatpush.bf16.msra.mxu0 %v7168
        %7178 = vmatpush.bf16.msra.mxu0 %v7167
        %7179 = vmatpush.bf16.msra.mxu0 %v7166
        %7180 = vmatpush.bf16.msra.mxu0 %v7165
        %7181 = vmatpush.bf16.msra.mxu0 %v7164
        %7182 = vmatpush.bf16.msra.mxu0 %v7163
        %7183 = vmatpush.bf16.msra.mxu0 %v7162
        %7184 = vmatpush.bf16.msra.mxu0 %v7161
        %7185 = vmatmul.bf16.gmra.mxu0 %v7097
        %v7186 = vpop.f32.mrf.mxu0
        %v7187 = vadd.f32 %v6986, %v7186
        %v7188 = vpop.f32.mrf.mxu0
        %v7189 = vadd.f32 %v6988, %v7188
        %7190 = vmatmul.bf16.gmra.mxu0 %v7098
        %v7191 = vpop.f32.mrf.mxu0
        %v7192 = vadd.f32 %v6991, %v7191
        %v7193 = vpop.f32.mrf.mxu0
        %v7194 = vadd.f32 %v6993, %v7193
        %7195 = vmatmul.bf16.gmra.mxu0 %v7099
        %v7196 = vpop.f32.mrf.mxu0
        %v7197 = vadd.f32 %v6996, %v7196
        %v7198 = vpop.f32.mrf.mxu0
        %v7199 = vadd.f32 %v6998, %v7198
        %7200 = vmatmul.bf16.gmra.mxu0 %v7100
        %v7201 = vpop.f32.mrf.mxu0
        %v7202 = vadd.f32 %v7001, %v7201
        %v7203 = vpop.f32.mrf.mxu0
        %v7204 = vadd.f32 %v7003, %v7203
        %7205 = vmatmul.bf16.gmra.mxu0 %v7101
        %v7206 = vpop.f32.mrf.mxu0
        %v7207 = vadd.f32 %v7006, %v7206
        %v7208 = vpop.f32.mrf.mxu0
        %v7209 = vadd.f32 %v7008, %v7208
        %7210 = vmatmul.bf16.gmra.mxu0 %v7102
        %v7211 = vpop.f32.mrf.mxu0
        %v7212 = vadd.f32 %v7011, %v7211
        %v7213 = vpop.f32.mrf.mxu0
        %v7214 = vadd.f32 %v7013, %v7213
        %7215 = vmatmul.bf16.gmra.mxu0 %v7103
        %v7216 = vpop.f32.mrf.mxu0
        %v7217 = vadd.f32 %v7016, %v7216
        %v7218 = vpop.f32.mrf.mxu0
        %v7219 = vadd.f32 %v7018, %v7218
        %7220 = vmatmul.bf16.gmra.mxu0 %v7104
        %v7221 = vpop.f32.mrf.mxu0
        %v7222 = vadd.f32 %v7021, %v7221
        %v7223 = vpop.f32.mrf.mxu0
        %v7224 = vadd.f32 %v7023, %v7223
        %7225 = vmatmul.bf16.gmra.mxu0 %v7105
        %v7226 = vpop.f32.mrf.mxu0
        %v7227 = vadd.f32 %v7026, %v7226
        %v7228 = vpop.f32.mrf.mxu0
        %v7229 = vadd.f32 %v7028, %v7228
        %7230 = vmatmul.bf16.gmra.mxu0 %v7106
        %v7231 = vpop.f32.mrf.mxu0
        %v7232 = vadd.f32 %v7031, %v7231
        %v7233 = vpop.f32.mrf.mxu0
        %v7234 = vadd.f32 %v7033, %v7233
        %7235 = vmatmul.bf16.gmra.mxu0 %v7107
        %v7236 = vpop.f32.mrf.mxu0
        %v7237 = vadd.f32 %v7036, %v7236
        %v7238 = vpop.f32.mrf.mxu0
        %v7239 = vadd.f32 %v7038, %v7238
        %7240 = vmatmul.bf16.gmra.mxu0 %v7108
        %v7241 = vpop.f32.mrf.mxu0
        %v7242 = vadd.f32 %v7041, %v7241
        %v7243 = vpop.f32.mrf.mxu0
        %v7244 = vadd.f32 %v7043, %v7243
        %7245 = vmatmul.bf16.gmra.mxu0 %v7109
        %v7246 = vpop.f32.mrf.mxu0
        %v7247 = vadd.f32 %v7046, %v7246
        %v7248 = vpop.f32.mrf.mxu0
        %v7249 = vadd.f32 %v7048, %v7248
        %7250 = vmatmul.bf16.gmra.mxu0 %v7110
        %v7251 = vpop.f32.mrf.mxu0
        %v7252 = vadd.f32 %v7051, %v7251
        %v7253 = vpop.f32.mrf.mxu0
        %v7254 = vadd.f32 %v7053, %v7253
        %7255 = vmatmul.bf16.gmra.mxu0 %v7111
        %v7256 = vpop.f32.mrf.mxu0
        %v7257 = vadd.f32 %v7056, %v7256
        %v7258 = vpop.f32.mrf.mxu0
        %v7259 = vadd.f32 %v7058, %v7258
        %7260 = vmatmul.bf16.gmra.mxu0 %v7112
        %v7261 = vpop.f32.mrf.mxu0
        %v7262 = vadd.f32 %v7061, %v7261
        %v7263 = vpop.f32.mrf.mxu0
        %v7264 = vadd.f32 %v7063, %v7263
        %7265 = vdwg.mxu0
        %v7266 = vld [vmem:[#allocation3 + $0x8] sm:$0xf]
        %v7267 = vld [vmem:[#allocation3 + $0xc] sm:$0xf]
        %v7268 = vld [vmem:[#allocation3 + $0x10] sm:$0x1]
        %v7269 = vld [vmem:[#allocation3 + $0x1c] sm:$0xf]
        %v7270 = vld [vmem:[#allocation3 + $0x20] sm:$0xf]
        %v7271 = vld [vmem:[#allocation3 + $0x24] sm:$0x1]
        %v7272 = vld [vmem:[#allocation3 + $0x30] sm:$0xf]
        %v7273 = vld [vmem:[#allocation3 + $0x34] sm:$0xf]
        %v7274 = vld [vmem:[#allocation3 + $0x38] sm:$0x1]
        %v7275 = vld [vmem:[#allocation3 + $0x44] sm:$0xf]
        %v7276 = vld [vmem:[#allocation3 + $0x48] sm:$0xf]
        %v7277 = vld [vmem:[#allocation3 + $0x4c] sm:$0x1]
        %v7278 = vld [vmem:[#allocation3 + $0x58] sm:$0xf]
        %v7279 = vld [vmem:[#allocation3 + $0x5c] sm:$0xf]
        %v7280 = vld [vmem:[#allocation3 + $0x60] sm:$0x1]
        %v7281 = vld [vmem:[#allocation3 + $0x6c] sm:$0xf]
        %v7282 = vld [vmem:[#allocation3 + $0x70] sm:$0xf]
        %v7283 = vld [vmem:[#allocation3 + $0x74] sm:$0x1]
        %v7284 = vld [vmem:[#allocation3 + $0x80] sm:$0xf]
        %v7285 = vld [vmem:[#allocation3 + $0x84] sm:$0xf]
        %v7286 = vld [vmem:[#allocation3 + $0x88] sm:$0x1]
        %v7287 = vld [vmem:[#allocation3 + $0x94] sm:$0xf]
        %v7288 = vld [vmem:[#allocation3 + $0x98] sm:$0xf]
        %v7289 = vld [vmem:[#allocation3 + $0x9c] sm:$0x1]
        %v7290 = vld [vmem:[#allocation3 + $0xa8] sm:$0xf]
        %v7291 = vld [vmem:[#allocation3 + $0xac] sm:$0xf]
        %v7292 = vld [vmem:[#allocation3 + $0xb0] sm:$0x1]
        %v7293 = vld [vmem:[#allocation3 + $0xbc] sm:$0xf]
        %v7294 = vld [vmem:[#allocation3 + $0xc0] sm:$0xf]
        %v7295 = vld [vmem:[#allocation3 + $0xc4] sm:$0x1]
        %v7296 = vld [vmem:[#allocation3 + $0xd0] sm:$0xf]
        %v7297 = vld [vmem:[#allocation3 + $0xd4] sm:$0xf]
        %v7298 = vld [vmem:[#allocation3 + $0xd8] sm:$0x1]
        %v7299 = vld [vmem:[#allocation3 + $0xe4] sm:$0xf]
        %v7300 = vld [vmem:[#allocation3 + $0xe8] sm:$0xf]
        %v7301 = vld [vmem:[#allocation3 + $0xec] sm:$0x1]
        %v7302 = vld [vmem:[#allocation3 + $0xf8] sm:$0xf]
        %v7303 = vld [vmem:[#allocation3 + $0xfc] sm:$0xf]
        %v7304 = vld [vmem:[#allocation3 + $0x100] sm:$0x1]
        %v7305 = vld [vmem:[#allocation3 + $0x10c] sm:$0xf]
        %v7306 = vld [vmem:[#allocation3 + $0x110] sm:$0xf]
        %v7307 = vld [vmem:[#allocation3 + $0x114] sm:$0x1]
        %v7308 = vld [vmem:[#allocation3 + $0x120] sm:$0xf]
        %v7309 = vld [vmem:[#allocation3 + $0x124] sm:$0xf]
        %v7310 = vld [vmem:[#allocation3 + $0x128] sm:$0x1]
        %v7311 = vld [vmem:[#allocation3 + $0x134] sm:$0xf]
        %v7312 = vld [vmem:[#allocation3 + $0x138] sm:$0xf]
        %v7313 = vld [vmem:[#allocation3 + $0x13c] sm:$0x1]
        %v7315 = vshrl.u32 %v7266, 16
        %v7317 = vrot.slane %v7315, 4
        %v7318 = vshll.u32 %v7266, 16
        %v7320 = vrot.slane %v7318, 5
        %v7321 = vor.u32 %v7317, %v7320
        %v7322 = vrot.slane %v7321, 4
        %v7324 = vshll.u32 %v7267, 16
        %v7326 = vrot.slane %v7324, 5
        %v7327 = vsel %vm1491, %v7322, %v7326
        %v7328 = vshrl.u32 %v7267, 16
        %v7330 = vrot.slane %v7328, 4
        %v7331 = vor.u32 %v7330, %v7326
        %v7332 = vrot.slane %v7331, 4
        %v7334 = vshll.u32 %v7268, 16
        %v7336 = vrot.slane %v7334, 5
        %v7337 = vsel %vm1491, %v7332, %v7336
        %v7339 = vshrl.u32 %v7269, 16
        %v7341 = vrot.slane %v7339, 4
        %v7342 = vshll.u32 %v7269, 16
        %v7344 = vrot.slane %v7342, 5
        %v7345 = vor.u32 %v7341, %v7344
        %v7346 = vrot.slane %v7345, 4
        %v7348 = vshll.u32 %v7270, 16
        %v7350 = vrot.slane %v7348, 5
        %v7351 = vsel %vm1491, %v7346, %v7350
        %v7352 = vshrl.u32 %v7270, 16
        %v7354 = vrot.slane %v7352, 4
        %v7355 = vor.u32 %v7354, %v7350
        %v7356 = vrot.slane %v7355, 4
        %v7358 = vshll.u32 %v7271, 16
        %v7360 = vrot.slane %v7358, 5
        %v7361 = vsel %vm1491, %v7356, %v7360
        %v7363 = vshrl.u32 %v7272, 16
        %v7365 = vrot.slane %v7363, 4
        %v7366 = vshll.u32 %v7272, 16
        %v7368 = vrot.slane %v7366, 5
        %v7369 = vor.u32 %v7365, %v7368
        %v7370 = vrot.slane %v7369, 4
        %v7372 = vshll.u32 %v7273, 16
        %v7374 = vrot.slane %v7372, 5
        %v7375 = vsel %vm1491, %v7370, %v7374
        %v7376 = vshrl.u32 %v7273, 16
        %v7378 = vrot.slane %v7376, 4
        %v7379 = vor.u32 %v7378, %v7374
        %v7380 = vrot.slane %v7379, 4
        %v7382 = vshll.u32 %v7274, 16
        %v7384 = vrot.slane %v7382, 5
        %v7385 = vsel %vm1491, %v7380, %v7384
        %v7387 = vshrl.u32 %v7275, 16
        %v7389 = vrot.slane %v7387, 4
        %v7390 = vshll.u32 %v7275, 16
        %v7392 = vrot.slane %v7390, 5
        %v7393 = vor.u32 %v7389, %v7392
        %v7394 = vrot.slane %v7393, 4
        %v7396 = vshll.u32 %v7276, 16
        %v7398 = vrot.slane %v7396, 5
        %v7399 = vsel %vm1491, %v7394, %v7398
        %v7400 = vshrl.u32 %v7276, 16
        %v7402 = vrot.slane %v7400, 4
        %v7403 = vor.u32 %v7402, %v7398
        %v7404 = vrot.slane %v7403, 4
        %v7406 = vshll.u32 %v7277, 16
        %v7408 = vrot.slane %v7406, 5
        %v7409 = vsel %vm1491, %v7404, %v7408
        %v7411 = vshrl.u32 %v7278, 16
        %v7413 = vrot.slane %v7411, 4
        %v7414 = vshll.u32 %v7278, 16
        %v7416 = vrot.slane %v7414, 5
        %v7417 = vor.u32 %v7413, %v7416
        %v7418 = vrot.slane %v7417, 4
        %v7420 = vshll.u32 %v7279, 16
        %v7422 = vrot.slane %v7420, 5
        %v7423 = vsel %vm1491, %v7418, %v7422
        %v7424 = vshrl.u32 %v7279, 16
        %v7426 = vrot.slane %v7424, 4
        %v7427 = vor.u32 %v7426, %v7422
        %v7428 = vrot.slane %v7427, 4
        %v7430 = vshll.u32 %v7280, 16
        %v7432 = vrot.slane %v7430, 5
        %v7433 = vsel %vm1491, %v7428, %v7432
        %v7435 = vshrl.u32 %v7281, 16
        %v7437 = vrot.slane %v7435, 4
        %v7438 = vshll.u32 %v7281, 16
        %v7440 = vrot.slane %v7438, 5
        %v7441 = vor.u32 %v7437, %v7440
        %v7442 = vrot.slane %v7441, 4
        %v7444 = vshll.u32 %v7282, 16
        %v7446 = vrot.slane %v7444, 5
        %v7447 = vsel %vm1491, %v7442, %v7446
        %v7448 = vshrl.u32 %v7282, 16
        %v7450 = vrot.slane %v7448, 4
        %v7451 = vor.u32 %v7450, %v7446
        %v7452 = vrot.slane %v7451, 4
        %v7454 = vshll.u32 %v7283, 16
        %v7456 = vrot.slane %v7454, 5
        %v7457 = vsel %vm1491, %v7452, %v7456
        %v7459 = vshrl.u32 %v7284, 16
        %v7461 = vrot.slane %v7459, 4
        %v7462 = vshll.u32 %v7284, 16
        %v7464 = vrot.slane %v7462, 5
        %v7465 = vor.u32 %v7461, %v7464
        %v7466 = vrot.slane %v7465, 4
        %v7468 = vshll.u32 %v7285, 16
        %v7470 = vrot.slane %v7468, 5
        %v7471 = vsel %vm1491, %v7466, %v7470
        %v7472 = vshrl.u32 %v7285, 16
        %v7474 = vrot.slane %v7472, 4
        %v7475 = vor.u32 %v7474, %v7470
        %v7476 = vrot.slane %v7475, 4
        %v7478 = vshll.u32 %v7286, 16
        %v7480 = vrot.slane %v7478, 5
        %v7481 = vsel %vm1491, %v7476, %v7480
        %v7483 = vshrl.u32 %v7287, 16
        %v7485 = vrot.slane %v7483, 4
        %v7486 = vshll.u32 %v7287, 16
        %v7488 = vrot.slane %v7486, 5
        %v7489 = vor.u32 %v7485, %v7488
        %v7490 = vrot.slane %v7489, 4
        %v7492 = vshll.u32 %v7288, 16
        %v7494 = vrot.slane %v7492, 5
        %v7495 = vsel %vm1491, %v7490, %v7494
        %v7496 = vshrl.u32 %v7288, 16
        %v7498 = vrot.slane %v7496, 4
        %v7499 = vor.u32 %v7498, %v7494
        %v7500 = vrot.slane %v7499, 4
        %v7502 = vshll.u32 %v7289, 16
        %v7504 = vrot.slane %v7502, 5
        %v7505 = vsel %vm1491, %v7500, %v7504
        %v7507 = vshrl.u32 %v7290, 16
        %v7509 = vrot.slane %v7507, 4
        %v7510 = vshll.u32 %v7290, 16
        %v7512 = vrot.slane %v7510, 5
        %v7513 = vor.u32 %v7509, %v7512
        %v7514 = vrot.slane %v7513, 4
        %v7516 = vshll.u32 %v7291, 16
        %v7518 = vrot.slane %v7516, 5
        %v7519 = vsel %vm1491, %v7514, %v7518
        %v7520 = vshrl.u32 %v7291, 16
        %v7522 = vrot.slane %v7520, 4
        %v7523 = vor.u32 %v7522, %v7518
        %v7524 = vrot.slane %v7523, 4
        %v7526 = vshll.u32 %v7292, 16
        %v7528 = vrot.slane %v7526, 5
        %v7529 = vsel %vm1491, %v7524, %v7528
        %v7531 = vshrl.u32 %v7293, 16
        %v7533 = vrot.slane %v7531, 4
        %v7534 = vshll.u32 %v7293, 16
        %v7536 = vrot.slane %v7534, 5
        %v7537 = vor.u32 %v7533, %v7536
        %v7538 = vrot.slane %v7537, 4
        %v7540 = vshll.u32 %v7294, 16
        %v7542 = vrot.slane %v7540, 5
        %v7543 = vsel %vm1491, %v7538, %v7542
        %v7544 = vshrl.u32 %v7294, 16
        %v7546 = vrot.slane %v7544, 4
        %v7547 = vor.u32 %v7546, %v7542
        %v7548 = vrot.slane %v7547, 4
        %v7550 = vshll.u32 %v7295, 16
        %v7552 = vrot.slane %v7550, 5
        %v7553 = vsel %vm1491, %v7548, %v7552
        %v7555 = vshrl.u32 %v7296, 16
        %v7557 = vrot.slane %v7555, 4
        %v7558 = vshll.u32 %v7296, 16
        %v7560 = vrot.slane %v7558, 5
        %v7561 = vor.u32 %v7557, %v7560
        %v7562 = vrot.slane %v7561, 4
        %v7564 = vshll.u32 %v7297, 16
        %v7566 = vrot.slane %v7564, 5
        %v7567 = vsel %vm1491, %v7562, %v7566
        %v7568 = vshrl.u32 %v7297, 16
        %v7570 = vrot.slane %v7568, 4
        %v7571 = vor.u32 %v7570, %v7566
        %v7572 = vrot.slane %v7571, 4
        %v7574 = vshll.u32 %v7298, 16
        %v7576 = vrot.slane %v7574, 5
        %v7577 = vsel %vm1491, %v7572, %v7576
        %v7579 = vshrl.u32 %v7299, 16
        %v7581 = vrot.slane %v7579, 4
        %v7582 = vshll.u32 %v7299, 16
        %v7584 = vrot.slane %v7582, 5
        %v7585 = vor.u32 %v7581, %v7584
        %v7586 = vrot.slane %v7585, 4
        %v7588 = vshll.u32 %v7300, 16
        %v7590 = vrot.slane %v7588, 5
        %v7591 = vsel %vm1491, %v7586, %v7590
        %v7592 = vshrl.u32 %v7300, 16
        %v7594 = vrot.slane %v7592, 4
        %v7595 = vor.u32 %v7594, %v7590
        %v7596 = vrot.slane %v7595, 4
        %v7598 = vshll.u32 %v7301, 16
        %v7600 = vrot.slane %v7598, 5
        %v7601 = vsel %vm1491, %v7596, %v7600
        %v7603 = vshrl.u32 %v7302, 16
        %v7605 = vrot.slane %v7603, 4
        %v7606 = vshll.u32 %v7302, 16
        %v7608 = vrot.slane %v7606, 5
        %v7609 = vor.u32 %v7605, %v7608
        %v7610 = vrot.slane %v7609, 4
        %v7612 = vshll.u32 %v7303, 16
        %v7614 = vrot.slane %v7612, 5
        %v7615 = vsel %vm1491, %v7610, %v7614
        %v7616 = vshrl.u32 %v7303, 16
        %v7618 = vrot.slane %v7616, 4
        %v7619 = vor.u32 %v7618, %v7614
        %v7620 = vrot.slane %v7619, 4
        %v7622 = vshll.u32 %v7304, 16
        %v7624 = vrot.slane %v7622, 5
        %v7625 = vsel %vm1491, %v7620, %v7624
        %v7627 = vshrl.u32 %v7305, 16
        %v7629 = vrot.slane %v7627, 4
        %v7630 = vshll.u32 %v7305, 16
        %v7632 = vrot.slane %v7630, 5
        %v7633 = vor.u32 %v7629, %v7632
        %v7634 = vrot.slane %v7633, 4
        %v7636 = vshll.u32 %v7306, 16
        %v7638 = vrot.slane %v7636, 5
        %v7639 = vsel %vm1491, %v7634, %v7638
        %v7640 = vshrl.u32 %v7306, 16
        %v7642 = vrot.slane %v7640, 4
        %v7643 = vor.u32 %v7642, %v7638
        %v7644 = vrot.slane %v7643, 4
        %v7646 = vshll.u32 %v7307, 16
        %v7648 = vrot.slane %v7646, 5
        %v7649 = vsel %vm1491, %v7644, %v7648
        %v7651 = vshrl.u32 %v7308, 16
        %v7653 = vrot.slane %v7651, 4
        %v7654 = vshll.u32 %v7308, 16
        %v7656 = vrot.slane %v7654, 5
        %v7657 = vor.u32 %v7653, %v7656
        %v7658 = vrot.slane %v7657, 4
        %v7660 = vshll.u32 %v7309, 16
        %v7662 = vrot.slane %v7660, 5
        %v7663 = vsel %vm1491, %v7658, %v7662
        %v7664 = vshrl.u32 %v7309, 16
        %v7666 = vrot.slane %v7664, 4
        %v7667 = vor.u32 %v7666, %v7662
        %v7668 = vrot.slane %v7667, 4
        %v7670 = vshll.u32 %v7310, 16
        %v7672 = vrot.slane %v7670, 5
        %v7673 = vsel %vm1491, %v7668, %v7672
        %v7675 = vshrl.u32 %v7311, 16
        %v7677 = vrot.slane %v7675, 4
        %v7678 = vshll.u32 %v7311, 16
        %v7680 = vrot.slane %v7678, 5
        %v7681 = vor.u32 %v7677, %v7680
        %v7682 = vrot.slane %v7681, 4
        %v7684 = vshll.u32 %v7312, 16
        %v7686 = vrot.slane %v7684, 5
        %v7687 = vsel %vm1491, %v7682, %v7686
        %v7688 = vshrl.u32 %v7312, 16
        %v7690 = vrot.slane %v7688, 4
        %v7691 = vor.u32 %v7690, %v7686
        %v7692 = vrot.slane %v7691, 4
        %v7694 = vshll.u32 %v7313, 16
        %v7696 = vrot.slane %v7694, 5
        %v7697 = vsel %vm1491, %v7692, %v7696
        %s7698 = scalar_lea.vmem [#allocation4], 128
        %v7699 = vld [vmem:[%s7698] sm:$0xf]
        %v7700 = vld [vmem:[%s7698 + $0x4] sm:$0xf]
        %v7701 = vld [vmem:[%s7698 + $0x8] sm:$0xf]
        %v7702 = vld [vmem:[%s7698 + $0xc] sm:$0xf]
        %v7703 = vld [vmem:[%s7698 + $0x10] sm:$0xf]
        %v7704 = vld [vmem:[%s7698 + $0x14] sm:$0xf]
        %v7705 = vld [vmem:[%s7698 + $0x18] sm:$0xf]
        %v7706 = vld [vmem:[%s7698 + $0x1c] sm:$0xf]
        %v7707 = vld [vmem:[%s7698 + $0x20] sm:$0xf]
        %v7708 = vld [vmem:[%s7698 + $0x24] sm:$0xf]
        %v7709 = vld [vmem:[%s7698 + $0x28] sm:$0xf]
        %v7710 = vld [vmem:[%s7698 + $0x2c] sm:$0xf]
        %v7711 = vld [vmem:[%s7698 + $0x30] sm:$0xf]
        %v7712 = vld [vmem:[%s7698 + $0x34] sm:$0xf]
        %v7713 = vld [vmem:[%s7698 + $0x38] sm:$0xf]
        %v7714 = vld [vmem:[%s7698 + $0x3c] sm:$0xf]
        %v7715 = vunpack.c.l.b16 %v7327
        %v7716 = vunpack.c.l.b16 %v7337
        %v7717 = vunpack.c.l.b16 %v7351
        %v7718 = vunpack.c.l.b16 %v7361
        %v7719 = vunpack.c.l.b16 %v7375
        %v7720 = vunpack.c.l.b16 %v7385
        %v7721 = vunpack.c.l.b16 %v7399
        %v7722 = vunpack.c.l.b16 %v7409
        %v7723 = vunpack.c.l.b16 %v7423
        %v7724 = vunpack.c.l.b16 %v7433
        %v7725 = vunpack.c.l.b16 %v7447
        %v7726 = vunpack.c.l.b16 %v7457
        %v7727 = vunpack.c.l.b16 %v7471
        %v7728 = vunpack.c.l.b16 %v7481
        %v7729 = vunpack.c.l.b16 %v7495
        %v7730 = vunpack.c.l.b16 %v7505
        %v7731 = vunpack.c.l.b16 %v7519
        %v7732 = vunpack.c.l.b16 %v7529
        %v7733 = vunpack.c.l.b16 %v7543
        %v7734 = vunpack.c.l.b16 %v7553
        %v7735 = vunpack.c.l.b16 %v7567
        %v7736 = vunpack.c.l.b16 %v7577
        %v7737 = vunpack.c.l.b16 %v7591
        %v7738 = vunpack.c.l.b16 %v7601
        %v7739 = vunpack.c.l.b16 %v7615
        %v7740 = vunpack.c.l.b16 %v7625
        %v7741 = vunpack.c.l.b16 %v7639
        %v7742 = vunpack.c.l.b16 %v7649
        %v7743 = vunpack.c.l.b16 %v7663
        %v7744 = vunpack.c.l.b16 %v7673
        %v7745 = vunpack.c.l.b16 %v7687
        %v7746 = vunpack.c.l.b16 %v7697
        %v7747 = vpack.c.b16 %v7716, %v7715
        %v7748 = vpack.c.b16 %v7718, %v7717
        %v7749 = vpack.c.b16 %v7720, %v7719
        %v7750 = vpack.c.b16 %v7722, %v7721
        %v7751 = vpack.c.b16 %v7724, %v7723
        %v7752 = vpack.c.b16 %v7726, %v7725
        %v7753 = vpack.c.b16 %v7728, %v7727
        %v7754 = vpack.c.b16 %v7730, %v7729
        %v7755 = vpack.c.b16 %v7732, %v7731
        %v7756 = vpack.c.b16 %v7734, %v7733
        %v7757 = vpack.c.b16 %v7736, %v7735
        %v7758 = vpack.c.b16 %v7738, %v7737
        %v7759 = vpack.c.b16 %v7740, %v7739
        %v7760 = vpack.c.b16 %v7742, %v7741
        %v7761 = vpack.c.b16 %v7744, %v7743
        %v7762 = vpack.c.b16 %v7746, %v7745
        %v7795 = vunpack.c.l.b16 %v7699
        %v7796 = vunpack.c.l.b16 %v7700
        %v7797 = vunpack.c.l.b16 %v7701
        %v7798 = vunpack.c.l.b16 %v7702
        %v7799 = vunpack.c.l.b16 %v7703
        %v7800 = vunpack.c.l.b16 %v7704
        %v7801 = vunpack.c.l.b16 %v7705
        %v7802 = vunpack.c.l.b16 %v7706
        %v7803 = vunpack.c.l.b16 %v7707
        %v7804 = vunpack.c.l.b16 %v7708
        %v7805 = vunpack.c.l.b16 %v7709
        %v7806 = vunpack.c.l.b16 %v7710
        %v7807 = vunpack.c.l.b16 %v7711
        %v7808 = vunpack.c.l.b16 %v7712
        %v7809 = vunpack.c.l.b16 %v7713
        %v7810 = vunpack.c.l.b16 %v7714
        %v7811 = vpack.c.b16 %v7796, %v7795
        %v7812 = vpack.c.b16 %v7798, %v7797
        %v7813 = vpack.c.b16 %v7800, %v7799
        %v7814 = vpack.c.b16 %v7802, %v7801
        %v7815 = vpack.c.b16 %v7804, %v7803
        %v7816 = vpack.c.b16 %v7806, %v7805
        %v7817 = vpack.c.b16 %v7808, %v7807
        %v7818 = vpack.c.b16 %v7810, %v7809
        %7827 = vmatpush.bf16.msra.mxu0 %v7818
        %7828 = vmatpush.bf16.msra.mxu0 %v7817
        %7829 = vmatpush.bf16.msra.mxu0 %v7816
        %7830 = vmatpush.bf16.msra.mxu0 %v7815
        %7831 = vmatpush.bf16.msra.mxu0 %v7814
        %7832 = vmatpush.bf16.msra.mxu0 %v7813
        %7833 = vmatpush.bf16.msra.mxu0 %v7812
        %7834 = vmatpush.bf16.msra.mxu0 %v7811
        %7835 = vmatmul.bf16.gmra.mxu0 %v7747
        %v7836 = vpop.f32.mrf.mxu0
        %v7837 = vadd.f32 0.0, %v7836
        %v7838 = vpop.f32.mrf.mxu0
        %v7839 = vadd.f32 0.0, %v7838
        %7840 = vmatmul.bf16.gmra.mxu0 %v7748
        %v7841 = vpop.f32.mrf.mxu0
        %v7842 = vadd.f32 0.0, %v7841
        %v7843 = vpop.f32.mrf.mxu0
        %v7844 = vadd.f32 0.0, %v7843
        %7845 = vmatmul.bf16.gmra.mxu0 %v7749
        %v7846 = vpop.f32.mrf.mxu0
        %v7847 = vadd.f32 0.0, %v7846
        %v7848 = vpop.f32.mrf.mxu0
        %v7849 = vadd.f32 0.0, %v7848
        %7850 = vmatmul.bf16.gmra.mxu0 %v7750
        %v7851 = vpop.f32.mrf.mxu0
        %v7852 = vadd.f32 0.0, %v7851
        %v7853 = vpop.f32.mrf.mxu0
        %v7854 = vadd.f32 0.0, %v7853
        %7855 = vmatmul.bf16.gmra.mxu0 %v7751
        %v7856 = vpop.f32.mrf.mxu0
        %v7857 = vadd.f32 0.0, %v7856
        %v7858 = vpop.f32.mrf.mxu0
        %v7859 = vadd.f32 0.0, %v7858
        %7860 = vmatmul.bf16.gmra.mxu0 %v7752
        %v7861 = vpop.f32.mrf.mxu0
        %v7862 = vadd.f32 0.0, %v7861
        %v7863 = vpop.f32.mrf.mxu0
        %v7864 = vadd.f32 0.0, %v7863
        %7865 = vmatmul.bf16.gmra.mxu0 %v7753
        %v7866 = vpop.f32.mrf.mxu0
        %v7867 = vadd.f32 0.0, %v7866
        %v7868 = vpop.f32.mrf.mxu0
        %v7869 = vadd.f32 0.0, %v7868
        %7870 = vmatmul.bf16.gmra.mxu0 %v7754
        %v7871 = vpop.f32.mrf.mxu0
        %v7872 = vadd.f32 0.0, %v7871
        %v7873 = vpop.f32.mrf.mxu0
        %v7874 = vadd.f32 0.0, %v7873
        %7875 = vmatmul.bf16.gmra.mxu0 %v7755
        %v7876 = vpop.f32.mrf.mxu0
        %v7877 = vadd.f32 0.0, %v7876
        %v7878 = vpop.f32.mrf.mxu0
        %v7879 = vadd.f32 0.0, %v7878
        %7880 = vmatmul.bf16.gmra.mxu0 %v7756
        %v7881 = vpop.f32.mrf.mxu0
        %v7882 = vadd.f32 0.0, %v7881
        %v7883 = vpop.f32.mrf.mxu0
        %v7884 = vadd.f32 0.0, %v7883
        %7885 = vmatmul.bf16.gmra.mxu0 %v7757
        %v7886 = vpop.f32.mrf.mxu0
        %v7887 = vadd.f32 0.0, %v7886
        %v7888 = vpop.f32.mrf.mxu0
        %v7889 = vadd.f32 0.0, %v7888
        %7890 = vmatmul.bf16.gmra.mxu0 %v7758
        %v7891 = vpop.f32.mrf.mxu0
        %v7892 = vadd.f32 0.0, %v7891
        %v7893 = vpop.f32.mrf.mxu0
        %v7894 = vadd.f32 0.0, %v7893
        %7895 = vmatmul.bf16.gmra.mxu0 %v7759
        %v7896 = vpop.f32.mrf.mxu0
        %v7897 = vadd.f32 0.0, %v7896
        %v7898 = vpop.f32.mrf.mxu0
        %v7899 = vadd.f32 0.0, %v7898
        %7900 = vmatmul.bf16.gmra.mxu0 %v7760
        %v7901 = vpop.f32.mrf.mxu0
        %v7902 = vadd.f32 0.0, %v7901
        %v7903 = vpop.f32.mrf.mxu0
        %v7904 = vadd.f32 0.0, %v7903
        %7905 = vmatmul.bf16.gmra.mxu0 %v7761
        %v7906 = vpop.f32.mrf.mxu0
        %v7907 = vadd.f32 0.0, %v7906
        %v7908 = vpop.f32.mrf.mxu0
        %v7909 = vadd.f32 0.0, %v7908
        %7910 = vmatmul.bf16.gmra.mxu0 %v7762
        %v7911 = vpop.f32.mrf.mxu0
        %v7912 = vadd.f32 0.0, %v7911
        %v7913 = vpop.f32.mrf.mxu0
        %v7914 = vadd.f32 0.0, %v7913
        %7915 = vdwg.mxu0
        %v7916 = vadd.f32 %v7187, %v7837
        %v7917 = vadd.f32 %v7189, %v7839
        %v7918 = vadd.f32 %v7192, %v7842
        %v7919 = vadd.f32 %v7194, %v7844
        %v7920 = vadd.f32 %v7197, %v7847
        %v7921 = vadd.f32 %v7199, %v7849
        %v7922 = vadd.f32 %v7202, %v7852
        %v7923 = vadd.f32 %v7204, %v7854
        %v7924 = vadd.f32 %v7207, %v7857
        %v7925 = vadd.f32 %v7209, %v7859
        %v7926 = vadd.f32 %v7212, %v7862
        %v7927 = vadd.f32 %v7214, %v7864
        %v7928 = vadd.f32 %v7217, %v7867
        %v7929 = vadd.f32 %v7219, %v7869
        %v7930 = vadd.f32 %v7222, %v7872
        %v7931 = vadd.f32 %v7224, %v7874
        %v7932 = vadd.f32 %v7227, %v7877
        %v7933 = vadd.f32 %v7229, %v7879
        %v7934 = vadd.f32 %v7232, %v7882
        %v7935 = vadd.f32 %v7234, %v7884
        %v7936 = vadd.f32 %v7237, %v7887
        %v7937 = vadd.f32 %v7239, %v7889
        %v7938 = vadd.f32 %v7242, %v7892
        %v7939 = vadd.f32 %v7244, %v7894
        %v7940 = vadd.f32 %v7247, %v7897
        %v7941 = vadd.f32 %v7249, %v7899
        %v7942 = vadd.f32 %v7252, %v7902
        %v7943 = vadd.f32 %v7254, %v7904
        %v7944 = vadd.f32 %v7257, %v7907
        %v7945 = vadd.f32 %v7259, %v7909
        %v7946 = vadd.f32 %v7262, %v7912
        %v7947 = vadd.f32 %v7264, %v7914
        %v7948 = vld [vmem:[%s6366 + $0x4] sm:$0x8]
        %v7949 = vld [vmem:[%s6366 + $0x8] sm:$0xf]
        %v7950 = vld [vmem:[%s6366 + $0xc] sm:$0xf]
        %v7951 = vld [vmem:[%s6366 + $0x18] sm:$0x8]
        %v7952 = vld [vmem:[%s6366 + $0x1c] sm:$0xf]
        %v7953 = vld [vmem:[%s6366 + $0x20] sm:$0xf]
        %v7954 = vld [vmem:[%s6366 + $0x2c] sm:$0x8]
        %v7955 = vld [vmem:[%s6366 + $0x30] sm:$0xf]
        %v7956 = vld [vmem:[%s6366 + $0x34] sm:$0xf]
        %v7957 = vld [vmem:[%s6366 + $0x40] sm:$0x8]
        %v7958 = vld [vmem:[%s6366 + $0x44] sm:$0xf]
        %v7959 = vld [vmem:[%s6366 + $0x48] sm:$0xf]
        %v7960 = vld [vmem:[%s6366 + $0x54] sm:$0x8]
        %v7961 = vld [vmem:[%s6366 + $0x58] sm:$0xf]
        %v7962 = vld [vmem:[%s6366 + $0x5c] sm:$0xf]
        %v7963 = vld [vmem:[%s6366 + $0x68] sm:$0x8]
        %v7964 = vld [vmem:[%s6366 + $0x6c] sm:$0xf]
        %v7965 = vld [vmem:[%s6366 + $0x70] sm:$0xf]
        %v7966 = vld [vmem:[%s6366 + $0x7c] sm:$0x8]
        %v7967 = vld [vmem:[%s6366 + $0x80] sm:$0xf]
        %v7968 = vld [vmem:[%s6366 + $0x84] sm:$0xf]
        %v7969 = vld [vmem:[%s6366 + $0x90] sm:$0x8]
        %v7970 = vld [vmem:[%s6366 + $0x94] sm:$0xf]
        %v7971 = vld [vmem:[%s6366 + $0x98] sm:$0xf]
        %v7972 = vld [vmem:[%s6366 + $0xa4] sm:$0x8]
        %v7973 = vld [vmem:[%s6366 + $0xa8] sm:$0xf]
        %v7974 = vld [vmem:[%s6366 + $0xac] sm:$0xf]
        %v7975 = vld [vmem:[%s6366 + $0xb8] sm:$0x8]
        %v7976 = vld [vmem:[%s6366 + $0xbc] sm:$0xf]
        %v7977 = vld [vmem:[%s6366 + $0xc0] sm:$0xf]
        %v7978 = vld [vmem:[%s6366 + $0xcc] sm:$0x8]
        %v7979 = vld [vmem:[%s6366 + $0xd0] sm:$0xf]
        %v7980 = vld [vmem:[%s6366 + $0xd4] sm:$0xf]
        %v7981 = vld [vmem:[%s6366 + $0xe0] sm:$0x8]
        %v7982 = vld [vmem:[%s6366 + $0xe4] sm:$0xf]
        %v7983 = vld [vmem:[%s6366 + $0xe8] sm:$0xf]
        %v7984 = vld [vmem:[%s6366 + $0xf4] sm:$0x8]
        %v7985 = vld [vmem:[%s6366 + $0xf8] sm:$0xf]
        %v7986 = vld [vmem:[%s6366 + $0xfc] sm:$0xf]
        %v7987 = vld [vmem:[%s6366 + $0x108] sm:$0x8]
        %v7988 = vld [vmem:[%s6366 + $0x10c] sm:$0xf]
        %v7989 = vld [vmem:[%s6366 + $0x110] sm:$0xf]
        %v7990 = vld [vmem:[%s6366 + $0x11c] sm:$0x8]
        %v7991 = vld [vmem:[%s6366 + $0x120] sm:$0xf]
        %v7992 = vld [vmem:[%s6366 + $0x124] sm:$0xf]
        %v7993 = vld [vmem:[%s6366 + $0x130] sm:$0x8]
        %v7994 = vld [vmem:[%s6366 + $0x134] sm:$0xf]
        %v7995 = vld [vmem:[%s6366 + $0x138] sm:$0xf]
        %v7997 = vshrl.u32 %v7948, 16
        %v7999 = vrot.slane %v7997, 7
        %v8000 = vrot.slane %v7999, 4
        %v8002 = vshrl.u32 %v7949, 16
        %v8004 = vrot.slane %v8002, 7
        %v8005 = vshll.u32 %v7949, 16
        %v8007 = vor.u32 %v8004, %v8005
        %v8008 = vsel %vm487, %v8000, %v8007
        %v8009 = vrot.slane %v8004, 4
        %v8011 = vshrl.u32 %v7950, 16
        %v8013 = vrot.slane %v8011, 7
        %v8014 = vshll.u32 %v7950, 16
        %v8016 = vor.u32 %v8013, %v8014
        %v8017 = vsel %vm487, %v8009, %v8016
        %v8019 = vshrl.u32 %v7951, 16
        %v8021 = vrot.slane %v8019, 7
        %v8022 = vrot.slane %v8021, 4
        %v8024 = vshrl.u32 %v7952, 16
        %v8026 = vrot.slane %v8024, 7
        %v8027 = vshll.u32 %v7952, 16
        %v8029 = vor.u32 %v8026, %v8027
        %v8030 = vsel %vm487, %v8022, %v8029
        %v8031 = vrot.slane %v8026, 4
        %v8033 = vshrl.u32 %v7953, 16
        %v8035 = vrot.slane %v8033, 7
        %v8036 = vshll.u32 %v7953, 16
        %v8038 = vor.u32 %v8035, %v8036
        %v8039 = vsel %vm487, %v8031, %v8038
        %v8041 = vshrl.u32 %v7954, 16
        %v8043 = vrot.slane %v8041, 7
        %v8044 = vrot.slane %v8043, 4
        %v8046 = vshrl.u32 %v7955, 16
        %v8048 = vrot.slane %v8046, 7
        %v8049 = vshll.u32 %v7955, 16
        %v8051 = vor.u32 %v8048, %v8049
        %v8052 = vsel %vm487, %v8044, %v8051
        %v8053 = vrot.slane %v8048, 4
        %v8055 = vshrl.u32 %v7956, 16
        %v8057 = vrot.slane %v8055, 7
        %v8058 = vshll.u32 %v7956, 16
        %v8060 = vor.u32 %v8057, %v8058
        %v8061 = vsel %vm487, %v8053, %v8060
        %v8063 = vshrl.u32 %v7957, 16
        %v8065 = vrot.slane %v8063, 7
        %v8066 = vrot.slane %v8065, 4
        %v8068 = vshrl.u32 %v7958, 16
        %v8070 = vrot.slane %v8068, 7
        %v8071 = vshll.u32 %v7958, 16
        %v8073 = vor.u32 %v8070, %v8071
        %v8074 = vsel %vm487, %v8066, %v8073
        %v8075 = vrot.slane %v8070, 4
        %v8077 = vshrl.u32 %v7959, 16
        %v8079 = vrot.slane %v8077, 7
        %v8080 = vshll.u32 %v7959, 16
        %v8082 = vor.u32 %v8079, %v8080
        %v8083 = vsel %vm487, %v8075, %v8082
        %v8085 = vshrl.u32 %v7960, 16
        %v8087 = vrot.slane %v8085, 7
        %v8088 = vrot.slane %v8087, 4
        %v8090 = vshrl.u32 %v7961, 16
        %v8092 = vrot.slane %v8090, 7
        %v8093 = vshll.u32 %v7961, 16
        %v8095 = vor.u32 %v8092, %v8093
        %v8096 = vsel %vm487, %v8088, %v8095
        %v8097 = vrot.slane %v8092, 4
        %v8099 = vshrl.u32 %v7962, 16
        %v8101 = vrot.slane %v8099, 7
        %v8102 = vshll.u32 %v7962, 16
        %v8104 = vor.u32 %v8101, %v8102
        %v8105 = vsel %vm487, %v8097, %v8104
        %v8107 = vshrl.u32 %v7963, 16
        %v8109 = vrot.slane %v8107, 7
        %v8110 = vrot.slane %v8109, 4
        %v8112 = vshrl.u32 %v7964, 16
        %v8114 = vrot.slane %v8112, 7
        %v8115 = vshll.u32 %v7964, 16
        %v8117 = vor.u32 %v8114, %v8115
        %v8118 = vsel %vm487, %v8110, %v8117
        %v8119 = vrot.slane %v8114, 4
        %v8121 = vshrl.u32 %v7965, 16
        %v8123 = vrot.slane %v8121, 7
        %v8124 = vshll.u32 %v7965, 16
        %v8126 = vor.u32 %v8123, %v8124
        %v8127 = vsel %vm487, %v8119, %v8126
        %v8129 = vshrl.u32 %v7966, 16
        %v8131 = vrot.slane %v8129, 7
        %v8132 = vrot.slane %v8131, 4
        %v8134 = vshrl.u32 %v7967, 16
        %v8136 = vrot.slane %v8134, 7
        %v8137 = vshll.u32 %v7967, 16
        %v8139 = vor.u32 %v8136, %v8137
        %v8140 = vsel %vm487, %v8132, %v8139
        %v8141 = vrot.slane %v8136, 4
        %v8143 = vshrl.u32 %v7968, 16
        %v8145 = vrot.slane %v8143, 7
        %v8146 = vshll.u32 %v7968, 16
        %v8148 = vor.u32 %v8145, %v8146
        %v8149 = vsel %vm487, %v8141, %v8148
        %v8151 = vshrl.u32 %v7969, 16
        %v8153 = vrot.slane %v8151, 7
        %v8154 = vrot.slane %v8153, 4
        %v8156 = vshrl.u32 %v7970, 16
        %v8158 = vrot.slane %v8156, 7
        %v8159 = vshll.u32 %v7970, 16
        %v8161 = vor.u32 %v8158, %v8159
        %v8162 = vsel %vm487, %v8154, %v8161
        %v8163 = vrot.slane %v8158, 4
        %v8165 = vshrl.u32 %v7971, 16
        %v8167 = vrot.slane %v8165, 7
        %v8168 = vshll.u32 %v7971, 16
        %v8170 = vor.u32 %v8167, %v8168
        %v8171 = vsel %vm487, %v8163, %v8170
        %v8173 = vshrl.u32 %v7972, 16
        %v8175 = vrot.slane %v8173, 7
        %v8176 = vrot.slane %v8175, 4
        %v8178 = vshrl.u32 %v7973, 16
        %v8180 = vrot.slane %v8178, 7
        %v8181 = vshll.u32 %v7973, 16
        %v8183 = vor.u32 %v8180, %v8181
        %v8184 = vsel %vm487, %v8176, %v8183
        %v8185 = vrot.slane %v8180, 4
        %v8187 = vshrl.u32 %v7974, 16
        %v8189 = vrot.slane %v8187, 7
        %v8190 = vshll.u32 %v7974, 16
        %v8192 = vor.u32 %v8189, %v8190
        %v8193 = vsel %vm487, %v8185, %v8192
        %v8195 = vshrl.u32 %v7975, 16
        %v8197 = vrot.slane %v8195, 7
        %v8198 = vrot.slane %v8197, 4
        %v8200 = vshrl.u32 %v7976, 16
        %v8202 = vrot.slane %v8200, 7
        %v8203 = vshll.u32 %v7976, 16
        %v8205 = vor.u32 %v8202, %v8203
        %v8206 = vsel %vm487, %v8198, %v8205
        %v8207 = vrot.slane %v8202, 4
        %v8209 = vshrl.u32 %v7977, 16
        %v8211 = vrot.slane %v8209, 7
        %v8212 = vshll.u32 %v7977, 16
        %v8214 = vor.u32 %v8211, %v8212
        %v8215 = vsel %vm487, %v8207, %v8214
        %v8217 = vshrl.u32 %v7978, 16
        %v8219 = vrot.slane %v8217, 7
        %v8220 = vrot.slane %v8219, 4
        %v8222 = vshrl.u32 %v7979, 16
        %v8224 = vrot.slane %v8222, 7
        %v8225 = vshll.u32 %v7979, 16
        %v8227 = vor.u32 %v8224, %v8225
        %v8228 = vsel %vm487, %v8220, %v8227
        %v8229 = vrot.slane %v8224, 4
        %v8231 = vshrl.u32 %v7980, 16
        %v8233 = vrot.slane %v8231, 7
        %v8234 = vshll.u32 %v7980, 16
        %v8236 = vor.u32 %v8233, %v8234
        %v8237 = vsel %vm487, %v8229, %v8236
        %v8239 = vshrl.u32 %v7981, 16
        %v8241 = vrot.slane %v8239, 7
        %v8242 = vrot.slane %v8241, 4
        %v8244 = vshrl.u32 %v7982, 16
        %v8246 = vrot.slane %v8244, 7
        %v8247 = vshll.u32 %v7982, 16
        %v8249 = vor.u32 %v8246, %v8247
        %v8250 = vsel %vm487, %v8242, %v8249
        %v8251 = vrot.slane %v8246, 4
        %v8253 = vshrl.u32 %v7983, 16
        %v8255 = vrot.slane %v8253, 7
        %v8256 = vshll.u32 %v7983, 16
        %v8258 = vor.u32 %v8255, %v8256
        %v8259 = vsel %vm487, %v8251, %v8258
        %v8261 = vshrl.u32 %v7984, 16
        %v8263 = vrot.slane %v8261, 7
        %v8264 = vrot.slane %v8263, 4
        %v8266 = vshrl.u32 %v7985, 16
        %v8268 = vrot.slane %v8266, 7
        %v8269 = vshll.u32 %v7985, 16
        %v8271 = vor.u32 %v8268, %v8269
        %v8272 = vsel %vm487, %v8264, %v8271
        %v8273 = vrot.slane %v8268, 4
        %v8275 = vshrl.u32 %v7986, 16
        %v8277 = vrot.slane %v8275, 7
        %v8278 = vshll.u32 %v7986, 16
        %v8280 = vor.u32 %v8277, %v8278
        %v8281 = vsel %vm487, %v8273, %v8280
        %v8283 = vshrl.u32 %v7987, 16
        %v8285 = vrot.slane %v8283, 7
        %v8286 = vrot.slane %v8285, 4
        %v8288 = vshrl.u32 %v7988, 16
        %v8290 = vrot.slane %v8288, 7
        %v8291 = vshll.u32 %v7988, 16
        %v8293 = vor.u32 %v8290, %v8291
        %v8294 = vsel %vm487, %v8286, %v8293
        %v8295 = vrot.slane %v8290, 4
        %v8297 = vshrl.u32 %v7989, 16
        %v8299 = vrot.slane %v8297, 7
        %v8300 = vshll.u32 %v7989, 16
        %v8302 = vor.u32 %v8299, %v8300
        %v8303 = vsel %vm487, %v8295, %v8302
        %v8305 = vshrl.u32 %v7990, 16
        %v8307 = vrot.slane %v8305, 7
        %v8308 = vrot.slane %v8307, 4
        %v8310 = vshrl.u32 %v7991, 16
        %v8312 = vrot.slane %v8310, 7
        %v8313 = vshll.u32 %v7991, 16
        %v8315 = vor.u32 %v8312, %v8313
        %v8316 = vsel %vm487, %v8308, %v8315
        %v8317 = vrot.slane %v8312, 4
        %v8319 = vshrl.u32 %v7992, 16
        %v8321 = vrot.slane %v8319, 7
        %v8322 = vshll.u32 %v7992, 16
        %v8324 = vor.u32 %v8321, %v8322
        %v8325 = vsel %vm487, %v8317, %v8324
        %v8327 = vshrl.u32 %v7993, 16
        %v8329 = vrot.slane %v8327, 7
        %v8330 = vrot.slane %v8329, 4
        %v8332 = vshrl.u32 %v7994, 16
        %v8334 = vrot.slane %v8332, 7
        %v8335 = vshll.u32 %v7994, 16
        %v8337 = vor.u32 %v8334, %v8335
        %v8338 = vsel %vm487, %v8330, %v8337
        %v8339 = vrot.slane %v8334, 4
        %v8341 = vshrl.u32 %v7995, 16
        %v8343 = vrot.slane %v8341, 7
        %v8344 = vshll.u32 %v7995, 16
        %v8346 = vor.u32 %v8343, %v8344
        %v8347 = vsel %vm487, %v8339, %v8346
        %s8348 = scalar_lea.vmem [#allocation4], 192
        %v8349 = vld [vmem:[%s8348] sm:$0xf]
        %v8350 = vld [vmem:[%s8348 + $0x4] sm:$0xf]
        %v8351 = vld [vmem:[%s8348 + $0x8] sm:$0xf]
        %v8352 = vld [vmem:[%s8348 + $0xc] sm:$0xf]
        %v8353 = vld [vmem:[%s8348 + $0x10] sm:$0xf]
        %v8354 = vld [vmem:[%s8348 + $0x14] sm:$0xf]
        %v8355 = vld [vmem:[%s8348 + $0x18] sm:$0xf]
        %v8356 = vld [vmem:[%s8348 + $0x1c] sm:$0xf]
        %v8357 = vld [vmem:[%s8348 + $0x20] sm:$0xf]
        %v8358 = vld [vmem:[%s8348 + $0x24] sm:$0xf]
        %v8359 = vld [vmem:[%s8348 + $0x28] sm:$0xf]
        %v8360 = vld [vmem:[%s8348 + $0x2c] sm:$0xf]
        %v8361 = vld [vmem:[%s8348 + $0x30] sm:$0xf]
        %v8362 = vld [vmem:[%s8348 + $0x34] sm:$0xf]
        %v8363 = vld [vmem:[%s8348 + $0x38] sm:$0xf]
        %v8364 = vld [vmem:[%s8348 + $0x3c] sm:$0xf]
        %v8365 = vunpack.c.l.b16 %v8008
        %v8366 = vunpack.c.l.b16 %v8017
        %v8367 = vunpack.c.l.b16 %v8030
        %v8368 = vunpack.c.l.b16 %v8039
        %v8369 = vunpack.c.l.b16 %v8052
        %v8370 = vunpack.c.l.b16 %v8061
        %v8371 = vunpack.c.l.b16 %v8074
        %v8372 = vunpack.c.l.b16 %v8083
        %v8373 = vunpack.c.l.b16 %v8096
        %v8374 = vunpack.c.l.b16 %v8105
        %v8375 = vunpack.c.l.b16 %v8118
        %v8376 = vunpack.c.l.b16 %v8127
        %v8377 = vunpack.c.l.b16 %v8140
        %v8378 = vunpack.c.l.b16 %v8149
        %v8379 = vunpack.c.l.b16 %v8162
        %v8380 = vunpack.c.l.b16 %v8171
        %v8381 = vunpack.c.l.b16 %v8184
        %v8382 = vunpack.c.l.b16 %v8193
        %v8383 = vunpack.c.l.b16 %v8206
        %v8384 = vunpack.c.l.b16 %v8215
        %v8385 = vunpack.c.l.b16 %v8228
        %v8386 = vunpack.c.l.b16 %v8237
        %v8387 = vunpack.c.l.b16 %v8250
        %v8388 = vunpack.c.l.b16 %v8259
        %v8389 = vunpack.c.l.b16 %v8272
        %v8390 = vunpack.c.l.b16 %v8281
        %v8391 = vunpack.c.l.b16 %v8294
        %v8392 = vunpack.c.l.b16 %v8303
        %v8393 = vunpack.c.l.b16 %v8316
        %v8394 = vunpack.c.l.b16 %v8325
        %v8395 = vunpack.c.l.b16 %v8338
        %v8396 = vunpack.c.l.b16 %v8347
        %v8397 = vpack.c.b16 %v8366, %v8365
        %v8398 = vpack.c.b16 %v8368, %v8367
        %v8399 = vpack.c.b16 %v8370, %v8369
        %v8400 = vpack.c.b16 %v8372, %v8371
        %v8401 = vpack.c.b16 %v8374, %v8373
        %v8402 = vpack.c.b16 %v8376, %v8375
        %v8403 = vpack.c.b16 %v8378, %v8377
        %v8404 = vpack.c.b16 %v8380, %v8379
        %v8405 = vpack.c.b16 %v8382, %v8381
        %v8406 = vpack.c.b16 %v8384, %v8383
        %v8407 = vpack.c.b16 %v8386, %v8385
        %v8408 = vpack.c.b16 %v8388, %v8387
        %v8409 = vpack.c.b16 %v8390, %v8389
        %v8410 = vpack.c.b16 %v8392, %v8391
        %v8411 = vpack.c.b16 %v8394, %v8393
        %v8412 = vpack.c.b16 %v8396, %v8395
        %v8445 = vunpack.c.l.b16 %v8349
        %v8446 = vunpack.c.l.b16 %v8350
        %v8447 = vunpack.c.l.b16 %v8351
        %v8448 = vunpack.c.l.b16 %v8352
        %v8449 = vunpack.c.l.b16 %v8353
        %v8450 = vunpack.c.l.b16 %v8354
        %v8451 = vunpack.c.l.b16 %v8355
        %v8452 = vunpack.c.l.b16 %v8356
        %v8453 = vunpack.c.l.b16 %v8357
        %v8454 = vunpack.c.l.b16 %v8358
        %v8455 = vunpack.c.l.b16 %v8359
        %v8456 = vunpack.c.l.b16 %v8360
        %v8457 = vunpack.c.l.b16 %v8361
        %v8458 = vunpack.c.l.b16 %v8362
        %v8459 = vunpack.c.l.b16 %v8363
        %v8460 = vunpack.c.l.b16 %v8364
        %v8461 = vpack.c.b16 %v8446, %v8445
        %v8462 = vpack.c.b16 %v8448, %v8447
        %v8463 = vpack.c.b16 %v8450, %v8449
        %v8464 = vpack.c.b16 %v8452, %v8451
        %v8465 = vpack.c.b16 %v8454, %v8453
        %v8466 = vpack.c.b16 %v8456, %v8455
        %v8467 = vpack.c.b16 %v8458, %v8457
        %v8468 = vpack.c.b16 %v8460, %v8459
        %8477 = vmatpush.bf16.msra.mxu0 %v8468
        %8478 = vmatpush.bf16.msra.mxu0 %v8467
        %8479 = vmatpush.bf16.msra.mxu0 %v8466
        %8480 = vmatpush.bf16.msra.mxu0 %v8465
        %8481 = vmatpush.bf16.msra.mxu0 %v8464
        %8482 = vmatpush.bf16.msra.mxu0 %v8463
        %8483 = vmatpush.bf16.msra.mxu0 %v8462
        %8484 = vmatpush.bf16.msra.mxu0 %v8461
        %8485 = vmatmul.bf16.gmra.mxu0 %v8397
        %v8486 = vpop.f32.mrf.mxu0
        %v8487 = vadd.f32 0.0, %v8486
        %v8488 = vpop.f32.mrf.mxu0
        %v8489 = vadd.f32 0.0, %v8488
        %8490 = vmatmul.bf16.gmra.mxu0 %v8398
        %v8491 = vpop.f32.mrf.mxu0
        %v8492 = vadd.f32 0.0, %v8491
        %v8493 = vpop.f32.mrf.mxu0
        %v8494 = vadd.f32 0.0, %v8493
        %8495 = vmatmul.bf16.gmra.mxu0 %v8399
        %v8496 = vpop.f32.mrf.mxu0
        %v8497 = vadd.f32 0.0, %v8496
        %v8498 = vpop.f32.mrf.mxu0
        %v8499 = vadd.f32 0.0, %v8498
        %8500 = vmatmul.bf16.gmra.mxu0 %v8400
        %v8501 = vpop.f32.mrf.mxu0
        %v8502 = vadd.f32 0.0, %v8501
        %v8503 = vpop.f32.mrf.mxu0
        %v8504 = vadd.f32 0.0, %v8503
        %8505 = vmatmul.bf16.gmra.mxu0 %v8401
        %v8506 = vpop.f32.mrf.mxu0
        %v8507 = vadd.f32 0.0, %v8506
        %v8508 = vpop.f32.mrf.mxu0
        %v8509 = vadd.f32 0.0, %v8508
        %8510 = vmatmul.bf16.gmra.mxu0 %v8402
        %v8511 = vpop.f32.mrf.mxu0
        %v8512 = vadd.f32 0.0, %v8511
        %v8513 = vpop.f32.mrf.mxu0
        %v8514 = vadd.f32 0.0, %v8513
        %8515 = vmatmul.bf16.gmra.mxu0 %v8403
        %v8516 = vpop.f32.mrf.mxu0
        %v8517 = vadd.f32 0.0, %v8516
        %v8518 = vpop.f32.mrf.mxu0
        %v8519 = vadd.f32 0.0, %v8518
        %8520 = vmatmul.bf16.gmra.mxu0 %v8404
        %v8521 = vpop.f32.mrf.mxu0
        %v8522 = vadd.f32 0.0, %v8521
        %v8523 = vpop.f32.mrf.mxu0
        %v8524 = vadd.f32 0.0, %v8523
        %8525 = vmatmul.bf16.gmra.mxu0 %v8405
        %v8526 = vpop.f32.mrf.mxu0
        %v8527 = vadd.f32 0.0, %v8526
        %v8528 = vpop.f32.mrf.mxu0
        %v8529 = vadd.f32 0.0, %v8528
        %8530 = vmatmul.bf16.gmra.mxu0 %v8406
        %v8531 = vpop.f32.mrf.mxu0
        %v8532 = vadd.f32 0.0, %v8531
        %v8533 = vpop.f32.mrf.mxu0
        %v8534 = vadd.f32 0.0, %v8533
        %8535 = vmatmul.bf16.gmra.mxu0 %v8407
        %v8536 = vpop.f32.mrf.mxu0
        %v8537 = vadd.f32 0.0, %v8536
        %v8538 = vpop.f32.mrf.mxu0
        %v8539 = vadd.f32 0.0, %v8538
        %8540 = vmatmul.bf16.gmra.mxu0 %v8408
        %v8541 = vpop.f32.mrf.mxu0
        %v8542 = vadd.f32 0.0, %v8541
        %v8543 = vpop.f32.mrf.mxu0
        %v8544 = vadd.f32 0.0, %v8543
        %8545 = vmatmul.bf16.gmra.mxu0 %v8409
        %v8546 = vpop.f32.mrf.mxu0
        %v8547 = vadd.f32 0.0, %v8546
        %v8548 = vpop.f32.mrf.mxu0
        %v8549 = vadd.f32 0.0, %v8548
        %8550 = vmatmul.bf16.gmra.mxu0 %v8410
        %v8551 = vpop.f32.mrf.mxu0
        %v8552 = vadd.f32 0.0, %v8551
        %v8553 = vpop.f32.mrf.mxu0
        %v8554 = vadd.f32 0.0, %v8553
        %8555 = vmatmul.bf16.gmra.mxu0 %v8411
        %v8556 = vpop.f32.mrf.mxu0
        %v8557 = vadd.f32 0.0, %v8556
        %v8558 = vpop.f32.mrf.mxu0
        %v8559 = vadd.f32 0.0, %v8558
        %8560 = vmatmul.bf16.gmra.mxu0 %v8412
        %v8561 = vpop.f32.mrf.mxu0
        %v8562 = vadd.f32 0.0, %v8561
        %v8563 = vpop.f32.mrf.mxu0
        %v8564 = vadd.f32 0.0, %v8563
        %8565 = vdwg.mxu0
        %v8566 = vadd.f32 %v7916, %v8487
        %v8567 = vadd.f32 %v7917, %v8489
        %v8568 = vadd.f32 %v7918, %v8492
        %v8569 = vadd.f32 %v7919, %v8494
        %v8570 = vadd.f32 %v7920, %v8497
        %v8571 = vadd.f32 %v7921, %v8499
        %v8572 = vadd.f32 %v7922, %v8502
        %v8573 = vadd.f32 %v7923, %v8504
        %v8574 = vadd.f32 %v7924, %v8507
        %v8575 = vadd.f32 %v7925, %v8509
        %v8576 = vadd.f32 %v7926, %v8512
        %v8577 = vadd.f32 %v7927, %v8514
        %v8578 = vadd.f32 %v7928, %v8517
        %v8579 = vadd.f32 %v7929, %v8519
        %v8580 = vadd.f32 %v7930, %v8522
        %v8581 = vadd.f32 %v7931, %v8524
        %v8582 = vadd.f32 %v7932, %v8527
        %v8583 = vadd.f32 %v7933, %v8529
        %v8584 = vadd.f32 %v7934, %v8532
        %v8585 = vadd.f32 %v7935, %v8534
        %v8586 = vadd.f32 %v7936, %v8537
        %v8587 = vadd.f32 %v7937, %v8539
        %v8588 = vadd.f32 %v7938, %v8542
        %v8589 = vadd.f32 %v7939, %v8544
        %v8590 = vadd.f32 %v7940, %v8547
        %v8591 = vadd.f32 %v7941, %v8549
        %v8592 = vadd.f32 %v7942, %v8552
        %v8593 = vadd.f32 %v7943, %v8554
        %v8594 = vadd.f32 %v7944, %v8557
        %v8595 = vadd.f32 %v7945, %v8559
        %v8596 = vadd.f32 %v7946, %v8562
        %v8597 = vadd.f32 %v7947, %v8564
        %s8598 = scalar_lea.vmem [#allocation4], 256
        %v8599 = vld [vmem:[%s8598] sm:$0xf]
        %v8600 = vld [vmem:[%s8598 + $0x4] sm:$0xf]
        %v8601 = vld [vmem:[%s8598 + $0x8] sm:$0xf]
        %v8602 = vld [vmem:[%s8598 + $0xc] sm:$0xf]
        %v8603 = vld [vmem:[%s8598 + $0x10] sm:$0xf]
        %v8604 = vld [vmem:[%s8598 + $0x14] sm:$0xf]
        %v8605 = vld [vmem:[%s8598 + $0x18] sm:$0xf]
        %v8606 = vld [vmem:[%s8598 + $0x1c] sm:$0xf]
        %v8607 = vld [vmem:[%s8598 + $0x20] sm:$0xf]
        %v8608 = vld [vmem:[%s8598 + $0x24] sm:$0xf]
        %v8609 = vld [vmem:[%s8598 + $0x28] sm:$0xf]
        %v8610 = vld [vmem:[%s8598 + $0x2c] sm:$0xf]
        %v8611 = vld [vmem:[%s8598 + $0x30] sm:$0xf]
        %v8612 = vld [vmem:[%s8598 + $0x34] sm:$0xf]
        %v8613 = vld [vmem:[%s8598 + $0x38] sm:$0xf]
        %v8614 = vld [vmem:[%s8598 + $0x3c] sm:$0xf]
        %v8647 = vunpack.c.l.b16 %v7949
        %v8648 = vunpack.c.l.b16 %v7950
        %v8649 = vunpack.c.l.b16 %v7952
        %v8650 = vunpack.c.l.b16 %v7953
        %v8651 = vunpack.c.l.b16 %v7955
        %v8652 = vunpack.c.l.b16 %v7956
        %v8653 = vunpack.c.l.b16 %v7958
        %v8654 = vunpack.c.l.b16 %v7959
        %v8655 = vunpack.c.l.b16 %v7961
        %v8656 = vunpack.c.l.b16 %v7962
        %v8657 = vunpack.c.l.b16 %v7964
        %v8658 = vunpack.c.l.b16 %v7965
        %v8659 = vunpack.c.l.b16 %v7967
        %v8660 = vunpack.c.l.b16 %v7968
        %v8661 = vunpack.c.l.b16 %v7970
        %v8662 = vunpack.c.l.b16 %v7971
        %v8663 = vunpack.c.l.b16 %v7973
        %v8664 = vunpack.c.l.b16 %v7974
        %v8665 = vunpack.c.l.b16 %v7976
        %v8666 = vunpack.c.l.b16 %v7977
        %v8667 = vunpack.c.l.b16 %v7979
        %v8668 = vunpack.c.l.b16 %v7980
        %v8669 = vunpack.c.l.b16 %v7982
        %v8670 = vunpack.c.l.b16 %v7983
        %v8671 = vunpack.c.l.b16 %v7985
        %v8672 = vunpack.c.l.b16 %v7986
        %v8673 = vunpack.c.l.b16 %v7988
        %v8674 = vunpack.c.l.b16 %v7989
        %v8675 = vunpack.c.l.b16 %v7991
        %v8676 = vunpack.c.l.b16 %v7992
        %v8677 = vunpack.c.l.b16 %v7994
        %v8678 = vunpack.c.l.b16 %v7995
        %v8679 = vpack.c.b16 %v8648, %v8647
        %v8680 = vpack.c.b16 %v8650, %v8649
        %v8681 = vpack.c.b16 %v8652, %v8651
        %v8682 = vpack.c.b16 %v8654, %v8653
        %v8683 = vpack.c.b16 %v8656, %v8655
        %v8684 = vpack.c.b16 %v8658, %v8657
        %v8685 = vpack.c.b16 %v8660, %v8659
        %v8686 = vpack.c.b16 %v8662, %v8661
        %v8687 = vpack.c.b16 %v8664, %v8663
        %v8688 = vpack.c.b16 %v8666, %v8665
        %v8689 = vpack.c.b16 %v8668, %v8667
        %v8690 = vpack.c.b16 %v8670, %v8669
        %v8691 = vpack.c.b16 %v8672, %v8671
        %v8692 = vpack.c.b16 %v8674, %v8673
        %v8693 = vpack.c.b16 %v8676, %v8675
        %v8694 = vpack.c.b16 %v8678, %v8677
        %v8727 = vunpack.c.l.b16 %v8599
        %v8728 = vunpack.c.l.b16 %v8600
        %v8729 = vunpack.c.l.b16 %v8601
        %v8730 = vunpack.c.l.b16 %v8602
        %v8731 = vunpack.c.l.b16 %v8603
        %v8732 = vunpack.c.l.b16 %v8604
        %v8733 = vunpack.c.l.b16 %v8605
        %v8734 = vunpack.c.l.b16 %v8606
        %v8735 = vunpack.c.l.b16 %v8607
        %v8736 = vunpack.c.l.b16 %v8608
        %v8737 = vunpack.c.l.b16 %v8609
        %v8738 = vunpack.c.l.b16 %v8610
        %v8739 = vunpack.c.l.b16 %v8611
        %v8740 = vunpack.c.l.b16 %v8612
        %v8741 = vunpack.c.l.b16 %v8613
        %v8742 = vunpack.c.l.b16 %v8614
        %v8743 = vpack.c.b16 %v8728, %v8727
        %v8744 = vpack.c.b16 %v8730, %v8729
        %v8745 = vpack.c.b16 %v8732, %v8731
        %v8746 = vpack.c.b16 %v8734, %v8733
        %v8747 = vpack.c.b16 %v8736, %v8735
        %v8748 = vpack.c.b16 %v8738, %v8737
        %v8749 = vpack.c.b16 %v8740, %v8739
        %v8750 = vpack.c.b16 %v8742, %v8741
        %8759 = vmatpush.bf16.msra.mxu0 %v8750
        %8760 = vmatpush.bf16.msra.mxu0 %v8749
        %8761 = vmatpush.bf16.msra.mxu0 %v8748
        %8762 = vmatpush.bf16.msra.mxu0 %v8747
        %8763 = vmatpush.bf16.msra.mxu0 %v8746
        %8764 = vmatpush.bf16.msra.mxu0 %v8745
        %8765 = vmatpush.bf16.msra.mxu0 %v8744
        %8766 = vmatpush.bf16.msra.mxu0 %v8743
        %8767 = vmatmul.bf16.gmra.mxu0 %v8679
        %v8768 = vpop.f32.mrf.mxu0
        %v8769 = vadd.f32 0.0, %v8768
        %v8770 = vpop.f32.mrf.mxu0
        %v8771 = vadd.f32 0.0, %v8770
        %8772 = vmatmul.bf16.gmra.mxu0 %v8680
        %v8773 = vpop.f32.mrf.mxu0
        %v8774 = vadd.f32 0.0, %v8773
        %v8775 = vpop.f32.mrf.mxu0
        %v8776 = vadd.f32 0.0, %v8775
        %8777 = vmatmul.bf16.gmra.mxu0 %v8681
        %v8778 = vpop.f32.mrf.mxu0
        %v8779 = vadd.f32 0.0, %v8778
        %v8780 = vpop.f32.mrf.mxu0
        %v8781 = vadd.f32 0.0, %v8780
        %8782 = vmatmul.bf16.gmra.mxu0 %v8682
        %v8783 = vpop.f32.mrf.mxu0
        %v8784 = vadd.f32 0.0, %v8783
        %v8785 = vpop.f32.mrf.mxu0
        %v8786 = vadd.f32 0.0, %v8785
        %8787 = vmatmul.bf16.gmra.mxu0 %v8683
        %v8788 = vpop.f32.mrf.mxu0
        %v8789 = vadd.f32 0.0, %v8788
        %v8790 = vpop.f32.mrf.mxu0
        %v8791 = vadd.f32 0.0, %v8790
        %8792 = vmatmul.bf16.gmra.mxu0 %v8684
        %v8793 = vpop.f32.mrf.mxu0
        %v8794 = vadd.f32 0.0, %v8793
        %v8795 = vpop.f32.mrf.mxu0
        %v8796 = vadd.f32 0.0, %v8795
        %8797 = vmatmul.bf16.gmra.mxu0 %v8685
        %v8798 = vpop.f32.mrf.mxu0
        %v8799 = vadd.f32 0.0, %v8798
        %v8800 = vpop.f32.mrf.mxu0
        %v8801 = vadd.f32 0.0, %v8800
        %8802 = vmatmul.bf16.gmra.mxu0 %v8686
        %v8803 = vpop.f32.mrf.mxu0
        %v8804 = vadd.f32 0.0, %v8803
        %v8805 = vpop.f32.mrf.mxu0
        %v8806 = vadd.f32 0.0, %v8805
        %8807 = vmatmul.bf16.gmra.mxu0 %v8687
        %v8808 = vpop.f32.mrf.mxu0
        %v8809 = vadd.f32 0.0, %v8808
        %v8810 = vpop.f32.mrf.mxu0
        %v8811 = vadd.f32 0.0, %v8810
        %8812 = vmatmul.bf16.gmra.mxu0 %v8688
        %v8813 = vpop.f32.mrf.mxu0
        %v8814 = vadd.f32 0.0, %v8813
        %v8815 = vpop.f32.mrf.mxu0
        %v8816 = vadd.f32 0.0, %v8815
        %8817 = vmatmul.bf16.gmra.mxu0 %v8689
        %v8818 = vpop.f32.mrf.mxu0
        %v8819 = vadd.f32 0.0, %v8818
        %v8820 = vpop.f32.mrf.mxu0
        %v8821 = vadd.f32 0.0, %v8820
        %8822 = vmatmul.bf16.gmra.mxu0 %v8690
        %v8823 = vpop.f32.mrf.mxu0
        %v8824 = vadd.f32 0.0, %v8823
        %v8825 = vpop.f32.mrf.mxu0
        %v8826 = vadd.f32 0.0, %v8825
        %8827 = vmatmul.bf16.gmra.mxu0 %v8691
        %v8828 = vpop.f32.mrf.mxu0
        %v8829 = vadd.f32 0.0, %v8828
        %v8830 = vpop.f32.mrf.mxu0
        %v8831 = vadd.f32 0.0, %v8830
        %8832 = vmatmul.bf16.gmra.mxu0 %v8692
        %v8833 = vpop.f32.mrf.mxu0
        %v8834 = vadd.f32 0.0, %v8833
        %v8835 = vpop.f32.mrf.mxu0
        %v8836 = vadd.f32 0.0, %v8835
        %8837 = vmatmul.bf16.gmra.mxu0 %v8693
        %v8838 = vpop.f32.mrf.mxu0
        %v8839 = vadd.f32 0.0, %v8838
        %v8840 = vpop.f32.mrf.mxu0
        %v8841 = vadd.f32 0.0, %v8840
        %8842 = vmatmul.bf16.gmra.mxu0 %v8694
        %v8843 = vpop.f32.mrf.mxu0
        %v8844 = vadd.f32 0.0, %v8843
        %v8845 = vpop.f32.mrf.mxu0
        %v8846 = vadd.f32 0.0, %v8845
        %8847 = vdwg.mxu0
        %v8848 = vadd.f32 %v8566, %v8769
        %v8849 = vadd.f32 %v8567, %v8771
        %v8850 = vadd.f32 %v8568, %v8774
        %v8851 = vadd.f32 %v8569, %v8776
        %v8852 = vadd.f32 %v8570, %v8779
        %v8853 = vadd.f32 %v8571, %v8781
        %v8854 = vadd.f32 %v8572, %v8784
        %v8855 = vadd.f32 %v8573, %v8786
        %v8856 = vadd.f32 %v8574, %v8789
        %v8857 = vadd.f32 %v8575, %v8791
        %v8858 = vadd.f32 %v8576, %v8794
        %v8859 = vadd.f32 %v8577, %v8796
        %v8860 = vadd.f32 %v8578, %v8799
        %v8861 = vadd.f32 %v8579, %v8801
        %v8862 = vadd.f32 %v8580, %v8804
        %v8863 = vadd.f32 %v8581, %v8806
        %v8864 = vadd.f32 %v8582, %v8809
        %v8865 = vadd.f32 %v8583, %v8811
        %v8866 = vadd.f32 %v8584, %v8814
        %v8867 = vadd.f32 %v8585, %v8816
        %v8868 = vadd.f32 %v8586, %v8819
        %v8869 = vadd.f32 %v8587, %v8821
        %v8870 = vadd.f32 %v8588, %v8824
        %v8871 = vadd.f32 %v8589, %v8826
        %v8872 = vadd.f32 %v8590, %v8829
        %v8873 = vadd.f32 %v8591, %v8831
        %v8874 = vadd.f32 %v8592, %v8834
        %v8875 = vadd.f32 %v8593, %v8836
        %v8876 = vadd.f32 %v8594, %v8839
        %v8877 = vadd.f32 %v8595, %v8841
        %v8878 = vadd.f32 %v8596, %v8844
        %v8879 = vadd.f32 %v8597, %v8846
        %v8880 = vld [vmem:[%s6366 + $0x8] sm:$0xf]
        %v8881 = vld [vmem:[%s6366 + $0xc] sm:$0xf]
        %v8882 = vld [vmem:[%s6366 + $0x10] sm:$0x1]
        %v8883 = vld [vmem:[%s6366 + $0x1c] sm:$0xf]
        %v8884 = vld [vmem:[%s6366 + $0x20] sm:$0xf]
        %v8885 = vld [vmem:[%s6366 + $0x24] sm:$0x1]
        %v8886 = vld [vmem:[%s6366 + $0x30] sm:$0xf]
        %v8887 = vld [vmem:[%s6366 + $0x34] sm:$0xf]
        %v8888 = vld [vmem:[%s6366 + $0x38] sm:$0x1]
        %v8889 = vld [vmem:[%s6366 + $0x44] sm:$0xf]
        %v8890 = vld [vmem:[%s6366 + $0x48] sm:$0xf]
        %v8891 = vld [vmem:[%s6366 + $0x4c] sm:$0x1]
        %v8892 = vld [vmem:[%s6366 + $0x58] sm:$0xf]
        %v8893 = vld [vmem:[%s6366 + $0x5c] sm:$0xf]
        %v8894 = vld [vmem:[%s6366 + $0x60] sm:$0x1]
        %v8895 = vld [vmem:[%s6366 + $0x6c] sm:$0xf]
        %v8896 = vld [vmem:[%s6366 + $0x70] sm:$0xf]
        %v8897 = vld [vmem:[%s6366 + $0x74] sm:$0x1]
        %v8898 = vld [vmem:[%s6366 + $0x80] sm:$0xf]
        %v8899 = vld [vmem:[%s6366 + $0x84] sm:$0xf]
        %v8900 = vld [vmem:[%s6366 + $0x88] sm:$0x1]
        %v8901 = vld [vmem:[%s6366 + $0x94] sm:$0xf]
        %v8902 = vld [vmem:[%s6366 + $0x98] sm:$0xf]
        %v8903 = vld [vmem:[%s6366 + $0x9c] sm:$0x1]
        %v8904 = vld [vmem:[%s6366 + $0xa8] sm:$0xf]
        %v8905 = vld [vmem:[%s6366 + $0xac] sm:$0xf]
        %v8906 = vld [vmem:[%s6366 + $0xb0] sm:$0x1]
        %v8907 = vld [vmem:[%s6366 + $0xbc] sm:$0xf]
        %v8908 = vld [vmem:[%s6366 + $0xc0] sm:$0xf]
        %v8909 = vld [vmem:[%s6366 + $0xc4] sm:$0x1]
        %v8910 = vld [vmem:[%s6366 + $0xd0] sm:$0xf]
        %v8911 = vld [vmem:[%s6366 + $0xd4] sm:$0xf]
        %v8912 = vld [vmem:[%s6366 + $0xd8] sm:$0x1]
        %v8913 = vld [vmem:[%s6366 + $0xe4] sm:$0xf]
        %v8914 = vld [vmem:[%s6366 + $0xe8] sm:$0xf]
        %v8915 = vld [vmem:[%s6366 + $0xec] sm:$0x1]
        %v8916 = vld [vmem:[%s6366 + $0xf8] sm:$0xf]
        %v8917 = vld [vmem:[%s6366 + $0xfc] sm:$0xf]
        %v8918 = vld [vmem:[%s6366 + $0x100] sm:$0x1]
        %v8919 = vld [vmem:[%s6366 + $0x10c] sm:$0xf]
        %v8920 = vld [vmem:[%s6366 + $0x110] sm:$0xf]
        %v8921 = vld [vmem:[%s6366 + $0x114] sm:$0x1]
        %v8922 = vld [vmem:[%s6366 + $0x120] sm:$0xf]
        %v8923 = vld [vmem:[%s6366 + $0x124] sm:$0xf]
        %v8924 = vld [vmem:[%s6366 + $0x128] sm:$0x1]
        %v8925 = vld [vmem:[%s6366 + $0x134] sm:$0xf]
        %v8926 = vld [vmem:[%s6366 + $0x138] sm:$0xf]
        %v8927 = vld [vmem:[%s6366 + $0x13c] sm:$0x1]
        %v8929 = vshrl.u32 %v8880, 16
        %v8931 = vrot.slane %v8929, 4
        %v8932 = vshll.u32 %v8880, 16
        %v8934 = vrot.slane %v8932, 5
        %v8935 = vor.u32 %v8931, %v8934
        %v8936 = vrot.slane %v8935, 4
        %v8938 = vshll.u32 %v8881, 16
        %v8940 = vrot.slane %v8938, 5
        %v8941 = vsel %vm1491, %v8936, %v8940
        %v8942 = vshrl.u32 %v8881, 16
        %v8944 = vrot.slane %v8942, 4
        %v8945 = vor.u32 %v8944, %v8940
        %v8946 = vrot.slane %v8945, 4
        %v8948 = vshll.u32 %v8882, 16
        %v8950 = vrot.slane %v8948, 5
        %v8951 = vsel %vm1491, %v8946, %v8950
        %v8953 = vshrl.u32 %v8883, 16
        %v8955 = vrot.slane %v8953, 4
        %v8956 = vshll.u32 %v8883, 16
        %v8958 = vrot.slane %v8956, 5
        %v8959 = vor.u32 %v8955, %v8958
        %v8960 = vrot.slane %v8959, 4
        %v8962 = vshll.u32 %v8884, 16
        %v8964 = vrot.slane %v8962, 5
        %v8965 = vsel %vm1491, %v8960, %v8964
        %v8966 = vshrl.u32 %v8884, 16
        %v8968 = vrot.slane %v8966, 4
        %v8969 = vor.u32 %v8968, %v8964
        %v8970 = vrot.slane %v8969, 4
        %v8972 = vshll.u32 %v8885, 16
        %v8974 = vrot.slane %v8972, 5
        %v8975 = vsel %vm1491, %v8970, %v8974
        %v8977 = vshrl.u32 %v8886, 16
        %v8979 = vrot.slane %v8977, 4
        %v8980 = vshll.u32 %v8886, 16
        %v8982 = vrot.slane %v8980, 5
        %v8983 = vor.u32 %v8979, %v8982
        %v8984 = vrot.slane %v8983, 4
        %v8986 = vshll.u32 %v8887, 16
        %v8988 = vrot.slane %v8986, 5
        %v8989 = vsel %vm1491, %v8984, %v8988
        %v8990 = vshrl.u32 %v8887, 16
        %v8992 = vrot.slane %v8990, 4
        %v8993 = vor.u32 %v8992, %v8988
        %v8994 = vrot.slane %v8993, 4
        %v8996 = vshll.u32 %v8888, 16
        %v8998 = vrot.slane %v8996, 5
        %v8999 = vsel %vm1491, %v8994, %v8998
        %v9001 = vshrl.u32 %v8889, 16
        %v9003 = vrot.slane %v9001, 4
        %v9004 = vshll.u32 %v8889, 16
        %v9006 = vrot.slane %v9004, 5
        %v9007 = vor.u32 %v9003, %v9006
        %v9008 = vrot.slane %v9007, 4
        %v9010 = vshll.u32 %v8890, 16
        %v9012 = vrot.slane %v9010, 5
        %v9013 = vsel %vm1491, %v9008, %v9012
        %v9014 = vshrl.u32 %v8890, 16
        %v9016 = vrot.slane %v9014, 4
        %v9017 = vor.u32 %v9016, %v9012
        %v9018 = vrot.slane %v9017, 4
        %v9020 = vshll.u32 %v8891, 16
        %v9022 = vrot.slane %v9020, 5
        %v9023 = vsel %vm1491, %v9018, %v9022
        %v9025 = vshrl.u32 %v8892, 16
        %v9027 = vrot.slane %v9025, 4
        %v9028 = vshll.u32 %v8892, 16
        %v9030 = vrot.slane %v9028, 5
        %v9031 = vor.u32 %v9027, %v9030
        %v9032 = vrot.slane %v9031, 4
        %v9034 = vshll.u32 %v8893, 16
        %v9036 = vrot.slane %v9034, 5
        %v9037 = vsel %vm1491, %v9032, %v9036
        %v9038 = vshrl.u32 %v8893, 16
        %v9040 = vrot.slane %v9038, 4
        %v9041 = vor.u32 %v9040, %v9036
        %v9042 = vrot.slane %v9041, 4
        %v9044 = vshll.u32 %v8894, 16
        %v9046 = vrot.slane %v9044, 5
        %v9047 = vsel %vm1491, %v9042, %v9046
        %v9049 = vshrl.u32 %v8895, 16
        %v9051 = vrot.slane %v9049, 4
        %v9052 = vshll.u32 %v8895, 16
        %v9054 = vrot.slane %v9052, 5
        %v9055 = vor.u32 %v9051, %v9054
        %v9056 = vrot.slane %v9055, 4
        %v9058 = vshll.u32 %v8896, 16
        %v9060 = vrot.slane %v9058, 5
        %v9061 = vsel %vm1491, %v9056, %v9060
        %v9062 = vshrl.u32 %v8896, 16
        %v9064 = vrot.slane %v9062, 4
        %v9065 = vor.u32 %v9064, %v9060
        %v9066 = vrot.slane %v9065, 4
        %v9068 = vshll.u32 %v8897, 16
        %v9070 = vrot.slane %v9068, 5
        %v9071 = vsel %vm1491, %v9066, %v9070
        %v9073 = vshrl.u32 %v8898, 16
        %v9075 = vrot.slane %v9073, 4
        %v9076 = vshll.u32 %v8898, 16
        %v9078 = vrot.slane %v9076, 5
        %v9079 = vor.u32 %v9075, %v9078
        %v9080 = vrot.slane %v9079, 4
        %v9082 = vshll.u32 %v8899, 16
        %v9084 = vrot.slane %v9082, 5
        %v9085 = vsel %vm1491, %v9080, %v9084
        %v9086 = vshrl.u32 %v8899, 16
        %v9088 = vrot.slane %v9086, 4
        %v9089 = vor.u32 %v9088, %v9084
        %v9090 = vrot.slane %v9089, 4
        %v9092 = vshll.u32 %v8900, 16
        %v9094 = vrot.slane %v9092, 5
        %v9095 = vsel %vm1491, %v9090, %v9094
        %v9097 = vshrl.u32 %v8901, 16
        %v9099 = vrot.slane %v9097, 4
        %v9100 = vshll.u32 %v8901, 16
        %v9102 = vrot.slane %v9100, 5
        %v9103 = vor.u32 %v9099, %v9102
        %v9104 = vrot.slane %v9103, 4
        %v9106 = vshll.u32 %v8902, 16
        %v9108 = vrot.slane %v9106, 5
        %v9109 = vsel %vm1491, %v9104, %v9108
        %v9110 = vshrl.u32 %v8902, 16
        %v9112 = vrot.slane %v9110, 4
        %v9113 = vor.u32 %v9112, %v9108
        %v9114 = vrot.slane %v9113, 4
        %v9116 = vshll.u32 %v8903, 16
        %v9118 = vrot.slane %v9116, 5
        %v9119 = vsel %vm1491, %v9114, %v9118
        %v9121 = vshrl.u32 %v8904, 16
        %v9123 = vrot.slane %v9121, 4
        %v9124 = vshll.u32 %v8904, 16
        %v9126 = vrot.slane %v9124, 5
        %v9127 = vor.u32 %v9123, %v9126
        %v9128 = vrot.slane %v9127, 4
        %v9130 = vshll.u32 %v8905, 16
        %v9132 = vrot.slane %v9130, 5
        %v9133 = vsel %vm1491, %v9128, %v9132
        %v9134 = vshrl.u32 %v8905, 16
        %v9136 = vrot.slane %v9134, 4
        %v9137 = vor.u32 %v9136, %v9132
        %v9138 = vrot.slane %v9137, 4
        %v9140 = vshll.u32 %v8906, 16
        %v9142 = vrot.slane %v9140, 5
        %v9143 = vsel %vm1491, %v9138, %v9142
        %v9145 = vshrl.u32 %v8907, 16
        %v9147 = vrot.slane %v9145, 4
        %v9148 = vshll.u32 %v8907, 16
        %v9150 = vrot.slane %v9148, 5
        %v9151 = vor.u32 %v9147, %v9150
        %v9152 = vrot.slane %v9151, 4
        %v9154 = vshll.u32 %v8908, 16
        %v9156 = vrot.slane %v9154, 5
        %v9157 = vsel %vm1491, %v9152, %v9156
        %v9158 = vshrl.u32 %v8908, 16
        %v9160 = vrot.slane %v9158, 4
        %v9161 = vor.u32 %v9160, %v9156
        %v9162 = vrot.slane %v9161, 4
        %v9164 = vshll.u32 %v8909, 16
        %v9166 = vrot.slane %v9164, 5
        %v9167 = vsel %vm1491, %v9162, %v9166
        %v9169 = vshrl.u32 %v8910, 16
        %v9171 = vrot.slane %v9169, 4
        %v9172 = vshll.u32 %v8910, 16
        %v9174 = vrot.slane %v9172, 5
        %v9175 = vor.u32 %v9171, %v9174
        %v9176 = vrot.slane %v9175, 4
        %v9178 = vshll.u32 %v8911, 16
        %v9180 = vrot.slane %v9178, 5
        %v9181 = vsel %vm1491, %v9176, %v9180
        %v9182 = vshrl.u32 %v8911, 16
        %v9184 = vrot.slane %v9182, 4
        %v9185 = vor.u32 %v9184, %v9180
        %v9186 = vrot.slane %v9185, 4
        %v9188 = vshll.u32 %v8912, 16
        %v9190 = vrot.slane %v9188, 5
        %v9191 = vsel %vm1491, %v9186, %v9190
        %v9193 = vshrl.u32 %v8913, 16
        %v9195 = vrot.slane %v9193, 4
        %v9196 = vshll.u32 %v8913, 16
        %v9198 = vrot.slane %v9196, 5
        %v9199 = vor.u32 %v9195, %v9198
        %v9200 = vrot.slane %v9199, 4
        %v9202 = vshll.u32 %v8914, 16
        %v9204 = vrot.slane %v9202, 5
        %v9205 = vsel %vm1491, %v9200, %v9204
        %v9206 = vshrl.u32 %v8914, 16
        %v9208 = vrot.slane %v9206, 4
        %v9209 = vor.u32 %v9208, %v9204
        %v9210 = vrot.slane %v9209, 4
        %v9212 = vshll.u32 %v8915, 16
        %v9214 = vrot.slane %v9212, 5
        %v9215 = vsel %vm1491, %v9210, %v9214
        %v9217 = vshrl.u32 %v8916, 16
        %v9219 = vrot.slane %v9217, 4
        %v9220 = vshll.u32 %v8916, 16
        %v9222 = vrot.slane %v9220, 5
        %v9223 = vor.u32 %v9219, %v9222
        %v9224 = vrot.slane %v9223, 4
        %v9226 = vshll.u32 %v8917, 16
        %v9228 = vrot.slane %v9226, 5
        %v9229 = vsel %vm1491, %v9224, %v9228
        %v9230 = vshrl.u32 %v8917, 16
        %v9232 = vrot.slane %v9230, 4
        %v9233 = vor.u32 %v9232, %v9228
        %v9234 = vrot.slane %v9233, 4
        %v9236 = vshll.u32 %v8918, 16
        %v9238 = vrot.slane %v9236, 5
        %v9239 = vsel %vm1491, %v9234, %v9238
        %v9241 = vshrl.u32 %v8919, 16
        %v9243 = vrot.slane %v9241, 4
        %v9244 = vshll.u32 %v8919, 16
        %v9246 = vrot.slane %v9244, 5
        %v9247 = vor.u32 %v9243, %v9246
        %v9248 = vrot.slane %v9247, 4
        %v9250 = vshll.u32 %v8920, 16
        %v9252 = vrot.slane %v9250, 5
        %v9253 = vsel %vm1491, %v9248, %v9252
        %v9254 = vshrl.u32 %v8920, 16
        %v9256 = vrot.slane %v9254, 4
        %v9257 = vor.u32 %v9256, %v9252
        %v9258 = vrot.slane %v9257, 4
        %v9260 = vshll.u32 %v8921, 16
        %v9262 = vrot.slane %v9260, 5
        %v9263 = vsel %vm1491, %v9258, %v9262
        %v9265 = vshrl.u32 %v8922, 16
        %v9267 = vrot.slane %v9265, 4
        %v9268 = vshll.u32 %v8922, 16
        %v9270 = vrot.slane %v9268, 5
        %v9271 = vor.u32 %v9267, %v9270
        %v9272 = vrot.slane %v9271, 4
        %v9274 = vshll.u32 %v8923, 16
        %v9276 = vrot.slane %v9274, 5
        %v9277 = vsel %vm1491, %v9272, %v9276
        %v9278 = vshrl.u32 %v8923, 16
        %v9280 = vrot.slane %v9278, 4
        %v9281 = vor.u32 %v9280, %v9276
        %v9282 = vrot.slane %v9281, 4
        %v9284 = vshll.u32 %v8924, 16
        %v9286 = vrot.slane %v9284, 5
        %v9287 = vsel %vm1491, %v9282, %v9286
        %v9289 = vshrl.u32 %v8925, 16
        %v9291 = vrot.slane %v9289, 4
        %v9292 = vshll.u32 %v8925, 16
        %v9294 = vrot.slane %v9292, 5
        %v9295 = vor.u32 %v9291, %v9294
        %v9296 = vrot.slane %v9295, 4
        %v9298 = vshll.u32 %v8926, 16
        %v9300 = vrot.slane %v9298, 5
        %v9301 = vsel %vm1491, %v9296, %v9300
        %v9302 = vshrl.u32 %v8926, 16
        %v9304 = vrot.slane %v9302, 4
        %v9305 = vor.u32 %v9304, %v9300
        %v9306 = vrot.slane %v9305, 4
        %v9308 = vshll.u32 %v8927, 16
        %v9310 = vrot.slane %v9308, 5
        %v9311 = vsel %vm1491, %v9306, %v9310
        %s9312 = scalar_lea.vmem [#allocation4], 320
        %v9313 = vld [vmem:[%s9312] sm:$0xf]
        %v9314 = vld [vmem:[%s9312 + $0x4] sm:$0xf]
        %v9315 = vld [vmem:[%s9312 + $0x8] sm:$0xf]
        %v9316 = vld [vmem:[%s9312 + $0xc] sm:$0xf]
        %v9317 = vld [vmem:[%s9312 + $0x10] sm:$0xf]
        %v9318 = vld [vmem:[%s9312 + $0x14] sm:$0xf]
        %v9319 = vld [vmem:[%s9312 + $0x18] sm:$0xf]
        %v9320 = vld [vmem:[%s9312 + $0x1c] sm:$0xf]
        %v9321 = vld [vmem:[%s9312 + $0x20] sm:$0xf]
        %v9322 = vld [vmem:[%s9312 + $0x24] sm:$0xf]
        %v9323 = vld [vmem:[%s9312 + $0x28] sm:$0xf]
        %v9324 = vld [vmem:[%s9312 + $0x2c] sm:$0xf]
        %v9325 = vld [vmem:[%s9312 + $0x30] sm:$0xf]
        %v9326 = vld [vmem:[%s9312 + $0x34] sm:$0xf]
        %v9327 = vld [vmem:[%s9312 + $0x38] sm:$0xf]
        %v9328 = vld [vmem:[%s9312 + $0x3c] sm:$0xf]
        %v9329 = vunpack.c.l.b16 %v8941
        %v9330 = vunpack.c.l.b16 %v8951
        %v9331 = vunpack.c.l.b16 %v8965
        %v9332 = vunpack.c.l.b16 %v8975
        %v9333 = vunpack.c.l.b16 %v8989
        %v9334 = vunpack.c.l.b16 %v8999
        %v9335 = vunpack.c.l.b16 %v9013
        %v9336 = vunpack.c.l.b16 %v9023
        %v9337 = vunpack.c.l.b16 %v9037
        %v9338 = vunpack.c.l.b16 %v9047
        %v9339 = vunpack.c.l.b16 %v9061
        %v9340 = vunpack.c.l.b16 %v9071
        %v9341 = vunpack.c.l.b16 %v9085
        %v9342 = vunpack.c.l.b16 %v9095
        %v9343 = vunpack.c.l.b16 %v9109
        %v9344 = vunpack.c.l.b16 %v9119
        %v9345 = vunpack.c.l.b16 %v9133
        %v9346 = vunpack.c.l.b16 %v9143
        %v9347 = vunpack.c.l.b16 %v9157
        %v9348 = vunpack.c.l.b16 %v9167
        %v9349 = vunpack.c.l.b16 %v9181
        %v9350 = vunpack.c.l.b16 %v9191
        %v9351 = vunpack.c.l.b16 %v9205
        %v9352 = vunpack.c.l.b16 %v9215
        %v9353 = vunpack.c.l.b16 %v9229
        %v9354 = vunpack.c.l.b16 %v9239
        %v9355 = vunpack.c.l.b16 %v9253
        %v9356 = vunpack.c.l.b16 %v9263
        %v9357 = vunpack.c.l.b16 %v9277
        %v9358 = vunpack.c.l.b16 %v9287
        %v9359 = vunpack.c.l.b16 %v9301
        %v9360 = vunpack.c.l.b16 %v9311
        %v9361 = vpack.c.b16 %v9330, %v9329
        %v9362 = vpack.c.b16 %v9332, %v9331
        %v9363 = vpack.c.b16 %v9334, %v9333
        %v9364 = vpack.c.b16 %v9336, %v9335
        %v9365 = vpack.c.b16 %v9338, %v9337
        %v9366 = vpack.c.b16 %v9340, %v9339
        %v9367 = vpack.c.b16 %v9342, %v9341
        %v9368 = vpack.c.b16 %v9344, %v9343
        %v9369 = vpack.c.b16 %v9346, %v9345
        %v9370 = vpack.c.b16 %v9348, %v9347
        %v9371 = vpack.c.b16 %v9350, %v9349
        %v9372 = vpack.c.b16 %v9352, %v9351
        %v9373 = vpack.c.b16 %v9354, %v9353
        %v9374 = vpack.c.b16 %v9356, %v9355
        %v9375 = vpack.c.b16 %v9358, %v9357
        %v9376 = vpack.c.b16 %v9360, %v9359
        %v9409 = vunpack.c.l.b16 %v9313
        %v9410 = vunpack.c.l.b16 %v9314
        %v9411 = vunpack.c.l.b16 %v9315
        %v9412 = vunpack.c.l.b16 %v9316
        %v9413 = vunpack.c.l.b16 %v9317
        %v9414 = vunpack.c.l.b16 %v9318
        %v9415 = vunpack.c.l.b16 %v9319
        %v9416 = vunpack.c.l.b16 %v9320
        %v9417 = vunpack.c.l.b16 %v9321
        %v9418 = vunpack.c.l.b16 %v9322
        %v9419 = vunpack.c.l.b16 %v9323
        %v9420 = vunpack.c.l.b16 %v9324
        %v9421 = vunpack.c.l.b16 %v9325
        %v9422 = vunpack.c.l.b16 %v9326
        %v9423 = vunpack.c.l.b16 %v9327
        %v9424 = vunpack.c.l.b16 %v9328
        %v9425 = vpack.c.b16 %v9410, %v9409
        %v9426 = vpack.c.b16 %v9412, %v9411
        %v9427 = vpack.c.b16 %v9414, %v9413
        %v9428 = vpack.c.b16 %v9416, %v9415
        %v9429 = vpack.c.b16 %v9418, %v9417
        %v9430 = vpack.c.b16 %v9420, %v9419
        %v9431 = vpack.c.b16 %v9422, %v9421
        %v9432 = vpack.c.b16 %v9424, %v9423
        %9441 = vmatpush.bf16.msra.mxu0 %v9432
        %9442 = vmatpush.bf16.msra.mxu0 %v9431
        %9443 = vmatpush.bf16.msra.mxu0 %v9430
        %9444 = vmatpush.bf16.msra.mxu0 %v9429
        %9445 = vmatpush.bf16.msra.mxu0 %v9428
        %9446 = vmatpush.bf16.msra.mxu0 %v9427
        %9447 = vmatpush.bf16.msra.mxu0 %v9426
        %9448 = vmatpush.bf16.msra.mxu0 %v9425
        %9449 = vmatmul.bf16.gmra.mxu0 %v9361
        %v9450 = vpop.f32.mrf.mxu0
        %v9451 = vadd.f32 0.0, %v9450
        %v9452 = vpop.f32.mrf.mxu0
        %v9453 = vadd.f32 0.0, %v9452
        %9454 = vmatmul.bf16.gmra.mxu0 %v9362
        %v9455 = vpop.f32.mrf.mxu0
        %v9456 = vadd.f32 0.0, %v9455
        %v9457 = vpop.f32.mrf.mxu0
        %v9458 = vadd.f32 0.0, %v9457
        %9459 = vmatmul.bf16.gmra.mxu0 %v9363
        %v9460 = vpop.f32.mrf.mxu0
        %v9461 = vadd.f32 0.0, %v9460
        %v9462 = vpop.f32.mrf.mxu0
        %v9463 = vadd.f32 0.0, %v9462
        %9464 = vmatmul.bf16.gmra.mxu0 %v9364
        %v9465 = vpop.f32.mrf.mxu0
        %v9466 = vadd.f32 0.0, %v9465
        %v9467 = vpop.f32.mrf.mxu0
        %v9468 = vadd.f32 0.0, %v9467
        %9469 = vmatmul.bf16.gmra.mxu0 %v9365
        %v9470 = vpop.f32.mrf.mxu0
        %v9471 = vadd.f32 0.0, %v9470
        %v9472 = vpop.f32.mrf.mxu0
        %v9473 = vadd.f32 0.0, %v9472
        %9474 = vmatmul.bf16.gmra.mxu0 %v9366
        %v9475 = vpop.f32.mrf.mxu0
        %v9476 = vadd.f32 0.0, %v9475
        %v9477 = vpop.f32.mrf.mxu0
        %v9478 = vadd.f32 0.0, %v9477
        %9479 = vmatmul.bf16.gmra.mxu0 %v9367
        %v9480 = vpop.f32.mrf.mxu0
        %v9481 = vadd.f32 0.0, %v9480
        %v9482 = vpop.f32.mrf.mxu0
        %v9483 = vadd.f32 0.0, %v9482
        %9484 = vmatmul.bf16.gmra.mxu0 %v9368
        %v9485 = vpop.f32.mrf.mxu0
        %v9486 = vadd.f32 0.0, %v9485
        %v9487 = vpop.f32.mrf.mxu0
        %v9488 = vadd.f32 0.0, %v9487
        %9489 = vmatmul.bf16.gmra.mxu0 %v9369
        %v9490 = vpop.f32.mrf.mxu0
        %v9491 = vadd.f32 0.0, %v9490
        %v9492 = vpop.f32.mrf.mxu0
        %v9493 = vadd.f32 0.0, %v9492
        %9494 = vmatmul.bf16.gmra.mxu0 %v9370
        %v9495 = vpop.f32.mrf.mxu0
        %v9496 = vadd.f32 0.0, %v9495
        %v9497 = vpop.f32.mrf.mxu0
        %v9498 = vadd.f32 0.0, %v9497
        %9499 = vmatmul.bf16.gmra.mxu0 %v9371
        %v9500 = vpop.f32.mrf.mxu0
        %v9501 = vadd.f32 0.0, %v9500
        %v9502 = vpop.f32.mrf.mxu0
        %v9503 = vadd.f32 0.0, %v9502
        %9504 = vmatmul.bf16.gmra.mxu0 %v9372
        %v9505 = vpop.f32.mrf.mxu0
        %v9506 = vadd.f32 0.0, %v9505
        %v9507 = vpop.f32.mrf.mxu0
        %v9508 = vadd.f32 0.0, %v9507
        %9509 = vmatmul.bf16.gmra.mxu0 %v9373
        %v9510 = vpop.f32.mrf.mxu0
        %v9511 = vadd.f32 0.0, %v9510
        %v9512 = vpop.f32.mrf.mxu0
        %v9513 = vadd.f32 0.0, %v9512
        %9514 = vmatmul.bf16.gmra.mxu0 %v9374
        %v9515 = vpop.f32.mrf.mxu0
        %v9516 = vadd.f32 0.0, %v9515
        %v9517 = vpop.f32.mrf.mxu0
        %v9518 = vadd.f32 0.0, %v9517
        %9519 = vmatmul.bf16.gmra.mxu0 %v9375
        %v9520 = vpop.f32.mrf.mxu0
        %v9521 = vadd.f32 0.0, %v9520
        %v9522 = vpop.f32.mrf.mxu0
        %v9523 = vadd.f32 0.0, %v9522
        %9524 = vmatmul.bf16.gmra.mxu0 %v9376
        %v9525 = vpop.f32.mrf.mxu0
        %v9526 = vadd.f32 0.0, %v9525
        %v9527 = vpop.f32.mrf.mxu0
        %v9528 = vadd.f32 0.0, %v9527
        %9529 = vdwg.mxu0
        %v9530 = vadd.f32 %v8848, %v9451
        %v9531 = vadd.f32 %v8849, %v9453
        %v9532 = vadd.f32 %v8850, %v9456
        %v9533 = vadd.f32 %v8851, %v9458
        %v9534 = vadd.f32 %v8852, %v9461
        %v9535 = vadd.f32 %v8853, %v9463
        %v9536 = vadd.f32 %v8854, %v9466
        %v9537 = vadd.f32 %v8855, %v9468
        %v9538 = vadd.f32 %v8856, %v9471
        %v9539 = vadd.f32 %v8857, %v9473
        %v9540 = vadd.f32 %v8858, %v9476
        %v9541 = vadd.f32 %v8859, %v9478
        %v9542 = vadd.f32 %v8860, %v9481
        %v9543 = vadd.f32 %v8861, %v9483
        %v9544 = vadd.f32 %v8862, %v9486
        %v9545 = vadd.f32 %v8863, %v9488
        %v9546 = vadd.f32 %v8864, %v9491
        %v9547 = vadd.f32 %v8865, %v9493
        %v9548 = vadd.f32 %v8866, %v9496
        %v9549 = vadd.f32 %v8867, %v9498
        %v9550 = vadd.f32 %v8868, %v9501
        %v9551 = vadd.f32 %v8869, %v9503
        %v9552 = vadd.f32 %v8870, %v9506
        %v9553 = vadd.f32 %v8871, %v9508
        %v9554 = vadd.f32 %v8872, %v9511
        %v9555 = vadd.f32 %v8873, %v9513
        %v9556 = vadd.f32 %v8874, %v9516
        %v9557 = vadd.f32 %v8875, %v9518
        %v9558 = vadd.f32 %v8876, %v9521
        %v9559 = vadd.f32 %v8877, %v9523
        %v9560 = vadd.f32 %v8878, %v9526
        %v9561 = vadd.f32 %v8879, %v9528
        %s9562 = scalar_lea.vmem [#allocation3], 40
        %v9563 = vld [vmem:[%s9562 + $0x4] sm:$0x8]
        %v9564 = vld [vmem:[%s9562 + $0x8] sm:$0xf]
        %v9565 = vld [vmem:[%s9562 + $0xc] sm:$0xf]
        %v9566 = vld [vmem:[%s9562 + $0x18] sm:$0x8]
        %v9567 = vld [vmem:[%s9562 + $0x1c] sm:$0xf]
        %v9568 = vld [vmem:[%s9562 + $0x20] sm:$0xf]
        %v9569 = vld [vmem:[%s9562 + $0x2c] sm:$0x8]
        %v9570 = vld [vmem:[%s9562 + $0x30] sm:$0xf]
        %v9571 = vld [vmem:[%s9562 + $0x34] sm:$0xf]
        %v9572 = vld [vmem:[%s9562 + $0x40] sm:$0x8]
        %v9573 = vld [vmem:[%s9562 + $0x44] sm:$0xf]
        %v9574 = vld [vmem:[%s9562 + $0x48] sm:$0xf]
        %v9575 = vld [vmem:[%s9562 + $0x54] sm:$0x8]
        %v9576 = vld [vmem:[%s9562 + $0x58] sm:$0xf]
        %v9577 = vld [vmem:[%s9562 + $0x5c] sm:$0xf]
        %v9578 = vld [vmem:[%s9562 + $0x68] sm:$0x8]
        %v9579 = vld [vmem:[%s9562 + $0x6c] sm:$0xf]
        %v9580 = vld [vmem:[%s9562 + $0x70] sm:$0xf]
        %v9581 = vld [vmem:[%s9562 + $0x7c] sm:$0x8]
        %v9582 = vld [vmem:[%s9562 + $0x80] sm:$0xf]
        %v9583 = vld [vmem:[%s9562 + $0x84] sm:$0xf]
        %v9584 = vld [vmem:[%s9562 + $0x90] sm:$0x8]
        %v9585 = vld [vmem:[%s9562 + $0x94] sm:$0xf]
        %v9586 = vld [vmem:[%s9562 + $0x98] sm:$0xf]
        %v9587 = vld [vmem:[%s9562 + $0xa4] sm:$0x8]
        %v9588 = vld [vmem:[%s9562 + $0xa8] sm:$0xf]
        %v9589 = vld [vmem:[%s9562 + $0xac] sm:$0xf]
        %v9590 = vld [vmem:[%s9562 + $0xb8] sm:$0x8]
        %v9591 = vld [vmem:[%s9562 + $0xbc] sm:$0xf]
        %v9592 = vld [vmem:[%s9562 + $0xc0] sm:$0xf]
        %v9593 = vld [vmem:[%s9562 + $0xcc] sm:$0x8]
        %v9594 = vld [vmem:[%s9562 + $0xd0] sm:$0xf]
        %v9595 = vld [vmem:[%s9562 + $0xd4] sm:$0xf]
        %v9596 = vld [vmem:[%s9562 + $0xe0] sm:$0x8]
        %v9597 = vld [vmem:[%s9562 + $0xe4] sm:$0xf]
        %v9598 = vld [vmem:[%s9562 + $0xe8] sm:$0xf]
        %v9599 = vld [vmem:[%s9562 + $0xf4] sm:$0x8]
        %v9600 = vld [vmem:[%s9562 + $0xf8] sm:$0xf]
        %v9601 = vld [vmem:[%s9562 + $0xfc] sm:$0xf]
        %v9602 = vld [vmem:[%s9562 + $0x108] sm:$0x8]
        %v9603 = vld [vmem:[%s9562 + $0x10c] sm:$0xf]
        %v9604 = vld [vmem:[%s9562 + $0x110] sm:$0xf]
        %v9605 = vld [vmem:[%s9562 + $0x11c] sm:$0x8]
        %v9606 = vld [vmem:[%s9562 + $0x120] sm:$0xf]
        %v9607 = vld [vmem:[%s9562 + $0x124] sm:$0xf]
        %v9608 = vld [vmem:[%s9562 + $0x130] sm:$0x8]
        %v9609 = vld [vmem:[%s9562 + $0x134] sm:$0xf]
        %v9610 = vld [vmem:[%s9562 + $0x138] sm:$0xf]
        %v9612 = vshrl.u32 %v9563, 16
        %v9614 = vrot.slane %v9612, 7
        %v9615 = vrot.slane %v9614, 4
        %v9617 = vshrl.u32 %v9564, 16
        %v9619 = vrot.slane %v9617, 7
        %v9620 = vshll.u32 %v9564, 16
        %v9622 = vor.u32 %v9619, %v9620
        %v9623 = vsel %vm487, %v9615, %v9622
        %v9624 = vrot.slane %v9619, 4
        %v9626 = vshrl.u32 %v9565, 16
        %v9628 = vrot.slane %v9626, 7
        %v9629 = vshll.u32 %v9565, 16
        %v9631 = vor.u32 %v9628, %v9629
        %v9632 = vsel %vm487, %v9624, %v9631
        %v9634 = vshrl.u32 %v9566, 16
        %v9636 = vrot.slane %v9634, 7
        %v9637 = vrot.slane %v9636, 4
        %v9639 = vshrl.u32 %v9567, 16
        %v9641 = vrot.slane %v9639, 7
        %v9642 = vshll.u32 %v9567, 16
        %v9644 = vor.u32 %v9641, %v9642
        %v9645 = vsel %vm487, %v9637, %v9644
        %v9646 = vrot.slane %v9641, 4
        %v9648 = vshrl.u32 %v9568, 16
        %v9650 = vrot.slane %v9648, 7
        %v9651 = vshll.u32 %v9568, 16
        %v9653 = vor.u32 %v9650, %v9651
        %v9654 = vsel %vm487, %v9646, %v9653
        %v9656 = vshrl.u32 %v9569, 16
        %v9658 = vrot.slane %v9656, 7
        %v9659 = vrot.slane %v9658, 4
        %v9661 = vshrl.u32 %v9570, 16
        %v9663 = vrot.slane %v9661, 7
        %v9664 = vshll.u32 %v9570, 16
        %v9666 = vor.u32 %v9663, %v9664
        %v9667 = vsel %vm487, %v9659, %v9666
        %v9668 = vrot.slane %v9663, 4
        %v9670 = vshrl.u32 %v9571, 16
        %v9672 = vrot.slane %v9670, 7
        %v9673 = vshll.u32 %v9571, 16
        %v9675 = vor.u32 %v9672, %v9673
        %v9676 = vsel %vm487, %v9668, %v9675
        %v9678 = vshrl.u32 %v9572, 16
        %v9680 = vrot.slane %v9678, 7
        %v9681 = vrot.slane %v9680, 4
        %v9683 = vshrl.u32 %v9573, 16
        %v9685 = vrot.slane %v9683, 7
        %v9686 = vshll.u32 %v9573, 16
        %v9688 = vor.u32 %v9685, %v9686
        %v9689 = vsel %vm487, %v9681, %v9688
        %v9690 = vrot.slane %v9685, 4
        %v9692 = vshrl.u32 %v9574, 16
        %v9694 = vrot.slane %v9692, 7
        %v9695 = vshll.u32 %v9574, 16
        %v9697 = vor.u32 %v9694, %v9695
        %v9698 = vsel %vm487, %v9690, %v9697
        %v9700 = vshrl.u32 %v9575, 16
        %v9702 = vrot.slane %v9700, 7
        %v9703 = vrot.slane %v9702, 4
        %v9705 = vshrl.u32 %v9576, 16
        %v9707 = vrot.slane %v9705, 7
        %v9708 = vshll.u32 %v9576, 16
        %v9710 = vor.u32 %v9707, %v9708
        %v9711 = vsel %vm487, %v9703, %v9710
        %v9712 = vrot.slane %v9707, 4
        %v9714 = vshrl.u32 %v9577, 16
        %v9716 = vrot.slane %v9714, 7
        %v9717 = vshll.u32 %v9577, 16
        %v9719 = vor.u32 %v9716, %v9717
        %v9720 = vsel %vm487, %v9712, %v9719
        %v9722 = vshrl.u32 %v9578, 16
        %v9724 = vrot.slane %v9722, 7
        %v9725 = vrot.slane %v9724, 4
        %v9727 = vshrl.u32 %v9579, 16
        %v9729 = vrot.slane %v9727, 7
        %v9730 = vshll.u32 %v9579, 16
        %v9732 = vor.u32 %v9729, %v9730
        %v9733 = vsel %vm487, %v9725, %v9732
        %v9734 = vrot.slane %v9729, 4
        %v9736 = vshrl.u32 %v9580, 16
        %v9738 = vrot.slane %v9736, 7
        %v9739 = vshll.u32 %v9580, 16
        %v9741 = vor.u32 %v9738, %v9739
        %v9742 = vsel %vm487, %v9734, %v9741
        %v9744 = vshrl.u32 %v9581, 16
        %v9746 = vrot.slane %v9744, 7
        %v9747 = vrot.slane %v9746, 4
        %v9749 = vshrl.u32 %v9582, 16
        %v9751 = vrot.slane %v9749, 7
        %v9752 = vshll.u32 %v9582, 16
        %v9754 = vor.u32 %v9751, %v9752
        %v9755 = vsel %vm487, %v9747, %v9754
        %v9756 = vrot.slane %v9751, 4
        %v9758 = vshrl.u32 %v9583, 16
        %v9760 = vrot.slane %v9758, 7
        %v9761 = vshll.u32 %v9583, 16
        %v9763 = vor.u32 %v9760, %v9761
        %v9764 = vsel %vm487, %v9756, %v9763
        %v9766 = vshrl.u32 %v9584, 16
        %v9768 = vrot.slane %v9766, 7
        %v9769 = vrot.slane %v9768, 4
        %v9771 = vshrl.u32 %v9585, 16
        %v9773 = vrot.slane %v9771, 7
        %v9774 = vshll.u32 %v9585, 16
        %v9776 = vor.u32 %v9773, %v9774
        %v9777 = vsel %vm487, %v9769, %v9776
        %v9778 = vrot.slane %v9773, 4
        %v9780 = vshrl.u32 %v9586, 16
        %v9782 = vrot.slane %v9780, 7
        %v9783 = vshll.u32 %v9586, 16
        %v9785 = vor.u32 %v9782, %v9783
        %v9786 = vsel %vm487, %v9778, %v9785
        %v9788 = vshrl.u32 %v9587, 16
        %v9790 = vrot.slane %v9788, 7
        %v9791 = vrot.slane %v9790, 4
        %v9793 = vshrl.u32 %v9588, 16
        %v9795 = vrot.slane %v9793, 7
        %v9796 = vshll.u32 %v9588, 16
        %v9798 = vor.u32 %v9795, %v9796
        %v9799 = vsel %vm487, %v9791, %v9798
        %v9800 = vrot.slane %v9795, 4
        %v9802 = vshrl.u32 %v9589, 16
        %v9804 = vrot.slane %v9802, 7
        %v9805 = vshll.u32 %v9589, 16
        %v9807 = vor.u32 %v9804, %v9805
        %v9808 = vsel %vm487, %v9800, %v9807
        %v9810 = vshrl.u32 %v9590, 16
        %v9812 = vrot.slane %v9810, 7
        %v9813 = vrot.slane %v9812, 4
        %v9815 = vshrl.u32 %v9591, 16
        %v9817 = vrot.slane %v9815, 7
        %v9818 = vshll.u32 %v9591, 16
        %v9820 = vor.u32 %v9817, %v9818
        %v9821 = vsel %vm487, %v9813, %v9820
        %v9822 = vrot.slane %v9817, 4
        %v9824 = vshrl.u32 %v9592, 16
        %v9826 = vrot.slane %v9824, 7
        %v9827 = vshll.u32 %v9592, 16
        %v9829 = vor.u32 %v9826, %v9827
        %v9830 = vsel %vm487, %v9822, %v9829
        %v9832 = vshrl.u32 %v9593, 16
        %v9834 = vrot.slane %v9832, 7
        %v9835 = vrot.slane %v9834, 4
        %v9837 = vshrl.u32 %v9594, 16
        %v9839 = vrot.slane %v9837, 7
        %v9840 = vshll.u32 %v9594, 16
        %v9842 = vor.u32 %v9839, %v9840
        %v9843 = vsel %vm487, %v9835, %v9842
        %v9844 = vrot.slane %v9839, 4
        %v9846 = vshrl.u32 %v9595, 16
        %v9848 = vrot.slane %v9846, 7
        %v9849 = vshll.u32 %v9595, 16
        %v9851 = vor.u32 %v9848, %v9849
        %v9852 = vsel %vm487, %v9844, %v9851
        %v9854 = vshrl.u32 %v9596, 16
        %v9856 = vrot.slane %v9854, 7
        %v9857 = vrot.slane %v9856, 4
        %v9859 = vshrl.u32 %v9597, 16
        %v9861 = vrot.slane %v9859, 7
        %v9862 = vshll.u32 %v9597, 16
        %v9864 = vor.u32 %v9861, %v9862
        %v9865 = vsel %vm487, %v9857, %v9864
        %v9866 = vrot.slane %v9861, 4
        %v9868 = vshrl.u32 %v9598, 16
        %v9870 = vrot.slane %v9868, 7
        %v9871 = vshll.u32 %v9598, 16
        %v9873 = vor.u32 %v9870, %v9871
        %v9874 = vsel %vm487, %v9866, %v9873
        %v9876 = vshrl.u32 %v9599, 16
        %v9878 = vrot.slane %v9876, 7
        %v9879 = vrot.slane %v9878, 4
        %v9881 = vshrl.u32 %v9600, 16
        %v9883 = vrot.slane %v9881, 7
        %v9884 = vshll.u32 %v9600, 16
        %v9886 = vor.u32 %v9883, %v9884
        %v9887 = vsel %vm487, %v9879, %v9886
        %v9888 = vrot.slane %v9883, 4
        %v9890 = vshrl.u32 %v9601, 16
        %v9892 = vrot.slane %v9890, 7
        %v9893 = vshll.u32 %v9601, 16
        %v9895 = vor.u32 %v9892, %v9893
        %v9896 = vsel %vm487, %v9888, %v9895
        %v9898 = vshrl.u32 %v9602, 16
        %v9900 = vrot.slane %v9898, 7
        %v9901 = vrot.slane %v9900, 4
        %v9903 = vshrl.u32 %v9603, 16
        %v9905 = vrot.slane %v9903, 7
        %v9906 = vshll.u32 %v9603, 16
        %v9908 = vor.u32 %v9905, %v9906
        %v9909 = vsel %vm487, %v9901, %v9908
        %v9910 = vrot.slane %v9905, 4
        %v9912 = vshrl.u32 %v9604, 16
        %v9914 = vrot.slane %v9912, 7
        %v9915 = vshll.u32 %v9604, 16
        %v9917 = vor.u32 %v9914, %v9915
        %v9918 = vsel %vm487, %v9910, %v9917
        %v9920 = vshrl.u32 %v9605, 16
        %v9922 = vrot.slane %v9920, 7
        %v9923 = vrot.slane %v9922, 4
        %v9925 = vshrl.u32 %v9606, 16
        %v9927 = vrot.slane %v9925, 7
        %v9928 = vshll.u32 %v9606, 16
        %v9930 = vor.u32 %v9927, %v9928
        %v9931 = vsel %vm487, %v9923, %v9930
        %v9932 = vrot.slane %v9927, 4
        %v9934 = vshrl.u32 %v9607, 16
        %v9936 = vrot.slane %v9934, 7
        %v9937 = vshll.u32 %v9607, 16
        %v9939 = vor.u32 %v9936, %v9937
        %v9940 = vsel %vm487, %v9932, %v9939
        %v9942 = vshrl.u32 %v9608, 16
        %v9944 = vrot.slane %v9942, 7
        %v9945 = vrot.slane %v9944, 4
        %v9947 = vshrl.u32 %v9609, 16
        %v9949 = vrot.slane %v9947, 7
        %v9950 = vshll.u32 %v9609, 16
        %v9952 = vor.u32 %v9949, %v9950
        %v9953 = vsel %vm487, %v9945, %v9952
        %v9954 = vrot.slane %v9949, 4
        %v9956 = vshrl.u32 %v9610, 16
        %v9958 = vrot.slane %v9956, 7
        %v9959 = vshll.u32 %v9610, 16
        %v9961 = vor.u32 %v9958, %v9959
        %v9962 = vsel %vm487, %v9954, %v9961
        %s9963 = scalar_lea.vmem [#allocation4], 384
        %v9964 = vld [vmem:[%s9963] sm:$0xf]
        %v9965 = vld [vmem:[%s9963 + $0x4] sm:$0xf]
        %v9966 = vld [vmem:[%s9963 + $0x8] sm:$0xf]
        %v9967 = vld [vmem:[%s9963 + $0xc] sm:$0xf]
        %v9968 = vld [vmem:[%s9963 + $0x10] sm:$0xf]
        %v9969 = vld [vmem:[%s9963 + $0x14] sm:$0xf]
        %v9970 = vld [vmem:[%s9963 + $0x18] sm:$0xf]
        %v9971 = vld [vmem:[%s9963 + $0x1c] sm:$0xf]
        %v9972 = vld [vmem:[%s9963 + $0x20] sm:$0xf]
        %v9973 = vld [vmem:[%s9963 + $0x24] sm:$0xf]
        %v9974 = vld [vmem:[%s9963 + $0x28] sm:$0xf]
        %v9975 = vld [vmem:[%s9963 + $0x2c] sm:$0xf]
        %v9976 = vld [vmem:[%s9963 + $0x30] sm:$0xf]
        %v9977 = vld [vmem:[%s9963 + $0x34] sm:$0xf]
        %v9978 = vld [vmem:[%s9963 + $0x38] sm:$0xf]
        %v9979 = vld [vmem:[%s9963 + $0x3c] sm:$0xf]
        %v9980 = vunpack.c.l.b16 %v9623
        %v9981 = vunpack.c.l.b16 %v9632
        %v9982 = vunpack.c.l.b16 %v9645
        %v9983 = vunpack.c.l.b16 %v9654
        %v9984 = vunpack.c.l.b16 %v9667
        %v9985 = vunpack.c.l.b16 %v9676
        %v9986 = vunpack.c.l.b16 %v9689
        %v9987 = vunpack.c.l.b16 %v9698
        %v9988 = vunpack.c.l.b16 %v9711
        %v9989 = vunpack.c.l.b16 %v9720
        %v9990 = vunpack.c.l.b16 %v9733
        %v9991 = vunpack.c.l.b16 %v9742
        %v9992 = vunpack.c.l.b16 %v9755
        %v9993 = vunpack.c.l.b16 %v9764
        %v9994 = vunpack.c.l.b16 %v9777
        %v9995 = vunpack.c.l.b16 %v9786
        %v9996 = vunpack.c.l.b16 %v9799
        %v9997 = vunpack.c.l.b16 %v9808
        %v9998 = vunpack.c.l.b16 %v9821
        %v9999 = vunpack.c.l.b16 %v9830
        %v10000 = vunpack.c.l.b16 %v9843
        %v10001 = vunpack.c.l.b16 %v9852
        %v10002 = vunpack.c.l.b16 %v9865
        %v10003 = vunpack.c.l.b16 %v9874
        %v10004 = vunpack.c.l.b16 %v9887
        %v10005 = vunpack.c.l.b16 %v9896
        %v10006 = vunpack.c.l.b16 %v9909
        %v10007 = vunpack.c.l.b16 %v9918
        %v10008 = vunpack.c.l.b16 %v9931
        %v10009 = vunpack.c.l.b16 %v9940
        %v10010 = vunpack.c.l.b16 %v9953
        %v10011 = vunpack.c.l.b16 %v9962
        %v10012 = vpack.c.b16 %v9981, %v9980
        %v10013 = vpack.c.b16 %v9983, %v9982
        %v10014 = vpack.c.b16 %v9985, %v9984
        %v10015 = vpack.c.b16 %v9987, %v9986
        %v10016 = vpack.c.b16 %v9989, %v9988
        %v10017 = vpack.c.b16 %v9991, %v9990
        %v10018 = vpack.c.b16 %v9993, %v9992
        %v10019 = vpack.c.b16 %v9995, %v9994
        %v10020 = vpack.c.b16 %v9997, %v9996
        %v10021 = vpack.c.b16 %v9999, %v9998
        %v10022 = vpack.c.b16 %v10001, %v10000
        %v10023 = vpack.c.b16 %v10003, %v10002
        %v10024 = vpack.c.b16 %v10005, %v10004
        %v10025 = vpack.c.b16 %v10007, %v10006
        %v10026 = vpack.c.b16 %v10009, %v10008
        %v10027 = vpack.c.b16 %v10011, %v10010
        %v10060 = vunpack.c.l.b16 %v9964
        %v10061 = vunpack.c.l.b16 %v9965
        %v10062 = vunpack.c.l.b16 %v9966
        %v10063 = vunpack.c.l.b16 %v9967
        %v10064 = vunpack.c.l.b16 %v9968
        %v10065 = vunpack.c.l.b16 %v9969
        %v10066 = vunpack.c.l.b16 %v9970
        %v10067 = vunpack.c.l.b16 %v9971
        %v10068 = vunpack.c.l.b16 %v9972
        %v10069 = vunpack.c.l.b16 %v9973
        %v10070 = vunpack.c.l.b16 %v9974
        %v10071 = vunpack.c.l.b16 %v9975
        %v10072 = vunpack.c.l.b16 %v9976
        %v10073 = vunpack.c.l.b16 %v9977
        %v10074 = vunpack.c.l.b16 %v9978
        %v10075 = vunpack.c.l.b16 %v9979
        %v10076 = vpack.c.b16 %v10061, %v10060
        %v10077 = vpack.c.b16 %v10063, %v10062
        %v10078 = vpack.c.b16 %v10065, %v10064
        %v10079 = vpack.c.b16 %v10067, %v10066
        %v10080 = vpack.c.b16 %v10069, %v10068
        %v10081 = vpack.c.b16 %v10071, %v10070
        %v10082 = vpack.c.b16 %v10073, %v10072
        %v10083 = vpack.c.b16 %v10075, %v10074
        %10092 = vmatpush.bf16.msra.mxu0 %v10083
        %10093 = vmatpush.bf16.msra.mxu0 %v10082
        %10094 = vmatpush.bf16.msra.mxu0 %v10081
        %10095 = vmatpush.bf16.msra.mxu0 %v10080
        %10096 = vmatpush.bf16.msra.mxu0 %v10079
        %10097 = vmatpush.bf16.msra.mxu0 %v10078
        %10098 = vmatpush.bf16.msra.mxu0 %v10077
        %10099 = vmatpush.bf16.msra.mxu0 %v10076
        %10100 = vmatmul.bf16.gmra.mxu0 %v10012
        %v10101 = vpop.f32.mrf.mxu0
        %v10102 = vadd.f32 0.0, %v10101
        %v10103 = vpop.f32.mrf.mxu0
        %v10104 = vadd.f32 0.0, %v10103
        %10105 = vmatmul.bf16.gmra.mxu0 %v10013
        %v10106 = vpop.f32.mrf.mxu0
        %v10107 = vadd.f32 0.0, %v10106
        %v10108 = vpop.f32.mrf.mxu0
        %v10109 = vadd.f32 0.0, %v10108
        %10110 = vmatmul.bf16.gmra.mxu0 %v10014
        %v10111 = vpop.f32.mrf.mxu0
        %v10112 = vadd.f32 0.0, %v10111
        %v10113 = vpop.f32.mrf.mxu0
        %v10114 = vadd.f32 0.0, %v10113
        %10115 = vmatmul.bf16.gmra.mxu0 %v10015
        %v10116 = vpop.f32.mrf.mxu0
        %v10117 = vadd.f32 0.0, %v10116
        %v10118 = vpop.f32.mrf.mxu0
        %v10119 = vadd.f32 0.0, %v10118
        %10120 = vmatmul.bf16.gmra.mxu0 %v10016
        %v10121 = vpop.f32.mrf.mxu0
        %v10122 = vadd.f32 0.0, %v10121
        %v10123 = vpop.f32.mrf.mxu0
        %v10124 = vadd.f32 0.0, %v10123
        %10125 = vmatmul.bf16.gmra.mxu0 %v10017
        %v10126 = vpop.f32.mrf.mxu0
        %v10127 = vadd.f32 0.0, %v10126
        %v10128 = vpop.f32.mrf.mxu0
        %v10129 = vadd.f32 0.0, %v10128
        %10130 = vmatmul.bf16.gmra.mxu0 %v10018
        %v10131 = vpop.f32.mrf.mxu0
        %v10132 = vadd.f32 0.0, %v10131
        %v10133 = vpop.f32.mrf.mxu0
        %v10134 = vadd.f32 0.0, %v10133
        %10135 = vmatmul.bf16.gmra.mxu0 %v10019
        %v10136 = vpop.f32.mrf.mxu0
        %v10137 = vadd.f32 0.0, %v10136
        %v10138 = vpop.f32.mrf.mxu0
        %v10139 = vadd.f32 0.0, %v10138
        %10140 = vmatmul.bf16.gmra.mxu0 %v10020
        %v10141 = vpop.f32.mrf.mxu0
        %v10142 = vadd.f32 0.0, %v10141
        %v10143 = vpop.f32.mrf.mxu0
        %v10144 = vadd.f32 0.0, %v10143
        %10145 = vmatmul.bf16.gmra.mxu0 %v10021
        %v10146 = vpop.f32.mrf.mxu0
        %v10147 = vadd.f32 0.0, %v10146
        %v10148 = vpop.f32.mrf.mxu0
        %v10149 = vadd.f32 0.0, %v10148
        %10150 = vmatmul.bf16.gmra.mxu0 %v10022
        %v10151 = vpop.f32.mrf.mxu0
        %v10152 = vadd.f32 0.0, %v10151
        %v10153 = vpop.f32.mrf.mxu0
        %v10154 = vadd.f32 0.0, %v10153
        %10155 = vmatmul.bf16.gmra.mxu0 %v10023
        %v10156 = vpop.f32.mrf.mxu0
        %v10157 = vadd.f32 0.0, %v10156
        %v10158 = vpop.f32.mrf.mxu0
        %v10159 = vadd.f32 0.0, %v10158
        %10160 = vmatmul.bf16.gmra.mxu0 %v10024
        %v10161 = vpop.f32.mrf.mxu0
        %v10162 = vadd.f32 0.0, %v10161
        %v10163 = vpop.f32.mrf.mxu0
        %v10164 = vadd.f32 0.0, %v10163
        %10165 = vmatmul.bf16.gmra.mxu0 %v10025
        %v10166 = vpop.f32.mrf.mxu0
        %v10167 = vadd.f32 0.0, %v10166
        %v10168 = vpop.f32.mrf.mxu0
        %v10169 = vadd.f32 0.0, %v10168
        %10170 = vmatmul.bf16.gmra.mxu0 %v10026
        %v10171 = vpop.f32.mrf.mxu0
        %v10172 = vadd.f32 0.0, %v10171
        %v10173 = vpop.f32.mrf.mxu0
        %v10174 = vadd.f32 0.0, %v10173
        %10175 = vmatmul.bf16.gmra.mxu0 %v10027
        %v10176 = vpop.f32.mrf.mxu0
        %v10177 = vadd.f32 0.0, %v10176
        %v10178 = vpop.f32.mrf.mxu0
        %v10179 = vadd.f32 0.0, %v10178
        %10180 = vdwg.mxu0
        %v10181 = vadd.f32 %v9530, %v10102
        %v10182 = vadd.f32 %v9531, %v10104
        %v10183 = vadd.f32 %v9532, %v10107
        %v10184 = vadd.f32 %v9533, %v10109
        %v10185 = vadd.f32 %v9534, %v10112
        %v10186 = vadd.f32 %v9535, %v10114
        %v10187 = vadd.f32 %v9536, %v10117
        %v10188 = vadd.f32 %v9537, %v10119
        %v10189 = vadd.f32 %v9538, %v10122
        %v10190 = vadd.f32 %v9539, %v10124
        %v10191 = vadd.f32 %v9540, %v10127
        %v10192 = vadd.f32 %v9541, %v10129
        %v10193 = vadd.f32 %v9542, %v10132
        %v10194 = vadd.f32 %v9543, %v10134
        %v10195 = vadd.f32 %v9544, %v10137
        %v10196 = vadd.f32 %v9545, %v10139
        %v10197 = vadd.f32 %v9546, %v10142
        %v10198 = vadd.f32 %v9547, %v10144
        %v10199 = vadd.f32 %v9548, %v10147
        %v10200 = vadd.f32 %v9549, %v10149
        %v10201 = vadd.f32 %v9550, %v10152
        %v10202 = vadd.f32 %v9551, %v10154
        %v10203 = vadd.f32 %v9552, %v10157
        %v10204 = vadd.f32 %v9553, %v10159
        %v10205 = vadd.f32 %v9554, %v10162
        %v10206 = vadd.f32 %v9555, %v10164
        %v10207 = vadd.f32 %v9556, %v10167
        %v10208 = vadd.f32 %v9557, %v10169
        %v10209 = vadd.f32 %v9558, %v10172
        %v10210 = vadd.f32 %v9559, %v10174
        %v10211 = vadd.f32 %v9560, %v10177
        %v10212 = vadd.f32 %v9561, %v10179
        %s10213 = scalar_lea.vmem [#allocation4], 448
        %v10214 = vld [vmem:[%s10213] sm:$0xf]
        %v10215 = vld [vmem:[%s10213 + $0x4] sm:$0xf]
        %v10216 = vld [vmem:[%s10213 + $0x8] sm:$0xf]
        %v10217 = vld [vmem:[%s10213 + $0xc] sm:$0xf]
        %v10218 = vld [vmem:[%s10213 + $0x10] sm:$0xf]
        %v10219 = vld [vmem:[%s10213 + $0x14] sm:$0xf]
        %v10220 = vld [vmem:[%s10213 + $0x18] sm:$0xf]
        %v10221 = vld [vmem:[%s10213 + $0x1c] sm:$0xf]
        %v10222 = vld [vmem:[%s10213 + $0x20] sm:$0xf]
        %v10223 = vld [vmem:[%s10213 + $0x24] sm:$0xf]
        %v10224 = vld [vmem:[%s10213 + $0x28] sm:$0xf]
        %v10225 = vld [vmem:[%s10213 + $0x2c] sm:$0xf]
        %v10226 = vld [vmem:[%s10213 + $0x30] sm:$0xf]
        %v10227 = vld [vmem:[%s10213 + $0x34] sm:$0xf]
        %v10228 = vld [vmem:[%s10213 + $0x38] sm:$0xf]
        %v10229 = vld [vmem:[%s10213 + $0x3c] sm:$0xf]
        %v10262 = vunpack.c.l.b16 %v9564
        %v10263 = vunpack.c.l.b16 %v9565
        %v10264 = vunpack.c.l.b16 %v9567
        %v10265 = vunpack.c.l.b16 %v9568
        %v10266 = vunpack.c.l.b16 %v9570
        %v10267 = vunpack.c.l.b16 %v9571
        %v10268 = vunpack.c.l.b16 %v9573
        %v10269 = vunpack.c.l.b16 %v9574
        %v10270 = vunpack.c.l.b16 %v9576
        %v10271 = vunpack.c.l.b16 %v9577
        %v10272 = vunpack.c.l.b16 %v9579
        %v10273 = vunpack.c.l.b16 %v9580
        %v10274 = vunpack.c.l.b16 %v9582
        %v10275 = vunpack.c.l.b16 %v9583
        %v10276 = vunpack.c.l.b16 %v9585
        %v10277 = vunpack.c.l.b16 %v9586
        %v10278 = vunpack.c.l.b16 %v9588
        %v10279 = vunpack.c.l.b16 %v9589
        %v10280 = vunpack.c.l.b16 %v9591
        %v10281 = vunpack.c.l.b16 %v9592
        %v10282 = vunpack.c.l.b16 %v9594
        %v10283 = vunpack.c.l.b16 %v9595
        %v10284 = vunpack.c.l.b16 %v9597
        %v10285 = vunpack.c.l.b16 %v9598
        %v10286 = vunpack.c.l.b16 %v9600
        %v10287 = vunpack.c.l.b16 %v9601
        %v10288 = vunpack.c.l.b16 %v9603
        %v10289 = vunpack.c.l.b16 %v9604
        %v10290 = vunpack.c.l.b16 %v9606
        %v10291 = vunpack.c.l.b16 %v9607
        %v10292 = vunpack.c.l.b16 %v9609
        %v10293 = vunpack.c.l.b16 %v9610
        %v10294 = vpack.c.b16 %v10263, %v10262
        %v10295 = vpack.c.b16 %v10265, %v10264
        %v10296 = vpack.c.b16 %v10267, %v10266
        %v10297 = vpack.c.b16 %v10269, %v10268
        %v10298 = vpack.c.b16 %v10271, %v10270
        %v10299 = vpack.c.b16 %v10273, %v10272
        %v10300 = vpack.c.b16 %v10275, %v10274
        %v10301 = vpack.c.b16 %v10277, %v10276
        %v10302 = vpack.c.b16 %v10279, %v10278
        %v10303 = vpack.c.b16 %v10281, %v10280
        %v10304 = vpack.c.b16 %v10283, %v10282
        %v10305 = vpack.c.b16 %v10285, %v10284
        %v10306 = vpack.c.b16 %v10287, %v10286
        %v10307 = vpack.c.b16 %v10289, %v10288
        %v10308 = vpack.c.b16 %v10291, %v10290
        %v10309 = vpack.c.b16 %v10293, %v10292
        %v10342 = vunpack.c.l.b16 %v10214
        %v10343 = vunpack.c.l.b16 %v10215
        %v10344 = vunpack.c.l.b16 %v10216
        %v10345 = vunpack.c.l.b16 %v10217
        %v10346 = vunpack.c.l.b16 %v10218
        %v10347 = vunpack.c.l.b16 %v10219
        %v10348 = vunpack.c.l.b16 %v10220
        %v10349 = vunpack.c.l.b16 %v10221
        %v10350 = vunpack.c.l.b16 %v10222
        %v10351 = vunpack.c.l.b16 %v10223
        %v10352 = vunpack.c.l.b16 %v10224
        %v10353 = vunpack.c.l.b16 %v10225
        %v10354 = vunpack.c.l.b16 %v10226
        %v10355 = vunpack.c.l.b16 %v10227
        %v10356 = vunpack.c.l.b16 %v10228
        %v10357 = vunpack.c.l.b16 %v10229
        %v10358 = vpack.c.b16 %v10343, %v10342
        %v10359 = vpack.c.b16 %v10345, %v10344
        %v10360 = vpack.c.b16 %v10347, %v10346
        %v10361 = vpack.c.b16 %v10349, %v10348
        %v10362 = vpack.c.b16 %v10351, %v10350
        %v10363 = vpack.c.b16 %v10353, %v10352
        %v10364 = vpack.c.b16 %v10355, %v10354
        %v10365 = vpack.c.b16 %v10357, %v10356
        %10374 = vmatpush.bf16.msra.mxu0 %v10365
        %10375 = vmatpush.bf16.msra.mxu0 %v10364
        %10376 = vmatpush.bf16.msra.mxu0 %v10363
        %10377 = vmatpush.bf16.msra.mxu0 %v10362
        %10378 = vmatpush.bf16.msra.mxu0 %v10361
        %10379 = vmatpush.bf16.msra.mxu0 %v10360
        %10380 = vmatpush.bf16.msra.mxu0 %v10359
        %10381 = vmatpush.bf16.msra.mxu0 %v10358
        %10382 = vmatmul.bf16.gmra.mxu0 %v10294
        %v10383 = vpop.f32.mrf.mxu0
        %v10384 = vadd.f32 0.0, %v10383
        %v10385 = vpop.f32.mrf.mxu0
        %v10386 = vadd.f32 0.0, %v10385
        %10387 = vmatmul.bf16.gmra.mxu0 %v10295
        %v10388 = vpop.f32.mrf.mxu0
        %v10389 = vadd.f32 0.0, %v10388
        %v10390 = vpop.f32.mrf.mxu0
        %v10391 = vadd.f32 0.0, %v10390
        %10392 = vmatmul.bf16.gmra.mxu0 %v10296
        %v10393 = vpop.f32.mrf.mxu0
        %v10394 = vadd.f32 0.0, %v10393
        %v10395 = vpop.f32.mrf.mxu0
        %v10396 = vadd.f32 0.0, %v10395
        %10397 = vmatmul.bf16.gmra.mxu0 %v10297
        %v10398 = vpop.f32.mrf.mxu0
        %v10399 = vadd.f32 0.0, %v10398
        %v10400 = vpop.f32.mrf.mxu0
        %v10401 = vadd.f32 0.0, %v10400
        %10402 = vmatmul.bf16.gmra.mxu0 %v10298
        %v10403 = vpop.f32.mrf.mxu0
        %v10404 = vadd.f32 0.0, %v10403
        %v10405 = vpop.f32.mrf.mxu0
        %v10406 = vadd.f32 0.0, %v10405
        %10407 = vmatmul.bf16.gmra.mxu0 %v10299
        %v10408 = vpop.f32.mrf.mxu0
        %v10409 = vadd.f32 0.0, %v10408
        %v10410 = vpop.f32.mrf.mxu0
        %v10411 = vadd.f32 0.0, %v10410
        %10412 = vmatmul.bf16.gmra.mxu0 %v10300
        %v10413 = vpop.f32.mrf.mxu0
        %v10414 = vadd.f32 0.0, %v10413
        %v10415 = vpop.f32.mrf.mxu0
        %v10416 = vadd.f32 0.0, %v10415
        %10417 = vmatmul.bf16.gmra.mxu0 %v10301
        %v10418 = vpop.f32.mrf.mxu0
        %v10419 = vadd.f32 0.0, %v10418
        %v10420 = vpop.f32.mrf.mxu0
        %v10421 = vadd.f32 0.0, %v10420
        %10422 = vmatmul.bf16.gmra.mxu0 %v10302
        %v10423 = vpop.f32.mrf.mxu0
        %v10424 = vadd.f32 0.0, %v10423
        %v10425 = vpop.f32.mrf.mxu0
        %v10426 = vadd.f32 0.0, %v10425
        %10427 = vmatmul.bf16.gmra.mxu0 %v10303
        %v10428 = vpop.f32.mrf.mxu0
        %v10429 = vadd.f32 0.0, %v10428
        %v10430 = vpop.f32.mrf.mxu0
        %v10431 = vadd.f32 0.0, %v10430
        %10432 = vmatmul.bf16.gmra.mxu0 %v10304
        %v10433 = vpop.f32.mrf.mxu0
        %v10434 = vadd.f32 0.0, %v10433
        %v10435 = vpop.f32.mrf.mxu0
        %v10436 = vadd.f32 0.0, %v10435
        %10437 = vmatmul.bf16.gmra.mxu0 %v10305
        %v10438 = vpop.f32.mrf.mxu0
        %v10439 = vadd.f32 0.0, %v10438
        %v10440 = vpop.f32.mrf.mxu0
        %v10441 = vadd.f32 0.0, %v10440
        %10442 = vmatmul.bf16.gmra.mxu0 %v10306
        %v10443 = vpop.f32.mrf.mxu0
        %v10444 = vadd.f32 0.0, %v10443
        %v10445 = vpop.f32.mrf.mxu0
        %v10446 = vadd.f32 0.0, %v10445
        %10447 = vmatmul.bf16.gmra.mxu0 %v10307
        %v10448 = vpop.f32.mrf.mxu0
        %v10449 = vadd.f32 0.0, %v10448
        %v10450 = vpop.f32.mrf.mxu0
        %v10451 = vadd.f32 0.0, %v10450
        %10452 = vmatmul.bf16.gmra.mxu0 %v10308
        %v10453 = vpop.f32.mrf.mxu0
        %v10454 = vadd.f32 0.0, %v10453
        %v10455 = vpop.f32.mrf.mxu0
        %v10456 = vadd.f32 0.0, %v10455
        %10457 = vmatmul.bf16.gmra.mxu0 %v10309
        %v10458 = vpop.f32.mrf.mxu0
        %v10459 = vadd.f32 0.0, %v10458
        %v10460 = vpop.f32.mrf.mxu0
        %v10461 = vadd.f32 0.0, %v10460
        %10462 = vdwg.mxu0
        %v10463 = vadd.f32 %v10181, %v10384
        %v10464 = vadd.f32 %v10182, %v10386
        %v10465 = vadd.f32 %v10183, %v10389
        %v10466 = vadd.f32 %v10184, %v10391
        %v10467 = vadd.f32 %v10185, %v10394
        %v10468 = vadd.f32 %v10186, %v10396
        %v10469 = vadd.f32 %v10187, %v10399
        %v10470 = vadd.f32 %v10188, %v10401
        %v10471 = vadd.f32 %v10189, %v10404
        %v10472 = vadd.f32 %v10190, %v10406
        %v10473 = vadd.f32 %v10191, %v10409
        %v10474 = vadd.f32 %v10192, %v10411
        %v10475 = vadd.f32 %v10193, %v10414
        %v10476 = vadd.f32 %v10194, %v10416
        %v10477 = vadd.f32 %v10195, %v10419
        %v10478 = vadd.f32 %v10196, %v10421
        %v10479 = vadd.f32 %v10197, %v10424
        %v10480 = vadd.f32 %v10198, %v10426
        %v10481 = vadd.f32 %v10199, %v10429
        %v10482 = vadd.f32 %v10200, %v10431
        %v10483 = vadd.f32 %v10201, %v10434
        %v10484 = vadd.f32 %v10202, %v10436
        %v10485 = vadd.f32 %v10203, %v10439
        %v10486 = vadd.f32 %v10204, %v10441
        %v10487 = vadd.f32 %v10205, %v10444
        %v10488 = vadd.f32 %v10206, %v10446
        %v10489 = vadd.f32 %v10207, %v10449
        %v10490 = vadd.f32 %v10208, %v10451
        %v10491 = vadd.f32 %v10209, %v10454
        %v10492 = vadd.f32 %v10210, %v10456
        %v10493 = vadd.f32 %v10211, %v10459
        %v10494 = vadd.f32 %v10212, %v10461
        %v10495 = vld [vmem:[%s9562 + $0x8] sm:$0xf]
        %v10496 = vld [vmem:[%s9562 + $0xc] sm:$0xf]
        %v10497 = vld [vmem:[%s9562 + $0x10] sm:$0x1]
        %v10498 = vld [vmem:[%s9562 + $0x1c] sm:$0xf]
        %v10499 = vld [vmem:[%s9562 + $0x20] sm:$0xf]
        %v10500 = vld [vmem:[%s9562 + $0x24] sm:$0x1]
        %v10501 = vld [vmem:[%s9562 + $0x30] sm:$0xf]
        %v10502 = vld [vmem:[%s9562 + $0x34] sm:$0xf]
        %v10503 = vld [vmem:[%s9562 + $0x38] sm:$0x1]
        %v10504 = vld [vmem:[%s9562 + $0x44] sm:$0xf]
        %v10505 = vld [vmem:[%s9562 + $0x48] sm:$0xf]
        %v10506 = vld [vmem:[%s9562 + $0x4c] sm:$0x1]
        %v10507 = vld [vmem:[%s9562 + $0x58] sm:$0xf]
        %v10508 = vld [vmem:[%s9562 + $0x5c] sm:$0xf]
        %v10509 = vld [vmem:[%s9562 + $0x60] sm:$0x1]
        %v10510 = vld [vmem:[%s9562 + $0x6c] sm:$0xf]
        %v10511 = vld [vmem:[%s9562 + $0x70] sm:$0xf]
        %v10512 = vld [vmem:[%s9562 + $0x74] sm:$0x1]
        %v10513 = vld [vmem:[%s9562 + $0x80] sm:$0xf]
        %v10514 = vld [vmem:[%s9562 + $0x84] sm:$0xf]
        %v10515 = vld [vmem:[%s9562 + $0x88] sm:$0x1]
        %v10516 = vld [vmem:[%s9562 + $0x94] sm:$0xf]
        %v10517 = vld [vmem:[%s9562 + $0x98] sm:$0xf]
        %v10518 = vld [vmem:[%s9562 + $0x9c] sm:$0x1]
        %v10519 = vld [vmem:[%s9562 + $0xa8] sm:$0xf]
        %v10520 = vld [vmem:[%s9562 + $0xac] sm:$0xf]
        %v10521 = vld [vmem:[%s9562 + $0xb0] sm:$0x1]
        %v10522 = vld [vmem:[%s9562 + $0xbc] sm:$0xf]
        %v10523 = vld [vmem:[%s9562 + $0xc0] sm:$0xf]
        %v10524 = vld [vmem:[%s9562 + $0xc4] sm:$0x1]
        %v10525 = vld [vmem:[%s9562 + $0xd0] sm:$0xf]
        %v10526 = vld [vmem:[%s9562 + $0xd4] sm:$0xf]
        %v10527 = vld [vmem:[%s9562 + $0xd8] sm:$0x1]
        %v10528 = vld [vmem:[%s9562 + $0xe4] sm:$0xf]
        %v10529 = vld [vmem:[%s9562 + $0xe8] sm:$0xf]
        %v10530 = vld [vmem:[%s9562 + $0xec] sm:$0x1]
        %v10531 = vld [vmem:[%s9562 + $0xf8] sm:$0xf]
        %v10532 = vld [vmem:[%s9562 + $0xfc] sm:$0xf]
        %v10533 = vld [vmem:[%s9562 + $0x100] sm:$0x1]
        %v10534 = vld [vmem:[%s9562 + $0x10c] sm:$0xf]
        %v10535 = vld [vmem:[%s9562 + $0x110] sm:$0xf]
        %v10536 = vld [vmem:[%s9562 + $0x114] sm:$0x1]
        %v10537 = vld [vmem:[%s9562 + $0x120] sm:$0xf]
        %v10538 = vld [vmem:[%s9562 + $0x124] sm:$0xf]
        %v10539 = vld [vmem:[%s9562 + $0x128] sm:$0x1]
        %v10540 = vld [vmem:[%s9562 + $0x134] sm:$0xf]
        %v10541 = vld [vmem:[%s9562 + $0x138] sm:$0xf]
        %v10542 = vld [vmem:[%s9562 + $0x13c] sm:$0x1]
        %v10544 = vshrl.u32 %v10495, 16
        %v10546 = vrot.slane %v10544, 4
        %v10547 = vshll.u32 %v10495, 16
        %v10549 = vrot.slane %v10547, 5
        %v10550 = vor.u32 %v10546, %v10549
        %v10551 = vrot.slane %v10550, 4
        %v10553 = vshll.u32 %v10496, 16
        %v10555 = vrot.slane %v10553, 5
        %v10556 = vsel %vm1491, %v10551, %v10555
        %v10557 = vshrl.u32 %v10496, 16
        %v10559 = vrot.slane %v10557, 4
        %v10560 = vor.u32 %v10559, %v10555
        %v10561 = vrot.slane %v10560, 4
        %v10563 = vshll.u32 %v10497, 16
        %v10565 = vrot.slane %v10563, 5
        %v10566 = vsel %vm1491, %v10561, %v10565
        %v10568 = vshrl.u32 %v10498, 16
        %v10570 = vrot.slane %v10568, 4
        %v10571 = vshll.u32 %v10498, 16
        %v10573 = vrot.slane %v10571, 5
        %v10574 = vor.u32 %v10570, %v10573
        %v10575 = vrot.slane %v10574, 4
        %v10577 = vshll.u32 %v10499, 16
        %v10579 = vrot.slane %v10577, 5
        %v10580 = vsel %vm1491, %v10575, %v10579
        %v10581 = vshrl.u32 %v10499, 16
        %v10583 = vrot.slane %v10581, 4
        %v10584 = vor.u32 %v10583, %v10579
        %v10585 = vrot.slane %v10584, 4
        %v10587 = vshll.u32 %v10500, 16
        %v10589 = vrot.slane %v10587, 5
        %v10590 = vsel %vm1491, %v10585, %v10589
        %v10592 = vshrl.u32 %v10501, 16
        %v10594 = vrot.slane %v10592, 4
        %v10595 = vshll.u32 %v10501, 16
        %v10597 = vrot.slane %v10595, 5
        %v10598 = vor.u32 %v10594, %v10597
        %v10599 = vrot.slane %v10598, 4
        %v10601 = vshll.u32 %v10502, 16
        %v10603 = vrot.slane %v10601, 5
        %v10604 = vsel %vm1491, %v10599, %v10603
        %v10605 = vshrl.u32 %v10502, 16
        %v10607 = vrot.slane %v10605, 4
        %v10608 = vor.u32 %v10607, %v10603
        %v10609 = vrot.slane %v10608, 4
        %v10611 = vshll.u32 %v10503, 16
        %v10613 = vrot.slane %v10611, 5
        %v10614 = vsel %vm1491, %v10609, %v10613
        %v10616 = vshrl.u32 %v10504, 16
        %v10618 = vrot.slane %v10616, 4
        %v10619 = vshll.u32 %v10504, 16
        %v10621 = vrot.slane %v10619, 5
        %v10622 = vor.u32 %v10618, %v10621
        %v10623 = vrot.slane %v10622, 4
        %v10625 = vshll.u32 %v10505, 16
        %v10627 = vrot.slane %v10625, 5
        %v10628 = vsel %vm1491, %v10623, %v10627
        %v10629 = vshrl.u32 %v10505, 16
        %v10631 = vrot.slane %v10629, 4
        %v10632 = vor.u32 %v10631, %v10627
        %v10633 = vrot.slane %v10632, 4
        %v10635 = vshll.u32 %v10506, 16
        %v10637 = vrot.slane %v10635, 5
        %v10638 = vsel %vm1491, %v10633, %v10637
        %v10640 = vshrl.u32 %v10507, 16
        %v10642 = vrot.slane %v10640, 4
        %v10643 = vshll.u32 %v10507, 16
        %v10645 = vrot.slane %v10643, 5
        %v10646 = vor.u32 %v10642, %v10645
        %v10647 = vrot.slane %v10646, 4
        %v10649 = vshll.u32 %v10508, 16
        %v10651 = vrot.slane %v10649, 5
        %v10652 = vsel %vm1491, %v10647, %v10651
        %v10653 = vshrl.u32 %v10508, 16
        %v10655 = vrot.slane %v10653, 4
        %v10656 = vor.u32 %v10655, %v10651
        %v10657 = vrot.slane %v10656, 4
        %v10659 = vshll.u32 %v10509, 16
        %v10661 = vrot.slane %v10659, 5
        %v10662 = vsel %vm1491, %v10657, %v10661
        %v10664 = vshrl.u32 %v10510, 16
        %v10666 = vrot.slane %v10664, 4
        %v10667 = vshll.u32 %v10510, 16
        %v10669 = vrot.slane %v10667, 5
        %v10670 = vor.u32 %v10666, %v10669
        %v10671 = vrot.slane %v10670, 4
        %v10673 = vshll.u32 %v10511, 16
        %v10675 = vrot.slane %v10673, 5
        %v10676 = vsel %vm1491, %v10671, %v10675
        %v10677 = vshrl.u32 %v10511, 16
        %v10679 = vrot.slane %v10677, 4
        %v10680 = vor.u32 %v10679, %v10675
        %v10681 = vrot.slane %v10680, 4
        %v10683 = vshll.u32 %v10512, 16
        %v10685 = vrot.slane %v10683, 5
        %v10686 = vsel %vm1491, %v10681, %v10685
        %v10688 = vshrl.u32 %v10513, 16
        %v10690 = vrot.slane %v10688, 4
        %v10691 = vshll.u32 %v10513, 16
        %v10693 = vrot.slane %v10691, 5
        %v10694 = vor.u32 %v10690, %v10693
        %v10695 = vrot.slane %v10694, 4
        %v10697 = vshll.u32 %v10514, 16
        %v10699 = vrot.slane %v10697, 5
        %v10700 = vsel %vm1491, %v10695, %v10699
        %v10701 = vshrl.u32 %v10514, 16
        %v10703 = vrot.slane %v10701, 4
        %v10704 = vor.u32 %v10703, %v10699
        %v10705 = vrot.slane %v10704, 4
        %v10707 = vshll.u32 %v10515, 16
        %v10709 = vrot.slane %v10707, 5
        %v10710 = vsel %vm1491, %v10705, %v10709
        %v10712 = vshrl.u32 %v10516, 16
        %v10714 = vrot.slane %v10712, 4
        %v10715 = vshll.u32 %v10516, 16
        %v10717 = vrot.slane %v10715, 5
        %v10718 = vor.u32 %v10714, %v10717
        %v10719 = vrot.slane %v10718, 4
        %v10721 = vshll.u32 %v10517, 16
        %v10723 = vrot.slane %v10721, 5
        %v10724 = vsel %vm1491, %v10719, %v10723
        %v10725 = vshrl.u32 %v10517, 16
        %v10727 = vrot.slane %v10725, 4
        %v10728 = vor.u32 %v10727, %v10723
        %v10729 = vrot.slane %v10728, 4
        %v10731 = vshll.u32 %v10518, 16
        %v10733 = vrot.slane %v10731, 5
        %v10734 = vsel %vm1491, %v10729, %v10733
        %v10736 = vshrl.u32 %v10519, 16
        %v10738 = vrot.slane %v10736, 4
        %v10739 = vshll.u32 %v10519, 16
        %v10741 = vrot.slane %v10739, 5
        %v10742 = vor.u32 %v10738, %v10741
        %v10743 = vrot.slane %v10742, 4
        %v10745 = vshll.u32 %v10520, 16
        %v10747 = vrot.slane %v10745, 5
        %v10748 = vsel %vm1491, %v10743, %v10747
        %v10749 = vshrl.u32 %v10520, 16
        %v10751 = vrot.slane %v10749, 4
        %v10752 = vor.u32 %v10751, %v10747
        %v10753 = vrot.slane %v10752, 4
        %v10755 = vshll.u32 %v10521, 16
        %v10757 = vrot.slane %v10755, 5
        %v10758 = vsel %vm1491, %v10753, %v10757
        %v10760 = vshrl.u32 %v10522, 16
        %v10762 = vrot.slane %v10760, 4
        %v10763 = vshll.u32 %v10522, 16
        %v10765 = vrot.slane %v10763, 5
        %v10766 = vor.u32 %v10762, %v10765
        %v10767 = vrot.slane %v10766, 4
        %v10769 = vshll.u32 %v10523, 16
        %v10771 = vrot.slane %v10769, 5
        %v10772 = vsel %vm1491, %v10767, %v10771
        %v10773 = vshrl.u32 %v10523, 16
        %v10775 = vrot.slane %v10773, 4
        %v10776 = vor.u32 %v10775, %v10771
        %v10777 = vrot.slane %v10776, 4
        %v10779 = vshll.u32 %v10524, 16
        %v10781 = vrot.slane %v10779, 5
        %v10782 = vsel %vm1491, %v10777, %v10781
        %v10784 = vshrl.u32 %v10525, 16
        %v10786 = vrot.slane %v10784, 4
        %v10787 = vshll.u32 %v10525, 16
        %v10789 = vrot.slane %v10787, 5
        %v10790 = vor.u32 %v10786, %v10789
        %v10791 = vrot.slane %v10790, 4
        %v10793 = vshll.u32 %v10526, 16
        %v10795 = vrot.slane %v10793, 5
        %v10796 = vsel %vm1491, %v10791, %v10795
        %v10797 = vshrl.u32 %v10526, 16
        %v10799 = vrot.slane %v10797, 4
        %v10800 = vor.u32 %v10799, %v10795
        %v10801 = vrot.slane %v10800, 4
        %v10803 = vshll.u32 %v10527, 16
        %v10805 = vrot.slane %v10803, 5
        %v10806 = vsel %vm1491, %v10801, %v10805
        %v10808 = vshrl.u32 %v10528, 16
        %v10810 = vrot.slane %v10808, 4
        %v10811 = vshll.u32 %v10528, 16
        %v10813 = vrot.slane %v10811, 5
        %v10814 = vor.u32 %v10810, %v10813
        %v10815 = vrot.slane %v10814, 4
        %v10817 = vshll.u32 %v10529, 16
        %v10819 = vrot.slane %v10817, 5
        %v10820 = vsel %vm1491, %v10815, %v10819
        %v10821 = vshrl.u32 %v10529, 16
        %v10823 = vrot.slane %v10821, 4
        %v10824 = vor.u32 %v10823, %v10819
        %v10825 = vrot.slane %v10824, 4
        %v10827 = vshll.u32 %v10530, 16
        %v10829 = vrot.slane %v10827, 5
        %v10830 = vsel %vm1491, %v10825, %v10829
        %v10832 = vshrl.u32 %v10531, 16
        %v10834 = vrot.slane %v10832, 4
        %v10835 = vshll.u32 %v10531, 16
        %v10837 = vrot.slane %v10835, 5
        %v10838 = vor.u32 %v10834, %v10837
        %v10839 = vrot.slane %v10838, 4
        %v10841 = vshll.u32 %v10532, 16
        %v10843 = vrot.slane %v10841, 5
        %v10844 = vsel %vm1491, %v10839, %v10843
        %v10845 = vshrl.u32 %v10532, 16
        %v10847 = vrot.slane %v10845, 4
        %v10848 = vor.u32 %v10847, %v10843
        %v10849 = vrot.slane %v10848, 4
        %v10851 = vshll.u32 %v10533, 16
        %v10853 = vrot.slane %v10851, 5
        %v10854 = vsel %vm1491, %v10849, %v10853
        %v10856 = vshrl.u32 %v10534, 16
        %v10858 = vrot.slane %v10856, 4
        %v10859 = vshll.u32 %v10534, 16
        %v10861 = vrot.slane %v10859, 5
        %v10862 = vor.u32 %v10858, %v10861
        %v10863 = vrot.slane %v10862, 4
        %v10865 = vshll.u32 %v10535, 16
        %v10867 = vrot.slane %v10865, 5
        %v10868 = vsel %vm1491, %v10863, %v10867
        %v10869 = vshrl.u32 %v10535, 16
        %v10871 = vrot.slane %v10869, 4
        %v10872 = vor.u32 %v10871, %v10867
        %v10873 = vrot.slane %v10872, 4
        %v10875 = vshll.u32 %v10536, 16
        %v10877 = vrot.slane %v10875, 5
        %v10878 = vsel %vm1491, %v10873, %v10877
        %v10880 = vshrl.u32 %v10537, 16
        %v10882 = vrot.slane %v10880, 4
        %v10883 = vshll.u32 %v10537, 16
        %v10885 = vrot.slane %v10883, 5
        %v10886 = vor.u32 %v10882, %v10885
        %v10887 = vrot.slane %v10886, 4
        %v10889 = vshll.u32 %v10538, 16
        %v10891 = vrot.slane %v10889, 5
        %v10892 = vsel %vm1491, %v10887, %v10891
        %v10893 = vshrl.u32 %v10538, 16
        %v10895 = vrot.slane %v10893, 4
        %v10896 = vor.u32 %v10895, %v10891
        %v10897 = vrot.slane %v10896, 4
        %v10899 = vshll.u32 %v10539, 16
        %v10901 = vrot.slane %v10899, 5
        %v10902 = vsel %vm1491, %v10897, %v10901
        %v10904 = vshrl.u32 %v10540, 16
        %v10906 = vrot.slane %v10904, 4
        %v10907 = vshll.u32 %v10540, 16
        %v10909 = vrot.slane %v10907, 5
        %v10910 = vor.u32 %v10906, %v10909
        %v10911 = vrot.slane %v10910, 4
        %v10913 = vshll.u32 %v10541, 16
        %v10915 = vrot.slane %v10913, 5
        %v10916 = vsel %vm1491, %v10911, %v10915
        %v10917 = vshrl.u32 %v10541, 16
        %v10919 = vrot.slane %v10917, 4
        %v10920 = vor.u32 %v10919, %v10915
        %v10921 = vrot.slane %v10920, 4
        %v10923 = vshll.u32 %v10542, 16
        %v10925 = vrot.slane %v10923, 5
        %v10926 = vsel %vm1491, %v10921, %v10925
        %s10927 = scalar_lea.vmem [#allocation4], 512
        %v10928 = vld [vmem:[%s10927] sm:$0xf]
        %v10929 = vld [vmem:[%s10927 + $0x4] sm:$0xf]
        %v10930 = vld [vmem:[%s10927 + $0x8] sm:$0xf]
        %v10931 = vld [vmem:[%s10927 + $0xc] sm:$0xf]
        %v10932 = vld [vmem:[%s10927 + $0x10] sm:$0xf]
        %v10933 = vld [vmem:[%s10927 + $0x14] sm:$0xf]
        %v10934 = vld [vmem:[%s10927 + $0x18] sm:$0xf]
        %v10935 = vld [vmem:[%s10927 + $0x1c] sm:$0xf]
        %v10936 = vld [vmem:[%s10927 + $0x20] sm:$0xf]
        %v10937 = vld [vmem:[%s10927 + $0x24] sm:$0xf]
        %v10938 = vld [vmem:[%s10927 + $0x28] sm:$0xf]
        %v10939 = vld [vmem:[%s10927 + $0x2c] sm:$0xf]
        %v10940 = vld [vmem:[%s10927 + $0x30] sm:$0xf]
        %v10941 = vld [vmem:[%s10927 + $0x34] sm:$0xf]
        %v10942 = vld [vmem:[%s10927 + $0x38] sm:$0xf]
        %v10943 = vld [vmem:[%s10927 + $0x3c] sm:$0xf]
        %v10944 = vunpack.c.l.b16 %v10556
        %v10945 = vunpack.c.l.b16 %v10566
        %v10946 = vunpack.c.l.b16 %v10580
        %v10947 = vunpack.c.l.b16 %v10590
        %v10948 = vunpack.c.l.b16 %v10604
        %v10949 = vunpack.c.l.b16 %v10614
        %v10950 = vunpack.c.l.b16 %v10628
        %v10951 = vunpack.c.l.b16 %v10638
        %v10952 = vunpack.c.l.b16 %v10652
        %v10953 = vunpack.c.l.b16 %v10662
        %v10954 = vunpack.c.l.b16 %v10676
        %v10955 = vunpack.c.l.b16 %v10686
        %v10956 = vunpack.c.l.b16 %v10700
        %v10957 = vunpack.c.l.b16 %v10710
        %v10958 = vunpack.c.l.b16 %v10724
        %v10959 = vunpack.c.l.b16 %v10734
        %v10960 = vunpack.c.l.b16 %v10748
        %v10961 = vunpack.c.l.b16 %v10758
        %v10962 = vunpack.c.l.b16 %v10772
        %v10963 = vunpack.c.l.b16 %v10782
        %v10964 = vunpack.c.l.b16 %v10796
        %v10965 = vunpack.c.l.b16 %v10806
        %v10966 = vunpack.c.l.b16 %v10820
        %v10967 = vunpack.c.l.b16 %v10830
        %v10968 = vunpack.c.l.b16 %v10844
        %v10969 = vunpack.c.l.b16 %v10854
        %v10970 = vunpack.c.l.b16 %v10868
        %v10971 = vunpack.c.l.b16 %v10878
        %v10972 = vunpack.c.l.b16 %v10892
        %v10973 = vunpack.c.l.b16 %v10902
        %v10974 = vunpack.c.l.b16 %v10916
        %v10975 = vunpack.c.l.b16 %v10926
        %v10976 = vpack.c.b16 %v10945, %v10944
        %v10977 = vpack.c.b16 %v10947, %v10946
        %v10978 = vpack.c.b16 %v10949, %v10948
        %v10979 = vpack.c.b16 %v10951, %v10950
        %v10980 = vpack.c.b16 %v10953, %v10952
        %v10981 = vpack.c.b16 %v10955, %v10954
        %v10982 = vpack.c.b16 %v10957, %v10956
        %v10983 = vpack.c.b16 %v10959, %v10958
        %v10984 = vpack.c.b16 %v10961, %v10960
        %v10985 = vpack.c.b16 %v10963, %v10962
        %v10986 = vpack.c.b16 %v10965, %v10964
        %v10987 = vpack.c.b16 %v10967, %v10966
        %v10988 = vpack.c.b16 %v10969, %v10968
        %v10989 = vpack.c.b16 %v10971, %v10970
        %v10990 = vpack.c.b16 %v10973, %v10972
        %v10991 = vpack.c.b16 %v10975, %v10974
        %v11024 = vunpack.c.l.b16 %v10928
        %v11025 = vunpack.c.l.b16 %v10929
        %v11026 = vunpack.c.l.b16 %v10930
        %v11027 = vunpack.c.l.b16 %v10931
        %v11028 = vunpack.c.l.b16 %v10932
        %v11029 = vunpack.c.l.b16 %v10933
        %v11030 = vunpack.c.l.b16 %v10934
        %v11031 = vunpack.c.l.b16 %v10935
        %v11032 = vunpack.c.l.b16 %v10936
        %v11033 = vunpack.c.l.b16 %v10937
        %v11034 = vunpack.c.l.b16 %v10938
        %v11035 = vunpack.c.l.b16 %v10939
        %v11036 = vunpack.c.l.b16 %v10940
        %v11037 = vunpack.c.l.b16 %v10941
        %v11038 = vunpack.c.l.b16 %v10942
        %v11039 = vunpack.c.l.b16 %v10943
        %v11040 = vpack.c.b16 %v11025, %v11024
        %v11041 = vpack.c.b16 %v11027, %v11026
        %v11042 = vpack.c.b16 %v11029, %v11028
        %v11043 = vpack.c.b16 %v11031, %v11030
        %v11044 = vpack.c.b16 %v11033, %v11032
        %v11045 = vpack.c.b16 %v11035, %v11034
        %v11046 = vpack.c.b16 %v11037, %v11036
        %v11047 = vpack.c.b16 %v11039, %v11038
        %11056 = vmatpush.bf16.msra.mxu0 %v11047
        %11057 = vmatpush.bf16.msra.mxu0 %v11046
        %11058 = vmatpush.bf16.msra.mxu0 %v11045
        %11059 = vmatpush.bf16.msra.mxu0 %v11044
        %11060 = vmatpush.bf16.msra.mxu0 %v11043
        %11061 = vmatpush.bf16.msra.mxu0 %v11042
        %11062 = vmatpush.bf16.msra.mxu0 %v11041
        %11063 = vmatpush.bf16.msra.mxu0 %v11040
        %11064 = vmatmul.bf16.gmra.mxu0 %v10976
        %v11065 = vpop.f32.mrf.mxu0
        %v11066 = vadd.f32 0.0, %v11065
        %v11067 = vpop.f32.mrf.mxu0
        %v11068 = vadd.f32 0.0, %v11067
        %11069 = vmatmul.bf16.gmra.mxu0 %v10977
        %v11070 = vpop.f32.mrf.mxu0
        %v11071 = vadd.f32 0.0, %v11070
        %v11072 = vpop.f32.mrf.mxu0
        %v11073 = vadd.f32 0.0, %v11072
        %11074 = vmatmul.bf16.gmra.mxu0 %v10978
        %v11075 = vpop.f32.mrf.mxu0
        %v11076 = vadd.f32 0.0, %v11075
        %v11077 = vpop.f32.mrf.mxu0
        %v11078 = vadd.f32 0.0, %v11077
        %11079 = vmatmul.bf16.gmra.mxu0 %v10979
        %v11080 = vpop.f32.mrf.mxu0
        %v11081 = vadd.f32 0.0, %v11080
        %v11082 = vpop.f32.mrf.mxu0
        %v11083 = vadd.f32 0.0, %v11082
        %11084 = vmatmul.bf16.gmra.mxu0 %v10980
        %v11085 = vpop.f32.mrf.mxu0
        %v11086 = vadd.f32 0.0, %v11085
        %v11087 = vpop.f32.mrf.mxu0
        %v11088 = vadd.f32 0.0, %v11087
        %11089 = vmatmul.bf16.gmra.mxu0 %v10981
        %v11090 = vpop.f32.mrf.mxu0
        %v11091 = vadd.f32 0.0, %v11090
        %v11092 = vpop.f32.mrf.mxu0
        %v11093 = vadd.f32 0.0, %v11092
        %11094 = vmatmul.bf16.gmra.mxu0 %v10982
        %v11095 = vpop.f32.mrf.mxu0
        %v11096 = vadd.f32 0.0, %v11095
        %v11097 = vpop.f32.mrf.mxu0
        %v11098 = vadd.f32 0.0, %v11097
        %11099 = vmatmul.bf16.gmra.mxu0 %v10983
        %v11100 = vpop.f32.mrf.mxu0
        %v11101 = vadd.f32 0.0, %v11100
        %v11102 = vpop.f32.mrf.mxu0
        %v11103 = vadd.f32 0.0, %v11102
        %11104 = vmatmul.bf16.gmra.mxu0 %v10984
        %v11105 = vpop.f32.mrf.mxu0
        %v11106 = vadd.f32 0.0, %v11105
        %v11107 = vpop.f32.mrf.mxu0
        %v11108 = vadd.f32 0.0, %v11107
        %11109 = vmatmul.bf16.gmra.mxu0 %v10985
        %v11110 = vpop.f32.mrf.mxu0
        %v11111 = vadd.f32 0.0, %v11110
        %v11112 = vpop.f32.mrf.mxu0
        %v11113 = vadd.f32 0.0, %v11112
        %11114 = vmatmul.bf16.gmra.mxu0 %v10986
        %v11115 = vpop.f32.mrf.mxu0
        %v11116 = vadd.f32 0.0, %v11115
        %v11117 = vpop.f32.mrf.mxu0
        %v11118 = vadd.f32 0.0, %v11117
        %11119 = vmatmul.bf16.gmra.mxu0 %v10987
        %v11120 = vpop.f32.mrf.mxu0
        %v11121 = vadd.f32 0.0, %v11120
        %v11122 = vpop.f32.mrf.mxu0
        %v11123 = vadd.f32 0.0, %v11122
        %11124 = vmatmul.bf16.gmra.mxu0 %v10988
        %v11125 = vpop.f32.mrf.mxu0
        %v11126 = vadd.f32 0.0, %v11125
        %v11127 = vpop.f32.mrf.mxu0
        %v11128 = vadd.f32 0.0, %v11127
        %11129 = vmatmul.bf16.gmra.mxu0 %v10989
        %v11130 = vpop.f32.mrf.mxu0
        %v11131 = vadd.f32 0.0, %v11130
        %v11132 = vpop.f32.mrf.mxu0
        %v11133 = vadd.f32 0.0, %v11132
        %11134 = vmatmul.bf16.gmra.mxu0 %v10990
        %v11135 = vpop.f32.mrf.mxu0
        %v11136 = vadd.f32 0.0, %v11135
        %v11137 = vpop.f32.mrf.mxu0
        %v11138 = vadd.f32 0.0, %v11137
        %11139 = vmatmul.bf16.gmra.mxu0 %v10991
        %v11140 = vpop.f32.mrf.mxu0
        %v11141 = vadd.f32 0.0, %v11140
        %v11142 = vpop.f32.mrf.mxu0
        %v11143 = vadd.f32 0.0, %v11142
        %11144 = vdwg.mxu0
        %v11145 = vadd.f32 %v10463, %v11066
        %v11146 = vadd.f32 %v10464, %v11068
        %v11147 = vadd.f32 %v10465, %v11071
        %v11148 = vadd.f32 %v10466, %v11073
        %v11149 = vadd.f32 %v10467, %v11076
        %v11150 = vadd.f32 %v10468, %v11078
        %v11151 = vadd.f32 %v10469, %v11081
        %v11152 = vadd.f32 %v10470, %v11083
        %v11153 = vadd.f32 %v10471, %v11086
        %v11154 = vadd.f32 %v10472, %v11088
        %v11155 = vadd.f32 %v10473, %v11091
        %v11156 = vadd.f32 %v10474, %v11093
        %v11157 = vadd.f32 %v10475, %v11096
        %v11158 = vadd.f32 %v10476, %v11098
        %v11159 = vadd.f32 %v10477, %v11101
        %v11160 = vadd.f32 %v10478, %v11103
        %v11161 = vadd.f32 %v10479, %v11106
        %v11162 = vadd.f32 %v10480, %v11108
        %v11163 = vadd.f32 %v10481, %v11111
        %v11164 = vadd.f32 %v10482, %v11113
        %v11165 = vadd.f32 %v10483, %v11116
        %v11166 = vadd.f32 %v10484, %v11118
        %v11167 = vadd.f32 %v10485, %v11121
        %v11168 = vadd.f32 %v10486, %v11123
        %v11169 = vadd.f32 %v10487, %v11126
        %v11170 = vadd.f32 %v10488, %v11128
        %v11171 = vadd.f32 %v10489, %v11131
        %v11172 = vadd.f32 %v10490, %v11133
        %v11173 = vadd.f32 %v10491, %v11136
        %v11174 = vadd.f32 %v10492, %v11138
        %v11175 = vadd.f32 %v10493, %v11141
        %v11176 = vadd.f32 %v10494, %v11143
        %v11177 = vld [vmem:[%s4] sm:$0x1]
        %v11179 = vperm.slane %v11177, 0
        %v11181 = vadd.f32 %v11145, %v11179
        %v11182 = vadd.f32 %v11146, %v11179
        %v11183 = vadd.f32 %v11147, %v11179
        %v11184 = vadd.f32 %v11148, %v11179
        %v11185 = vadd.f32 %v11149, %v11179
        %v11186 = vadd.f32 %v11150, %v11179
        %v11187 = vadd.f32 %v11151, %v11179
        %v11188 = vadd.f32 %v11152, %v11179
        %v11189 = vadd.f32 %v11153, %v11179
        %v11190 = vadd.f32 %v11154, %v11179
        %v11191 = vadd.f32 %v11155, %v11179
        %v11192 = vadd.f32 %v11156, %v11179
        %v11193 = vadd.f32 %v11157, %v11179
        %v11194 = vadd.f32 %v11158, %v11179
        %v11195 = vadd.f32 %v11159, %v11179
        %v11196 = vadd.f32 %v11160, %v11179
        %v11197 = vadd.f32 %v11161, %v11179
        %v11198 = vadd.f32 %v11162, %v11179
        %v11199 = vadd.f32 %v11163, %v11179
        %v11200 = vadd.f32 %v11164, %v11179
        %v11201 = vadd.f32 %v11165, %v11179
        %v11202 = vadd.f32 %v11166, %v11179
        %v11203 = vadd.f32 %v11167, %v11179
        %v11204 = vadd.f32 %v11168, %v11179
        %v11205 = vadd.f32 %v11169, %v11179
        %v11206 = vadd.f32 %v11170, %v11179
        %v11207 = vadd.f32 %v11171, %v11179
        %v11208 = vadd.f32 %v11172, %v11179
        %v11209 = vadd.f32 %v11173, %v11179
        %v11210 = vadd.f32 %v11174, %v11179
        %v11211 = vadd.f32 %v11175, %v11179
        %v11212 = vadd.f32 %v11176, %v11179
        %v11213 = vadd.f32 %v11181, %v6112
        %v11214 = vadd.f32 %v11182, %v6114
        %v11215 = vadd.f32 %v11183, %v6116
        %v11216 = vadd.f32 %v11184, %v6118
        %v11217 = vadd.f32 %v11185, %v6120
        %v11218 = vadd.f32 %v11186, %v6122
        %v11219 = vadd.f32 %v11187, %v6124
        %v11220 = vadd.f32 %v11188, %v6126
        %v11221 = vadd.f32 %v11189, %v6128
        %v11222 = vadd.f32 %v11190, %v6130
        %v11223 = vadd.f32 %v11191, %v6132
        %v11224 = vadd.f32 %v11192, %v6134
        %v11225 = vadd.f32 %v11193, %v6136
        %v11226 = vadd.f32 %v11194, %v6138
        %v11227 = vadd.f32 %v11195, %v6140
        %v11228 = vadd.f32 %v11196, %v6142
        %v11229 = vadd.f32 %v11197, %v6144
        %v11230 = vadd.f32 %v11198, %v6146
        %v11231 = vadd.f32 %v11199, %v6148
        %v11232 = vadd.f32 %v11200, %v6150
        %v11233 = vadd.f32 %v11201, %v6152
        %v11234 = vadd.f32 %v11202, %v6154
        %v11235 = vadd.f32 %v11203, %v6156
        %v11236 = vadd.f32 %v11204, %v6158
        %v11237 = vadd.f32 %v11205, %v6160
        %v11238 = vadd.f32 %v11206, %v6162
        %v11239 = vadd.f32 %v11207, %v6164
        %v11240 = vadd.f32 %v11208, %v6166
        %v11241 = vadd.f32 %v11209, %v6168
        %v11242 = vadd.f32 %v11210, %v6170
        %v11243 = vadd.f32 %v11211, %v6172
        %v11244 = vadd.f32 %v11212, %v6174
        %v11245 = vmul.f32 %v11213, 0.70710677
        %v11246 = vmul.f32 %v11214, 0.70710677
        %v11247 = vmul.f32 %v11215, 0.70710677
        %v11248 = vmul.f32 %v11216, 0.70710677
        %v11249 = vmul.f32 %v11217, 0.70710677
        %v11250 = vmul.f32 %v11218, 0.70710677
        %v11251 = vmul.f32 %v11219, 0.70710677
        %v11252 = vmul.f32 %v11220, 0.70710677
        %v11253 = vmul.f32 %v11221, 0.70710677
        %v11254 = vmul.f32 %v11222, 0.70710677
        %v11255 = vmul.f32 %v11223, 0.70710677
        %v11256 = vmul.f32 %v11224, 0.70710677
        %v11257 = vmul.f32 %v11225, 0.70710677
        %v11258 = vmul.f32 %v11226, 0.70710677
        %v11259 = vmul.f32 %v11227, 0.70710677
        %v11260 = vmul.f32 %v11228, 0.70710677
        %v11261 = vmul.f32 %v11229, 0.70710677
        %v11262 = vmul.f32 %v11230, 0.70710677
        %v11263 = vmul.f32 %v11231, 0.70710677
        %v11264 = vmul.f32 %v11232, 0.70710677
        %v11265 = vmul.f32 %v11233, 0.70710677
        %v11266 = vmul.f32 %v11234, 0.70710677
        %v11267 = vmul.f32 %v11235, 0.70710677
        %v11268 = vmul.f32 %v11236, 0.70710677
        %v11269 = vmul.f32 %v11237, 0.70710677
        %v11270 = vmul.f32 %v11238, 0.70710677
        %v11271 = vmul.f32 %v11239, 0.70710677
        %v11272 = vmul.f32 %v11240, 0.70710677
        %v11273 = vmul.f32 %v11241, 0.70710677
        %v11274 = vmul.f32 %v11242, 0.70710677
        %v11275 = vmul.f32 %v11243, 0.70710677
        %v11276 = vmul.f32 %v11244, 0.70710677
        %vm11277 = vcmask 64512
        %11278 = vst.msk [vmem:[%s241] sm:$0xff] %vm11277, %v11245
        %11279 = vst.msk [vmem:[%s241 + $0x8] sm:$0xff] %vm11277, %v11246
        %11280 = vst.msk [vmem:[%s241 + $0x10] sm:$0xff] %vm11277, %v11247
        %11281 = vst.msk [vmem:[%s241 + $0x18] sm:$0xff] %vm11277, %v11248
        %11282 = vst.msk [vmem:[%s241 + $0x20] sm:$0xff] %vm11277, %v11249
        %11283 = vst.msk [vmem:[%s241 + $0x28] sm:$0xff] %vm11277, %v11250
        %11284 = vst.msk [vmem:[%s241 + $0x30] sm:$0xff] %vm11277, %v11251
        %11285 = vst.msk [vmem:[%s241 + $0x38] sm:$0xff] %vm11277, %v11252
        %11286 = vst.msk [vmem:[%s241 + $0x40] sm:$0xff] %vm11277, %v11253
        %11287 = vst.msk [vmem:[%s241 + $0x48] sm:$0xff] %vm11277, %v11254
        %11288 = vst.msk [vmem:[%s241 + $0x50] sm:$0xff] %vm11277, %v11255
        %11289 = vst.msk [vmem:[%s241 + $0x58] sm:$0xff] %vm11277, %v11256
        %11290 = vst.msk [vmem:[%s241 + $0x60] sm:$0xff] %vm11277, %v11257
        %11291 = vst.msk [vmem:[%s241 + $0x68] sm:$0xff] %vm11277, %v11258
        %11292 = vst.msk [vmem:[%s241 + $0x70] sm:$0xff] %vm11277, %v11259
        %11293 = vst.msk [vmem:[%s241 + $0x78] sm:$0xff] %vm11277, %v11260
        %11294 = vst.msk [vmem:[%s241 + $0x80] sm:$0xff] %vm11277, %v11261
        %11295 = vst.msk [vmem:[%s241 + $0x88] sm:$0xff] %vm11277, %v11262
        %11296 = vst.msk [vmem:[%s241 + $0x90] sm:$0xff] %vm11277, %v11263
        %11297 = vst.msk [vmem:[%s241 + $0x98] sm:$0xff] %vm11277, %v11264
        %11298 = vst.msk [vmem:[%s241 + $0xa0] sm:$0xff] %vm11277, %v11265
        %11299 = vst.msk [vmem:[%s241 + $0xa8] sm:$0xff] %vm11277, %v11266
        %11300 = vst.msk [vmem:[%s241 + $0xb0] sm:$0xff] %vm11277, %v11267
        %11301 = vst.msk [vmem:[%s241 + $0xb8] sm:$0xff] %vm11277, %v11268
        %11302 = vst.msk [vmem:[%s241 + $0xc0] sm:$0xff] %vm11277, %v11269
        %11303 = vst.msk [vmem:[%s241 + $0xc8] sm:$0xff] %vm11277, %v11270
        %11304 = vst.msk [vmem:[%s241 + $0xd0] sm:$0xff] %vm11277, %v11271
        %11305 = vst.msk [vmem:[%s241 + $0xd8] sm:$0xff] %vm11277, %v11272
        %11306 = vst.msk [vmem:[%s241 + $0xe0] sm:$0xff] %vm11277, %v11273
        %11307 = vst.msk [vmem:[%s241 + $0xe8] sm:$0xff] %vm11277, %v11274
        %11308 = vst.msk [vmem:[%s241 + $0xf0] sm:$0xff] %vm11277, %v11275
        %11309 = vst.msk [vmem:[%s241 + $0xf8] sm:$0xff] %vm11277, %v11276
        %p11310 = scmp.lt.s32.totalorder %s17, 1
        %s11311 = scalar_select %p11310, %s17, 1
        %s11312 = smul.addr %s11311, 32
        %s11313 = smul.addr %s11312, 8
        %s11314 = scalar_lea.vmem %s5, %s11313
        // Predicated region
        $region45: #{tpu_custom_call.1} parent=39 // pred_check
          %p11315 = pneg %p145
        $region46: #{tpu_custom_call.1} parent=39 // pred_check_branch
          %11317 = sbr.rel (%p11315) target = $region48
        $region47: #{tpu_custom_call.1} parent=39 // pred_region
          _
        $region48: #{tpu_custom_call.1} parent=39 // pred_fallthru
          _
      $region40: #{tpu_custom_call.1} parent=5 // pred_fallthru
        _
      %p11318 = scmp.le.s32.totalorder 2, %s12
      // Predicated region
      $region49: #{tpu_custom_call.1} parent=5 // pred_check
        %p11319 = pneg %p11318
      $region50: #{tpu_custom_call.1} parent=5 // pred_check_branch
        %11321 = sbr.rel (%p11319) target = $region52
      $region51: #{tpu_custom_call.1} parent=5 // pred_region
        %s11322 = ssub.s32 %s12, 2
        // Predicated region
        $region53: #{tpu_custom_call.1} parent=51 // pred_check
          %p11323 = pneg %p151
        $region54: #{tpu_custom_call.1} parent=51 // pred_check_branch
          %11325 = sbr.rel (%p11323) target = $region56
        $region55: #{tpu_custom_call.1} parent=51 // pred_region
          %p11326 = scmp.lt.s32.totalorder %s18, 1
          %s11327 = scalar_select %p11326, %s18, 1
          %s11328 = smul.addr %s11327, 32
          %s11329 = smul.addr %s11328, 8
          %s11330 = scalar_lea.vmem %s5, %s11329
        $region56: #{tpu_custom_call.1} parent=51 // pred_fallthru
          _
      $region52: #{tpu_custom_call.1} parent=5 // pred_fallthru
        _
    $region6: #{tpu_custom_call.1} parent=1 // loop_footer
      %s16 = sadd.s32 1, %s12
    $region7: #{tpu_custom_call.1} parent=1 // loop_footer_branch
      %11 = sbr.rel target = $region3
    $region8: #{tpu_custom_call.1} parent=1 // loop_exit
      _
    %11331 = vsyncpa [#allocation5], 1
    %s11332 = scalar_lea.sflag [#allocation5], 1
    %11333 = vsyncpa %s11332, 1

</llo_original>
